<compile_context>
chip_gen: v5e
topology: v5e:2x2
jax: 0.10.0
libtpu: 0.0.40
codegen_flags: <defaults>
</compile_context>

<pallas_src>
import jax
import jax.numpy as jnp
from jax.experimental import pallas as pl
from jax.experimental.pallas import tpu as pltpu


def _dropout_linear_kernel(x_ref, w_ref, b_ref, o_ref):
    # x_ref: (M, K) bf16, w_ref: (tn, K) bf16 (PyTorch (out, in) layout),
    # b_ref: (1, tn) f32, o_ref: (M, tn) f32.
    acc = jax.lax.dot_general(
        x_ref[...],
        w_ref[...],
        dimension_numbers=(((1,), (1,)), ((), ())),   # contract K with K (NT)
        preferred_element_type=jnp.float32,
    )
    o_ref[...] = acc + b_ref[...]


def dropout_linear(x, weight, bias, *, tn=512):
    """x: [B, H, W, K]; weight: [N, K] (PyTorch layout, ideally pre-cast to
    bf16 at parameter-setup time); bias: [N]. Returns [B, H, W, N] in f32."""
    B, H, W, K = x.shape
    N = weight.shape[0]
    M = B * H * W

    assert N % tn == 0, "N must be divisible by tn"

    x2d = x.reshape(M, K).astype(jnp.bfloat16)        # cheap (tiny activations)
    w = weight.astype(jnp.bfloat16)                   # no-op if pre-cast
    b2d = bias.astype(jnp.float32).reshape(1, N)

    out2d = pl.pallas_call(
        _dropout_linear_kernel,
        out_shape=jax.ShapeDtypeStruct((M, N), jnp.float32),
        grid_spec=pltpu.PrefetchScalarGridSpec(
            num_scalar_prefetch=0,
            grid=(N // tn,),                               # parallel over N
            in_specs=[
                pl.BlockSpec((M, K), lambda j: (0, 0)),    # activations (all)
                pl.BlockSpec((tn, K), lambda j: (j, 0)),   # weight (N, K) slab
                pl.BlockSpec((1, tn), lambda j: (0, j)),   # bias
            ],
            out_specs=pl.BlockSpec((M, tn), lambda j: (0, j)),
        ),
        compiler_params=pltpu.CompilerParams(
            dimension_semantics=("parallel",),
        ),
    )(x2d, w, b2d)

    return out2d.reshape(B, H, W, N)


if __name__ == "__main__":
    # Shapes implied by the module: x [1, 7, 7, 4096], Linear(4096 -> 1024).
    B, Hs, Ws, K, N = 1, 7, 7, 4096, 1024

    key = jax.random.PRNGKey(0)
    kx, kw, kb = jax.random.split(key, 3)

    x = jax.random.normal(kx, (B, Hs, Ws, K), dtype=jnp.float32)
    # Deterministic parameter init (synthetic; mimics PyTorch's (out, in) layout).
    bound = 1.0 / (K ** 0.5)
    weight = jax.random.uniform(kw, (N, K), minval=-bound, maxval=bound,
                                dtype=jnp.float32)
    bias = jax.random.uniform(kb, (N,), minval=-bound, maxval=bound,
                              dtype=jnp.float32)

    # One-time parameter setup (hoisted out of the hot path): keep the PyTorch
    # (N, K) layout, store weights as bf16.
    weight_bf16 = weight.astype(jnp.bfloat16)

    out = dropout_linear(x, weight_bf16, bias)
    out = jax.block_until_ready(out)
    assert out.shape == (B, Hs, Ws, N), out.shape

    # Correctness check vs full-f32 reference; tolerance widened slightly to
    # account for the bf16 input cast (accumulation is still f32).
    ref_f32 = (x.reshape(-1, K) @ weight.T + bias).reshape(B, Hs, Ws, N)
    assert jnp.allclose(out, ref_f32, atol=5e-2, rtol=5e-2), float(
        jnp.max(jnp.abs(out - ref_f32)))

    # Tighter check vs a reference using the same bf16-matmul / f32-accumulate
    # numerics as the kernel.
    ref_bf16 = jax.lax.dot_general(
        x.reshape(-1, K).astype(jnp.bfloat16), weight_bf16,
        dimension_numbers=(((1,), (1,)), ((), ())),
        preferred_element_type=jnp.float32,
    ) + bias
    assert jnp.allclose(out.reshape(-1, N), ref_bf16, atol=1e-2, rtol=1e-2)

    print("KERNEL_OK")
</pallas_src>

<mosaic_0001>
module attributes {stable_mosaic.version = 11 : i64} {
  func.func @_dropout_linear_kernel(%arg0: i32, %arg1: memref<49x4096xbf16, #tpu.memory_space<vmem>>, %arg2: memref<512x4096xbf16, #tpu.memory_space<vmem>>, %arg3: memref<1x512xf32, #tpu.memory_space<vmem>>, %arg4: memref<49x512xf32, #tpu.memory_space<vmem>>) attributes {dimension_semantics = [#tpu.dimension_semantics<parallel>], iteration_bounds = array<i64: 2>, scalar_prefetch = 0 : i64, scratch_operands = 0 : i64, tpu.core_type = #tpu.core_type<tc>, window_params = [{pipeline_mode = #tpu.pipeline_mode<synchronous>, transform_indices = @transform_0, window_bounds = array<i64: 49, 4096>}, {transform_indices = @transform_1, window_bounds = array<i64: 512, 4096>}, {transform_indices = @transform_2, window_bounds = array<i64: 1, 512>}, {transform_indices = @transform_3, window_bounds = array<i64: 49, 512>}]} {
    %c0 = arith.constant 0 : index
    %c0_0 = arith.constant 0 : index
    %0 = vector.load %arg1[%c0, %c0_0] : memref<49x4096xbf16, #tpu.memory_space<vmem>>, vector<49x4096xbf16>
    %c0_1 = arith.constant 0 : index
    %c0_2 = arith.constant 0 : index
    %1 = vector.load %arg2[%c0_1, %c0_2] : memref<512x4096xbf16, #tpu.memory_space<vmem>>, vector<512x4096xbf16>
    %cst = arith.constant dense<0.000000e+00> : vector<49x512xf32>
    %2 = tpu.matmul %0, %1, %cst {dimension_numbers = #tpu.dot_dimension_numbers<[1], [1], [0], [0], [0, 0, 1, 0], [], []>} : vector<49x4096xbf16>, vector<512x4096xbf16>, vector<49x512xf32> -> vector<49x512xf32>
    %c0_3 = arith.constant 0 : index
    %c0_4 = arith.constant 0 : index
    %3 = vector.load %arg3[%c0_3, %c0_4] : memref<1x512xf32, #tpu.memory_space<vmem>>, vector<1x512xf32>
    %4 = vector.broadcast %3 : vector<1x512xf32> to vector<49x512xf32>
    %5 = arith.addf %2, %4 : vector<49x512xf32>
    %c0_5 = arith.constant 0 : index
    %c0_6 = arith.constant 0 : index
    %6 = vector.load %arg4[%c0_5, %c0_6] : memref<49x512xf32, #tpu.memory_space<vmem>>, vector<49x512xf32>
    tpu.vector_store %arg4[%c0_5, %c0_6], %5 {strides = array<i32>} : memref<49x512xf32, #tpu.memory_space<vmem>>, vector<49x512xf32>,
    return
  }
  func.func @transform_0(%arg0: i32) -> (i32, i32) {
    %c0_i32 = arith.constant 0 : i32
    %c0_i32_0 = arith.constant 0 : i32
    %c0_i32_1 = arith.constant 0 : i32
    return %c0_i32, %c0_i32_0 : i32, i32
  }
  func.func @transform_1(%arg0: i32) -> (i32, i32) {
    %c0_i32 = arith.constant 0 : i32
    %c0_i32_0 = arith.constant 0 : i32
    return %arg0, %c0_i32 : i32, i32
  }
  func.func @transform_2(%arg0: i32) -> (i32, i32) {
    %c0_i32 = arith.constant 0 : i32
    %c0_i32_0 = arith.constant 0 : i32
    return %c0_i32, %arg0 : i32, i32
  }
  func.func @transform_3(%arg0: i32) -> (i32, i32) {
    %c0_i32 = arith.constant 0 : i32
    %c0_i32_0 = arith.constant 0 : i32
    return %c0_i32, %arg0 : i32, i32
  }
}

</mosaic_0001>

<llo_original>
// kernel: tpu_custom_call.1
$region0: #{tpu_custom_call.1}
  #allocation0 [shape = 'u32[]', space=smem, size = 0x4, offset = 0x4, fixed_abs, tag = 'smem constant byte address 0x4 - core index']
  #allocation1 [shape = 'u32[72,128]{1,0:T(1,128)}', space=vmem, size = 0x9000, scoped, tag = 'internal scratch']
  %s0 = inlined_call_operand.hbm [shape: bf16[49,4096], index: 0, kind: input, shape index: {}]
  %s1 = inlined_call_operand.hbm [shape: bf16[1024,4096], index: 1, kind: input, shape index: {}]
  %s2 = inlined_call_operand.hbm [shape: f32[1,1024], index: 2, kind: input, shape index: {}]
  %s3 = inlined_call_operand.hbm [shape: f32[49,1024], index: 3, kind: output, shape index: {}]
  %s4 = sld [smem:[#allocation0]]
  $region57: #{tpu_custom_call.1} parent=0
    _
  %s6 = ssub.s32 1, %s4
  %s7 = scalar_select 0, %s6, %s4
  $region1: #{tpu_custom_call.1} parent=0
    #allocation2 [shape = 'u8[458752]{0}', space=vmem, size = 0x70000, scoped, tag = 'input window, operand 0, single buffered']
    #allocation3 [shape = 's32[2]{0}', space=sflag, size = 0x8, scoped, tag = 'scoped memory for tpu_custom_call.1']
    #allocation4 [shape = 's32[2]{0}', space=sflag, size = 0x8, scoped, tag = 'scoped memory for tpu_custom_call.1']
    #allocation5 [shape = 'u8[8388608]{0}', space=vmem, size = 0x800000, scoped, tag = 'input window, operand 1']
    #allocation6 [shape = 's32[2]{0}', space=sflag, size = 0x8, scoped, tag = 'scoped memory for tpu_custom_call.1']
    #allocation7 [shape = 'u8[4096]{0}', space=vmem, size = 0x1000, scoped, tag = 'input window, operand 2']
    #allocation8 [shape = 'u8[229376]{0}', space=vmem, size = 0x38000, scoped, tag = 'output window, operand 0']
    %8 = vsyncpa [#allocation3], 0
    %9 = vsyncpa [#allocation6], 0
    %s10 = scalar_lea.sflag [#allocation6], 1
    %11 = vsyncpa %s10, 0
    %12 = vsyncpa [#allocation4], 0
    %s13 = scalar_lea.sflag [#allocation4], 1
    %14 = vsyncpa %s13, 0
    loop: start=0, step=1, limit=4
    $region2: #{tpu_custom_call.1} parent=1 // loop_pre_header
      _
    $region3: #{tpu_custom_call.1} parent=1 // loop_header
      %s16 = sphi 0, %s20
      %p17 = scmp.ge.s32.totalorder %s16, 4
      %s24 = sphi 0, %s24
      %s26 = sphi 0, %s24
      %s27 = sphi 0, %s26
      %s41 = sphi 0, %s27
      %s47 = sphi 0, %s49
      %s50 = sphi 0, %s47
      %s51 = sphi 0, %s50
      %s67 = sphi 0, %s51
      %s73 = sphi 0, %s75
      %s76 = sphi 0, %s73
      %s77 = sphi 0, %s76
      %s93 = sphi 0, %s77
      %s99 = sphi 0, %s101
      %s102 = sphi 0, %s99
      %s103 = sphi 0, %s102
      %s119 = sphi 0, %s103
    $region4: #{tpu_custom_call.1} parent=1 // loop_header_branch
      %19 = sbr.rel (%p17) target = $region8
    $region5: #{tpu_custom_call.1} parent=1 // loop_body
      %s21 = ssub.s32 %s16, 1
      %s22 = ssub.s32 %s16, 2
      %s23 = sadd.s32 %s16, 1
      %s25 = sadd.s32 %s24, 1
      %p28 = scmp.eq.s32.totalorder %s16, 1
      %p29 = scmp.ne.s32.totalorder %s24, %s26
      %p30 = scmp.eq.s32.totalorder %s16, 0
      %p31 = por %p29, %p30
      %p32 = scmp.ne.s32.totalorder %s24, %s26
      %p33 = scmp.eq.s32.totalorder %s21, 1
      %p34 = por %p32, %p33
      %p35 = scmp.ne.s32.totalorder %s26, %s27
      %p36 = scmp.eq.s32.totalorder %s21, 0
      %p37 = por %p35, %p36
      %p38 = scmp.ne.s32.totalorder %s26, %s27
      %p39 = scmp.eq.s32.totalorder %s22, 1
      %p40 = por %p38, %p39
      %p42 = scmp.ne.s32.totalorder %s27, %s41
      %p43 = scmp.eq.s32.totalorder %s22, 0
      %p44 = por %p42, %p43
      %s45 = ssub.s32 %s16, %s23
      %p46 = scmp.eq.s32.totalorder %s45, 0
      %s48 = sadd.s32 %s47, 1
      %s49 = scalar_select %p46, %s47, %s48
      %p52 = pneg %p46
      %p53 = scmp.eq.s32.totalorder %s16, 1
      %p54 = por %p52, %p53
      %p55 = scmp.ne.s32.totalorder %s47, %s50
      %p56 = scmp.eq.s32.totalorder %s16, 0
      %p57 = por %p55, %p56
      %p58 = scmp.ne.s32.totalorder %s47, %s50
      %p59 = scmp.eq.s32.totalorder %s21, 1
      %p60 = por %p58, %p59
      %p61 = scmp.ne.s32.totalorder %s50, %s51
      %p62 = scmp.eq.s32.totalorder %s21, 0
      %p63 = por %p61, %p62
      %p64 = scmp.ne.s32.totalorder %s50, %s51
      %p65 = scmp.eq.s32.totalorder %s22, 1
      %p66 = por %p64, %p65
      %p68 = scmp.ne.s32.totalorder %s51, %s67
      %p69 = scmp.eq.s32.totalorder %s22, 0
      %p70 = por %p68, %p69
      %s71 = ssub.s32 %s16, %s23
      %p72 = scmp.eq.s32.totalorder %s71, 0
      %s74 = sadd.s32 %s73, 1
      %s75 = scalar_select %p72, %s73, %s74
      %p78 = pneg %p72
      %p79 = scmp.eq.s32.totalorder %s16, 1
      %p80 = por %p78, %p79
      %p81 = scmp.ne.s32.totalorder %s73, %s76
      %p82 = scmp.eq.s32.totalorder %s16, 0
      %p83 = por %p81, %p82
      %p84 = scmp.ne.s32.totalorder %s73, %s76
      %p85 = scmp.eq.s32.totalorder %s21, 1
      %p86 = por %p84, %p85
      %p87 = scmp.ne.s32.totalorder %s76, %s77
      %p88 = scmp.eq.s32.totalorder %s21, 0
      %p89 = por %p87, %p88
      %p90 = scmp.ne.s32.totalorder %s76, %s77
      %p91 = scmp.eq.s32.totalorder %s22, 1
      %p92 = por %p90, %p91
      %p94 = scmp.ne.s32.totalorder %s77, %s93
      %p95 = scmp.eq.s32.totalorder %s22, 0
      %p96 = por %p94, %p95
      %s97 = ssub.s32 %s16, %s23
      %p98 = scmp.eq.s32.totalorder %s97, 0
      %s100 = sadd.s32 %s99, 1
      %s101 = scalar_select %p98, %s99, %s100
      %p104 = pneg %p98
      %p105 = scmp.eq.s32.totalorder %s16, 1
      %p106 = por %p104, %p105
      %p107 = scmp.ne.s32.totalorder %s99, %s102
      %p108 = scmp.eq.s32.totalorder %s16, 0
      %p109 = por %p107, %p108
      %p110 = scmp.ne.s32.totalorder %s99, %s102
      %p111 = scmp.eq.s32.totalorder %s21, 1
      %p112 = por %p110, %p111
      %p113 = scmp.ne.s32.totalorder %s102, %s103
      %p114 = scmp.eq.s32.totalorder %s21, 0
      %p115 = por %p113, %p114
      %p116 = scmp.ne.s32.totalorder %s102, %s103
      %p117 = scmp.eq.s32.totalorder %s22, 1
      %p118 = por %p116, %p117
      %p120 = scmp.ne.s32.totalorder %s103, %s119
      %p121 = scmp.eq.s32.totalorder %s22, 0
      %p122 = por %p120, %p121
      %p123 = scmp.le.s32.totalorder 1, %s16
      %p124 = scmp.lt.s32.totalorder %s16, 3
      %p125 = pnand %p123, %p124
      %p126 = pneg %p125
      // Predicated region
      $region9: #{tpu_custom_call.1} parent=5 // pred_check
        _
      $region10: #{tpu_custom_call.1} parent=5 // pred_check_branch
        %128 = sbr.rel (%p125) target = $region12
      $region11: #{tpu_custom_call.1} parent=5 // pred_region
        %s129 = ssub.s32 %s16, 1
        // Predicated region
        $region13: #{tpu_custom_call.1} parent=11 // pred_check
          %p130 = pneg %p37
        $region14: #{tpu_custom_call.1} parent=11 // pred_check_branch
          %132 = sbr.rel (%p130) target = $region16
        $region15: #{tpu_custom_call.1} parent=11 // pred_region
          %134 = vsyncadd [#allocation3], 0
          %s135 = sshll.u32 %s0, 4
          %s136 = int_to_ptr.hbm [resolvable:$true] %s135
          %s137 = sshll.u32 [#allocation2], 4
          %s138 = int_to_ptr.vmem [resolvable:$true] %s137
          %143 = dma.hbm_to_vmem [thread:$0]  %s136, 14336, %s138, [#allocation3], 2048, 2048, 128
        $region16: #{tpu_custom_call.1} parent=11 // pred_fallthru
          _
      $region12: #{tpu_custom_call.1} parent=5 // pred_fallthru
        _
      %p144 = scmp.lt.s32.totalorder %s16, 2
      // Predicated region
      $region17: #{tpu_custom_call.1} parent=5 // pred_check
        %p145 = pneg %p144
      $region18: #{tpu_custom_call.1} parent=5 // pred_check_branch
        %147 = sbr.rel (%p145) target = $region20
      $region19: #{tpu_custom_call.1} parent=5 // pred_region
        // Predicated region
        $region21: #{tpu_custom_call.1} parent=19 // pred_check
          %p148 = pneg %p57
        $region22: #{tpu_custom_call.1} parent=19 // pred_check_branch
          %150 = sbr.rel (%p148) target = $region24
        $region23: #{tpu_custom_call.1} parent=19 // pred_region
          %s151 = sand.u32 %s16, 1
          %s152 = scalar_lea.sflag [#allocation6], %s151
          %s153 = sand.u32 %s47, 1
          %s154 = smul.addr %s153, 8192
          %s155 = scalar_lea.vmem [#allocation5], %s154
          %s156 = smul.u32 64, %s16
          %158 = vsyncadd %s152, 0
          %s159 = smul.addr %s156, 32
          %s160 = smul.addr %s159, 4
          %s161 = scalar_lea.hbm %s1, %s160
          %s162 = sshll.u32 %s161, 4
          %s163 = int_to_ptr.hbm [resolvable:$true] %s162
          %s164 = sshll.u32 %s155, 4
          %s165 = int_to_ptr.vmem [resolvable:$true] %s164
          %170 = dma.hbm_to_vmem [thread:$0]  %s163, 131072, %s165, %s152, 2048, 2048, 128
        $region24: #{tpu_custom_call.1} parent=19 // pred_fallthru
          _
        // Predicated region
        $region25: #{tpu_custom_call.1} parent=19 // pred_check
          %p171 = pneg %p83
        $region26: #{tpu_custom_call.1} parent=19 // pred_check_branch
          %173 = sbr.rel (%p171) target = $region28
        $region27: #{tpu_custom_call.1} parent=19 // pred_region
          %s174 = sand.u32 %s16, 1
          %s175 = scalar_lea.sflag [#allocation6], %s174
          %s176 = sand.u32 %s73, 1
          %s177 = smul.addr %s176, 4
          %s178 = scalar_lea.vmem [#allocation7], %s177
          %s179 = smul.u32 4, %s16
          %181 = vsyncadd %s175, 0
          %s182 = scalar_lea.hbm %s2, %s179
          %s184 = sshll.u32 %s182, 4
          %s185 = int_to_ptr.hbm [resolvable:$true] %s184
          %s186 = sshll.u32 %s178, 4
          %s187 = int_to_ptr.vmem [resolvable:$true] %s186
          %189 = dma.hbm_to_vmem [thread:$0]  %s185, 64, %s187, %s175
        $region28: #{tpu_custom_call.1} parent=19 // pred_fallthru
          _
      $region20: #{tpu_custom_call.1} parent=5 // pred_fallthru
        _
      %p190 = scmp.le.s32.totalorder 1, %s16
      %p191 = scmp.lt.s32.totalorder %s16, 3
      %p192 = pnand %p190, %p191
      %p193 = pneg %p192
      // Predicated region
      $region29: #{tpu_custom_call.1} parent=5 // pred_check
        _
      $region30: #{tpu_custom_call.1} parent=5 // pred_check_branch
        %195 = sbr.rel (%p192) target = $region32
      $region31: #{tpu_custom_call.1} parent=5 // pred_region
        %s196 = ssub.s32 %s16, 1
        // Predicated region
        $region33: #{tpu_custom_call.1} parent=31 // pred_check
          %p197 = pneg %p37
        $region34: #{tpu_custom_call.1} parent=31 // pred_check_branch
          %199 = sbr.rel (%p197) target = $region36
        $region35: #{tpu_custom_call.1} parent=31 // pred_region
          %201 = dma.done [#allocation3], 14336
        $region36: #{tpu_custom_call.1} parent=31 // pred_fallthru
          _
        %s202 = sand.u32 %s21, 1
        %s203 = scalar_lea.sflag [#allocation6], %s202
        %s204 = sand.u32 %s50, 1
        %s205 = smul.addr %s204, 8192
        %s206 = scalar_lea.vmem [#allocation5], %s205
        // Predicated region
        $region37: #{tpu_custom_call.1} parent=31 // pred_check
          %p207 = pneg %p63
        $region38: #{tpu_custom_call.1} parent=31 // pred_check_branch
          %209 = sbr.rel (%p207) target = $region40
        $region39: #{tpu_custom_call.1} parent=31 // pred_region
          %211 = dma.done %s203, 131072
        $region40: #{tpu_custom_call.1} parent=31 // pred_fallthru
          _
        %s212 = sand.u32 %s21, 1
        %s213 = scalar_lea.sflag [#allocation6], %s212
        %s214 = sand.u32 %s76, 1
        %s215 = smul.addr %s214, 4
        %s216 = scalar_lea.vmem [#allocation7], %s215
        // Predicated region
        $region41: #{tpu_custom_call.1} parent=31 // pred_check
          %p217 = pneg %p89
        $region42: #{tpu_custom_call.1} parent=31 // pred_check_branch
          %219 = sbr.rel (%p217) target = $region44
        $region43: #{tpu_custom_call.1} parent=31 // pred_region
          %221 = dma.done %s213, 64
        $region44: #{tpu_custom_call.1} parent=31 // pred_fallthru
          _
        %p222 = pneg %p37
        %p223 = pneg %p34
        %s224 = sand.u32 %s21, 1
        %s225 = scalar_lea.sflag [#allocation6], %s224
        %s226 = sand.u32 %s50, 1
        %s227 = smul.addr %s226, 8192
        %s228 = scalar_lea.vmem [#allocation5], %s227
        %p229 = pneg %p63
        %p230 = pneg %p60
        %s231 = sand.u32 %s21, 1
        %s232 = scalar_lea.sflag [#allocation6], %s231
        %s233 = sand.u32 %s76, 1
        %s234 = smul.addr %s233, 4
        %s235 = scalar_lea.vmem [#allocation7], %s234
        %p236 = pneg %p89
        %p237 = pneg %p86
        %p238 = pneg %p115
        %p239 = pneg %p112
        %s240 = sand.u32 %s102, 1
        %s241 = scalar_lea.sflag [#allocation4], %s240
        %s242 = sand.u32 %s102, 1
        %s243 = smul.addr %s242, 224
        %s244 = scalar_lea.vmem [#allocation8], %s243
        %s245 = smul.u32 64, %s21
        %s246 = smul.u32 4, %s21
        %s247 = smul.u32 4, %s21
        %v248 = vld [vmem:[#allocation2] sm:$0xff]
        %v249 = vld [vmem:[#allocation2 + $0x8] sm:$0xff]
        %v250 = vld [vmem:[#allocation2 + $0x10] sm:$0xff]
        %v251 = vld [vmem:[#allocation2 + $0x18] sm:$0xff]
        %v252 = vld [vmem:[#allocation2 + $0x20] sm:$0xff]
        %v253 = vld [vmem:[#allocation2 + $0x28] sm:$0xff]
        %v254 = vld [vmem:[#allocation2 + $0x30] sm:$0xff]
        %v255 = vld [vmem:[#allocation2 + $0x38] sm:$0xff]
        %v256 = vld [vmem:[#allocation2 + $0x40] sm:$0xff]
        %v257 = vld [vmem:[#allocation2 + $0x48] sm:$0xff]
        %v258 = vld [vmem:[#allocation2 + $0x50] sm:$0xff]
        %v259 = vld [vmem:[#allocation2 + $0x58] sm:$0xff]
        %v260 = vld [vmem:[#allocation2 + $0x60] sm:$0xff]
        %v261 = vld [vmem:[#allocation2 + $0x68] sm:$0xff]
        %v262 = vld [vmem:[#allocation2 + $0x70] sm:$0xff]
        %v263 = vld [vmem:[#allocation2 + $0x78] sm:$0xff]
        %v264 = vld [vmem:[#allocation2 + $0x80] sm:$0xff]
        %v265 = vld [vmem:[#allocation2 + $0x88] sm:$0xff]
        %v266 = vld [vmem:[#allocation2 + $0x90] sm:$0xff]
        %v267 = vld [vmem:[#allocation2 + $0x98] sm:$0xff]
        %v268 = vld [vmem:[#allocation2 + $0xa0] sm:$0xff]
        %v269 = vld [vmem:[#allocation2 + $0xa8] sm:$0xff]
        %v270 = vld [vmem:[#allocation2 + $0xb0] sm:$0xff]
        %v271 = vld [vmem:[#allocation2 + $0xb8] sm:$0xff]
        %v272 = vld [vmem:[#allocation2 + $0xc0] sm:$0xff]
        %v273 = vld [vmem:[#allocation2 + $0xc8] sm:$0xff]
        %v274 = vld [vmem:[#allocation2 + $0xd0] sm:$0xff]
        %v275 = vld [vmem:[#allocation2 + $0xd8] sm:$0xff]
        %v276 = vld [vmem:[#allocation2 + $0xe0] sm:$0xff]
        %v277 = vld [vmem:[#allocation2 + $0xe8] sm:$0xff]
        %v278 = vld [vmem:[#allocation2 + $0xf0] sm:$0xff]
        %v279 = vld [vmem:[#allocation2 + $0xf8] sm:$0xff]
        %v280 = vld [vmem:[#allocation2 + $0x100] sm:$0xff]
        %v281 = vld [vmem:[#allocation2 + $0x108] sm:$0xff]
        %v282 = vld [vmem:[#allocation2 + $0x110] sm:$0xff]
        %v283 = vld [vmem:[#allocation2 + $0x118] sm:$0xff]
        %v284 = vld [vmem:[#allocation2 + $0x120] sm:$0xff]
        %v285 = vld [vmem:[#allocation2 + $0x128] sm:$0xff]
        %v286 = vld [vmem:[#allocation2 + $0x130] sm:$0xff]
        %v287 = vld [vmem:[#allocation2 + $0x138] sm:$0xff]
        %v288 = vld [vmem:[#allocation2 + $0x140] sm:$0xff]
        %v289 = vld [vmem:[#allocation2 + $0x148] sm:$0xff]
        %v290 = vld [vmem:[#allocation2 + $0x150] sm:$0xff]
        %v291 = vld [vmem:[#allocation2 + $0x158] sm:$0xff]
        %v292 = vld [vmem:[#allocation2 + $0x160] sm:$0xff]
        %v293 = vld [vmem:[#allocation2 + $0x168] sm:$0xff]
        %v294 = vld [vmem:[#allocation2 + $0x170] sm:$0xff]
        %v295 = vld [vmem:[#allocation2 + $0x178] sm:$0xff]
        %v296 = vld [vmem:[#allocation2 + $0x180] sm:$0xff]
        %v297 = vld [vmem:[#allocation2 + $0x188] sm:$0xff]
        %v298 = vld [vmem:[#allocation2 + $0x190] sm:$0xff]
        %v299 = vld [vmem:[#allocation2 + $0x198] sm:$0xff]
        %v300 = vld [vmem:[#allocation2 + $0x1a0] sm:$0xff]
        %v301 = vld [vmem:[#allocation2 + $0x1a8] sm:$0xff]
        %v302 = vld [vmem:[#allocation2 + $0x1b0] sm:$0xff]
        %v303 = vld [vmem:[#allocation2 + $0x1b8] sm:$0xff]
        %v304 = vld [vmem:[#allocation2 + $0x1c0] sm:$0xff]
        %v305 = vld [vmem:[#allocation2 + $0x1c8] sm:$0xff]
        %v306 = vld [vmem:[#allocation2 + $0x1d0] sm:$0xff]
        %v307 = vld [vmem:[#allocation2 + $0x1d8] sm:$0xff]
        %v308 = vld [vmem:[#allocation2 + $0x1e0] sm:$0xff]
        %v309 = vld [vmem:[#allocation2 + $0x1e8] sm:$0xff]
        %v310 = vld [vmem:[#allocation2 + $0x1f0] sm:$0xff]
        %v311 = vld [vmem:[#allocation2 + $0x1f8] sm:$0xff]
        %v312 = vld [vmem:[#allocation2 + $0x200] sm:$0xff]
        %v313 = vld [vmem:[#allocation2 + $0x208] sm:$0xff]
        %v314 = vld [vmem:[#allocation2 + $0x210] sm:$0xff]
        %v315 = vld [vmem:[#allocation2 + $0x218] sm:$0xff]
        %v316 = vld [vmem:[#allocation2 + $0x220] sm:$0xff]
        %v317 = vld [vmem:[#allocation2 + $0x228] sm:$0xff]
        %v318 = vld [vmem:[#allocation2 + $0x230] sm:$0xff]
        %v319 = vld [vmem:[#allocation2 + $0x238] sm:$0xff]
        %v320 = vld [vmem:[#allocation2 + $0x240] sm:$0xff]
        %v321 = vld [vmem:[#allocation2 + $0x248] sm:$0xff]
        %v322 = vld [vmem:[#allocation2 + $0x250] sm:$0xff]
        %v323 = vld [vmem:[#allocation2 + $0x258] sm:$0xff]
        %v324 = vld [vmem:[#allocation2 + $0x260] sm:$0xff]
        %v325 = vld [vmem:[#allocation2 + $0x268] sm:$0xff]
        %v326 = vld [vmem:[#allocation2 + $0x270] sm:$0xff]
        %v327 = vld [vmem:[#allocation2 + $0x278] sm:$0xff]
        %v328 = vld [vmem:[#allocation2 + $0x280] sm:$0xff]
        %v329 = vld [vmem:[#allocation2 + $0x288] sm:$0xff]
        %v330 = vld [vmem:[#allocation2 + $0x290] sm:$0xff]
        %v331 = vld [vmem:[#allocation2 + $0x298] sm:$0xff]
        %v332 = vld [vmem:[#allocation2 + $0x2a0] sm:$0xff]
        %v333 = vld [vmem:[#allocation2 + $0x2a8] sm:$0xff]
        %v334 = vld [vmem:[#allocation2 + $0x2b0] sm:$0xff]
        %v335 = vld [vmem:[#allocation2 + $0x2b8] sm:$0xff]
        %v336 = vld [vmem:[#allocation2 + $0x2c0] sm:$0xff]
        %v337 = vld [vmem:[#allocation2 + $0x2c8] sm:$0xff]
        %v338 = vld [vmem:[#allocation2 + $0x2d0] sm:$0xff]
        %v339 = vld [vmem:[#allocation2 + $0x2d8] sm:$0xff]
        %v340 = vld [vmem:[#allocation2 + $0x2e0] sm:$0xff]
        %v341 = vld [vmem:[#allocation2 + $0x2e8] sm:$0xff]
        %v342 = vld [vmem:[#allocation2 + $0x2f0] sm:$0xff]
        %v343 = vld [vmem:[#allocation2 + $0x2f8] sm:$0xff]
        %v344 = vld [vmem:[#allocation2 + $0x300] sm:$0x11]
        %v345 = vld [vmem:[#allocation2 + $0x308] sm:$0x11]
        %v346 = vld [vmem:[#allocation2 + $0x310] sm:$0x11]
        %v347 = vld [vmem:[#allocation2 + $0x318] sm:$0x11]
        %v348 = vld [vmem:[#allocation2 + $0x320] sm:$0x11]
        %v349 = vld [vmem:[#allocation2 + $0x328] sm:$0x11]
        %v350 = vld [vmem:[#allocation2 + $0x330] sm:$0x11]
        %v351 = vld [vmem:[#allocation2 + $0x338] sm:$0x11]
        %v352 = vld [vmem:[#allocation2 + $0x340] sm:$0x11]
        %v353 = vld [vmem:[#allocation2 + $0x348] sm:$0x11]
        %v354 = vld [vmem:[#allocation2 + $0x350] sm:$0x11]
        %v355 = vld [vmem:[#allocation2 + $0x358] sm:$0x11]
        %v356 = vld [vmem:[#allocation2 + $0x360] sm:$0x11]
        %v357 = vld [vmem:[#allocation2 + $0x368] sm:$0x11]
        %v358 = vld [vmem:[#allocation2 + $0x370] sm:$0x11]
        %v359 = vld [vmem:[#allocation2 + $0x378] sm:$0x11]
        %v360 = vld [vmem:[%s206] sm:$0xff]
        %v361 = vld [vmem:[%s206 + $0x8] sm:$0xff]
        %v362 = vld [vmem:[%s206 + $0x10] sm:$0xff]
        %v363 = vld [vmem:[%s206 + $0x18] sm:$0xff]
        %v364 = vld [vmem:[%s206 + $0x20] sm:$0xff]
        %v365 = vld [vmem:[%s206 + $0x28] sm:$0xff]
        %v366 = vld [vmem:[%s206 + $0x30] sm:$0xff]
        %v367 = vld [vmem:[%s206 + $0x38] sm:$0xff]
        %v368 = vld [vmem:[%s206 + $0x40] sm:$0xff]
        %v369 = vld [vmem:[%s206 + $0x48] sm:$0xff]
        %v370 = vld [vmem:[%s206 + $0x50] sm:$0xff]
        %v371 = vld [vmem:[%s206 + $0x58] sm:$0xff]
        %v372 = vld [vmem:[%s206 + $0x60] sm:$0xff]
        %v373 = vld [vmem:[%s206 + $0x68] sm:$0xff]
        %v374 = vld [vmem:[%s206 + $0x70] sm:$0xff]
        %v375 = vld [vmem:[%s206 + $0x78] sm:$0xff]
        %v376 = vld [vmem:[%s206 + $0x80] sm:$0xff]
        %v377 = vld [vmem:[%s206 + $0x88] sm:$0xff]
        %v378 = vld [vmem:[%s206 + $0x90] sm:$0xff]
        %v379 = vld [vmem:[%s206 + $0x98] sm:$0xff]
        %v380 = vld [vmem:[%s206 + $0xa0] sm:$0xff]
        %v381 = vld [vmem:[%s206 + $0xa8] sm:$0xff]
        %v382 = vld [vmem:[%s206 + $0xb0] sm:$0xff]
        %v383 = vld [vmem:[%s206 + $0xb8] sm:$0xff]
        %v384 = vld [vmem:[%s206 + $0xc0] sm:$0xff]
        %v385 = vld [vmem:[%s206 + $0xc8] sm:$0xff]
        %v386 = vld [vmem:[%s206 + $0xd0] sm:$0xff]
        %v387 = vld [vmem:[%s206 + $0xd8] sm:$0xff]
        %v388 = vld [vmem:[%s206 + $0xe0] sm:$0xff]
        %v389 = vld [vmem:[%s206 + $0xe8] sm:$0xff]
        %v390 = vld [vmem:[%s206 + $0xf0] sm:$0xff]
        %v391 = vld [vmem:[%s206 + $0xf8] sm:$0xff]
        %v392 = vld [vmem:[%s206 + $0x100] sm:$0xff]
        %v393 = vld [vmem:[%s206 + $0x108] sm:$0xff]
        %v394 = vld [vmem:[%s206 + $0x110] sm:$0xff]
        %v395 = vld [vmem:[%s206 + $0x118] sm:$0xff]
        %v396 = vld [vmem:[%s206 + $0x120] sm:$0xff]
        %v397 = vld [vmem:[%s206 + $0x128] sm:$0xff]
        %v398 = vld [vmem:[%s206 + $0x130] sm:$0xff]
        %v399 = vld [vmem:[%s206 + $0x138] sm:$0xff]
        %v400 = vld [vmem:[%s206 + $0x140] sm:$0xff]
        %v401 = vld [vmem:[%s206 + $0x148] sm:$0xff]
        %v402 = vld [vmem:[%s206 + $0x150] sm:$0xff]
        %v403 = vld [vmem:[%s206 + $0x158] sm:$0xff]
        %v404 = vld [vmem:[%s206 + $0x160] sm:$0xff]
        %v405 = vld [vmem:[%s206 + $0x168] sm:$0xff]
        %v406 = vld [vmem:[%s206 + $0x170] sm:$0xff]
        %v407 = vld [vmem:[%s206 + $0x178] sm:$0xff]
        %v408 = vld [vmem:[%s206 + $0x180] sm:$0xff]
        %v409 = vld [vmem:[%s206 + $0x188] sm:$0xff]
        %v410 = vld [vmem:[%s206 + $0x190] sm:$0xff]
        %v411 = vld [vmem:[%s206 + $0x198] sm:$0xff]
        %v412 = vld [vmem:[%s206 + $0x1a0] sm:$0xff]
        %v413 = vld [vmem:[%s206 + $0x1a8] sm:$0xff]
        %v414 = vld [vmem:[%s206 + $0x1b0] sm:$0xff]
        %v415 = vld [vmem:[%s206 + $0x1b8] sm:$0xff]
        %v416 = vld [vmem:[%s206 + $0x1c0] sm:$0xff]
        %v417 = vld [vmem:[%s206 + $0x1c8] sm:$0xff]
        %v418 = vld [vmem:[%s206 + $0x1d0] sm:$0xff]
        %v419 = vld [vmem:[%s206 + $0x1d8] sm:$0xff]
        %v420 = vld [vmem:[%s206 + $0x1e0] sm:$0xff]
        %v421 = vld [vmem:[%s206 + $0x1e8] sm:$0xff]
        %v422 = vld [vmem:[%s206 + $0x1f0] sm:$0xff]
        %v423 = vld [vmem:[%s206 + $0x1f8] sm:$0xff]
        %v424 = vld [vmem:[%s206 + $0x200] sm:$0xff]
        %v425 = vld [vmem:[%s206 + $0x208] sm:$0xff]
        %v426 = vld [vmem:[%s206 + $0x210] sm:$0xff]
        %v427 = vld [vmem:[%s206 + $0x218] sm:$0xff]
        %v428 = vld [vmem:[%s206 + $0x220] sm:$0xff]
        %v429 = vld [vmem:[%s206 + $0x228] sm:$0xff]
        %v430 = vld [vmem:[%s206 + $0x230] sm:$0xff]
        %v431 = vld [vmem:[%s206 + $0x238] sm:$0xff]
        %v432 = vld [vmem:[%s206 + $0x240] sm:$0xff]
        %v433 = vld [vmem:[%s206 + $0x248] sm:$0xff]
        %v434 = vld [vmem:[%s206 + $0x250] sm:$0xff]
        %v435 = vld [vmem:[%s206 + $0x258] sm:$0xff]
        %v436 = vld [vmem:[%s206 + $0x260] sm:$0xff]
        %v437 = vld [vmem:[%s206 + $0x268] sm:$0xff]
        %v438 = vld [vmem:[%s206 + $0x270] sm:$0xff]
        %v439 = vld [vmem:[%s206 + $0x278] sm:$0xff]
        %v440 = vld [vmem:[%s206 + $0x280] sm:$0xff]
        %v441 = vld [vmem:[%s206 + $0x288] sm:$0xff]
        %v442 = vld [vmem:[%s206 + $0x290] sm:$0xff]
        %v443 = vld [vmem:[%s206 + $0x298] sm:$0xff]
        %v444 = vld [vmem:[%s206 + $0x2a0] sm:$0xff]
        %v445 = vld [vmem:[%s206 + $0x2a8] sm:$0xff]
        %v446 = vld [vmem:[%s206 + $0x2b0] sm:$0xff]
        %v447 = vld [vmem:[%s206 + $0x2b8] sm:$0xff]
        %v448 = vld [vmem:[%s206 + $0x2c0] sm:$0xff]
        %v449 = vld [vmem:[%s206 + $0x2c8] sm:$0xff]
        %v450 = vld [vmem:[%s206 + $0x2d0] sm:$0xff]
        %v451 = vld [vmem:[%s206 + $0x2d8] sm:$0xff]
        %v452 = vld [vmem:[%s206 + $0x2e0] sm:$0xff]
        %v453 = vld [vmem:[%s206 + $0x2e8] sm:$0xff]
        %v454 = vld [vmem:[%s206 + $0x2f0] sm:$0xff]
        %v455 = vld [vmem:[%s206 + $0x2f8] sm:$0xff]
        %v456 = vld [vmem:[%s206 + $0x300] sm:$0xff]
        %v457 = vld [vmem:[%s206 + $0x308] sm:$0xff]
        %v458 = vld [vmem:[%s206 + $0x310] sm:$0xff]
        %v459 = vld [vmem:[%s206 + $0x318] sm:$0xff]
        %v460 = vld [vmem:[%s206 + $0x320] sm:$0xff]
        %v461 = vld [vmem:[%s206 + $0x328] sm:$0xff]
        %v462 = vld [vmem:[%s206 + $0x330] sm:$0xff]
        %v463 = vld [vmem:[%s206 + $0x338] sm:$0xff]
        %v464 = vld [vmem:[%s206 + $0x340] sm:$0xff]
        %v465 = vld [vmem:[%s206 + $0x348] sm:$0xff]
        %v466 = vld [vmem:[%s206 + $0x350] sm:$0xff]
        %v467 = vld [vmem:[%s206 + $0x358] sm:$0xff]
        %v468 = vld [vmem:[%s206 + $0x360] sm:$0xff]
        %v469 = vld [vmem:[%s206 + $0x368] sm:$0xff]
        %v470 = vld [vmem:[%s206 + $0x370] sm:$0xff]
        %v471 = vld [vmem:[%s206 + $0x378] sm:$0xff]
        %v472 = vld [vmem:[%s206 + $0x380] sm:$0xff]
        %v473 = vld [vmem:[%s206 + $0x388] sm:$0xff]
        %v474 = vld [vmem:[%s206 + $0x390] sm:$0xff]
        %v475 = vld [vmem:[%s206 + $0x398] sm:$0xff]
        %v476 = vld [vmem:[%s206 + $0x3a0] sm:$0xff]
        %v477 = vld [vmem:[%s206 + $0x3a8] sm:$0xff]
        %v478 = vld [vmem:[%s206 + $0x3b0] sm:$0xff]
        %v479 = vld [vmem:[%s206 + $0x3b8] sm:$0xff]
        %v480 = vld [vmem:[%s206 + $0x3c0] sm:$0xff]
        %v481 = vld [vmem:[%s206 + $0x3c8] sm:$0xff]
        %v482 = vld [vmem:[%s206 + $0x3d0] sm:$0xff]
        %v483 = vld [vmem:[%s206 + $0x3d8] sm:$0xff]
        %v484 = vld [vmem:[%s206 + $0x3e0] sm:$0xff]
        %v485 = vld [vmem:[%s206 + $0x3e8] sm:$0xff]
        %v486 = vld [vmem:[%s206 + $0x3f0] sm:$0xff]
        %v487 = vld [vmem:[%s206 + $0x3f8] sm:$0xff]
        %v488 = vld [vmem:[%s206 + $0x400] sm:$0xff]
        %v489 = vld [vmem:[%s206 + $0x408] sm:$0xff]
        %v490 = vld [vmem:[%s206 + $0x410] sm:$0xff]
        %v491 = vld [vmem:[%s206 + $0x418] sm:$0xff]
        %v492 = vld [vmem:[%s206 + $0x420] sm:$0xff]
        %v493 = vld [vmem:[%s206 + $0x428] sm:$0xff]
        %v494 = vld [vmem:[%s206 + $0x430] sm:$0xff]
        %v495 = vld [vmem:[%s206 + $0x438] sm:$0xff]
        %v496 = vld [vmem:[%s206 + $0x440] sm:$0xff]
        %v497 = vld [vmem:[%s206 + $0x448] sm:$0xff]
        %v498 = vld [vmem:[%s206 + $0x450] sm:$0xff]
        %v499 = vld [vmem:[%s206 + $0x458] sm:$0xff]
        %v500 = vld [vmem:[%s206 + $0x460] sm:$0xff]
        %v501 = vld [vmem:[%s206 + $0x468] sm:$0xff]
        %v502 = vld [vmem:[%s206 + $0x470] sm:$0xff]
        %v503 = vld [vmem:[%s206 + $0x478] sm:$0xff]
        %v504 = vld [vmem:[%s206 + $0x480] sm:$0xff]
        %v505 = vld [vmem:[%s206 + $0x488] sm:$0xff]
        %v506 = vld [vmem:[%s206 + $0x490] sm:$0xff]
        %v507 = vld [vmem:[%s206 + $0x498] sm:$0xff]
        %v508 = vld [vmem:[%s206 + $0x4a0] sm:$0xff]
        %v509 = vld [vmem:[%s206 + $0x4a8] sm:$0xff]
        %v510 = vld [vmem:[%s206 + $0x4b0] sm:$0xff]
        %v511 = vld [vmem:[%s206 + $0x4b8] sm:$0xff]
        %v512 = vld [vmem:[%s206 + $0x4c0] sm:$0xff]
        %v513 = vld [vmem:[%s206 + $0x4c8] sm:$0xff]
        %v514 = vld [vmem:[%s206 + $0x4d0] sm:$0xff]
        %v515 = vld [vmem:[%s206 + $0x4d8] sm:$0xff]
        %v516 = vld [vmem:[%s206 + $0x4e0] sm:$0xff]
        %v517 = vld [vmem:[%s206 + $0x4e8] sm:$0xff]
        %v518 = vld [vmem:[%s206 + $0x4f0] sm:$0xff]
        %v519 = vld [vmem:[%s206 + $0x4f8] sm:$0xff]
        %v520 = vld [vmem:[%s206 + $0x500] sm:$0xff]
        %v521 = vld [vmem:[%s206 + $0x508] sm:$0xff]
        %v522 = vld [vmem:[%s206 + $0x510] sm:$0xff]
        %v523 = vld [vmem:[%s206 + $0x518] sm:$0xff]
        %v524 = vld [vmem:[%s206 + $0x520] sm:$0xff]
        %v525 = vld [vmem:[%s206 + $0x528] sm:$0xff]
        %v526 = vld [vmem:[%s206 + $0x530] sm:$0xff]
        %v527 = vld [vmem:[%s206 + $0x538] sm:$0xff]
        %v528 = vld [vmem:[%s206 + $0x540] sm:$0xff]
        %v529 = vld [vmem:[%s206 + $0x548] sm:$0xff]
        %v530 = vld [vmem:[%s206 + $0x550] sm:$0xff]
        %v531 = vld [vmem:[%s206 + $0x558] sm:$0xff]
        %v532 = vld [vmem:[%s206 + $0x560] sm:$0xff]
        %v533 = vld [vmem:[%s206 + $0x568] sm:$0xff]
        %v534 = vld [vmem:[%s206 + $0x570] sm:$0xff]
        %v535 = vld [vmem:[%s206 + $0x578] sm:$0xff]
        %v536 = vld [vmem:[%s206 + $0x580] sm:$0xff]
        %v537 = vld [vmem:[%s206 + $0x588] sm:$0xff]
        %v538 = vld [vmem:[%s206 + $0x590] sm:$0xff]
        %v539 = vld [vmem:[%s206 + $0x598] sm:$0xff]
        %v540 = vld [vmem:[%s206 + $0x5a0] sm:$0xff]
        %v541 = vld [vmem:[%s206 + $0x5a8] sm:$0xff]
        %v542 = vld [vmem:[%s206 + $0x5b0] sm:$0xff]
        %v543 = vld [vmem:[%s206 + $0x5b8] sm:$0xff]
        %v544 = vld [vmem:[%s206 + $0x5c0] sm:$0xff]
        %v545 = vld [vmem:[%s206 + $0x5c8] sm:$0xff]
        %v546 = vld [vmem:[%s206 + $0x5d0] sm:$0xff]
        %v547 = vld [vmem:[%s206 + $0x5d8] sm:$0xff]
        %v548 = vld [vmem:[%s206 + $0x5e0] sm:$0xff]
        %v549 = vld [vmem:[%s206 + $0x5e8] sm:$0xff]
        %v550 = vld [vmem:[%s206 + $0x5f0] sm:$0xff]
        %v551 = vld [vmem:[%s206 + $0x5f8] sm:$0xff]
        %v552 = vld [vmem:[%s206 + $0x600] sm:$0xff]
        %v553 = vld [vmem:[%s206 + $0x608] sm:$0xff]
        %v554 = vld [vmem:[%s206 + $0x610] sm:$0xff]
        %v555 = vld [vmem:[%s206 + $0x618] sm:$0xff]
        %v556 = vld [vmem:[%s206 + $0x620] sm:$0xff]
        %v557 = vld [vmem:[%s206 + $0x628] sm:$0xff]
        %v558 = vld [vmem:[%s206 + $0x630] sm:$0xff]
        %v559 = vld [vmem:[%s206 + $0x638] sm:$0xff]
        %v560 = vld [vmem:[%s206 + $0x640] sm:$0xff]
        %v561 = vld [vmem:[%s206 + $0x648] sm:$0xff]
        %v562 = vld [vmem:[%s206 + $0x650] sm:$0xff]
        %v563 = vld [vmem:[%s206 + $0x658] sm:$0xff]
        %v564 = vld [vmem:[%s206 + $0x660] sm:$0xff]
        %v565 = vld [vmem:[%s206 + $0x668] sm:$0xff]
        %v566 = vld [vmem:[%s206 + $0x670] sm:$0xff]
        %v567 = vld [vmem:[%s206 + $0x678] sm:$0xff]
        %v568 = vld [vmem:[%s206 + $0x680] sm:$0xff]
        %v569 = vld [vmem:[%s206 + $0x688] sm:$0xff]
        %v570 = vld [vmem:[%s206 + $0x690] sm:$0xff]
        %v571 = vld [vmem:[%s206 + $0x698] sm:$0xff]
        %v572 = vld [vmem:[%s206 + $0x6a0] sm:$0xff]
        %v573 = vld [vmem:[%s206 + $0x6a8] sm:$0xff]
        %v574 = vld [vmem:[%s206 + $0x6b0] sm:$0xff]
        %v575 = vld [vmem:[%s206 + $0x6b8] sm:$0xff]
        %v576 = vld [vmem:[%s206 + $0x6c0] sm:$0xff]
        %v577 = vld [vmem:[%s206 + $0x6c8] sm:$0xff]
        %v578 = vld [vmem:[%s206 + $0x6d0] sm:$0xff]
        %v579 = vld [vmem:[%s206 + $0x6d8] sm:$0xff]
        %v580 = vld [vmem:[%s206 + $0x6e0] sm:$0xff]
        %v581 = vld [vmem:[%s206 + $0x6e8] sm:$0xff]
        %v582 = vld [vmem:[%s206 + $0x6f0] sm:$0xff]
        %v583 = vld [vmem:[%s206 + $0x6f8] sm:$0xff]
        %v584 = vld [vmem:[%s206 + $0x700] sm:$0xff]
        %v585 = vld [vmem:[%s206 + $0x708] sm:$0xff]
        %v586 = vld [vmem:[%s206 + $0x710] sm:$0xff]
        %v587 = vld [vmem:[%s206 + $0x718] sm:$0xff]
        %v588 = vld [vmem:[%s206 + $0x720] sm:$0xff]
        %v589 = vld [vmem:[%s206 + $0x728] sm:$0xff]
        %v590 = vld [vmem:[%s206 + $0x730] sm:$0xff]
        %v591 = vld [vmem:[%s206 + $0x738] sm:$0xff]
        %v592 = vld [vmem:[%s206 + $0x740] sm:$0xff]
        %v593 = vld [vmem:[%s206 + $0x748] sm:$0xff]
        %v594 = vld [vmem:[%s206 + $0x750] sm:$0xff]
        %v595 = vld [vmem:[%s206 + $0x758] sm:$0xff]
        %v596 = vld [vmem:[%s206 + $0x760] sm:$0xff]
        %v597 = vld [vmem:[%s206 + $0x768] sm:$0xff]
        %v598 = vld [vmem:[%s206 + $0x770] sm:$0xff]
        %v599 = vld [vmem:[%s206 + $0x778] sm:$0xff]
        %v600 = vld [vmem:[%s206 + $0x780] sm:$0xff]
        %v601 = vld [vmem:[%s206 + $0x788] sm:$0xff]
        %v602 = vld [vmem:[%s206 + $0x790] sm:$0xff]
        %v603 = vld [vmem:[%s206 + $0x798] sm:$0xff]
        %v604 = vld [vmem:[%s206 + $0x7a0] sm:$0xff]
        %v605 = vld [vmem:[%s206 + $0x7a8] sm:$0xff]
        %v606 = vld [vmem:[%s206 + $0x7b0] sm:$0xff]
        %v607 = vld [vmem:[%s206 + $0x7b8] sm:$0xff]
        %v608 = vld [vmem:[%s206 + $0x7c0] sm:$0xff]
        %v609 = vld [vmem:[%s206 + $0x7c8] sm:$0xff]
        %v610 = vld [vmem:[%s206 + $0x7d0] sm:$0xff]
        %v611 = vld [vmem:[%s206 + $0x7d8] sm:$0xff]
        %v612 = vld [vmem:[%s206 + $0x7e0] sm:$0xff]
        %v613 = vld [vmem:[%s206 + $0x7e8] sm:$0xff]
        %v614 = vld [vmem:[%s206 + $0x7f0] sm:$0xff]
        %v615 = vld [vmem:[%s206 + $0x7f8] sm:$0xff]
        %v616 = vld [vmem:[%s206 + $0x800] sm:$0xff]
        %v617 = vld [vmem:[%s206 + $0x808] sm:$0xff]
        %v618 = vld [vmem:[%s206 + $0x810] sm:$0xff]
        %v619 = vld [vmem:[%s206 + $0x818] sm:$0xff]
        %v620 = vld [vmem:[%s206 + $0x820] sm:$0xff]
        %v621 = vld [vmem:[%s206 + $0x828] sm:$0xff]
        %v622 = vld [vmem:[%s206 + $0x830] sm:$0xff]
        %v623 = vld [vmem:[%s206 + $0x838] sm:$0xff]
        %v624 = vld [vmem:[%s206 + $0x840] sm:$0xff]
        %v625 = vld [vmem:[%s206 + $0x848] sm:$0xff]
        %v626 = vld [vmem:[%s206 + $0x850] sm:$0xff]
        %v627 = vld [vmem:[%s206 + $0x858] sm:$0xff]
        %v628 = vld [vmem:[%s206 + $0x860] sm:$0xff]
        %v629 = vld [vmem:[%s206 + $0x868] sm:$0xff]
        %v630 = vld [vmem:[%s206 + $0x870] sm:$0xff]
        %v631 = vld [vmem:[%s206 + $0x878] sm:$0xff]
        %v632 = vld [vmem:[%s206 + $0x880] sm:$0xff]
        %v633 = vld [vmem:[%s206 + $0x888] sm:$0xff]
        %v634 = vld [vmem:[%s206 + $0x890] sm:$0xff]
        %v635 = vld [vmem:[%s206 + $0x898] sm:$0xff]
        %v636 = vld [vmem:[%s206 + $0x8a0] sm:$0xff]
        %v637 = vld [vmem:[%s206 + $0x8a8] sm:$0xff]
        %v638 = vld [vmem:[%s206 + $0x8b0] sm:$0xff]
        %v639 = vld [vmem:[%s206 + $0x8b8] sm:$0xff]
        %v640 = vld [vmem:[%s206 + $0x8c0] sm:$0xff]
        %v641 = vld [vmem:[%s206 + $0x8c8] sm:$0xff]
        %v642 = vld [vmem:[%s206 + $0x8d0] sm:$0xff]
        %v643 = vld [vmem:[%s206 + $0x8d8] sm:$0xff]
        %v644 = vld [vmem:[%s206 + $0x8e0] sm:$0xff]
        %v645 = vld [vmem:[%s206 + $0x8e8] sm:$0xff]
        %v646 = vld [vmem:[%s206 + $0x8f0] sm:$0xff]
        %v647 = vld [vmem:[%s206 + $0x8f8] sm:$0xff]
        %v648 = vld [vmem:[%s206 + $0x900] sm:$0xff]
        %v649 = vld [vmem:[%s206 + $0x908] sm:$0xff]
        %v650 = vld [vmem:[%s206 + $0x910] sm:$0xff]
        %v651 = vld [vmem:[%s206 + $0x918] sm:$0xff]
        %v652 = vld [vmem:[%s206 + $0x920] sm:$0xff]
        %v653 = vld [vmem:[%s206 + $0x928] sm:$0xff]
        %v654 = vld [vmem:[%s206 + $0x930] sm:$0xff]
        %v655 = vld [vmem:[%s206 + $0x938] sm:$0xff]
        %v656 = vld [vmem:[%s206 + $0x940] sm:$0xff]
        %v657 = vld [vmem:[%s206 + $0x948] sm:$0xff]
        %v658 = vld [vmem:[%s206 + $0x950] sm:$0xff]
        %v659 = vld [vmem:[%s206 + $0x958] sm:$0xff]
        %v660 = vld [vmem:[%s206 + $0x960] sm:$0xff]
        %v661 = vld [vmem:[%s206 + $0x968] sm:$0xff]
        %v662 = vld [vmem:[%s206 + $0x970] sm:$0xff]
        %v663 = vld [vmem:[%s206 + $0x978] sm:$0xff]
        %v664 = vld [vmem:[%s206 + $0x980] sm:$0xff]
        %v665 = vld [vmem:[%s206 + $0x988] sm:$0xff]
        %v666 = vld [vmem:[%s206 + $0x990] sm:$0xff]
        %v667 = vld [vmem:[%s206 + $0x998] sm:$0xff]
        %v668 = vld [vmem:[%s206 + $0x9a0] sm:$0xff]
        %v669 = vld [vmem:[%s206 + $0x9a8] sm:$0xff]
        %v670 = vld [vmem:[%s206 + $0x9b0] sm:$0xff]
        %v671 = vld [vmem:[%s206 + $0x9b8] sm:$0xff]
        %v672 = vld [vmem:[%s206 + $0x9c0] sm:$0xff]
        %v673 = vld [vmem:[%s206 + $0x9c8] sm:$0xff]
        %v674 = vld [vmem:[%s206 + $0x9d0] sm:$0xff]
        %v675 = vld [vmem:[%s206 + $0x9d8] sm:$0xff]
        %v676 = vld [vmem:[%s206 + $0x9e0] sm:$0xff]
        %v677 = vld [vmem:[%s206 + $0x9e8] sm:$0xff]
        %v678 = vld [vmem:[%s206 + $0x9f0] sm:$0xff]
        %v679 = vld [vmem:[%s206 + $0x9f8] sm:$0xff]
        %v680 = vld [vmem:[%s206 + $0xa00] sm:$0xff]
        %v681 = vld [vmem:[%s206 + $0xa08] sm:$0xff]
        %v682 = vld [vmem:[%s206 + $0xa10] sm:$0xff]
        %v683 = vld [vmem:[%s206 + $0xa18] sm:$0xff]
        %v684 = vld [vmem:[%s206 + $0xa20] sm:$0xff]
        %v685 = vld [vmem:[%s206 + $0xa28] sm:$0xff]
        %v686 = vld [vmem:[%s206 + $0xa30] sm:$0xff]
        %v687 = vld [vmem:[%s206 + $0xa38] sm:$0xff]
        %v688 = vld [vmem:[%s206 + $0xa40] sm:$0xff]
        %v689 = vld [vmem:[%s206 + $0xa48] sm:$0xff]
        %v690 = vld [vmem:[%s206 + $0xa50] sm:$0xff]
        %v691 = vld [vmem:[%s206 + $0xa58] sm:$0xff]
        %v692 = vld [vmem:[%s206 + $0xa60] sm:$0xff]
        %v693 = vld [vmem:[%s206 + $0xa68] sm:$0xff]
        %v694 = vld [vmem:[%s206 + $0xa70] sm:$0xff]
        %v695 = vld [vmem:[%s206 + $0xa78] sm:$0xff]
        %v696 = vld [vmem:[%s206 + $0xa80] sm:$0xff]
        %v697 = vld [vmem:[%s206 + $0xa88] sm:$0xff]
        %v698 = vld [vmem:[%s206 + $0xa90] sm:$0xff]
        %v699 = vld [vmem:[%s206 + $0xa98] sm:$0xff]
        %v700 = vld [vmem:[%s206 + $0xaa0] sm:$0xff]
        %v701 = vld [vmem:[%s206 + $0xaa8] sm:$0xff]
        %v702 = vld [vmem:[%s206 + $0xab0] sm:$0xff]
        %v703 = vld [vmem:[%s206 + $0xab8] sm:$0xff]
        %v704 = vld [vmem:[%s206 + $0xac0] sm:$0xff]
        %v705 = vld [vmem:[%s206 + $0xac8] sm:$0xff]
        %v706 = vld [vmem:[%s206 + $0xad0] sm:$0xff]
        %v707 = vld [vmem:[%s206 + $0xad8] sm:$0xff]
        %v708 = vld [vmem:[%s206 + $0xae0] sm:$0xff]
        %v709 = vld [vmem:[%s206 + $0xae8] sm:$0xff]
        %v710 = vld [vmem:[%s206 + $0xaf0] sm:$0xff]
        %v711 = vld [vmem:[%s206 + $0xaf8] sm:$0xff]
        %v712 = vld [vmem:[%s206 + $0xb00] sm:$0xff]
        %v713 = vld [vmem:[%s206 + $0xb08] sm:$0xff]
        %v714 = vld [vmem:[%s206 + $0xb10] sm:$0xff]
        %v715 = vld [vmem:[%s206 + $0xb18] sm:$0xff]
        %v716 = vld [vmem:[%s206 + $0xb20] sm:$0xff]
        %v717 = vld [vmem:[%s206 + $0xb28] sm:$0xff]
        %v718 = vld [vmem:[%s206 + $0xb30] sm:$0xff]
        %v719 = vld [vmem:[%s206 + $0xb38] sm:$0xff]
        %v720 = vld [vmem:[%s206 + $0xb40] sm:$0xff]
        %v721 = vld [vmem:[%s206 + $0xb48] sm:$0xff]
        %v722 = vld [vmem:[%s206 + $0xb50] sm:$0xff]
        %v723 = vld [vmem:[%s206 + $0xb58] sm:$0xff]
        %v724 = vld [vmem:[%s206 + $0xb60] sm:$0xff]
        %v725 = vld [vmem:[%s206 + $0xb68] sm:$0xff]
        %v726 = vld [vmem:[%s206 + $0xb70] sm:$0xff]
        %v727 = vld [vmem:[%s206 + $0xb78] sm:$0xff]
        %v728 = vld [vmem:[%s206 + $0xb80] sm:$0xff]
        %v729 = vld [vmem:[%s206 + $0xb88] sm:$0xff]
        %v730 = vld [vmem:[%s206 + $0xb90] sm:$0xff]
        %v731 = vld [vmem:[%s206 + $0xb98] sm:$0xff]
        %v732 = vld [vmem:[%s206 + $0xba0] sm:$0xff]
        %v733 = vld [vmem:[%s206 + $0xba8] sm:$0xff]
        %v734 = vld [vmem:[%s206 + $0xbb0] sm:$0xff]
        %v735 = vld [vmem:[%s206 + $0xbb8] sm:$0xff]
        %v736 = vld [vmem:[%s206 + $0xbc0] sm:$0xff]
        %v737 = vld [vmem:[%s206 + $0xbc8] sm:$0xff]
        %v738 = vld [vmem:[%s206 + $0xbd0] sm:$0xff]
        %v739 = vld [vmem:[%s206 + $0xbd8] sm:$0xff]
        %v740 = vld [vmem:[%s206 + $0xbe0] sm:$0xff]
        %v741 = vld [vmem:[%s206 + $0xbe8] sm:$0xff]
        %v742 = vld [vmem:[%s206 + $0xbf0] sm:$0xff]
        %v743 = vld [vmem:[%s206 + $0xbf8] sm:$0xff]
        %v744 = vld [vmem:[%s206 + $0xc00] sm:$0xff]
        %v745 = vld [vmem:[%s206 + $0xc08] sm:$0xff]
        %v746 = vld [vmem:[%s206 + $0xc10] sm:$0xff]
        %v747 = vld [vmem:[%s206 + $0xc18] sm:$0xff]
        %v748 = vld [vmem:[%s206 + $0xc20] sm:$0xff]
        %v749 = vld [vmem:[%s206 + $0xc28] sm:$0xff]
        %v750 = vld [vmem:[%s206 + $0xc30] sm:$0xff]
        %v751 = vld [vmem:[%s206 + $0xc38] sm:$0xff]
        %v752 = vld [vmem:[%s206 + $0xc40] sm:$0xff]
        %v753 = vld [vmem:[%s206 + $0xc48] sm:$0xff]
        %v754 = vld [vmem:[%s206 + $0xc50] sm:$0xff]
        %v755 = vld [vmem:[%s206 + $0xc58] sm:$0xff]
        %v756 = vld [vmem:[%s206 + $0xc60] sm:$0xff]
        %v757 = vld [vmem:[%s206 + $0xc68] sm:$0xff]
        %v758 = vld [vmem:[%s206 + $0xc70] sm:$0xff]
        %v759 = vld [vmem:[%s206 + $0xc78] sm:$0xff]
        %v760 = vld [vmem:[%s206 + $0xc80] sm:$0xff]
        %v761 = vld [vmem:[%s206 + $0xc88] sm:$0xff]
        %v762 = vld [vmem:[%s206 + $0xc90] sm:$0xff]
        %v763 = vld [vmem:[%s206 + $0xc98] sm:$0xff]
        %v764 = vld [vmem:[%s206 + $0xca0] sm:$0xff]
        %v765 = vld [vmem:[%s206 + $0xca8] sm:$0xff]
        %v766 = vld [vmem:[%s206 + $0xcb0] sm:$0xff]
        %v767 = vld [vmem:[%s206 + $0xcb8] sm:$0xff]
        %v768 = vld [vmem:[%s206 + $0xcc0] sm:$0xff]
        %v769 = vld [vmem:[%s206 + $0xcc8] sm:$0xff]
        %v770 = vld [vmem:[%s206 + $0xcd0] sm:$0xff]
        %v771 = vld [vmem:[%s206 + $0xcd8] sm:$0xff]
        %v772 = vld [vmem:[%s206 + $0xce0] sm:$0xff]
        %v773 = vld [vmem:[%s206 + $0xce8] sm:$0xff]
        %v774 = vld [vmem:[%s206 + $0xcf0] sm:$0xff]
        %v775 = vld [vmem:[%s206 + $0xcf8] sm:$0xff]
        %v776 = vld [vmem:[%s206 + $0xd00] sm:$0xff]
        %v777 = vld [vmem:[%s206 + $0xd08] sm:$0xff]
        %v778 = vld [vmem:[%s206 + $0xd10] sm:$0xff]
        %v779 = vld [vmem:[%s206 + $0xd18] sm:$0xff]
        %v780 = vld [vmem:[%s206 + $0xd20] sm:$0xff]
        %v781 = vld [vmem:[%s206 + $0xd28] sm:$0xff]
        %v782 = vld [vmem:[%s206 + $0xd30] sm:$0xff]
        %v783 = vld [vmem:[%s206 + $0xd38] sm:$0xff]
        %v784 = vld [vmem:[%s206 + $0xd40] sm:$0xff]
        %v785 = vld [vmem:[%s206 + $0xd48] sm:$0xff]
        %v786 = vld [vmem:[%s206 + $0xd50] sm:$0xff]
        %v787 = vld [vmem:[%s206 + $0xd58] sm:$0xff]
        %v788 = vld [vmem:[%s206 + $0xd60] sm:$0xff]
        %v789 = vld [vmem:[%s206 + $0xd68] sm:$0xff]
        %v790 = vld [vmem:[%s206 + $0xd70] sm:$0xff]
        %v791 = vld [vmem:[%s206 + $0xd78] sm:$0xff]
        %v792 = vld [vmem:[%s206 + $0xd80] sm:$0xff]
        %v793 = vld [vmem:[%s206 + $0xd88] sm:$0xff]
        %v794 = vld [vmem:[%s206 + $0xd90] sm:$0xff]
        %v795 = vld [vmem:[%s206 + $0xd98] sm:$0xff]
        %v796 = vld [vmem:[%s206 + $0xda0] sm:$0xff]
        %v797 = vld [vmem:[%s206 + $0xda8] sm:$0xff]
        %v798 = vld [vmem:[%s206 + $0xdb0] sm:$0xff]
        %v799 = vld [vmem:[%s206 + $0xdb8] sm:$0xff]
        %v800 = vld [vmem:[%s206 + $0xdc0] sm:$0xff]
        %v801 = vld [vmem:[%s206 + $0xdc8] sm:$0xff]
        %v802 = vld [vmem:[%s206 + $0xdd0] sm:$0xff]
        %v803 = vld [vmem:[%s206 + $0xdd8] sm:$0xff]
        %v804 = vld [vmem:[%s206 + $0xde0] sm:$0xff]
        %v805 = vld [vmem:[%s206 + $0xde8] sm:$0xff]
        %v806 = vld [vmem:[%s206 + $0xdf0] sm:$0xff]
        %v807 = vld [vmem:[%s206 + $0xdf8] sm:$0xff]
        %v808 = vld [vmem:[%s206 + $0xe00] sm:$0xff]
        %v809 = vld [vmem:[%s206 + $0xe08] sm:$0xff]
        %v810 = vld [vmem:[%s206 + $0xe10] sm:$0xff]
        %v811 = vld [vmem:[%s206 + $0xe18] sm:$0xff]
        %v812 = vld [vmem:[%s206 + $0xe20] sm:$0xff]
        %v813 = vld [vmem:[%s206 + $0xe28] sm:$0xff]
        %v814 = vld [vmem:[%s206 + $0xe30] sm:$0xff]
        %v815 = vld [vmem:[%s206 + $0xe38] sm:$0xff]
        %v816 = vld [vmem:[%s206 + $0xe40] sm:$0xff]
        %v817 = vld [vmem:[%s206 + $0xe48] sm:$0xff]
        %v818 = vld [vmem:[%s206 + $0xe50] sm:$0xff]
        %v819 = vld [vmem:[%s206 + $0xe58] sm:$0xff]
        %v820 = vld [vmem:[%s206 + $0xe60] sm:$0xff]
        %v821 = vld [vmem:[%s206 + $0xe68] sm:$0xff]
        %v822 = vld [vmem:[%s206 + $0xe70] sm:$0xff]
        %v823 = vld [vmem:[%s206 + $0xe78] sm:$0xff]
        %v824 = vld [vmem:[%s206 + $0xe80] sm:$0xff]
        %v825 = vld [vmem:[%s206 + $0xe88] sm:$0xff]
        %v826 = vld [vmem:[%s206 + $0xe90] sm:$0xff]
        %v827 = vld [vmem:[%s206 + $0xe98] sm:$0xff]
        %v828 = vld [vmem:[%s206 + $0xea0] sm:$0xff]
        %v829 = vld [vmem:[%s206 + $0xea8] sm:$0xff]
        %v830 = vld [vmem:[%s206 + $0xeb0] sm:$0xff]
        %v831 = vld [vmem:[%s206 + $0xeb8] sm:$0xff]
        %v832 = vld [vmem:[%s206 + $0xec0] sm:$0xff]
        %v833 = vld [vmem:[%s206 + $0xec8] sm:$0xff]
        %v834 = vld [vmem:[%s206 + $0xed0] sm:$0xff]
        %v835 = vld [vmem:[%s206 + $0xed8] sm:$0xff]
        %v836 = vld [vmem:[%s206 + $0xee0] sm:$0xff]
        %v837 = vld [vmem:[%s206 + $0xee8] sm:$0xff]
        %v838 = vld [vmem:[%s206 + $0xef0] sm:$0xff]
        %v839 = vld [vmem:[%s206 + $0xef8] sm:$0xff]
        %v840 = vld [vmem:[%s206 + $0xf00] sm:$0xff]
        %v841 = vld [vmem:[%s206 + $0xf08] sm:$0xff]
        %v842 = vld [vmem:[%s206 + $0xf10] sm:$0xff]
        %v843 = vld [vmem:[%s206 + $0xf18] sm:$0xff]
        %v844 = vld [vmem:[%s206 + $0xf20] sm:$0xff]
        %v845 = vld [vmem:[%s206 + $0xf28] sm:$0xff]
        %v846 = vld [vmem:[%s206 + $0xf30] sm:$0xff]
        %v847 = vld [vmem:[%s206 + $0xf38] sm:$0xff]
        %v848 = vld [vmem:[%s206 + $0xf40] sm:$0xff]
        %v849 = vld [vmem:[%s206 + $0xf48] sm:$0xff]
        %v850 = vld [vmem:[%s206 + $0xf50] sm:$0xff]
        %v851 = vld [vmem:[%s206 + $0xf58] sm:$0xff]
        %v852 = vld [vmem:[%s206 + $0xf60] sm:$0xff]
        %v853 = vld [vmem:[%s206 + $0xf68] sm:$0xff]
        %v854 = vld [vmem:[%s206 + $0xf70] sm:$0xff]
        %v855 = vld [vmem:[%s206 + $0xf78] sm:$0xff]
        %v856 = vld [vmem:[%s206 + $0xf80] sm:$0xff]
        %v857 = vld [vmem:[%s206 + $0xf88] sm:$0xff]
        %v858 = vld [vmem:[%s206 + $0xf90] sm:$0xff]
        %v859 = vld [vmem:[%s206 + $0xf98] sm:$0xff]
        %v860 = vld [vmem:[%s206 + $0xfa0] sm:$0xff]
        %v861 = vld [vmem:[%s206 + $0xfa8] sm:$0xff]
        %v862 = vld [vmem:[%s206 + $0xfb0] sm:$0xff]
        %v863 = vld [vmem:[%s206 + $0xfb8] sm:$0xff]
        %v864 = vld [vmem:[%s206 + $0xfc0] sm:$0xff]
        %v865 = vld [vmem:[%s206 + $0xfc8] sm:$0xff]
        %v866 = vld [vmem:[%s206 + $0xfd0] sm:$0xff]
        %v867 = vld [vmem:[%s206 + $0xfd8] sm:$0xff]
        %v868 = vld [vmem:[%s206 + $0xfe0] sm:$0xff]
        %v869 = vld [vmem:[%s206 + $0xfe8] sm:$0xff]
        %v870 = vld [vmem:[%s206 + $0xff0] sm:$0xff]
        %v871 = vld [vmem:[%s206 + $0xff8] sm:$0xff]
        %v872 = vld [vmem:[%s206 + $0x1000] sm:$0xff]
        %v873 = vld [vmem:[%s206 + $0x1008] sm:$0xff]
        %v874 = vld [vmem:[%s206 + $0x1010] sm:$0xff]
        %v875 = vld [vmem:[%s206 + $0x1018] sm:$0xff]
        %v876 = vld [vmem:[%s206 + $0x1020] sm:$0xff]
        %v877 = vld [vmem:[%s206 + $0x1028] sm:$0xff]
        %v878 = vld [vmem:[%s206 + $0x1030] sm:$0xff]
        %v879 = vld [vmem:[%s206 + $0x1038] sm:$0xff]
        %v880 = vld [vmem:[%s206 + $0x1040] sm:$0xff]
        %v881 = vld [vmem:[%s206 + $0x1048] sm:$0xff]
        %v882 = vld [vmem:[%s206 + $0x1050] sm:$0xff]
        %v883 = vld [vmem:[%s206 + $0x1058] sm:$0xff]
        %v884 = vld [vmem:[%s206 + $0x1060] sm:$0xff]
        %v885 = vld [vmem:[%s206 + $0x1068] sm:$0xff]
        %v886 = vld [vmem:[%s206 + $0x1070] sm:$0xff]
        %v887 = vld [vmem:[%s206 + $0x1078] sm:$0xff]
        %v888 = vld [vmem:[%s206 + $0x1080] sm:$0xff]
        %v889 = vld [vmem:[%s206 + $0x1088] sm:$0xff]
        %v890 = vld [vmem:[%s206 + $0x1090] sm:$0xff]
        %v891 = vld [vmem:[%s206 + $0x1098] sm:$0xff]
        %v892 = vld [vmem:[%s206 + $0x10a0] sm:$0xff]
        %v893 = vld [vmem:[%s206 + $0x10a8] sm:$0xff]
        %v894 = vld [vmem:[%s206 + $0x10b0] sm:$0xff]
        %v895 = vld [vmem:[%s206 + $0x10b8] sm:$0xff]
        %v896 = vld [vmem:[%s206 + $0x10c0] sm:$0xff]
        %v897 = vld [vmem:[%s206 + $0x10c8] sm:$0xff]
        %v898 = vld [vmem:[%s206 + $0x10d0] sm:$0xff]
        %v899 = vld [vmem:[%s206 + $0x10d8] sm:$0xff]
        %v900 = vld [vmem:[%s206 + $0x10e0] sm:$0xff]
        %v901 = vld [vmem:[%s206 + $0x10e8] sm:$0xff]
        %v902 = vld [vmem:[%s206 + $0x10f0] sm:$0xff]
        %v903 = vld [vmem:[%s206 + $0x10f8] sm:$0xff]
        %v904 = vld [vmem:[%s206 + $0x1100] sm:$0xff]
        %v905 = vld [vmem:[%s206 + $0x1108] sm:$0xff]
        %v906 = vld [vmem:[%s206 + $0x1110] sm:$0xff]
        %v907 = vld [vmem:[%s206 + $0x1118] sm:$0xff]
        %v908 = vld [vmem:[%s206 + $0x1120] sm:$0xff]
        %v909 = vld [vmem:[%s206 + $0x1128] sm:$0xff]
        %v910 = vld [vmem:[%s206 + $0x1130] sm:$0xff]
        %v911 = vld [vmem:[%s206 + $0x1138] sm:$0xff]
        %v912 = vld [vmem:[%s206 + $0x1140] sm:$0xff]
        %v913 = vld [vmem:[%s206 + $0x1148] sm:$0xff]
        %v914 = vld [vmem:[%s206 + $0x1150] sm:$0xff]
        %v915 = vld [vmem:[%s206 + $0x1158] sm:$0xff]
        %v916 = vld [vmem:[%s206 + $0x1160] sm:$0xff]
        %v917 = vld [vmem:[%s206 + $0x1168] sm:$0xff]
        %v918 = vld [vmem:[%s206 + $0x1170] sm:$0xff]
        %v919 = vld [vmem:[%s206 + $0x1178] sm:$0xff]
        %v920 = vld [vmem:[%s206 + $0x1180] sm:$0xff]
        %v921 = vld [vmem:[%s206 + $0x1188] sm:$0xff]
        %v922 = vld [vmem:[%s206 + $0x1190] sm:$0xff]
        %v923 = vld [vmem:[%s206 + $0x1198] sm:$0xff]
        %v924 = vld [vmem:[%s206 + $0x11a0] sm:$0xff]
        %v925 = vld [vmem:[%s206 + $0x11a8] sm:$0xff]
        %v926 = vld [vmem:[%s206 + $0x11b0] sm:$0xff]
        %v927 = vld [vmem:[%s206 + $0x11b8] sm:$0xff]
        %v928 = vld [vmem:[%s206 + $0x11c0] sm:$0xff]
        %v929 = vld [vmem:[%s206 + $0x11c8] sm:$0xff]
        %v930 = vld [vmem:[%s206 + $0x11d0] sm:$0xff]
        %v931 = vld [vmem:[%s206 + $0x11d8] sm:$0xff]
        %v932 = vld [vmem:[%s206 + $0x11e0] sm:$0xff]
        %v933 = vld [vmem:[%s206 + $0x11e8] sm:$0xff]
        %v934 = vld [vmem:[%s206 + $0x11f0] sm:$0xff]
        %v935 = vld [vmem:[%s206 + $0x11f8] sm:$0xff]
        %v936 = vld [vmem:[%s206 + $0x1200] sm:$0xff]
        %v937 = vld [vmem:[%s206 + $0x1208] sm:$0xff]
        %v938 = vld [vmem:[%s206 + $0x1210] sm:$0xff]
        %v939 = vld [vmem:[%s206 + $0x1218] sm:$0xff]
        %v940 = vld [vmem:[%s206 + $0x1220] sm:$0xff]
        %v941 = vld [vmem:[%s206 + $0x1228] sm:$0xff]
        %v942 = vld [vmem:[%s206 + $0x1230] sm:$0xff]
        %v943 = vld [vmem:[%s206 + $0x1238] sm:$0xff]
        %v944 = vld [vmem:[%s206 + $0x1240] sm:$0xff]
        %v945 = vld [vmem:[%s206 + $0x1248] sm:$0xff]
        %v946 = vld [vmem:[%s206 + $0x1250] sm:$0xff]
        %v947 = vld [vmem:[%s206 + $0x1258] sm:$0xff]
        %v948 = vld [vmem:[%s206 + $0x1260] sm:$0xff]
        %v949 = vld [vmem:[%s206 + $0x1268] sm:$0xff]
        %v950 = vld [vmem:[%s206 + $0x1270] sm:$0xff]
        %v951 = vld [vmem:[%s206 + $0x1278] sm:$0xff]
        %v952 = vld [vmem:[%s206 + $0x1280] sm:$0xff]
        %v953 = vld [vmem:[%s206 + $0x1288] sm:$0xff]
        %v954 = vld [vmem:[%s206 + $0x1290] sm:$0xff]
        %v955 = vld [vmem:[%s206 + $0x1298] sm:$0xff]
        %v956 = vld [vmem:[%s206 + $0x12a0] sm:$0xff]
        %v957 = vld [vmem:[%s206 + $0x12a8] sm:$0xff]
        %v958 = vld [vmem:[%s206 + $0x12b0] sm:$0xff]
        %v959 = vld [vmem:[%s206 + $0x12b8] sm:$0xff]
        %v960 = vld [vmem:[%s206 + $0x12c0] sm:$0xff]
        %v961 = vld [vmem:[%s206 + $0x12c8] sm:$0xff]
        %v962 = vld [vmem:[%s206 + $0x12d0] sm:$0xff]
        %v963 = vld [vmem:[%s206 + $0x12d8] sm:$0xff]
        %v964 = vld [vmem:[%s206 + $0x12e0] sm:$0xff]
        %v965 = vld [vmem:[%s206 + $0x12e8] sm:$0xff]
        %v966 = vld [vmem:[%s206 + $0x12f0] sm:$0xff]
        %v967 = vld [vmem:[%s206 + $0x12f8] sm:$0xff]
        %v968 = vld [vmem:[%s206 + $0x1300] sm:$0xff]
        %v969 = vld [vmem:[%s206 + $0x1308] sm:$0xff]
        %v970 = vld [vmem:[%s206 + $0x1310] sm:$0xff]
        %v971 = vld [vmem:[%s206 + $0x1318] sm:$0xff]
        %v972 = vld [vmem:[%s206 + $0x1320] sm:$0xff]
        %v973 = vld [vmem:[%s206 + $0x1328] sm:$0xff]
        %v974 = vld [vmem:[%s206 + $0x1330] sm:$0xff]
        %v975 = vld [vmem:[%s206 + $0x1338] sm:$0xff]
        %v976 = vld [vmem:[%s206 + $0x1340] sm:$0xff]
        %v977 = vld [vmem:[%s206 + $0x1348] sm:$0xff]
        %v978 = vld [vmem:[%s206 + $0x1350] sm:$0xff]
        %v979 = vld [vmem:[%s206 + $0x1358] sm:$0xff]
        %v980 = vld [vmem:[%s206 + $0x1360] sm:$0xff]
        %v981 = vld [vmem:[%s206 + $0x1368] sm:$0xff]
        %v982 = vld [vmem:[%s206 + $0x1370] sm:$0xff]
        %v983 = vld [vmem:[%s206 + $0x1378] sm:$0xff]
        %v984 = vld [vmem:[%s206 + $0x1380] sm:$0xff]
        %v985 = vld [vmem:[%s206 + $0x1388] sm:$0xff]
        %v986 = vld [vmem:[%s206 + $0x1390] sm:$0xff]
        %v987 = vld [vmem:[%s206 + $0x1398] sm:$0xff]
        %v988 = vld [vmem:[%s206 + $0x13a0] sm:$0xff]
        %v989 = vld [vmem:[%s206 + $0x13a8] sm:$0xff]
        %v990 = vld [vmem:[%s206 + $0x13b0] sm:$0xff]
        %v991 = vld [vmem:[%s206 + $0x13b8] sm:$0xff]
        %v992 = vld [vmem:[%s206 + $0x13c0] sm:$0xff]
        %v993 = vld [vmem:[%s206 + $0x13c8] sm:$0xff]
        %v994 = vld [vmem:[%s206 + $0x13d0] sm:$0xff]
        %v995 = vld [vmem:[%s206 + $0x13d8] sm:$0xff]
        %v996 = vld [vmem:[%s206 + $0x13e0] sm:$0xff]
        %v997 = vld [vmem:[%s206 + $0x13e8] sm:$0xff]
        %v998 = vld [vmem:[%s206 + $0x13f0] sm:$0xff]
        %v999 = vld [vmem:[%s206 + $0x13f8] sm:$0xff]
        %v1000 = vld [vmem:[%s206 + $0x1400] sm:$0xff]
        %v1001 = vld [vmem:[%s206 + $0x1408] sm:$0xff]
        %v1002 = vld [vmem:[%s206 + $0x1410] sm:$0xff]
        %v1003 = vld [vmem:[%s206 + $0x1418] sm:$0xff]
        %v1004 = vld [vmem:[%s206 + $0x1420] sm:$0xff]
        %v1005 = vld [vmem:[%s206 + $0x1428] sm:$0xff]
        %v1006 = vld [vmem:[%s206 + $0x1430] sm:$0xff]
        %v1007 = vld [vmem:[%s206 + $0x1438] sm:$0xff]
        %v1008 = vld [vmem:[%s206 + $0x1440] sm:$0xff]
        %v1009 = vld [vmem:[%s206 + $0x1448] sm:$0xff]
        %v1010 = vld [vmem:[%s206 + $0x1450] sm:$0xff]
        %v1011 = vld [vmem:[%s206 + $0x1458] sm:$0xff]
        %v1012 = vld [vmem:[%s206 + $0x1460] sm:$0xff]
        %v1013 = vld [vmem:[%s206 + $0x1468] sm:$0xff]
        %v1014 = vld [vmem:[%s206 + $0x1470] sm:$0xff]
        %v1015 = vld [vmem:[%s206 + $0x1478] sm:$0xff]
        %v1016 = vld [vmem:[%s206 + $0x1480] sm:$0xff]
        %v1017 = vld [vmem:[%s206 + $0x1488] sm:$0xff]
        %v1018 = vld [vmem:[%s206 + $0x1490] sm:$0xff]
        %v1019 = vld [vmem:[%s206 + $0x1498] sm:$0xff]
        %v1020 = vld [vmem:[%s206 + $0x14a0] sm:$0xff]
        %v1021 = vld [vmem:[%s206 + $0x14a8] sm:$0xff]
        %v1022 = vld [vmem:[%s206 + $0x14b0] sm:$0xff]
        %v1023 = vld [vmem:[%s206 + $0x14b8] sm:$0xff]
        %v1024 = vld [vmem:[%s206 + $0x14c0] sm:$0xff]
        %v1025 = vld [vmem:[%s206 + $0x14c8] sm:$0xff]
        %v1026 = vld [vmem:[%s206 + $0x14d0] sm:$0xff]
        %v1027 = vld [vmem:[%s206 + $0x14d8] sm:$0xff]
        %v1028 = vld [vmem:[%s206 + $0x14e0] sm:$0xff]
        %v1029 = vld [vmem:[%s206 + $0x14e8] sm:$0xff]
        %v1030 = vld [vmem:[%s206 + $0x14f0] sm:$0xff]
        %v1031 = vld [vmem:[%s206 + $0x14f8] sm:$0xff]
        %v1032 = vld [vmem:[%s206 + $0x1500] sm:$0xff]
        %v1033 = vld [vmem:[%s206 + $0x1508] sm:$0xff]
        %v1034 = vld [vmem:[%s206 + $0x1510] sm:$0xff]
        %v1035 = vld [vmem:[%s206 + $0x1518] sm:$0xff]
        %v1036 = vld [vmem:[%s206 + $0x1520] sm:$0xff]
        %v1037 = vld [vmem:[%s206 + $0x1528] sm:$0xff]
        %v1038 = vld [vmem:[%s206 + $0x1530] sm:$0xff]
        %v1039 = vld [vmem:[%s206 + $0x1538] sm:$0xff]
        %v1040 = vld [vmem:[%s206 + $0x1540] sm:$0xff]
        %v1041 = vld [vmem:[%s206 + $0x1548] sm:$0xff]
        %v1042 = vld [vmem:[%s206 + $0x1550] sm:$0xff]
        %v1043 = vld [vmem:[%s206 + $0x1558] sm:$0xff]
        %v1044 = vld [vmem:[%s206 + $0x1560] sm:$0xff]
        %v1045 = vld [vmem:[%s206 + $0x1568] sm:$0xff]
        %v1046 = vld [vmem:[%s206 + $0x1570] sm:$0xff]
        %v1047 = vld [vmem:[%s206 + $0x1578] sm:$0xff]
        %v1048 = vld [vmem:[%s206 + $0x1580] sm:$0xff]
        %v1049 = vld [vmem:[%s206 + $0x1588] sm:$0xff]
        %v1050 = vld [vmem:[%s206 + $0x1590] sm:$0xff]
        %v1051 = vld [vmem:[%s206 + $0x1598] sm:$0xff]
        %v1052 = vld [vmem:[%s206 + $0x15a0] sm:$0xff]
        %v1053 = vld [vmem:[%s206 + $0x15a8] sm:$0xff]
        %v1054 = vld [vmem:[%s206 + $0x15b0] sm:$0xff]
        %v1055 = vld [vmem:[%s206 + $0x15b8] sm:$0xff]
        %v1056 = vld [vmem:[%s206 + $0x15c0] sm:$0xff]
        %v1057 = vld [vmem:[%s206 + $0x15c8] sm:$0xff]
        %v1058 = vld [vmem:[%s206 + $0x15d0] sm:$0xff]
        %v1059 = vld [vmem:[%s206 + $0x15d8] sm:$0xff]
        %v1060 = vld [vmem:[%s206 + $0x15e0] sm:$0xff]
        %v1061 = vld [vmem:[%s206 + $0x15e8] sm:$0xff]
        %v1062 = vld [vmem:[%s206 + $0x15f0] sm:$0xff]
        %v1063 = vld [vmem:[%s206 + $0x15f8] sm:$0xff]
        %v1064 = vld [vmem:[%s206 + $0x1600] sm:$0xff]
        %v1065 = vld [vmem:[%s206 + $0x1608] sm:$0xff]
        %v1066 = vld [vmem:[%s206 + $0x1610] sm:$0xff]
        %v1067 = vld [vmem:[%s206 + $0x1618] sm:$0xff]
        %v1068 = vld [vmem:[%s206 + $0x1620] sm:$0xff]
        %v1069 = vld [vmem:[%s206 + $0x1628] sm:$0xff]
        %v1070 = vld [vmem:[%s206 + $0x1630] sm:$0xff]
        %v1071 = vld [vmem:[%s206 + $0x1638] sm:$0xff]
        %v1072 = vld [vmem:[%s206 + $0x1640] sm:$0xff]
        %v1073 = vld [vmem:[%s206 + $0x1648] sm:$0xff]
        %v1074 = vld [vmem:[%s206 + $0x1650] sm:$0xff]
        %v1075 = vld [vmem:[%s206 + $0x1658] sm:$0xff]
        %v1076 = vld [vmem:[%s206 + $0x1660] sm:$0xff]
        %v1077 = vld [vmem:[%s206 + $0x1668] sm:$0xff]
        %v1078 = vld [vmem:[%s206 + $0x1670] sm:$0xff]
        %v1079 = vld [vmem:[%s206 + $0x1678] sm:$0xff]
        %v1080 = vld [vmem:[%s206 + $0x1680] sm:$0xff]
        %v1081 = vld [vmem:[%s206 + $0x1688] sm:$0xff]
        %v1082 = vld [vmem:[%s206 + $0x1690] sm:$0xff]
        %v1083 = vld [vmem:[%s206 + $0x1698] sm:$0xff]
        %v1084 = vld [vmem:[%s206 + $0x16a0] sm:$0xff]
        %v1085 = vld [vmem:[%s206 + $0x16a8] sm:$0xff]
        %v1086 = vld [vmem:[%s206 + $0x16b0] sm:$0xff]
        %v1087 = vld [vmem:[%s206 + $0x16b8] sm:$0xff]
        %v1088 = vld [vmem:[%s206 + $0x16c0] sm:$0xff]
        %v1089 = vld [vmem:[%s206 + $0x16c8] sm:$0xff]
        %v1090 = vld [vmem:[%s206 + $0x16d0] sm:$0xff]
        %v1091 = vld [vmem:[%s206 + $0x16d8] sm:$0xff]
        %v1092 = vld [vmem:[%s206 + $0x16e0] sm:$0xff]
        %v1093 = vld [vmem:[%s206 + $0x16e8] sm:$0xff]
        %v1094 = vld [vmem:[%s206 + $0x16f0] sm:$0xff]
        %v1095 = vld [vmem:[%s206 + $0x16f8] sm:$0xff]
        %v1096 = vld [vmem:[%s206 + $0x1700] sm:$0xff]
        %v1097 = vld [vmem:[%s206 + $0x1708] sm:$0xff]
        %v1098 = vld [vmem:[%s206 + $0x1710] sm:$0xff]
        %v1099 = vld [vmem:[%s206 + $0x1718] sm:$0xff]
        %v1100 = vld [vmem:[%s206 + $0x1720] sm:$0xff]
        %v1101 = vld [vmem:[%s206 + $0x1728] sm:$0xff]
        %v1102 = vld [vmem:[%s206 + $0x1730] sm:$0xff]
        %v1103 = vld [vmem:[%s206 + $0x1738] sm:$0xff]
        %v1104 = vld [vmem:[%s206 + $0x1740] sm:$0xff]
        %v1105 = vld [vmem:[%s206 + $0x1748] sm:$0xff]
        %v1106 = vld [vmem:[%s206 + $0x1750] sm:$0xff]
        %v1107 = vld [vmem:[%s206 + $0x1758] sm:$0xff]
        %v1108 = vld [vmem:[%s206 + $0x1760] sm:$0xff]
        %v1109 = vld [vmem:[%s206 + $0x1768] sm:$0xff]
        %v1110 = vld [vmem:[%s206 + $0x1770] sm:$0xff]
        %v1111 = vld [vmem:[%s206 + $0x1778] sm:$0xff]
        %v1112 = vld [vmem:[%s206 + $0x1780] sm:$0xff]
        %v1113 = vld [vmem:[%s206 + $0x1788] sm:$0xff]
        %v1114 = vld [vmem:[%s206 + $0x1790] sm:$0xff]
        %v1115 = vld [vmem:[%s206 + $0x1798] sm:$0xff]
        %v1116 = vld [vmem:[%s206 + $0x17a0] sm:$0xff]
        %v1117 = vld [vmem:[%s206 + $0x17a8] sm:$0xff]
        %v1118 = vld [vmem:[%s206 + $0x17b0] sm:$0xff]
        %v1119 = vld [vmem:[%s206 + $0x17b8] sm:$0xff]
        %v1120 = vld [vmem:[%s206 + $0x17c0] sm:$0xff]
        %v1121 = vld [vmem:[%s206 + $0x17c8] sm:$0xff]
        %v1122 = vld [vmem:[%s206 + $0x17d0] sm:$0xff]
        %v1123 = vld [vmem:[%s206 + $0x17d8] sm:$0xff]
        %v1124 = vld [vmem:[%s206 + $0x17e0] sm:$0xff]
        %v1125 = vld [vmem:[%s206 + $0x17e8] sm:$0xff]
        %v1126 = vld [vmem:[%s206 + $0x17f0] sm:$0xff]
        %v1127 = vld [vmem:[%s206 + $0x17f8] sm:$0xff]
        %v1128 = vld [vmem:[%s206 + $0x1800] sm:$0xff]
        %v1129 = vld [vmem:[%s206 + $0x1808] sm:$0xff]
        %v1130 = vld [vmem:[%s206 + $0x1810] sm:$0xff]
        %v1131 = vld [vmem:[%s206 + $0x1818] sm:$0xff]
        %v1132 = vld [vmem:[%s206 + $0x1820] sm:$0xff]
        %v1133 = vld [vmem:[%s206 + $0x1828] sm:$0xff]
        %v1134 = vld [vmem:[%s206 + $0x1830] sm:$0xff]
        %v1135 = vld [vmem:[%s206 + $0x1838] sm:$0xff]
        %v1136 = vld [vmem:[%s206 + $0x1840] sm:$0xff]
        %v1137 = vld [vmem:[%s206 + $0x1848] sm:$0xff]
        %v1138 = vld [vmem:[%s206 + $0x1850] sm:$0xff]
        %v1139 = vld [vmem:[%s206 + $0x1858] sm:$0xff]
        %v1140 = vld [vmem:[%s206 + $0x1860] sm:$0xff]
        %v1141 = vld [vmem:[%s206 + $0x1868] sm:$0xff]
        %v1142 = vld [vmem:[%s206 + $0x1870] sm:$0xff]
        %v1143 = vld [vmem:[%s206 + $0x1878] sm:$0xff]
        %v1144 = vld [vmem:[%s206 + $0x1880] sm:$0xff]
        %v1145 = vld [vmem:[%s206 + $0x1888] sm:$0xff]
        %v1146 = vld [vmem:[%s206 + $0x1890] sm:$0xff]
        %v1147 = vld [vmem:[%s206 + $0x1898] sm:$0xff]
        %v1148 = vld [vmem:[%s206 + $0x18a0] sm:$0xff]
        %v1149 = vld [vmem:[%s206 + $0x18a8] sm:$0xff]
        %v1150 = vld [vmem:[%s206 + $0x18b0] sm:$0xff]
        %v1151 = vld [vmem:[%s206 + $0x18b8] sm:$0xff]
        %v1152 = vld [vmem:[%s206 + $0x18c0] sm:$0xff]
        %v1153 = vld [vmem:[%s206 + $0x18c8] sm:$0xff]
        %v1154 = vld [vmem:[%s206 + $0x18d0] sm:$0xff]
        %v1155 = vld [vmem:[%s206 + $0x18d8] sm:$0xff]
        %v1156 = vld [vmem:[%s206 + $0x18e0] sm:$0xff]
        %v1157 = vld [vmem:[%s206 + $0x18e8] sm:$0xff]
        %v1158 = vld [vmem:[%s206 + $0x18f0] sm:$0xff]
        %v1159 = vld [vmem:[%s206 + $0x18f8] sm:$0xff]
        %v1160 = vld [vmem:[%s206 + $0x1900] sm:$0xff]
        %v1161 = vld [vmem:[%s206 + $0x1908] sm:$0xff]
        %v1162 = vld [vmem:[%s206 + $0x1910] sm:$0xff]
        %v1163 = vld [vmem:[%s206 + $0x1918] sm:$0xff]
        %v1164 = vld [vmem:[%s206 + $0x1920] sm:$0xff]
        %v1165 = vld [vmem:[%s206 + $0x1928] sm:$0xff]
        %v1166 = vld [vmem:[%s206 + $0x1930] sm:$0xff]
        %v1167 = vld [vmem:[%s206 + $0x1938] sm:$0xff]
        %v1168 = vld [vmem:[%s206 + $0x1940] sm:$0xff]
        %v1169 = vld [vmem:[%s206 + $0x1948] sm:$0xff]
        %v1170 = vld [vmem:[%s206 + $0x1950] sm:$0xff]
        %v1171 = vld [vmem:[%s206 + $0x1958] sm:$0xff]
        %v1172 = vld [vmem:[%s206 + $0x1960] sm:$0xff]
        %v1173 = vld [vmem:[%s206 + $0x1968] sm:$0xff]
        %v1174 = vld [vmem:[%s206 + $0x1970] sm:$0xff]
        %v1175 = vld [vmem:[%s206 + $0x1978] sm:$0xff]
        %v1176 = vld [vmem:[%s206 + $0x1980] sm:$0xff]
        %v1177 = vld [vmem:[%s206 + $0x1988] sm:$0xff]
        %v1178 = vld [vmem:[%s206 + $0x1990] sm:$0xff]
        %v1179 = vld [vmem:[%s206 + $0x1998] sm:$0xff]
        %v1180 = vld [vmem:[%s206 + $0x19a0] sm:$0xff]
        %v1181 = vld [vmem:[%s206 + $0x19a8] sm:$0xff]
        %v1182 = vld [vmem:[%s206 + $0x19b0] sm:$0xff]
        %v1183 = vld [vmem:[%s206 + $0x19b8] sm:$0xff]
        %v1184 = vld [vmem:[%s206 + $0x19c0] sm:$0xff]
        %v1185 = vld [vmem:[%s206 + $0x19c8] sm:$0xff]
        %v1186 = vld [vmem:[%s206 + $0x19d0] sm:$0xff]
        %v1187 = vld [vmem:[%s206 + $0x19d8] sm:$0xff]
        %v1188 = vld [vmem:[%s206 + $0x19e0] sm:$0xff]
        %v1189 = vld [vmem:[%s206 + $0x19e8] sm:$0xff]
        %v1190 = vld [vmem:[%s206 + $0x19f0] sm:$0xff]
        %v1191 = vld [vmem:[%s206 + $0x19f8] sm:$0xff]
        %v1192 = vld [vmem:[%s206 + $0x1a00] sm:$0xff]
        %v1193 = vld [vmem:[%s206 + $0x1a08] sm:$0xff]
        %v1194 = vld [vmem:[%s206 + $0x1a10] sm:$0xff]
        %v1195 = vld [vmem:[%s206 + $0x1a18] sm:$0xff]
        %v1196 = vld [vmem:[%s206 + $0x1a20] sm:$0xff]
        %v1197 = vld [vmem:[%s206 + $0x1a28] sm:$0xff]
        %v1198 = vld [vmem:[%s206 + $0x1a30] sm:$0xff]
        %v1199 = vld [vmem:[%s206 + $0x1a38] sm:$0xff]
        %v1200 = vld [vmem:[%s206 + $0x1a40] sm:$0xff]
        %v1201 = vld [vmem:[%s206 + $0x1a48] sm:$0xff]
        %v1202 = vld [vmem:[%s206 + $0x1a50] sm:$0xff]
        %v1203 = vld [vmem:[%s206 + $0x1a58] sm:$0xff]
        %v1204 = vld [vmem:[%s206 + $0x1a60] sm:$0xff]
        %v1205 = vld [vmem:[%s206 + $0x1a68] sm:$0xff]
        %v1206 = vld [vmem:[%s206 + $0x1a70] sm:$0xff]
        %v1207 = vld [vmem:[%s206 + $0x1a78] sm:$0xff]
        %v1208 = vld [vmem:[%s206 + $0x1a80] sm:$0xff]
        %v1209 = vld [vmem:[%s206 + $0x1a88] sm:$0xff]
        %v1210 = vld [vmem:[%s206 + $0x1a90] sm:$0xff]
        %v1211 = vld [vmem:[%s206 + $0x1a98] sm:$0xff]
        %v1212 = vld [vmem:[%s206 + $0x1aa0] sm:$0xff]
        %v1213 = vld [vmem:[%s206 + $0x1aa8] sm:$0xff]
        %v1214 = vld [vmem:[%s206 + $0x1ab0] sm:$0xff]
        %v1215 = vld [vmem:[%s206 + $0x1ab8] sm:$0xff]
        %v1216 = vld [vmem:[%s206 + $0x1ac0] sm:$0xff]
        %v1217 = vld [vmem:[%s206 + $0x1ac8] sm:$0xff]
        %v1218 = vld [vmem:[%s206 + $0x1ad0] sm:$0xff]
        %v1219 = vld [vmem:[%s206 + $0x1ad8] sm:$0xff]
        %v1220 = vld [vmem:[%s206 + $0x1ae0] sm:$0xff]
        %v1221 = vld [vmem:[%s206 + $0x1ae8] sm:$0xff]
        %v1222 = vld [vmem:[%s206 + $0x1af0] sm:$0xff]
        %v1223 = vld [vmem:[%s206 + $0x1af8] sm:$0xff]
        %v1224 = vld [vmem:[%s206 + $0x1b00] sm:$0xff]
        %v1225 = vld [vmem:[%s206 + $0x1b08] sm:$0xff]
        %v1226 = vld [vmem:[%s206 + $0x1b10] sm:$0xff]
        %v1227 = vld [vmem:[%s206 + $0x1b18] sm:$0xff]
        %v1228 = vld [vmem:[%s206 + $0x1b20] sm:$0xff]
        %v1229 = vld [vmem:[%s206 + $0x1b28] sm:$0xff]
        %v1230 = vld [vmem:[%s206 + $0x1b30] sm:$0xff]
        %v1231 = vld [vmem:[%s206 + $0x1b38] sm:$0xff]
        %v1232 = vld [vmem:[%s206 + $0x1b40] sm:$0xff]
        %v1233 = vld [vmem:[%s206 + $0x1b48] sm:$0xff]
        %v1234 = vld [vmem:[%s206 + $0x1b50] sm:$0xff]
        %v1235 = vld [vmem:[%s206 + $0x1b58] sm:$0xff]
        %v1236 = vld [vmem:[%s206 + $0x1b60] sm:$0xff]
        %v1237 = vld [vmem:[%s206 + $0x1b68] sm:$0xff]
        %v1238 = vld [vmem:[%s206 + $0x1b70] sm:$0xff]
        %v1239 = vld [vmem:[%s206 + $0x1b78] sm:$0xff]
        %v1240 = vld [vmem:[%s206 + $0x1b80] sm:$0xff]
        %v1241 = vld [vmem:[%s206 + $0x1b88] sm:$0xff]
        %v1242 = vld [vmem:[%s206 + $0x1b90] sm:$0xff]
        %v1243 = vld [vmem:[%s206 + $0x1b98] sm:$0xff]
        %v1244 = vld [vmem:[%s206 + $0x1ba0] sm:$0xff]
        %v1245 = vld [vmem:[%s206 + $0x1ba8] sm:$0xff]
        %v1246 = vld [vmem:[%s206 + $0x1bb0] sm:$0xff]
        %v1247 = vld [vmem:[%s206 + $0x1bb8] sm:$0xff]
        %v1248 = vld [vmem:[%s206 + $0x1bc0] sm:$0xff]
        %v1249 = vld [vmem:[%s206 + $0x1bc8] sm:$0xff]
        %v1250 = vld [vmem:[%s206 + $0x1bd0] sm:$0xff]
        %v1251 = vld [vmem:[%s206 + $0x1bd8] sm:$0xff]
        %v1252 = vld [vmem:[%s206 + $0x1be0] sm:$0xff]
        %v1253 = vld [vmem:[%s206 + $0x1be8] sm:$0xff]
        %v1254 = vld [vmem:[%s206 + $0x1bf0] sm:$0xff]
        %v1255 = vld [vmem:[%s206 + $0x1bf8] sm:$0xff]
        %v1256 = vld [vmem:[%s206 + $0x1c00] sm:$0xff]
        %v1257 = vld [vmem:[%s206 + $0x1c08] sm:$0xff]
        %v1258 = vld [vmem:[%s206 + $0x1c10] sm:$0xff]
        %v1259 = vld [vmem:[%s206 + $0x1c18] sm:$0xff]
        %v1260 = vld [vmem:[%s206 + $0x1c20] sm:$0xff]
        %v1261 = vld [vmem:[%s206 + $0x1c28] sm:$0xff]
        %v1262 = vld [vmem:[%s206 + $0x1c30] sm:$0xff]
        %v1263 = vld [vmem:[%s206 + $0x1c38] sm:$0xff]
        %v1264 = vld [vmem:[%s206 + $0x1c40] sm:$0xff]
        %v1265 = vld [vmem:[%s206 + $0x1c48] sm:$0xff]
        %v1266 = vld [vmem:[%s206 + $0x1c50] sm:$0xff]
        %v1267 = vld [vmem:[%s206 + $0x1c58] sm:$0xff]
        %v1268 = vld [vmem:[%s206 + $0x1c60] sm:$0xff]
        %v1269 = vld [vmem:[%s206 + $0x1c68] sm:$0xff]
        %v1270 = vld [vmem:[%s206 + $0x1c70] sm:$0xff]
        %v1271 = vld [vmem:[%s206 + $0x1c78] sm:$0xff]
        %v1272 = vld [vmem:[%s206 + $0x1c80] sm:$0xff]
        %v1273 = vld [vmem:[%s206 + $0x1c88] sm:$0xff]
        %v1274 = vld [vmem:[%s206 + $0x1c90] sm:$0xff]
        %v1275 = vld [vmem:[%s206 + $0x1c98] sm:$0xff]
        %v1276 = vld [vmem:[%s206 + $0x1ca0] sm:$0xff]
        %v1277 = vld [vmem:[%s206 + $0x1ca8] sm:$0xff]
        %v1278 = vld [vmem:[%s206 + $0x1cb0] sm:$0xff]
        %v1279 = vld [vmem:[%s206 + $0x1cb8] sm:$0xff]
        %v1280 = vld [vmem:[%s206 + $0x1cc0] sm:$0xff]
        %v1281 = vld [vmem:[%s206 + $0x1cc8] sm:$0xff]
        %v1282 = vld [vmem:[%s206 + $0x1cd0] sm:$0xff]
        %v1283 = vld [vmem:[%s206 + $0x1cd8] sm:$0xff]
        %v1284 = vld [vmem:[%s206 + $0x1ce0] sm:$0xff]
        %v1285 = vld [vmem:[%s206 + $0x1ce8] sm:$0xff]
        %v1286 = vld [vmem:[%s206 + $0x1cf0] sm:$0xff]
        %v1287 = vld [vmem:[%s206 + $0x1cf8] sm:$0xff]
        %v1288 = vld [vmem:[%s206 + $0x1d00] sm:$0xff]
        %v1289 = vld [vmem:[%s206 + $0x1d08] sm:$0xff]
        %v1290 = vld [vmem:[%s206 + $0x1d10] sm:$0xff]
        %v1291 = vld [vmem:[%s206 + $0x1d18] sm:$0xff]
        %v1292 = vld [vmem:[%s206 + $0x1d20] sm:$0xff]
        %v1293 = vld [vmem:[%s206 + $0x1d28] sm:$0xff]
        %v1294 = vld [vmem:[%s206 + $0x1d30] sm:$0xff]
        %v1295 = vld [vmem:[%s206 + $0x1d38] sm:$0xff]
        %v1296 = vld [vmem:[%s206 + $0x1d40] sm:$0xff]
        %v1297 = vld [vmem:[%s206 + $0x1d48] sm:$0xff]
        %v1298 = vld [vmem:[%s206 + $0x1d50] sm:$0xff]
        %v1299 = vld [vmem:[%s206 + $0x1d58] sm:$0xff]
        %v1300 = vld [vmem:[%s206 + $0x1d60] sm:$0xff]
        %v1301 = vld [vmem:[%s206 + $0x1d68] sm:$0xff]
        %v1302 = vld [vmem:[%s206 + $0x1d70] sm:$0xff]
        %v1303 = vld [vmem:[%s206 + $0x1d78] sm:$0xff]
        %v1304 = vld [vmem:[%s206 + $0x1d80] sm:$0xff]
        %v1305 = vld [vmem:[%s206 + $0x1d88] sm:$0xff]
        %v1306 = vld [vmem:[%s206 + $0x1d90] sm:$0xff]
        %v1307 = vld [vmem:[%s206 + $0x1d98] sm:$0xff]
        %v1308 = vld [vmem:[%s206 + $0x1da0] sm:$0xff]
        %v1309 = vld [vmem:[%s206 + $0x1da8] sm:$0xff]
        %v1310 = vld [vmem:[%s206 + $0x1db0] sm:$0xff]
        %v1311 = vld [vmem:[%s206 + $0x1db8] sm:$0xff]
        %v1312 = vld [vmem:[%s206 + $0x1dc0] sm:$0xff]
        %v1313 = vld [vmem:[%s206 + $0x1dc8] sm:$0xff]
        %v1314 = vld [vmem:[%s206 + $0x1dd0] sm:$0xff]
        %v1315 = vld [vmem:[%s206 + $0x1dd8] sm:$0xff]
        %v1316 = vld [vmem:[%s206 + $0x1de0] sm:$0xff]
        %v1317 = vld [vmem:[%s206 + $0x1de8] sm:$0xff]
        %v1318 = vld [vmem:[%s206 + $0x1df0] sm:$0xff]
        %v1319 = vld [vmem:[%s206 + $0x1df8] sm:$0xff]
        %v1320 = vld [vmem:[%s206 + $0x1e00] sm:$0xff]
        %v1321 = vld [vmem:[%s206 + $0x1e08] sm:$0xff]
        %v1322 = vld [vmem:[%s206 + $0x1e10] sm:$0xff]
        %v1323 = vld [vmem:[%s206 + $0x1e18] sm:$0xff]
        %v1324 = vld [vmem:[%s206 + $0x1e20] sm:$0xff]
        %v1325 = vld [vmem:[%s206 + $0x1e28] sm:$0xff]
        %v1326 = vld [vmem:[%s206 + $0x1e30] sm:$0xff]
        %v1327 = vld [vmem:[%s206 + $0x1e38] sm:$0xff]
        %v1328 = vld [vmem:[%s206 + $0x1e40] sm:$0xff]
        %v1329 = vld [vmem:[%s206 + $0x1e48] sm:$0xff]
        %v1330 = vld [vmem:[%s206 + $0x1e50] sm:$0xff]
        %v1331 = vld [vmem:[%s206 + $0x1e58] sm:$0xff]
        %v1332 = vld [vmem:[%s206 + $0x1e60] sm:$0xff]
        %v1333 = vld [vmem:[%s206 + $0x1e68] sm:$0xff]
        %v1334 = vld [vmem:[%s206 + $0x1e70] sm:$0xff]
        %v1335 = vld [vmem:[%s206 + $0x1e78] sm:$0xff]
        %v1336 = vld [vmem:[%s206 + $0x1e80] sm:$0xff]
        %v1337 = vld [vmem:[%s206 + $0x1e88] sm:$0xff]
        %v1338 = vld [vmem:[%s206 + $0x1e90] sm:$0xff]
        %v1339 = vld [vmem:[%s206 + $0x1e98] sm:$0xff]
        %v1340 = vld [vmem:[%s206 + $0x1ea0] sm:$0xff]
        %v1341 = vld [vmem:[%s206 + $0x1ea8] sm:$0xff]
        %v1342 = vld [vmem:[%s206 + $0x1eb0] sm:$0xff]
        %v1343 = vld [vmem:[%s206 + $0x1eb8] sm:$0xff]
        %v1344 = vld [vmem:[%s206 + $0x1ec0] sm:$0xff]
        %v1345 = vld [vmem:[%s206 + $0x1ec8] sm:$0xff]
        %v1346 = vld [vmem:[%s206 + $0x1ed0] sm:$0xff]
        %v1347 = vld [vmem:[%s206 + $0x1ed8] sm:$0xff]
        %v1348 = vld [vmem:[%s206 + $0x1ee0] sm:$0xff]
        %v1349 = vld [vmem:[%s206 + $0x1ee8] sm:$0xff]
        %v1350 = vld [vmem:[%s206 + $0x1ef0] sm:$0xff]
        %v1351 = vld [vmem:[%s206 + $0x1ef8] sm:$0xff]
        %v1352 = vld [vmem:[%s206 + $0x1f00] sm:$0xff]
        %v1353 = vld [vmem:[%s206 + $0x1f08] sm:$0xff]
        %v1354 = vld [vmem:[%s206 + $0x1f10] sm:$0xff]
        %v1355 = vld [vmem:[%s206 + $0x1f18] sm:$0xff]
        %v1356 = vld [vmem:[%s206 + $0x1f20] sm:$0xff]
        %v1357 = vld [vmem:[%s206 + $0x1f28] sm:$0xff]
        %v1358 = vld [vmem:[%s206 + $0x1f30] sm:$0xff]
        %v1359 = vld [vmem:[%s206 + $0x1f38] sm:$0xff]
        %v1360 = vld [vmem:[%s206 + $0x1f40] sm:$0xff]
        %v1361 = vld [vmem:[%s206 + $0x1f48] sm:$0xff]
        %v1362 = vld [vmem:[%s206 + $0x1f50] sm:$0xff]
        %v1363 = vld [vmem:[%s206 + $0x1f58] sm:$0xff]
        %v1364 = vld [vmem:[%s206 + $0x1f60] sm:$0xff]
        %v1365 = vld [vmem:[%s206 + $0x1f68] sm:$0xff]
        %v1366 = vld [vmem:[%s206 + $0x1f70] sm:$0xff]
        %v1367 = vld [vmem:[%s206 + $0x1f78] sm:$0xff]
        %v1368 = vld [vmem:[%s206 + $0x1f80] sm:$0xff]
        %v1369 = vld [vmem:[%s206 + $0x1f88] sm:$0xff]
        %v1370 = vld [vmem:[%s206 + $0x1f90] sm:$0xff]
        %v1371 = vld [vmem:[%s206 + $0x1f98] sm:$0xff]
        %v1372 = vld [vmem:[%s206 + $0x1fa0] sm:$0xff]
        %v1373 = vld [vmem:[%s206 + $0x1fa8] sm:$0xff]
        %v1374 = vld [vmem:[%s206 + $0x1fb0] sm:$0xff]
        %v1375 = vld [vmem:[%s206 + $0x1fb8] sm:$0xff]
        %v1376 = vld [vmem:[%s206 + $0x1fc0] sm:$0xff]
        %v1377 = vld [vmem:[%s206 + $0x1fc8] sm:$0xff]
        %v1378 = vld [vmem:[%s206 + $0x1fd0] sm:$0xff]
        %v1379 = vld [vmem:[%s206 + $0x1fd8] sm:$0xff]
        %v1380 = vld [vmem:[%s206 + $0x1fe0] sm:$0xff]
        %v1381 = vld [vmem:[%s206 + $0x1fe8] sm:$0xff]
        %v1382 = vld [vmem:[%s206 + $0x1ff0] sm:$0xff]
        %v1383 = vld [vmem:[%s206 + $0x1ff8] sm:$0xff]
        %v1384 = vld [vmem:[%s216] sm:$0xf]
        %v1386 = vperm.slane %v1384, 0
        %v1387 = vperm.slane %v1384, 1
        %v1388 = vperm.slane %v1384, 2
        %v1389 = vperm.slane %v1384, 3
        %v1506 = vunpack.c.l.b16 %v248
        %v1507 = vunpack.c.h.b16 %v248
        %v1508 = vunpack.c.l.b16 %v249
        %v1509 = vunpack.c.h.b16 %v249
        %v1510 = vunpack.c.l.b16 %v250
        %v1511 = vunpack.c.h.b16 %v250
        %v1512 = vunpack.c.l.b16 %v251
        %v1513 = vunpack.c.h.b16 %v251
        %v1514 = vunpack.c.l.b16 %v252
        %v1515 = vunpack.c.h.b16 %v252
        %v1516 = vunpack.c.l.b16 %v253
        %v1517 = vunpack.c.h.b16 %v253
        %v1518 = vunpack.c.l.b16 %v254
        %v1519 = vunpack.c.h.b16 %v254
        %v1520 = vunpack.c.l.b16 %v255
        %v1521 = vunpack.c.h.b16 %v255
        %v1522 = vunpack.c.l.b16 %v256
        %v1523 = vunpack.c.h.b16 %v256
        %v1524 = vunpack.c.l.b16 %v257
        %v1525 = vunpack.c.h.b16 %v257
        %v1526 = vunpack.c.l.b16 %v258
        %v1527 = vunpack.c.h.b16 %v258
        %v1528 = vunpack.c.l.b16 %v259
        %v1529 = vunpack.c.h.b16 %v259
        %v1530 = vunpack.c.l.b16 %v260
        %v1531 = vunpack.c.h.b16 %v260
        %v1532 = vunpack.c.l.b16 %v261
        %v1533 = vunpack.c.h.b16 %v261
        %v1534 = vunpack.c.l.b16 %v262
        %v1535 = vunpack.c.h.b16 %v262
        %v1536 = vunpack.c.l.b16 %v263
        %v1537 = vunpack.c.h.b16 %v263
        %v1538 = vunpack.c.l.b16 %v264
        %v1539 = vunpack.c.h.b16 %v264
        %v1540 = vunpack.c.l.b16 %v265
        %v1541 = vunpack.c.h.b16 %v265
        %v1542 = vunpack.c.l.b16 %v266
        %v1543 = vunpack.c.h.b16 %v266
        %v1544 = vunpack.c.l.b16 %v267
        %v1545 = vunpack.c.h.b16 %v267
        %v1546 = vunpack.c.l.b16 %v268
        %v1547 = vunpack.c.h.b16 %v268
        %v1548 = vunpack.c.l.b16 %v269
        %v1549 = vunpack.c.h.b16 %v269
        %v1550 = vunpack.c.l.b16 %v270
        %v1551 = vunpack.c.h.b16 %v270
        %v1552 = vunpack.c.l.b16 %v271
        %v1553 = vunpack.c.h.b16 %v271
        %v1554 = vunpack.c.l.b16 %v272
        %v1555 = vunpack.c.h.b16 %v272
        %v1556 = vunpack.c.l.b16 %v273
        %v1557 = vunpack.c.h.b16 %v273
        %v1558 = vunpack.c.l.b16 %v274
        %v1559 = vunpack.c.h.b16 %v274
        %v1560 = vunpack.c.l.b16 %v275
        %v1561 = vunpack.c.h.b16 %v275
        %v1562 = vunpack.c.l.b16 %v276
        %v1563 = vunpack.c.h.b16 %v276
        %v1564 = vunpack.c.l.b16 %v277
        %v1565 = vunpack.c.h.b16 %v277
        %v1566 = vunpack.c.l.b16 %v278
        %v1567 = vunpack.c.h.b16 %v278
        %v1568 = vunpack.c.l.b16 %v279
        %v1569 = vunpack.c.h.b16 %v279
        %v1570 = vunpack.c.l.b16 %v280
        %v1571 = vunpack.c.h.b16 %v280
        %v1572 = vunpack.c.l.b16 %v281
        %v1573 = vunpack.c.h.b16 %v281
        %v1574 = vunpack.c.l.b16 %v282
        %v1575 = vunpack.c.h.b16 %v282
        %v1576 = vunpack.c.l.b16 %v283
        %v1577 = vunpack.c.h.b16 %v283
        %v1578 = vunpack.c.l.b16 %v284
        %v1579 = vunpack.c.h.b16 %v284
        %v1580 = vunpack.c.l.b16 %v285
        %v1581 = vunpack.c.h.b16 %v285
        %v1582 = vunpack.c.l.b16 %v286
        %v1583 = vunpack.c.h.b16 %v286
        %v1584 = vunpack.c.l.b16 %v287
        %v1585 = vunpack.c.h.b16 %v287
        %v1586 = vunpack.c.l.b16 %v288
        %v1587 = vunpack.c.h.b16 %v288
        %v1588 = vunpack.c.l.b16 %v289
        %v1589 = vunpack.c.h.b16 %v289
        %v1590 = vunpack.c.l.b16 %v290
        %v1591 = vunpack.c.h.b16 %v290
        %v1592 = vunpack.c.l.b16 %v291
        %v1593 = vunpack.c.h.b16 %v291
        %v1594 = vunpack.c.l.b16 %v292
        %v1595 = vunpack.c.h.b16 %v292
        %v1596 = vunpack.c.l.b16 %v293
        %v1597 = vunpack.c.h.b16 %v293
        %v1598 = vunpack.c.l.b16 %v294
        %v1599 = vunpack.c.h.b16 %v294
        %v1600 = vunpack.c.l.b16 %v295
        %v1601 = vunpack.c.h.b16 %v295
        %v1602 = vunpack.c.l.b16 %v296
        %v1603 = vunpack.c.h.b16 %v296
        %v1604 = vunpack.c.l.b16 %v297
        %v1605 = vunpack.c.h.b16 %v297
        %v1606 = vunpack.c.l.b16 %v298
        %v1607 = vunpack.c.h.b16 %v298
        %v1608 = vunpack.c.l.b16 %v299
        %v1609 = vunpack.c.h.b16 %v299
        %v1610 = vunpack.c.l.b16 %v300
        %v1611 = vunpack.c.h.b16 %v300
        %v1612 = vunpack.c.l.b16 %v301
        %v1613 = vunpack.c.h.b16 %v301
        %v1614 = vunpack.c.l.b16 %v302
        %v1615 = vunpack.c.h.b16 %v302
        %v1616 = vunpack.c.l.b16 %v303
        %v1617 = vunpack.c.h.b16 %v303
        %v1618 = vunpack.c.l.b16 %v304
        %v1619 = vunpack.c.h.b16 %v304
        %v1620 = vunpack.c.l.b16 %v305
        %v1621 = vunpack.c.h.b16 %v305
        %v1622 = vunpack.c.l.b16 %v306
        %v1623 = vunpack.c.h.b16 %v306
        %v1624 = vunpack.c.l.b16 %v307
        %v1625 = vunpack.c.h.b16 %v307
        %v1626 = vunpack.c.l.b16 %v308
        %v1627 = vunpack.c.h.b16 %v308
        %v1628 = vunpack.c.l.b16 %v309
        %v1629 = vunpack.c.h.b16 %v309
        %v1630 = vunpack.c.l.b16 %v310
        %v1631 = vunpack.c.h.b16 %v310
        %v1632 = vunpack.c.l.b16 %v311
        %v1633 = vunpack.c.h.b16 %v311
        %v1634 = vunpack.c.l.b16 %v312
        %v1635 = vunpack.c.h.b16 %v312
        %v1636 = vunpack.c.l.b16 %v313
        %v1637 = vunpack.c.h.b16 %v313
        %v1638 = vunpack.c.l.b16 %v314
        %v1639 = vunpack.c.h.b16 %v314
        %v1640 = vunpack.c.l.b16 %v315
        %v1641 = vunpack.c.h.b16 %v315
        %v1642 = vunpack.c.l.b16 %v316
        %v1643 = vunpack.c.h.b16 %v316
        %v1644 = vunpack.c.l.b16 %v317
        %v1645 = vunpack.c.h.b16 %v317
        %v1646 = vunpack.c.l.b16 %v318
        %v1647 = vunpack.c.h.b16 %v318
        %v1648 = vunpack.c.l.b16 %v319
        %v1649 = vunpack.c.h.b16 %v319
        %v1650 = vunpack.c.l.b16 %v320
        %v1651 = vunpack.c.h.b16 %v320
        %v1652 = vunpack.c.l.b16 %v321
        %v1653 = vunpack.c.h.b16 %v321
        %v1654 = vunpack.c.l.b16 %v322
        %v1655 = vunpack.c.h.b16 %v322
        %v1656 = vunpack.c.l.b16 %v323
        %v1657 = vunpack.c.h.b16 %v323
        %v1658 = vunpack.c.l.b16 %v324
        %v1659 = vunpack.c.h.b16 %v324
        %v1660 = vunpack.c.l.b16 %v325
        %v1661 = vunpack.c.h.b16 %v325
        %v1662 = vunpack.c.l.b16 %v326
        %v1663 = vunpack.c.h.b16 %v326
        %v1664 = vunpack.c.l.b16 %v327
        %v1665 = vunpack.c.h.b16 %v327
        %v1666 = vunpack.c.l.b16 %v328
        %v1667 = vunpack.c.h.b16 %v328
        %v1668 = vunpack.c.l.b16 %v329
        %v1669 = vunpack.c.h.b16 %v329
        %v1670 = vunpack.c.l.b16 %v330
        %v1671 = vunpack.c.h.b16 %v330
        %v1672 = vunpack.c.l.b16 %v331
        %v1673 = vunpack.c.h.b16 %v331
        %v1674 = vunpack.c.l.b16 %v332
        %v1675 = vunpack.c.h.b16 %v332
        %v1676 = vunpack.c.l.b16 %v333
        %v1677 = vunpack.c.h.b16 %v333
        %v1678 = vunpack.c.l.b16 %v334
        %v1679 = vunpack.c.h.b16 %v334
        %v1680 = vunpack.c.l.b16 %v335
        %v1681 = vunpack.c.h.b16 %v335
        %v1682 = vunpack.c.l.b16 %v336
        %v1683 = vunpack.c.h.b16 %v336
        %v1684 = vunpack.c.l.b16 %v337
        %v1685 = vunpack.c.h.b16 %v337
        %v1686 = vunpack.c.l.b16 %v338
        %v1687 = vunpack.c.h.b16 %v338
        %v1688 = vunpack.c.l.b16 %v339
        %v1689 = vunpack.c.h.b16 %v339
        %v1690 = vunpack.c.l.b16 %v340
        %v1691 = vunpack.c.h.b16 %v340
        %v1692 = vunpack.c.l.b16 %v341
        %v1693 = vunpack.c.h.b16 %v341
        %v1694 = vunpack.c.l.b16 %v342
        %v1695 = vunpack.c.h.b16 %v342
        %v1696 = vunpack.c.l.b16 %v343
        %v1697 = vunpack.c.h.b16 %v343
        %v1698 = vunpack.c.l.b16 %v344
        %v1699 = vunpack.c.h.b16 %v344
        %v1700 = vunpack.c.l.b16 %v345
        %v1701 = vunpack.c.h.b16 %v345
        %v1702 = vunpack.c.l.b16 %v346
        %v1703 = vunpack.c.h.b16 %v346
        %v1704 = vunpack.c.l.b16 %v347
        %v1705 = vunpack.c.h.b16 %v347
        %v1706 = vunpack.c.l.b16 %v348
        %v1707 = vunpack.c.h.b16 %v348
        %v1708 = vunpack.c.l.b16 %v349
        %v1709 = vunpack.c.h.b16 %v349
        %v1710 = vunpack.c.l.b16 %v350
        %v1711 = vunpack.c.h.b16 %v350
        %v1712 = vunpack.c.l.b16 %v351
        %v1713 = vunpack.c.h.b16 %v351
        %v1714 = vunpack.c.l.b16 %v352
        %v1715 = vunpack.c.h.b16 %v352
        %v1716 = vunpack.c.l.b16 %v353
        %v1717 = vunpack.c.h.b16 %v353
        %v1718 = vunpack.c.l.b16 %v354
        %v1719 = vunpack.c.h.b16 %v354
        %v1720 = vunpack.c.l.b16 %v355
        %v1721 = vunpack.c.h.b16 %v355
        %v1722 = vunpack.c.l.b16 %v356
        %v1723 = vunpack.c.h.b16 %v356
        %v1724 = vunpack.c.l.b16 %v357
        %v1725 = vunpack.c.h.b16 %v357
        %v1726 = vunpack.c.l.b16 %v358
        %v1727 = vunpack.c.h.b16 %v358
        %v1728 = vunpack.c.l.b16 %v359
        %v1729 = vunpack.c.h.b16 %v359
        %v1730 = vpack.c.b16 %v1538, %v1506
        %v1731 = vpack.c.b16 %v1539, %v1507
        %v1732 = vpack.c.b16 %v1540, %v1508
        %v1733 = vpack.c.b16 %v1541, %v1509
        %v1734 = vpack.c.b16 %v1542, %v1510
        %v1735 = vpack.c.b16 %v1543, %v1511
        %v1736 = vpack.c.b16 %v1544, %v1512
        %v1737 = vpack.c.b16 %v1545, %v1513
        %v1738 = vpack.c.b16 %v1546, %v1514
        %v1739 = vpack.c.b16 %v1547, %v1515
        %v1740 = vpack.c.b16 %v1548, %v1516
        %v1741 = vpack.c.b16 %v1549, %v1517
        %v1742 = vpack.c.b16 %v1550, %v1518
        %v1743 = vpack.c.b16 %v1551, %v1519
        %v1744 = vpack.c.b16 %v1552, %v1520
        %v1745 = vpack.c.b16 %v1553, %v1521
        %v1746 = vpack.c.b16 %v1554, %v1522
        %v1747 = vpack.c.b16 %v1555, %v1523
        %v1748 = vpack.c.b16 %v1556, %v1524
        %v1749 = vpack.c.b16 %v1557, %v1525
        %v1750 = vpack.c.b16 %v1558, %v1526
        %v1751 = vpack.c.b16 %v1559, %v1527
        %v1752 = vpack.c.b16 %v1560, %v1528
        %v1753 = vpack.c.b16 %v1561, %v1529
        %v1754 = vpack.c.b16 %v1562, %v1530
        %v1755 = vpack.c.b16 %v1563, %v1531
        %v1756 = vpack.c.b16 %v1564, %v1532
        %v1757 = vpack.c.b16 %v1565, %v1533
        %v1758 = vpack.c.b16 %v1566, %v1534
        %v1759 = vpack.c.b16 %v1567, %v1535
        %v1760 = vpack.c.b16 %v1568, %v1536
        %v1761 = vpack.c.b16 %v1569, %v1537
        %v1762 = vpack.c.b16 %v1602, %v1570
        %v1763 = vpack.c.b16 %v1603, %v1571
        %v1764 = vpack.c.b16 %v1604, %v1572
        %v1765 = vpack.c.b16 %v1605, %v1573
        %v1766 = vpack.c.b16 %v1606, %v1574
        %v1767 = vpack.c.b16 %v1607, %v1575
        %v1768 = vpack.c.b16 %v1608, %v1576
        %v1769 = vpack.c.b16 %v1609, %v1577
        %v1770 = vpack.c.b16 %v1610, %v1578
        %v1771 = vpack.c.b16 %v1611, %v1579
        %v1772 = vpack.c.b16 %v1612, %v1580
        %v1773 = vpack.c.b16 %v1613, %v1581
        %v1774 = vpack.c.b16 %v1614, %v1582
        %v1775 = vpack.c.b16 %v1615, %v1583
        %v1776 = vpack.c.b16 %v1616, %v1584
        %v1777 = vpack.c.b16 %v1617, %v1585
        %v1778 = vpack.c.b16 %v1618, %v1586
        %v1779 = vpack.c.b16 %v1619, %v1587
        %v1780 = vpack.c.b16 %v1620, %v1588
        %v1781 = vpack.c.b16 %v1621, %v1589
        %v1782 = vpack.c.b16 %v1622, %v1590
        %v1783 = vpack.c.b16 %v1623, %v1591
        %v1784 = vpack.c.b16 %v1624, %v1592
        %v1785 = vpack.c.b16 %v1625, %v1593
        %v1786 = vpack.c.b16 %v1626, %v1594
        %v1787 = vpack.c.b16 %v1627, %v1595
        %v1788 = vpack.c.b16 %v1628, %v1596
        %v1789 = vpack.c.b16 %v1629, %v1597
        %v1790 = vpack.c.b16 %v1630, %v1598
        %v1791 = vpack.c.b16 %v1631, %v1599
        %v1792 = vpack.c.b16 %v1632, %v1600
        %v1793 = vpack.c.b16 %v1633, %v1601
        %v1794 = vpack.c.b16 %v1666, %v1634
        %v1795 = vpack.c.b16 %v1667, %v1635
        %v1796 = vpack.c.b16 %v1668, %v1636
        %v1797 = vpack.c.b16 %v1669, %v1637
        %v1798 = vpack.c.b16 %v1670, %v1638
        %v1799 = vpack.c.b16 %v1671, %v1639
        %v1800 = vpack.c.b16 %v1672, %v1640
        %v1801 = vpack.c.b16 %v1673, %v1641
        %v1802 = vpack.c.b16 %v1674, %v1642
        %v1803 = vpack.c.b16 %v1675, %v1643
        %v1804 = vpack.c.b16 %v1676, %v1644
        %v1805 = vpack.c.b16 %v1677, %v1645
        %v1806 = vpack.c.b16 %v1678, %v1646
        %v1807 = vpack.c.b16 %v1679, %v1647
        %v1808 = vpack.c.b16 %v1680, %v1648
        %v1809 = vpack.c.b16 %v1681, %v1649
        %v1810 = vpack.c.b16 %v1682, %v1650
        %v1811 = vpack.c.b16 %v1683, %v1651
        %v1812 = vpack.c.b16 %v1684, %v1652
        %v1813 = vpack.c.b16 %v1685, %v1653
        %v1814 = vpack.c.b16 %v1686, %v1654
        %v1815 = vpack.c.b16 %v1687, %v1655
        %v1816 = vpack.c.b16 %v1688, %v1656
        %v1817 = vpack.c.b16 %v1689, %v1657
        %v1818 = vpack.c.b16 %v1690, %v1658
        %v1819 = vpack.c.b16 %v1691, %v1659
        %v1820 = vpack.c.b16 %v1692, %v1660
        %v1821 = vpack.c.b16 %v1693, %v1661
        %v1822 = vpack.c.b16 %v1694, %v1662
        %v1823 = vpack.c.b16 %v1695, %v1663
        %v1824 = vpack.c.b16 %v1696, %v1664
        %v1825 = vpack.c.b16 %v1697, %v1665
        %v1826 = vpack.c.b16 %v1698, %v1698
        %v1827 = vpack.c.b16 %v1699, %v1699
        %v1828 = vpack.c.b16 %v1700, %v1700
        %v1829 = vpack.c.b16 %v1701, %v1701
        %v1830 = vpack.c.b16 %v1702, %v1702
        %v1831 = vpack.c.b16 %v1703, %v1703
        %v1832 = vpack.c.b16 %v1704, %v1704
        %v1833 = vpack.c.b16 %v1705, %v1705
        %v1834 = vpack.c.b16 %v1706, %v1706
        %v1835 = vpack.c.b16 %v1707, %v1707
        %v1836 = vpack.c.b16 %v1708, %v1708
        %v1837 = vpack.c.b16 %v1709, %v1709
        %v1838 = vpack.c.b16 %v1710, %v1710
        %v1839 = vpack.c.b16 %v1711, %v1711
        %v1840 = vpack.c.b16 %v1712, %v1712
        %v1841 = vpack.c.b16 %v1713, %v1713
        %v1842 = vpack.c.b16 %v1714, %v1714
        %v1843 = vpack.c.b16 %v1715, %v1715
        %v1844 = vpack.c.b16 %v1716, %v1716
        %v1845 = vpack.c.b16 %v1717, %v1717
        %v1846 = vpack.c.b16 %v1718, %v1718
        %v1847 = vpack.c.b16 %v1719, %v1719
        %v1848 = vpack.c.b16 %v1720, %v1720
        %v1849 = vpack.c.b16 %v1721, %v1721
        %v1850 = vpack.c.b16 %v1722, %v1722
        %v1851 = vpack.c.b16 %v1723, %v1723
        %v1852 = vpack.c.b16 %v1724, %v1724
        %v1853 = vpack.c.b16 %v1725, %v1725
        %v1854 = vpack.c.b16 %v1726, %v1726
        %v1855 = vpack.c.b16 %v1727, %v1727
        %v1856 = vpack.c.b16 %v1728, %v1728
        %v1857 = vpack.c.b16 %v1729, %v1729
        %v3010 = vunpack.c.l.b16 %v360
        %v3011 = vunpack.c.h.b16 %v360
        %v3012 = vunpack.c.l.b16 %v361
        %v3013 = vunpack.c.h.b16 %v361
        %v3014 = vunpack.c.l.b16 %v362
        %v3015 = vunpack.c.h.b16 %v362
        %v3016 = vunpack.c.l.b16 %v363
        %v3017 = vunpack.c.h.b16 %v363
        %v3018 = vunpack.c.l.b16 %v364
        %v3019 = vunpack.c.h.b16 %v364
        %v3020 = vunpack.c.l.b16 %v365
        %v3021 = vunpack.c.h.b16 %v365
        %v3022 = vunpack.c.l.b16 %v366
        %v3023 = vunpack.c.h.b16 %v366
        %v3024 = vunpack.c.l.b16 %v367
        %v3025 = vunpack.c.h.b16 %v367
        %v3026 = vunpack.c.l.b16 %v368
        %v3027 = vunpack.c.h.b16 %v368
        %v3028 = vunpack.c.l.b16 %v369
        %v3029 = vunpack.c.h.b16 %v369
        %v3030 = vunpack.c.l.b16 %v370
        %v3031 = vunpack.c.h.b16 %v370
        %v3032 = vunpack.c.l.b16 %v371
        %v3033 = vunpack.c.h.b16 %v371
        %v3034 = vunpack.c.l.b16 %v372
        %v3035 = vunpack.c.h.b16 %v372
        %v3036 = vunpack.c.l.b16 %v373
        %v3037 = vunpack.c.h.b16 %v373
        %v3038 = vunpack.c.l.b16 %v374
        %v3039 = vunpack.c.h.b16 %v374
        %v3040 = vunpack.c.l.b16 %v375
        %v3041 = vunpack.c.h.b16 %v375
        %v3042 = vunpack.c.l.b16 %v376
        %v3043 = vunpack.c.h.b16 %v376
        %v3044 = vunpack.c.l.b16 %v377
        %v3045 = vunpack.c.h.b16 %v377
        %v3046 = vunpack.c.l.b16 %v378
        %v3047 = vunpack.c.h.b16 %v378
        %v3048 = vunpack.c.l.b16 %v379
        %v3049 = vunpack.c.h.b16 %v379
        %v3050 = vunpack.c.l.b16 %v380
        %v3051 = vunpack.c.h.b16 %v380
        %v3052 = vunpack.c.l.b16 %v381
        %v3053 = vunpack.c.h.b16 %v381
        %v3054 = vunpack.c.l.b16 %v382
        %v3055 = vunpack.c.h.b16 %v382
        %v3056 = vunpack.c.l.b16 %v383
        %v3057 = vunpack.c.h.b16 %v383
        %v3058 = vunpack.c.l.b16 %v384
        %v3059 = vunpack.c.h.b16 %v384
        %v3060 = vunpack.c.l.b16 %v385
        %v3061 = vunpack.c.h.b16 %v385
        %v3062 = vunpack.c.l.b16 %v386
        %v3063 = vunpack.c.h.b16 %v386
        %v3064 = vunpack.c.l.b16 %v387
        %v3065 = vunpack.c.h.b16 %v387
        %v3066 = vunpack.c.l.b16 %v388
        %v3067 = vunpack.c.h.b16 %v388
        %v3068 = vunpack.c.l.b16 %v389
        %v3069 = vunpack.c.h.b16 %v389
        %v3070 = vunpack.c.l.b16 %v390
        %v3071 = vunpack.c.h.b16 %v390
        %v3072 = vunpack.c.l.b16 %v391
        %v3073 = vunpack.c.h.b16 %v391
        %v3074 = vunpack.c.l.b16 %v392
        %v3075 = vunpack.c.h.b16 %v392
        %v3076 = vunpack.c.l.b16 %v393
        %v3077 = vunpack.c.h.b16 %v393
        %v3078 = vunpack.c.l.b16 %v394
        %v3079 = vunpack.c.h.b16 %v394
        %v3080 = vunpack.c.l.b16 %v395
        %v3081 = vunpack.c.h.b16 %v395
        %v3082 = vunpack.c.l.b16 %v396
        %v3083 = vunpack.c.h.b16 %v396
        %v3084 = vunpack.c.l.b16 %v397
        %v3085 = vunpack.c.h.b16 %v397
        %v3086 = vunpack.c.l.b16 %v398
        %v3087 = vunpack.c.h.b16 %v398
        %v3088 = vunpack.c.l.b16 %v399
        %v3089 = vunpack.c.h.b16 %v399
        %v3090 = vunpack.c.l.b16 %v400
        %v3091 = vunpack.c.h.b16 %v400
        %v3092 = vunpack.c.l.b16 %v401
        %v3093 = vunpack.c.h.b16 %v401
        %v3094 = vunpack.c.l.b16 %v402
        %v3095 = vunpack.c.h.b16 %v402
        %v3096 = vunpack.c.l.b16 %v403
        %v3097 = vunpack.c.h.b16 %v403
        %v3098 = vunpack.c.l.b16 %v404
        %v3099 = vunpack.c.h.b16 %v404
        %v3100 = vunpack.c.l.b16 %v405
        %v3101 = vunpack.c.h.b16 %v405
        %v3102 = vunpack.c.l.b16 %v406
        %v3103 = vunpack.c.h.b16 %v406
        %v3104 = vunpack.c.l.b16 %v407
        %v3105 = vunpack.c.h.b16 %v407
        %v3106 = vunpack.c.l.b16 %v408
        %v3107 = vunpack.c.h.b16 %v408
        %v3108 = vunpack.c.l.b16 %v409
        %v3109 = vunpack.c.h.b16 %v409
        %v3110 = vunpack.c.l.b16 %v410
        %v3111 = vunpack.c.h.b16 %v410
        %v3112 = vunpack.c.l.b16 %v411
        %v3113 = vunpack.c.h.b16 %v411
        %v3114 = vunpack.c.l.b16 %v412
        %v3115 = vunpack.c.h.b16 %v412
        %v3116 = vunpack.c.l.b16 %v413
        %v3117 = vunpack.c.h.b16 %v413
        %v3118 = vunpack.c.l.b16 %v414
        %v3119 = vunpack.c.h.b16 %v414
        %v3120 = vunpack.c.l.b16 %v415
        %v3121 = vunpack.c.h.b16 %v415
        %v3122 = vunpack.c.l.b16 %v416
        %v3123 = vunpack.c.h.b16 %v416
        %v3124 = vunpack.c.l.b16 %v417
        %v3125 = vunpack.c.h.b16 %v417
        %v3126 = vunpack.c.l.b16 %v418
        %v3127 = vunpack.c.h.b16 %v418
        %v3128 = vunpack.c.l.b16 %v419
        %v3129 = vunpack.c.h.b16 %v419
        %v3130 = vunpack.c.l.b16 %v420
        %v3131 = vunpack.c.h.b16 %v420
        %v3132 = vunpack.c.l.b16 %v421
        %v3133 = vunpack.c.h.b16 %v421
        %v3134 = vunpack.c.l.b16 %v422
        %v3135 = vunpack.c.h.b16 %v422
        %v3136 = vunpack.c.l.b16 %v423
        %v3137 = vunpack.c.h.b16 %v423
        %v3138 = vunpack.c.l.b16 %v424
        %v3139 = vunpack.c.h.b16 %v424
        %v3140 = vunpack.c.l.b16 %v425
        %v3141 = vunpack.c.h.b16 %v425
        %v3142 = vunpack.c.l.b16 %v426
        %v3143 = vunpack.c.h.b16 %v426
        %v3144 = vunpack.c.l.b16 %v427
        %v3145 = vunpack.c.h.b16 %v427
        %v3146 = vunpack.c.l.b16 %v428
        %v3147 = vunpack.c.h.b16 %v428
        %v3148 = vunpack.c.l.b16 %v429
        %v3149 = vunpack.c.h.b16 %v429
        %v3150 = vunpack.c.l.b16 %v430
        %v3151 = vunpack.c.h.b16 %v430
        %v3152 = vunpack.c.l.b16 %v431
        %v3153 = vunpack.c.h.b16 %v431
        %v3154 = vunpack.c.l.b16 %v432
        %v3155 = vunpack.c.h.b16 %v432
        %v3156 = vunpack.c.l.b16 %v433
        %v3157 = vunpack.c.h.b16 %v433
        %v3158 = vunpack.c.l.b16 %v434
        %v3159 = vunpack.c.h.b16 %v434
        %v3160 = vunpack.c.l.b16 %v435
        %v3161 = vunpack.c.h.b16 %v435
        %v3162 = vunpack.c.l.b16 %v436
        %v3163 = vunpack.c.h.b16 %v436
        %v3164 = vunpack.c.l.b16 %v437
        %v3165 = vunpack.c.h.b16 %v437
        %v3166 = vunpack.c.l.b16 %v438
        %v3167 = vunpack.c.h.b16 %v438
        %v3168 = vunpack.c.l.b16 %v439
        %v3169 = vunpack.c.h.b16 %v439
        %v3170 = vunpack.c.l.b16 %v440
        %v3171 = vunpack.c.h.b16 %v440
        %v3172 = vunpack.c.l.b16 %v441
        %v3173 = vunpack.c.h.b16 %v441
        %v3174 = vunpack.c.l.b16 %v442
        %v3175 = vunpack.c.h.b16 %v442
        %v3176 = vunpack.c.l.b16 %v443
        %v3177 = vunpack.c.h.b16 %v443
        %v3178 = vunpack.c.l.b16 %v444
        %v3179 = vunpack.c.h.b16 %v444
        %v3180 = vunpack.c.l.b16 %v445
        %v3181 = vunpack.c.h.b16 %v445
        %v3182 = vunpack.c.l.b16 %v446
        %v3183 = vunpack.c.h.b16 %v446
        %v3184 = vunpack.c.l.b16 %v447
        %v3185 = vunpack.c.h.b16 %v447
        %v3186 = vunpack.c.l.b16 %v448
        %v3187 = vunpack.c.h.b16 %v448
        %v3188 = vunpack.c.l.b16 %v449
        %v3189 = vunpack.c.h.b16 %v449
        %v3190 = vunpack.c.l.b16 %v450
        %v3191 = vunpack.c.h.b16 %v450
        %v3192 = vunpack.c.l.b16 %v451
        %v3193 = vunpack.c.h.b16 %v451
        %v3194 = vunpack.c.l.b16 %v452
        %v3195 = vunpack.c.h.b16 %v452
        %v3196 = vunpack.c.l.b16 %v453
        %v3197 = vunpack.c.h.b16 %v453
        %v3198 = vunpack.c.l.b16 %v454
        %v3199 = vunpack.c.h.b16 %v454
        %v3200 = vunpack.c.l.b16 %v455
        %v3201 = vunpack.c.h.b16 %v455
        %v3202 = vunpack.c.l.b16 %v456
        %v3203 = vunpack.c.h.b16 %v456
        %v3204 = vunpack.c.l.b16 %v457
        %v3205 = vunpack.c.h.b16 %v457
        %v3206 = vunpack.c.l.b16 %v458
        %v3207 = vunpack.c.h.b16 %v458
        %v3208 = vunpack.c.l.b16 %v459
        %v3209 = vunpack.c.h.b16 %v459
        %v3210 = vunpack.c.l.b16 %v460
        %v3211 = vunpack.c.h.b16 %v460
        %v3212 = vunpack.c.l.b16 %v461
        %v3213 = vunpack.c.h.b16 %v461
        %v3214 = vunpack.c.l.b16 %v462
        %v3215 = vunpack.c.h.b16 %v462
        %v3216 = vunpack.c.l.b16 %v463
        %v3217 = vunpack.c.h.b16 %v463
        %v3218 = vunpack.c.l.b16 %v464
        %v3219 = vunpack.c.h.b16 %v464
        %v3220 = vunpack.c.l.b16 %v465
        %v3221 = vunpack.c.h.b16 %v465
        %v3222 = vunpack.c.l.b16 %v466
        %v3223 = vunpack.c.h.b16 %v466
        %v3224 = vunpack.c.l.b16 %v467
        %v3225 = vunpack.c.h.b16 %v467
        %v3226 = vunpack.c.l.b16 %v468
        %v3227 = vunpack.c.h.b16 %v468
        %v3228 = vunpack.c.l.b16 %v469
        %v3229 = vunpack.c.h.b16 %v469
        %v3230 = vunpack.c.l.b16 %v470
        %v3231 = vunpack.c.h.b16 %v470
        %v3232 = vunpack.c.l.b16 %v471
        %v3233 = vunpack.c.h.b16 %v471
        %v3234 = vunpack.c.l.b16 %v472
        %v3235 = vunpack.c.h.b16 %v472
        %v3236 = vunpack.c.l.b16 %v473
        %v3237 = vunpack.c.h.b16 %v473
        %v3238 = vunpack.c.l.b16 %v474
        %v3239 = vunpack.c.h.b16 %v474
        %v3240 = vunpack.c.l.b16 %v475
        %v3241 = vunpack.c.h.b16 %v475
        %v3242 = vunpack.c.l.b16 %v476
        %v3243 = vunpack.c.h.b16 %v476
        %v3244 = vunpack.c.l.b16 %v477
        %v3245 = vunpack.c.h.b16 %v477
        %v3246 = vunpack.c.l.b16 %v478
        %v3247 = vunpack.c.h.b16 %v478
        %v3248 = vunpack.c.l.b16 %v479
        %v3249 = vunpack.c.h.b16 %v479
        %v3250 = vunpack.c.l.b16 %v480
        %v3251 = vunpack.c.h.b16 %v480
        %v3252 = vunpack.c.l.b16 %v481
        %v3253 = vunpack.c.h.b16 %v481
        %v3254 = vunpack.c.l.b16 %v482
        %v3255 = vunpack.c.h.b16 %v482
        %v3256 = vunpack.c.l.b16 %v483
        %v3257 = vunpack.c.h.b16 %v483
        %v3258 = vunpack.c.l.b16 %v484
        %v3259 = vunpack.c.h.b16 %v484
        %v3260 = vunpack.c.l.b16 %v485
        %v3261 = vunpack.c.h.b16 %v485
        %v3262 = vunpack.c.l.b16 %v486
        %v3263 = vunpack.c.h.b16 %v486
        %v3264 = vunpack.c.l.b16 %v487
        %v3265 = vunpack.c.h.b16 %v487
        %v3266 = vunpack.c.l.b16 %v488
        %v3267 = vunpack.c.h.b16 %v488
        %v3268 = vunpack.c.l.b16 %v489
        %v3269 = vunpack.c.h.b16 %v489
        %v3270 = vunpack.c.l.b16 %v490
        %v3271 = vunpack.c.h.b16 %v490
        %v3272 = vunpack.c.l.b16 %v491
        %v3273 = vunpack.c.h.b16 %v491
        %v3274 = vunpack.c.l.b16 %v492
        %v3275 = vunpack.c.h.b16 %v492
        %v3276 = vunpack.c.l.b16 %v493
        %v3277 = vunpack.c.h.b16 %v493
        %v3278 = vunpack.c.l.b16 %v494
        %v3279 = vunpack.c.h.b16 %v494
        %v3280 = vunpack.c.l.b16 %v495
        %v3281 = vunpack.c.h.b16 %v495
        %v3282 = vunpack.c.l.b16 %v496
        %v3283 = vunpack.c.h.b16 %v496
        %v3284 = vunpack.c.l.b16 %v497
        %v3285 = vunpack.c.h.b16 %v497
        %v3286 = vunpack.c.l.b16 %v498
        %v3287 = vunpack.c.h.b16 %v498
        %v3288 = vunpack.c.l.b16 %v499
        %v3289 = vunpack.c.h.b16 %v499
        %v3290 = vunpack.c.l.b16 %v500
        %v3291 = vunpack.c.h.b16 %v500
        %v3292 = vunpack.c.l.b16 %v501
        %v3293 = vunpack.c.h.b16 %v501
        %v3294 = vunpack.c.l.b16 %v502
        %v3295 = vunpack.c.h.b16 %v502
        %v3296 = vunpack.c.l.b16 %v503
        %v3297 = vunpack.c.h.b16 %v503
        %v3298 = vunpack.c.l.b16 %v504
        %v3299 = vunpack.c.h.b16 %v504
        %v3300 = vunpack.c.l.b16 %v505
        %v3301 = vunpack.c.h.b16 %v505
        %v3302 = vunpack.c.l.b16 %v506
        %v3303 = vunpack.c.h.b16 %v506
        %v3304 = vunpack.c.l.b16 %v507
        %v3305 = vunpack.c.h.b16 %v507
        %v3306 = vunpack.c.l.b16 %v508
        %v3307 = vunpack.c.h.b16 %v508
        %v3308 = vunpack.c.l.b16 %v509
        %v3309 = vunpack.c.h.b16 %v509
        %v3310 = vunpack.c.l.b16 %v510
        %v3311 = vunpack.c.h.b16 %v510
        %v3312 = vunpack.c.l.b16 %v511
        %v3313 = vunpack.c.h.b16 %v511
        %v3314 = vunpack.c.l.b16 %v512
        %v3315 = vunpack.c.h.b16 %v512
        %v3316 = vunpack.c.l.b16 %v513
        %v3317 = vunpack.c.h.b16 %v513
        %v3318 = vunpack.c.l.b16 %v514
        %v3319 = vunpack.c.h.b16 %v514
        %v3320 = vunpack.c.l.b16 %v515
        %v3321 = vunpack.c.h.b16 %v515
        %v3322 = vunpack.c.l.b16 %v516
        %v3323 = vunpack.c.h.b16 %v516
        %v3324 = vunpack.c.l.b16 %v517
        %v3325 = vunpack.c.h.b16 %v517
        %v3326 = vunpack.c.l.b16 %v518
        %v3327 = vunpack.c.h.b16 %v518
        %v3328 = vunpack.c.l.b16 %v519
        %v3329 = vunpack.c.h.b16 %v519
        %v3330 = vunpack.c.l.b16 %v520
        %v3331 = vunpack.c.h.b16 %v520
        %v3332 = vunpack.c.l.b16 %v521
        %v3333 = vunpack.c.h.b16 %v521
        %v3334 = vunpack.c.l.b16 %v522
        %v3335 = vunpack.c.h.b16 %v522
        %v3336 = vunpack.c.l.b16 %v523
        %v3337 = vunpack.c.h.b16 %v523
        %v3338 = vunpack.c.l.b16 %v524
        %v3339 = vunpack.c.h.b16 %v524
        %v3340 = vunpack.c.l.b16 %v525
        %v3341 = vunpack.c.h.b16 %v525
        %v3342 = vunpack.c.l.b16 %v526
        %v3343 = vunpack.c.h.b16 %v526
        %v3344 = vunpack.c.l.b16 %v527
        %v3345 = vunpack.c.h.b16 %v527
        %v3346 = vunpack.c.l.b16 %v528
        %v3347 = vunpack.c.h.b16 %v528
        %v3348 = vunpack.c.l.b16 %v529
        %v3349 = vunpack.c.h.b16 %v529
        %v3350 = vunpack.c.l.b16 %v530
        %v3351 = vunpack.c.h.b16 %v530
        %v3352 = vunpack.c.l.b16 %v531
        %v3353 = vunpack.c.h.b16 %v531
        %v3354 = vunpack.c.l.b16 %v532
        %v3355 = vunpack.c.h.b16 %v532
        %v3356 = vunpack.c.l.b16 %v533
        %v3357 = vunpack.c.h.b16 %v533
        %v3358 = vunpack.c.l.b16 %v534
        %v3359 = vunpack.c.h.b16 %v534
        %v3360 = vunpack.c.l.b16 %v535
        %v3361 = vunpack.c.h.b16 %v535
        %v3362 = vunpack.c.l.b16 %v536
        %v3363 = vunpack.c.h.b16 %v536
        %v3364 = vunpack.c.l.b16 %v537
        %v3365 = vunpack.c.h.b16 %v537
        %v3366 = vunpack.c.l.b16 %v538
        %v3367 = vunpack.c.h.b16 %v538
        %v3368 = vunpack.c.l.b16 %v539
        %v3369 = vunpack.c.h.b16 %v539
        %v3370 = vunpack.c.l.b16 %v540
        %v3371 = vunpack.c.h.b16 %v540
        %v3372 = vunpack.c.l.b16 %v541
        %v3373 = vunpack.c.h.b16 %v541
        %v3374 = vunpack.c.l.b16 %v542
        %v3375 = vunpack.c.h.b16 %v542
        %v3376 = vunpack.c.l.b16 %v543
        %v3377 = vunpack.c.h.b16 %v543
        %v3378 = vunpack.c.l.b16 %v544
        %v3379 = vunpack.c.h.b16 %v544
        %v3380 = vunpack.c.l.b16 %v545
        %v3381 = vunpack.c.h.b16 %v545
        %v3382 = vunpack.c.l.b16 %v546
        %v3383 = vunpack.c.h.b16 %v546
        %v3384 = vunpack.c.l.b16 %v547
        %v3385 = vunpack.c.h.b16 %v547
        %v3386 = vunpack.c.l.b16 %v548
        %v3387 = vunpack.c.h.b16 %v548
        %v3388 = vunpack.c.l.b16 %v549
        %v3389 = vunpack.c.h.b16 %v549
        %v3390 = vunpack.c.l.b16 %v550
        %v3391 = vunpack.c.h.b16 %v550
        %v3392 = vunpack.c.l.b16 %v551
        %v3393 = vunpack.c.h.b16 %v551
        %v3394 = vunpack.c.l.b16 %v552
        %v3395 = vunpack.c.h.b16 %v552
        %v3396 = vunpack.c.l.b16 %v553
        %v3397 = vunpack.c.h.b16 %v553
        %v3398 = vunpack.c.l.b16 %v554
        %v3399 = vunpack.c.h.b16 %v554
        %v3400 = vunpack.c.l.b16 %v555
        %v3401 = vunpack.c.h.b16 %v555
        %v3402 = vunpack.c.l.b16 %v556
        %v3403 = vunpack.c.h.b16 %v556
        %v3404 = vunpack.c.l.b16 %v557
        %v3405 = vunpack.c.h.b16 %v557
        %v3406 = vunpack.c.l.b16 %v558
        %v3407 = vunpack.c.h.b16 %v558
        %v3408 = vunpack.c.l.b16 %v559
        %v3409 = vunpack.c.h.b16 %v559
        %v3410 = vunpack.c.l.b16 %v560
        %v3411 = vunpack.c.h.b16 %v560
        %v3412 = vunpack.c.l.b16 %v561
        %v3413 = vunpack.c.h.b16 %v561
        %v3414 = vunpack.c.l.b16 %v562
        %v3415 = vunpack.c.h.b16 %v562
        %v3416 = vunpack.c.l.b16 %v563
        %v3417 = vunpack.c.h.b16 %v563
        %v3418 = vunpack.c.l.b16 %v564
        %v3419 = vunpack.c.h.b16 %v564
        %v3420 = vunpack.c.l.b16 %v565
        %v3421 = vunpack.c.h.b16 %v565
        %v3422 = vunpack.c.l.b16 %v566
        %v3423 = vunpack.c.h.b16 %v566
        %v3424 = vunpack.c.l.b16 %v567
        %v3425 = vunpack.c.h.b16 %v567
        %v3426 = vunpack.c.l.b16 %v568
        %v3427 = vunpack.c.h.b16 %v568
        %v3428 = vunpack.c.l.b16 %v569
        %v3429 = vunpack.c.h.b16 %v569
        %v3430 = vunpack.c.l.b16 %v570
        %v3431 = vunpack.c.h.b16 %v570
        %v3432 = vunpack.c.l.b16 %v571
        %v3433 = vunpack.c.h.b16 %v571
        %v3434 = vunpack.c.l.b16 %v572
        %v3435 = vunpack.c.h.b16 %v572
        %v3436 = vunpack.c.l.b16 %v573
        %v3437 = vunpack.c.h.b16 %v573
        %v3438 = vunpack.c.l.b16 %v574
        %v3439 = vunpack.c.h.b16 %v574
        %v3440 = vunpack.c.l.b16 %v575
        %v3441 = vunpack.c.h.b16 %v575
        %v3442 = vunpack.c.l.b16 %v576
        %v3443 = vunpack.c.h.b16 %v576
        %v3444 = vunpack.c.l.b16 %v577
        %v3445 = vunpack.c.h.b16 %v577
        %v3446 = vunpack.c.l.b16 %v578
        %v3447 = vunpack.c.h.b16 %v578
        %v3448 = vunpack.c.l.b16 %v579
        %v3449 = vunpack.c.h.b16 %v579
        %v3450 = vunpack.c.l.b16 %v580
        %v3451 = vunpack.c.h.b16 %v580
        %v3452 = vunpack.c.l.b16 %v581
        %v3453 = vunpack.c.h.b16 %v581
        %v3454 = vunpack.c.l.b16 %v582
        %v3455 = vunpack.c.h.b16 %v582
        %v3456 = vunpack.c.l.b16 %v583
        %v3457 = vunpack.c.h.b16 %v583
        %v3458 = vunpack.c.l.b16 %v584
        %v3459 = vunpack.c.h.b16 %v584
        %v3460 = vunpack.c.l.b16 %v585
        %v3461 = vunpack.c.h.b16 %v585
        %v3462 = vunpack.c.l.b16 %v586
        %v3463 = vunpack.c.h.b16 %v586
        %v3464 = vunpack.c.l.b16 %v587
        %v3465 = vunpack.c.h.b16 %v587
        %v3466 = vunpack.c.l.b16 %v588
        %v3467 = vunpack.c.h.b16 %v588
        %v3468 = vunpack.c.l.b16 %v589
        %v3469 = vunpack.c.h.b16 %v589
        %v3470 = vunpack.c.l.b16 %v590
        %v3471 = vunpack.c.h.b16 %v590
        %v3472 = vunpack.c.l.b16 %v591
        %v3473 = vunpack.c.h.b16 %v591
        %v3474 = vunpack.c.l.b16 %v592
        %v3475 = vunpack.c.h.b16 %v592
        %v3476 = vunpack.c.l.b16 %v593
        %v3477 = vunpack.c.h.b16 %v593
        %v3478 = vunpack.c.l.b16 %v594
        %v3479 = vunpack.c.h.b16 %v594
        %v3480 = vunpack.c.l.b16 %v595
        %v3481 = vunpack.c.h.b16 %v595
        %v3482 = vunpack.c.l.b16 %v596
        %v3483 = vunpack.c.h.b16 %v596
        %v3484 = vunpack.c.l.b16 %v597
        %v3485 = vunpack.c.h.b16 %v597
        %v3486 = vunpack.c.l.b16 %v598
        %v3487 = vunpack.c.h.b16 %v598
        %v3488 = vunpack.c.l.b16 %v599
        %v3489 = vunpack.c.h.b16 %v599
        %v3490 = vunpack.c.l.b16 %v600
        %v3491 = vunpack.c.h.b16 %v600
        %v3492 = vunpack.c.l.b16 %v601
        %v3493 = vunpack.c.h.b16 %v601
        %v3494 = vunpack.c.l.b16 %v602
        %v3495 = vunpack.c.h.b16 %v602
        %v3496 = vunpack.c.l.b16 %v603
        %v3497 = vunpack.c.h.b16 %v603
        %v3498 = vunpack.c.l.b16 %v604
        %v3499 = vunpack.c.h.b16 %v604
        %v3500 = vunpack.c.l.b16 %v605
        %v3501 = vunpack.c.h.b16 %v605
        %v3502 = vunpack.c.l.b16 %v606
        %v3503 = vunpack.c.h.b16 %v606
        %v3504 = vunpack.c.l.b16 %v607
        %v3505 = vunpack.c.h.b16 %v607
        %v3506 = vunpack.c.l.b16 %v608
        %v3507 = vunpack.c.h.b16 %v608
        %v3508 = vunpack.c.l.b16 %v609
        %v3509 = vunpack.c.h.b16 %v609
        %v3510 = vunpack.c.l.b16 %v610
        %v3511 = vunpack.c.h.b16 %v610
        %v3512 = vunpack.c.l.b16 %v611
        %v3513 = vunpack.c.h.b16 %v611
        %v3514 = vunpack.c.l.b16 %v612
        %v3515 = vunpack.c.h.b16 %v612
        %v3516 = vunpack.c.l.b16 %v613
        %v3517 = vunpack.c.h.b16 %v613
        %v3518 = vunpack.c.l.b16 %v614
        %v3519 = vunpack.c.h.b16 %v614
        %v3520 = vunpack.c.l.b16 %v615
        %v3521 = vunpack.c.h.b16 %v615
        %v3522 = vunpack.c.l.b16 %v616
        %v3523 = vunpack.c.h.b16 %v616
        %v3524 = vunpack.c.l.b16 %v617
        %v3525 = vunpack.c.h.b16 %v617
        %v3526 = vunpack.c.l.b16 %v618
        %v3527 = vunpack.c.h.b16 %v618
        %v3528 = vunpack.c.l.b16 %v619
        %v3529 = vunpack.c.h.b16 %v619
        %v3530 = vunpack.c.l.b16 %v620
        %v3531 = vunpack.c.h.b16 %v620
        %v3532 = vunpack.c.l.b16 %v621
        %v3533 = vunpack.c.h.b16 %v621
        %v3534 = vunpack.c.l.b16 %v622
        %v3535 = vunpack.c.h.b16 %v622
        %v3536 = vunpack.c.l.b16 %v623
        %v3537 = vunpack.c.h.b16 %v623
        %v3538 = vunpack.c.l.b16 %v624
        %v3539 = vunpack.c.h.b16 %v624
        %v3540 = vunpack.c.l.b16 %v625
        %v3541 = vunpack.c.h.b16 %v625
        %v3542 = vunpack.c.l.b16 %v626
        %v3543 = vunpack.c.h.b16 %v626
        %v3544 = vunpack.c.l.b16 %v627
        %v3545 = vunpack.c.h.b16 %v627
        %v3546 = vunpack.c.l.b16 %v628
        %v3547 = vunpack.c.h.b16 %v628
        %v3548 = vunpack.c.l.b16 %v629
        %v3549 = vunpack.c.h.b16 %v629
        %v3550 = vunpack.c.l.b16 %v630
        %v3551 = vunpack.c.h.b16 %v630
        %v3552 = vunpack.c.l.b16 %v631
        %v3553 = vunpack.c.h.b16 %v631
        %v3554 = vunpack.c.l.b16 %v632
        %v3555 = vunpack.c.h.b16 %v632
        %v3556 = vunpack.c.l.b16 %v633
        %v3557 = vunpack.c.h.b16 %v633
        %v3558 = vunpack.c.l.b16 %v634
        %v3559 = vunpack.c.h.b16 %v634
        %v3560 = vunpack.c.l.b16 %v635
        %v3561 = vunpack.c.h.b16 %v635
        %v3562 = vunpack.c.l.b16 %v636
        %v3563 = vunpack.c.h.b16 %v636
        %v3564 = vunpack.c.l.b16 %v637
        %v3565 = vunpack.c.h.b16 %v637
        %v3566 = vunpack.c.l.b16 %v638
        %v3567 = vunpack.c.h.b16 %v638
        %v3568 = vunpack.c.l.b16 %v639
        %v3569 = vunpack.c.h.b16 %v639
        %v3570 = vunpack.c.l.b16 %v640
        %v3571 = vunpack.c.h.b16 %v640
        %v3572 = vunpack.c.l.b16 %v641
        %v3573 = vunpack.c.h.b16 %v641
        %v3574 = vunpack.c.l.b16 %v642
        %v3575 = vunpack.c.h.b16 %v642
        %v3576 = vunpack.c.l.b16 %v643
        %v3577 = vunpack.c.h.b16 %v643
        %v3578 = vunpack.c.l.b16 %v644
        %v3579 = vunpack.c.h.b16 %v644
        %v3580 = vunpack.c.l.b16 %v645
        %v3581 = vunpack.c.h.b16 %v645
        %v3582 = vunpack.c.l.b16 %v646
        %v3583 = vunpack.c.h.b16 %v646
        %v3584 = vunpack.c.l.b16 %v647
        %v3585 = vunpack.c.h.b16 %v647
        %v3586 = vunpack.c.l.b16 %v648
        %v3587 = vunpack.c.h.b16 %v648
        %v3588 = vunpack.c.l.b16 %v649
        %v3589 = vunpack.c.h.b16 %v649
        %v3590 = vunpack.c.l.b16 %v650
        %v3591 = vunpack.c.h.b16 %v650
        %v3592 = vunpack.c.l.b16 %v651
        %v3593 = vunpack.c.h.b16 %v651
        %v3594 = vunpack.c.l.b16 %v652
        %v3595 = vunpack.c.h.b16 %v652
        %v3596 = vunpack.c.l.b16 %v653
        %v3597 = vunpack.c.h.b16 %v653
        %v3598 = vunpack.c.l.b16 %v654
        %v3599 = vunpack.c.h.b16 %v654
        %v3600 = vunpack.c.l.b16 %v655
        %v3601 = vunpack.c.h.b16 %v655
        %v3602 = vunpack.c.l.b16 %v656
        %v3603 = vunpack.c.h.b16 %v656
        %v3604 = vunpack.c.l.b16 %v657
        %v3605 = vunpack.c.h.b16 %v657
        %v3606 = vunpack.c.l.b16 %v658
        %v3607 = vunpack.c.h.b16 %v658
        %v3608 = vunpack.c.l.b16 %v659
        %v3609 = vunpack.c.h.b16 %v659
        %v3610 = vunpack.c.l.b16 %v660
        %v3611 = vunpack.c.h.b16 %v660
        %v3612 = vunpack.c.l.b16 %v661
        %v3613 = vunpack.c.h.b16 %v661
        %v3614 = vunpack.c.l.b16 %v662
        %v3615 = vunpack.c.h.b16 %v662
        %v3616 = vunpack.c.l.b16 %v663
        %v3617 = vunpack.c.h.b16 %v663
        %v3618 = vunpack.c.l.b16 %v664
        %v3619 = vunpack.c.h.b16 %v664
        %v3620 = vunpack.c.l.b16 %v665
        %v3621 = vunpack.c.h.b16 %v665
        %v3622 = vunpack.c.l.b16 %v666
        %v3623 = vunpack.c.h.b16 %v666
        %v3624 = vunpack.c.l.b16 %v667
        %v3625 = vunpack.c.h.b16 %v667
        %v3626 = vunpack.c.l.b16 %v668
        %v3627 = vunpack.c.h.b16 %v668
        %v3628 = vunpack.c.l.b16 %v669
        %v3629 = vunpack.c.h.b16 %v669
        %v3630 = vunpack.c.l.b16 %v670
        %v3631 = vunpack.c.h.b16 %v670
        %v3632 = vunpack.c.l.b16 %v671
        %v3633 = vunpack.c.h.b16 %v671
        %v3634 = vunpack.c.l.b16 %v672
        %v3635 = vunpack.c.h.b16 %v672
        %v3636 = vunpack.c.l.b16 %v673
        %v3637 = vunpack.c.h.b16 %v673
        %v3638 = vunpack.c.l.b16 %v674
        %v3639 = vunpack.c.h.b16 %v674
        %v3640 = vunpack.c.l.b16 %v675
        %v3641 = vunpack.c.h.b16 %v675
        %v3642 = vunpack.c.l.b16 %v676
        %v3643 = vunpack.c.h.b16 %v676
        %v3644 = vunpack.c.l.b16 %v677
        %v3645 = vunpack.c.h.b16 %v677
        %v3646 = vunpack.c.l.b16 %v678
        %v3647 = vunpack.c.h.b16 %v678
        %v3648 = vunpack.c.l.b16 %v679
        %v3649 = vunpack.c.h.b16 %v679
        %v3650 = vunpack.c.l.b16 %v680
        %v3651 = vunpack.c.h.b16 %v680
        %v3652 = vunpack.c.l.b16 %v681
        %v3653 = vunpack.c.h.b16 %v681
        %v3654 = vunpack.c.l.b16 %v682
        %v3655 = vunpack.c.h.b16 %v682
        %v3656 = vunpack.c.l.b16 %v683
        %v3657 = vunpack.c.h.b16 %v683
        %v3658 = vunpack.c.l.b16 %v684
        %v3659 = vunpack.c.h.b16 %v684
        %v3660 = vunpack.c.l.b16 %v685
        %v3661 = vunpack.c.h.b16 %v685
        %v3662 = vunpack.c.l.b16 %v686
        %v3663 = vunpack.c.h.b16 %v686
        %v3664 = vunpack.c.l.b16 %v687
        %v3665 = vunpack.c.h.b16 %v687
        %v3666 = vunpack.c.l.b16 %v688
        %v3667 = vunpack.c.h.b16 %v688
        %v3668 = vunpack.c.l.b16 %v689
        %v3669 = vunpack.c.h.b16 %v689
        %v3670 = vunpack.c.l.b16 %v690
        %v3671 = vunpack.c.h.b16 %v690
        %v3672 = vunpack.c.l.b16 %v691
        %v3673 = vunpack.c.h.b16 %v691
        %v3674 = vunpack.c.l.b16 %v692
        %v3675 = vunpack.c.h.b16 %v692
        %v3676 = vunpack.c.l.b16 %v693
        %v3677 = vunpack.c.h.b16 %v693
        %v3678 = vunpack.c.l.b16 %v694
        %v3679 = vunpack.c.h.b16 %v694
        %v3680 = vunpack.c.l.b16 %v695
        %v3681 = vunpack.c.h.b16 %v695
        %v3682 = vunpack.c.l.b16 %v696
        %v3683 = vunpack.c.h.b16 %v696
        %v3684 = vunpack.c.l.b16 %v697
        %v3685 = vunpack.c.h.b16 %v697
        %v3686 = vunpack.c.l.b16 %v698
        %v3687 = vunpack.c.h.b16 %v698
        %v3688 = vunpack.c.l.b16 %v699
        %v3689 = vunpack.c.h.b16 %v699
        %v3690 = vunpack.c.l.b16 %v700
        %v3691 = vunpack.c.h.b16 %v700
        %v3692 = vunpack.c.l.b16 %v701
        %v3693 = vunpack.c.h.b16 %v701
        %v3694 = vunpack.c.l.b16 %v702
        %v3695 = vunpack.c.h.b16 %v702
        %v3696 = vunpack.c.l.b16 %v703
        %v3697 = vunpack.c.h.b16 %v703
        %v3698 = vunpack.c.l.b16 %v704
        %v3699 = vunpack.c.h.b16 %v704
        %v3700 = vunpack.c.l.b16 %v705
        %v3701 = vunpack.c.h.b16 %v705
        %v3702 = vunpack.c.l.b16 %v706
        %v3703 = vunpack.c.h.b16 %v706
        %v3704 = vunpack.c.l.b16 %v707
        %v3705 = vunpack.c.h.b16 %v707
        %v3706 = vunpack.c.l.b16 %v708
        %v3707 = vunpack.c.h.b16 %v708
        %v3708 = vunpack.c.l.b16 %v709
        %v3709 = vunpack.c.h.b16 %v709
        %v3710 = vunpack.c.l.b16 %v710
        %v3711 = vunpack.c.h.b16 %v710
        %v3712 = vunpack.c.l.b16 %v711
        %v3713 = vunpack.c.h.b16 %v711
        %v3714 = vunpack.c.l.b16 %v712
        %v3715 = vunpack.c.h.b16 %v712
        %v3716 = vunpack.c.l.b16 %v713
        %v3717 = vunpack.c.h.b16 %v713
        %v3718 = vunpack.c.l.b16 %v714
        %v3719 = vunpack.c.h.b16 %v714
        %v3720 = vunpack.c.l.b16 %v715
        %v3721 = vunpack.c.h.b16 %v715
        %v3722 = vunpack.c.l.b16 %v716
        %v3723 = vunpack.c.h.b16 %v716
        %v3724 = vunpack.c.l.b16 %v717
        %v3725 = vunpack.c.h.b16 %v717
        %v3726 = vunpack.c.l.b16 %v718
        %v3727 = vunpack.c.h.b16 %v718
        %v3728 = vunpack.c.l.b16 %v719
        %v3729 = vunpack.c.h.b16 %v719
        %v3730 = vunpack.c.l.b16 %v720
        %v3731 = vunpack.c.h.b16 %v720
        %v3732 = vunpack.c.l.b16 %v721
        %v3733 = vunpack.c.h.b16 %v721
        %v3734 = vunpack.c.l.b16 %v722
        %v3735 = vunpack.c.h.b16 %v722
        %v3736 = vunpack.c.l.b16 %v723
        %v3737 = vunpack.c.h.b16 %v723
        %v3738 = vunpack.c.l.b16 %v724
        %v3739 = vunpack.c.h.b16 %v724
        %v3740 = vunpack.c.l.b16 %v725
        %v3741 = vunpack.c.h.b16 %v725
        %v3742 = vunpack.c.l.b16 %v726
        %v3743 = vunpack.c.h.b16 %v726
        %v3744 = vunpack.c.l.b16 %v727
        %v3745 = vunpack.c.h.b16 %v727
        %v3746 = vunpack.c.l.b16 %v728
        %v3747 = vunpack.c.h.b16 %v728
        %v3748 = vunpack.c.l.b16 %v729
        %v3749 = vunpack.c.h.b16 %v729
        %v3750 = vunpack.c.l.b16 %v730
        %v3751 = vunpack.c.h.b16 %v730
        %v3752 = vunpack.c.l.b16 %v731
        %v3753 = vunpack.c.h.b16 %v731
        %v3754 = vunpack.c.l.b16 %v732
        %v3755 = vunpack.c.h.b16 %v732
        %v3756 = vunpack.c.l.b16 %v733
        %v3757 = vunpack.c.h.b16 %v733
        %v3758 = vunpack.c.l.b16 %v734
        %v3759 = vunpack.c.h.b16 %v734
        %v3760 = vunpack.c.l.b16 %v735
        %v3761 = vunpack.c.h.b16 %v735
        %v3762 = vunpack.c.l.b16 %v736
        %v3763 = vunpack.c.h.b16 %v736
        %v3764 = vunpack.c.l.b16 %v737
        %v3765 = vunpack.c.h.b16 %v737
        %v3766 = vunpack.c.l.b16 %v738
        %v3767 = vunpack.c.h.b16 %v738
        %v3768 = vunpack.c.l.b16 %v739
        %v3769 = vunpack.c.h.b16 %v739
        %v3770 = vunpack.c.l.b16 %v740
        %v3771 = vunpack.c.h.b16 %v740
        %v3772 = vunpack.c.l.b16 %v741
        %v3773 = vunpack.c.h.b16 %v741
        %v3774 = vunpack.c.l.b16 %v742
        %v3775 = vunpack.c.h.b16 %v742
        %v3776 = vunpack.c.l.b16 %v743
        %v3777 = vunpack.c.h.b16 %v743
        %v3778 = vunpack.c.l.b16 %v744
        %v3779 = vunpack.c.h.b16 %v744
        %v3780 = vunpack.c.l.b16 %v745
        %v3781 = vunpack.c.h.b16 %v745
        %v3782 = vunpack.c.l.b16 %v746
        %v3783 = vunpack.c.h.b16 %v746
        %v3784 = vunpack.c.l.b16 %v747
        %v3785 = vunpack.c.h.b16 %v747
        %v3786 = vunpack.c.l.b16 %v748
        %v3787 = vunpack.c.h.b16 %v748
        %v3788 = vunpack.c.l.b16 %v749
        %v3789 = vunpack.c.h.b16 %v749
        %v3790 = vunpack.c.l.b16 %v750
        %v3791 = vunpack.c.h.b16 %v750
        %v3792 = vunpack.c.l.b16 %v751
        %v3793 = vunpack.c.h.b16 %v751
        %v3794 = vunpack.c.l.b16 %v752
        %v3795 = vunpack.c.h.b16 %v752
        %v3796 = vunpack.c.l.b16 %v753
        %v3797 = vunpack.c.h.b16 %v753
        %v3798 = vunpack.c.l.b16 %v754
        %v3799 = vunpack.c.h.b16 %v754
        %v3800 = vunpack.c.l.b16 %v755
        %v3801 = vunpack.c.h.b16 %v755
        %v3802 = vunpack.c.l.b16 %v756
        %v3803 = vunpack.c.h.b16 %v756
        %v3804 = vunpack.c.l.b16 %v757
        %v3805 = vunpack.c.h.b16 %v757
        %v3806 = vunpack.c.l.b16 %v758
        %v3807 = vunpack.c.h.b16 %v758
        %v3808 = vunpack.c.l.b16 %v759
        %v3809 = vunpack.c.h.b16 %v759
        %v3810 = vunpack.c.l.b16 %v760
        %v3811 = vunpack.c.h.b16 %v760
        %v3812 = vunpack.c.l.b16 %v761
        %v3813 = vunpack.c.h.b16 %v761
        %v3814 = vunpack.c.l.b16 %v762
        %v3815 = vunpack.c.h.b16 %v762
        %v3816 = vunpack.c.l.b16 %v763
        %v3817 = vunpack.c.h.b16 %v763
        %v3818 = vunpack.c.l.b16 %v764
        %v3819 = vunpack.c.h.b16 %v764
        %v3820 = vunpack.c.l.b16 %v765
        %v3821 = vunpack.c.h.b16 %v765
        %v3822 = vunpack.c.l.b16 %v766
        %v3823 = vunpack.c.h.b16 %v766
        %v3824 = vunpack.c.l.b16 %v767
        %v3825 = vunpack.c.h.b16 %v767
        %v3826 = vunpack.c.l.b16 %v768
        %v3827 = vunpack.c.h.b16 %v768
        %v3828 = vunpack.c.l.b16 %v769
        %v3829 = vunpack.c.h.b16 %v769
        %v3830 = vunpack.c.l.b16 %v770
        %v3831 = vunpack.c.h.b16 %v770
        %v3832 = vunpack.c.l.b16 %v771
        %v3833 = vunpack.c.h.b16 %v771
        %v3834 = vunpack.c.l.b16 %v772
        %v3835 = vunpack.c.h.b16 %v772
        %v3836 = vunpack.c.l.b16 %v773
        %v3837 = vunpack.c.h.b16 %v773
        %v3838 = vunpack.c.l.b16 %v774
        %v3839 = vunpack.c.h.b16 %v774
        %v3840 = vunpack.c.l.b16 %v775
        %v3841 = vunpack.c.h.b16 %v775
        %v3842 = vunpack.c.l.b16 %v776
        %v3843 = vunpack.c.h.b16 %v776
        %v3844 = vunpack.c.l.b16 %v777
        %v3845 = vunpack.c.h.b16 %v777
        %v3846 = vunpack.c.l.b16 %v778
        %v3847 = vunpack.c.h.b16 %v778
        %v3848 = vunpack.c.l.b16 %v779
        %v3849 = vunpack.c.h.b16 %v779
        %v3850 = vunpack.c.l.b16 %v780
        %v3851 = vunpack.c.h.b16 %v780
        %v3852 = vunpack.c.l.b16 %v781
        %v3853 = vunpack.c.h.b16 %v781
        %v3854 = vunpack.c.l.b16 %v782
        %v3855 = vunpack.c.h.b16 %v782
        %v3856 = vunpack.c.l.b16 %v783
        %v3857 = vunpack.c.h.b16 %v783
        %v3858 = vunpack.c.l.b16 %v784
        %v3859 = vunpack.c.h.b16 %v784
        %v3860 = vunpack.c.l.b16 %v785
        %v3861 = vunpack.c.h.b16 %v785
        %v3862 = vunpack.c.l.b16 %v786
        %v3863 = vunpack.c.h.b16 %v786
        %v3864 = vunpack.c.l.b16 %v787
        %v3865 = vunpack.c.h.b16 %v787
        %v3866 = vunpack.c.l.b16 %v788
        %v3867 = vunpack.c.h.b16 %v788
        %v3868 = vunpack.c.l.b16 %v789
        %v3869 = vunpack.c.h.b16 %v789
        %v3870 = vunpack.c.l.b16 %v790
        %v3871 = vunpack.c.h.b16 %v790
        %v3872 = vunpack.c.l.b16 %v791
        %v3873 = vunpack.c.h.b16 %v791
        %v3874 = vunpack.c.l.b16 %v792
        %v3875 = vunpack.c.h.b16 %v792
        %v3876 = vunpack.c.l.b16 %v793
        %v3877 = vunpack.c.h.b16 %v793
        %v3878 = vunpack.c.l.b16 %v794
        %v3879 = vunpack.c.h.b16 %v794
        %v3880 = vunpack.c.l.b16 %v795
        %v3881 = vunpack.c.h.b16 %v795
        %v3882 = vunpack.c.l.b16 %v796
        %v3883 = vunpack.c.h.b16 %v796
        %v3884 = vunpack.c.l.b16 %v797
        %v3885 = vunpack.c.h.b16 %v797
        %v3886 = vunpack.c.l.b16 %v798
        %v3887 = vunpack.c.h.b16 %v798
        %v3888 = vunpack.c.l.b16 %v799
        %v3889 = vunpack.c.h.b16 %v799
        %v3890 = vunpack.c.l.b16 %v800
        %v3891 = vunpack.c.h.b16 %v800
        %v3892 = vunpack.c.l.b16 %v801
        %v3893 = vunpack.c.h.b16 %v801
        %v3894 = vunpack.c.l.b16 %v802
        %v3895 = vunpack.c.h.b16 %v802
        %v3896 = vunpack.c.l.b16 %v803
        %v3897 = vunpack.c.h.b16 %v803
        %v3898 = vunpack.c.l.b16 %v804
        %v3899 = vunpack.c.h.b16 %v804
        %v3900 = vunpack.c.l.b16 %v805
        %v3901 = vunpack.c.h.b16 %v805
        %v3902 = vunpack.c.l.b16 %v806
        %v3903 = vunpack.c.h.b16 %v806
        %v3904 = vunpack.c.l.b16 %v807
        %v3905 = vunpack.c.h.b16 %v807
        %v3906 = vunpack.c.l.b16 %v808
        %v3907 = vunpack.c.h.b16 %v808
        %v3908 = vunpack.c.l.b16 %v809
        %v3909 = vunpack.c.h.b16 %v809
        %v3910 = vunpack.c.l.b16 %v810
        %v3911 = vunpack.c.h.b16 %v810
        %v3912 = vunpack.c.l.b16 %v811
        %v3913 = vunpack.c.h.b16 %v811
        %v3914 = vunpack.c.l.b16 %v812
        %v3915 = vunpack.c.h.b16 %v812
        %v3916 = vunpack.c.l.b16 %v813
        %v3917 = vunpack.c.h.b16 %v813
        %v3918 = vunpack.c.l.b16 %v814
        %v3919 = vunpack.c.h.b16 %v814
        %v3920 = vunpack.c.l.b16 %v815
        %v3921 = vunpack.c.h.b16 %v815
        %v3922 = vunpack.c.l.b16 %v816
        %v3923 = vunpack.c.h.b16 %v816
        %v3924 = vunpack.c.l.b16 %v817
        %v3925 = vunpack.c.h.b16 %v817
        %v3926 = vunpack.c.l.b16 %v818
        %v3927 = vunpack.c.h.b16 %v818
        %v3928 = vunpack.c.l.b16 %v819
        %v3929 = vunpack.c.h.b16 %v819
        %v3930 = vunpack.c.l.b16 %v820
        %v3931 = vunpack.c.h.b16 %v820
        %v3932 = vunpack.c.l.b16 %v821
        %v3933 = vunpack.c.h.b16 %v821
        %v3934 = vunpack.c.l.b16 %v822
        %v3935 = vunpack.c.h.b16 %v822
        %v3936 = vunpack.c.l.b16 %v823
        %v3937 = vunpack.c.h.b16 %v823
        %v3938 = vunpack.c.l.b16 %v824
        %v3939 = vunpack.c.h.b16 %v824
        %v3940 = vunpack.c.l.b16 %v825
        %v3941 = vunpack.c.h.b16 %v825
        %v3942 = vunpack.c.l.b16 %v826
        %v3943 = vunpack.c.h.b16 %v826
        %v3944 = vunpack.c.l.b16 %v827
        %v3945 = vunpack.c.h.b16 %v827
        %v3946 = vunpack.c.l.b16 %v828
        %v3947 = vunpack.c.h.b16 %v828
        %v3948 = vunpack.c.l.b16 %v829
        %v3949 = vunpack.c.h.b16 %v829
        %v3950 = vunpack.c.l.b16 %v830
        %v3951 = vunpack.c.h.b16 %v830
        %v3952 = vunpack.c.l.b16 %v831
        %v3953 = vunpack.c.h.b16 %v831
        %v3954 = vunpack.c.l.b16 %v832
        %v3955 = vunpack.c.h.b16 %v832
        %v3956 = vunpack.c.l.b16 %v833
        %v3957 = vunpack.c.h.b16 %v833
        %v3958 = vunpack.c.l.b16 %v834
        %v3959 = vunpack.c.h.b16 %v834
        %v3960 = vunpack.c.l.b16 %v835
        %v3961 = vunpack.c.h.b16 %v835
        %v3962 = vunpack.c.l.b16 %v836
        %v3963 = vunpack.c.h.b16 %v836
        %v3964 = vunpack.c.l.b16 %v837
        %v3965 = vunpack.c.h.b16 %v837
        %v3966 = vunpack.c.l.b16 %v838
        %v3967 = vunpack.c.h.b16 %v838
        %v3968 = vunpack.c.l.b16 %v839
        %v3969 = vunpack.c.h.b16 %v839
        %v3970 = vunpack.c.l.b16 %v840
        %v3971 = vunpack.c.h.b16 %v840
        %v3972 = vunpack.c.l.b16 %v841
        %v3973 = vunpack.c.h.b16 %v841
        %v3974 = vunpack.c.l.b16 %v842
        %v3975 = vunpack.c.h.b16 %v842
        %v3976 = vunpack.c.l.b16 %v843
        %v3977 = vunpack.c.h.b16 %v843
        %v3978 = vunpack.c.l.b16 %v844
        %v3979 = vunpack.c.h.b16 %v844
        %v3980 = vunpack.c.l.b16 %v845
        %v3981 = vunpack.c.h.b16 %v845
        %v3982 = vunpack.c.l.b16 %v846
        %v3983 = vunpack.c.h.b16 %v846
        %v3984 = vunpack.c.l.b16 %v847
        %v3985 = vunpack.c.h.b16 %v847
        %v3986 = vunpack.c.l.b16 %v848
        %v3987 = vunpack.c.h.b16 %v848
        %v3988 = vunpack.c.l.b16 %v849
        %v3989 = vunpack.c.h.b16 %v849
        %v3990 = vunpack.c.l.b16 %v850
        %v3991 = vunpack.c.h.b16 %v850
        %v3992 = vunpack.c.l.b16 %v851
        %v3993 = vunpack.c.h.b16 %v851
        %v3994 = vunpack.c.l.b16 %v852
        %v3995 = vunpack.c.h.b16 %v852
        %v3996 = vunpack.c.l.b16 %v853
        %v3997 = vunpack.c.h.b16 %v853
        %v3998 = vunpack.c.l.b16 %v854
        %v3999 = vunpack.c.h.b16 %v854
        %v4000 = vunpack.c.l.b16 %v855
        %v4001 = vunpack.c.h.b16 %v855
        %v4002 = vunpack.c.l.b16 %v856
        %v4003 = vunpack.c.h.b16 %v856
        %v4004 = vunpack.c.l.b16 %v857
        %v4005 = vunpack.c.h.b16 %v857
        %v4006 = vunpack.c.l.b16 %v858
        %v4007 = vunpack.c.h.b16 %v858
        %v4008 = vunpack.c.l.b16 %v859
        %v4009 = vunpack.c.h.b16 %v859
        %v4010 = vunpack.c.l.b16 %v860
        %v4011 = vunpack.c.h.b16 %v860
        %v4012 = vunpack.c.l.b16 %v861
        %v4013 = vunpack.c.h.b16 %v861
        %v4014 = vunpack.c.l.b16 %v862
        %v4015 = vunpack.c.h.b16 %v862
        %v4016 = vunpack.c.l.b16 %v863
        %v4017 = vunpack.c.h.b16 %v863
        %v4018 = vunpack.c.l.b16 %v864
        %v4019 = vunpack.c.h.b16 %v864
        %v4020 = vunpack.c.l.b16 %v865
        %v4021 = vunpack.c.h.b16 %v865
        %v4022 = vunpack.c.l.b16 %v866
        %v4023 = vunpack.c.h.b16 %v866
        %v4024 = vunpack.c.l.b16 %v867
        %v4025 = vunpack.c.h.b16 %v867
        %v4026 = vunpack.c.l.b16 %v868
        %v4027 = vunpack.c.h.b16 %v868
        %v4028 = vunpack.c.l.b16 %v869
        %v4029 = vunpack.c.h.b16 %v869
        %v4030 = vunpack.c.l.b16 %v870
        %v4031 = vunpack.c.h.b16 %v870
        %v4032 = vunpack.c.l.b16 %v871
        %v4033 = vunpack.c.h.b16 %v871
        %v4034 = vunpack.c.l.b16 %v872
        %v4035 = vunpack.c.h.b16 %v872
        %v4036 = vunpack.c.l.b16 %v873
        %v4037 = vunpack.c.h.b16 %v873
        %v4038 = vunpack.c.l.b16 %v874
        %v4039 = vunpack.c.h.b16 %v874
        %v4040 = vunpack.c.l.b16 %v875
        %v4041 = vunpack.c.h.b16 %v875
        %v4042 = vunpack.c.l.b16 %v876
        %v4043 = vunpack.c.h.b16 %v876
        %v4044 = vunpack.c.l.b16 %v877
        %v4045 = vunpack.c.h.b16 %v877
        %v4046 = vunpack.c.l.b16 %v878
        %v4047 = vunpack.c.h.b16 %v878
        %v4048 = vunpack.c.l.b16 %v879
        %v4049 = vunpack.c.h.b16 %v879
        %v4050 = vunpack.c.l.b16 %v880
        %v4051 = vunpack.c.h.b16 %v880
        %v4052 = vunpack.c.l.b16 %v881
        %v4053 = vunpack.c.h.b16 %v881
        %v4054 = vunpack.c.l.b16 %v882
        %v4055 = vunpack.c.h.b16 %v882
        %v4056 = vunpack.c.l.b16 %v883
        %v4057 = vunpack.c.h.b16 %v883
        %v4058 = vunpack.c.l.b16 %v884
        %v4059 = vunpack.c.h.b16 %v884
        %v4060 = vunpack.c.l.b16 %v885
        %v4061 = vunpack.c.h.b16 %v885
        %v4062 = vunpack.c.l.b16 %v886
        %v4063 = vunpack.c.h.b16 %v886
        %v4064 = vunpack.c.l.b16 %v887
        %v4065 = vunpack.c.h.b16 %v887
        %v4066 = vunpack.c.l.b16 %v888
        %v4067 = vunpack.c.h.b16 %v888
        %v4068 = vunpack.c.l.b16 %v889
        %v4069 = vunpack.c.h.b16 %v889
        %v4070 = vunpack.c.l.b16 %v890
        %v4071 = vunpack.c.h.b16 %v890
        %v4072 = vunpack.c.l.b16 %v891
        %v4073 = vunpack.c.h.b16 %v891
        %v4074 = vunpack.c.l.b16 %v892
        %v4075 = vunpack.c.h.b16 %v892
        %v4076 = vunpack.c.l.b16 %v893
        %v4077 = vunpack.c.h.b16 %v893
        %v4078 = vunpack.c.l.b16 %v894
        %v4079 = vunpack.c.h.b16 %v894
        %v4080 = vunpack.c.l.b16 %v895
        %v4081 = vunpack.c.h.b16 %v895
        %v4082 = vunpack.c.l.b16 %v896
        %v4083 = vunpack.c.h.b16 %v896
        %v4084 = vunpack.c.l.b16 %v897
        %v4085 = vunpack.c.h.b16 %v897
        %v4086 = vunpack.c.l.b16 %v898
        %v4087 = vunpack.c.h.b16 %v898
        %v4088 = vunpack.c.l.b16 %v899
        %v4089 = vunpack.c.h.b16 %v899
        %v4090 = vunpack.c.l.b16 %v900
        %v4091 = vunpack.c.h.b16 %v900
        %v4092 = vunpack.c.l.b16 %v901
        %v4093 = vunpack.c.h.b16 %v901
        %v4094 = vunpack.c.l.b16 %v902
        %v4095 = vunpack.c.h.b16 %v902
        %v4096 = vunpack.c.l.b16 %v903
        %v4097 = vunpack.c.h.b16 %v903
        %v4098 = vunpack.c.l.b16 %v904
        %v4099 = vunpack.c.h.b16 %v904
        %v4100 = vunpack.c.l.b16 %v905
        %v4101 = vunpack.c.h.b16 %v905
        %v4102 = vunpack.c.l.b16 %v906
        %v4103 = vunpack.c.h.b16 %v906
        %v4104 = vunpack.c.l.b16 %v907
        %v4105 = vunpack.c.h.b16 %v907
        %v4106 = vunpack.c.l.b16 %v908
        %v4107 = vunpack.c.h.b16 %v908
        %v4108 = vunpack.c.l.b16 %v909
        %v4109 = vunpack.c.h.b16 %v909
        %v4110 = vunpack.c.l.b16 %v910
        %v4111 = vunpack.c.h.b16 %v910
        %v4112 = vunpack.c.l.b16 %v911
        %v4113 = vunpack.c.h.b16 %v911
        %v4114 = vunpack.c.l.b16 %v912
        %v4115 = vunpack.c.h.b16 %v912
        %v4116 = vunpack.c.l.b16 %v913
        %v4117 = vunpack.c.h.b16 %v913
        %v4118 = vunpack.c.l.b16 %v914
        %v4119 = vunpack.c.h.b16 %v914
        %v4120 = vunpack.c.l.b16 %v915
        %v4121 = vunpack.c.h.b16 %v915
        %v4122 = vunpack.c.l.b16 %v916
        %v4123 = vunpack.c.h.b16 %v916
        %v4124 = vunpack.c.l.b16 %v917
        %v4125 = vunpack.c.h.b16 %v917
        %v4126 = vunpack.c.l.b16 %v918
        %v4127 = vunpack.c.h.b16 %v918
        %v4128 = vunpack.c.l.b16 %v919
        %v4129 = vunpack.c.h.b16 %v919
        %v4130 = vunpack.c.l.b16 %v920
        %v4131 = vunpack.c.h.b16 %v920
        %v4132 = vunpack.c.l.b16 %v921
        %v4133 = vunpack.c.h.b16 %v921
        %v4134 = vunpack.c.l.b16 %v922
        %v4135 = vunpack.c.h.b16 %v922
        %v4136 = vunpack.c.l.b16 %v923
        %v4137 = vunpack.c.h.b16 %v923
        %v4138 = vunpack.c.l.b16 %v924
        %v4139 = vunpack.c.h.b16 %v924
        %v4140 = vunpack.c.l.b16 %v925
        %v4141 = vunpack.c.h.b16 %v925
        %v4142 = vunpack.c.l.b16 %v926
        %v4143 = vunpack.c.h.b16 %v926
        %v4144 = vunpack.c.l.b16 %v927
        %v4145 = vunpack.c.h.b16 %v927
        %v4146 = vunpack.c.l.b16 %v928
        %v4147 = vunpack.c.h.b16 %v928
        %v4148 = vunpack.c.l.b16 %v929
        %v4149 = vunpack.c.h.b16 %v929
        %v4150 = vunpack.c.l.b16 %v930
        %v4151 = vunpack.c.h.b16 %v930
        %v4152 = vunpack.c.l.b16 %v931
        %v4153 = vunpack.c.h.b16 %v931
        %v4154 = vunpack.c.l.b16 %v932
        %v4155 = vunpack.c.h.b16 %v932
        %v4156 = vunpack.c.l.b16 %v933
        %v4157 = vunpack.c.h.b16 %v933
        %v4158 = vunpack.c.l.b16 %v934
        %v4159 = vunpack.c.h.b16 %v934
        %v4160 = vunpack.c.l.b16 %v935
        %v4161 = vunpack.c.h.b16 %v935
        %v4162 = vunpack.c.l.b16 %v936
        %v4163 = vunpack.c.h.b16 %v936
        %v4164 = vunpack.c.l.b16 %v937
        %v4165 = vunpack.c.h.b16 %v937
        %v4166 = vunpack.c.l.b16 %v938
        %v4167 = vunpack.c.h.b16 %v938
        %v4168 = vunpack.c.l.b16 %v939
        %v4169 = vunpack.c.h.b16 %v939
        %v4170 = vunpack.c.l.b16 %v940
        %v4171 = vunpack.c.h.b16 %v940
        %v4172 = vunpack.c.l.b16 %v941
        %v4173 = vunpack.c.h.b16 %v941
        %v4174 = vunpack.c.l.b16 %v942
        %v4175 = vunpack.c.h.b16 %v942
        %v4176 = vunpack.c.l.b16 %v943
        %v4177 = vunpack.c.h.b16 %v943
        %v4178 = vunpack.c.l.b16 %v944
        %v4179 = vunpack.c.h.b16 %v944
        %v4180 = vunpack.c.l.b16 %v945
        %v4181 = vunpack.c.h.b16 %v945
        %v4182 = vunpack.c.l.b16 %v946
        %v4183 = vunpack.c.h.b16 %v946
        %v4184 = vunpack.c.l.b16 %v947
        %v4185 = vunpack.c.h.b16 %v947
        %v4186 = vunpack.c.l.b16 %v948
        %v4187 = vunpack.c.h.b16 %v948
        %v4188 = vunpack.c.l.b16 %v949
        %v4189 = vunpack.c.h.b16 %v949
        %v4190 = vunpack.c.l.b16 %v950
        %v4191 = vunpack.c.h.b16 %v950
        %v4192 = vunpack.c.l.b16 %v951
        %v4193 = vunpack.c.h.b16 %v951
        %v4194 = vunpack.c.l.b16 %v952
        %v4195 = vunpack.c.h.b16 %v952
        %v4196 = vunpack.c.l.b16 %v953
        %v4197 = vunpack.c.h.b16 %v953
        %v4198 = vunpack.c.l.b16 %v954
        %v4199 = vunpack.c.h.b16 %v954
        %v4200 = vunpack.c.l.b16 %v955
        %v4201 = vunpack.c.h.b16 %v955
        %v4202 = vunpack.c.l.b16 %v956
        %v4203 = vunpack.c.h.b16 %v956
        %v4204 = vunpack.c.l.b16 %v957
        %v4205 = vunpack.c.h.b16 %v957
        %v4206 = vunpack.c.l.b16 %v958
        %v4207 = vunpack.c.h.b16 %v958
        %v4208 = vunpack.c.l.b16 %v959
        %v4209 = vunpack.c.h.b16 %v959
        %v4210 = vunpack.c.l.b16 %v960
        %v4211 = vunpack.c.h.b16 %v960
        %v4212 = vunpack.c.l.b16 %v961
        %v4213 = vunpack.c.h.b16 %v961
        %v4214 = vunpack.c.l.b16 %v962
        %v4215 = vunpack.c.h.b16 %v962
        %v4216 = vunpack.c.l.b16 %v963
        %v4217 = vunpack.c.h.b16 %v963
        %v4218 = vunpack.c.l.b16 %v964
        %v4219 = vunpack.c.h.b16 %v964
        %v4220 = vunpack.c.l.b16 %v965
        %v4221 = vunpack.c.h.b16 %v965
        %v4222 = vunpack.c.l.b16 %v966
        %v4223 = vunpack.c.h.b16 %v966
        %v4224 = vunpack.c.l.b16 %v967
        %v4225 = vunpack.c.h.b16 %v967
        %v4226 = vunpack.c.l.b16 %v968
        %v4227 = vunpack.c.h.b16 %v968
        %v4228 = vunpack.c.l.b16 %v969
        %v4229 = vunpack.c.h.b16 %v969
        %v4230 = vunpack.c.l.b16 %v970
        %v4231 = vunpack.c.h.b16 %v970
        %v4232 = vunpack.c.l.b16 %v971
        %v4233 = vunpack.c.h.b16 %v971
        %v4234 = vunpack.c.l.b16 %v972
        %v4235 = vunpack.c.h.b16 %v972
        %v4236 = vunpack.c.l.b16 %v973
        %v4237 = vunpack.c.h.b16 %v973
        %v4238 = vunpack.c.l.b16 %v974
        %v4239 = vunpack.c.h.b16 %v974
        %v4240 = vunpack.c.l.b16 %v975
        %v4241 = vunpack.c.h.b16 %v975
        %v4242 = vunpack.c.l.b16 %v976
        %v4243 = vunpack.c.h.b16 %v976
        %v4244 = vunpack.c.l.b16 %v977
        %v4245 = vunpack.c.h.b16 %v977
        %v4246 = vunpack.c.l.b16 %v978
        %v4247 = vunpack.c.h.b16 %v978
        %v4248 = vunpack.c.l.b16 %v979
        %v4249 = vunpack.c.h.b16 %v979
        %v4250 = vunpack.c.l.b16 %v980
        %v4251 = vunpack.c.h.b16 %v980
        %v4252 = vunpack.c.l.b16 %v981
        %v4253 = vunpack.c.h.b16 %v981
        %v4254 = vunpack.c.l.b16 %v982
        %v4255 = vunpack.c.h.b16 %v982
        %v4256 = vunpack.c.l.b16 %v983
        %v4257 = vunpack.c.h.b16 %v983
        %v4258 = vunpack.c.l.b16 %v984
        %v4259 = vunpack.c.h.b16 %v984
        %v4260 = vunpack.c.l.b16 %v985
        %v4261 = vunpack.c.h.b16 %v985
        %v4262 = vunpack.c.l.b16 %v986
        %v4263 = vunpack.c.h.b16 %v986
        %v4264 = vunpack.c.l.b16 %v987
        %v4265 = vunpack.c.h.b16 %v987
        %v4266 = vunpack.c.l.b16 %v988
        %v4267 = vunpack.c.h.b16 %v988
        %v4268 = vunpack.c.l.b16 %v989
        %v4269 = vunpack.c.h.b16 %v989
        %v4270 = vunpack.c.l.b16 %v990
        %v4271 = vunpack.c.h.b16 %v990
        %v4272 = vunpack.c.l.b16 %v991
        %v4273 = vunpack.c.h.b16 %v991
        %v4274 = vunpack.c.l.b16 %v992
        %v4275 = vunpack.c.h.b16 %v992
        %v4276 = vunpack.c.l.b16 %v993
        %v4277 = vunpack.c.h.b16 %v993
        %v4278 = vunpack.c.l.b16 %v994
        %v4279 = vunpack.c.h.b16 %v994
        %v4280 = vunpack.c.l.b16 %v995
        %v4281 = vunpack.c.h.b16 %v995
        %v4282 = vunpack.c.l.b16 %v996
        %v4283 = vunpack.c.h.b16 %v996
        %v4284 = vunpack.c.l.b16 %v997
        %v4285 = vunpack.c.h.b16 %v997
        %v4286 = vunpack.c.l.b16 %v998
        %v4287 = vunpack.c.h.b16 %v998
        %v4288 = vunpack.c.l.b16 %v999
        %v4289 = vunpack.c.h.b16 %v999
        %v4290 = vunpack.c.l.b16 %v1000
        %v4291 = vunpack.c.h.b16 %v1000
        %v4292 = vunpack.c.l.b16 %v1001
        %v4293 = vunpack.c.h.b16 %v1001
        %v4294 = vunpack.c.l.b16 %v1002
        %v4295 = vunpack.c.h.b16 %v1002
        %v4296 = vunpack.c.l.b16 %v1003
        %v4297 = vunpack.c.h.b16 %v1003
        %v4298 = vunpack.c.l.b16 %v1004
        %v4299 = vunpack.c.h.b16 %v1004
        %v4300 = vunpack.c.l.b16 %v1005
        %v4301 = vunpack.c.h.b16 %v1005
        %v4302 = vunpack.c.l.b16 %v1006
        %v4303 = vunpack.c.h.b16 %v1006
        %v4304 = vunpack.c.l.b16 %v1007
        %v4305 = vunpack.c.h.b16 %v1007
        %v4306 = vunpack.c.l.b16 %v1008
        %v4307 = vunpack.c.h.b16 %v1008
        %v4308 = vunpack.c.l.b16 %v1009
        %v4309 = vunpack.c.h.b16 %v1009
        %v4310 = vunpack.c.l.b16 %v1010
        %v4311 = vunpack.c.h.b16 %v1010
        %v4312 = vunpack.c.l.b16 %v1011
        %v4313 = vunpack.c.h.b16 %v1011
        %v4314 = vunpack.c.l.b16 %v1012
        %v4315 = vunpack.c.h.b16 %v1012
        %v4316 = vunpack.c.l.b16 %v1013
        %v4317 = vunpack.c.h.b16 %v1013
        %v4318 = vunpack.c.l.b16 %v1014
        %v4319 = vunpack.c.h.b16 %v1014
        %v4320 = vunpack.c.l.b16 %v1015
        %v4321 = vunpack.c.h.b16 %v1015
        %v4322 = vunpack.c.l.b16 %v1016
        %v4323 = vunpack.c.h.b16 %v1016
        %v4324 = vunpack.c.l.b16 %v1017
        %v4325 = vunpack.c.h.b16 %v1017
        %v4326 = vunpack.c.l.b16 %v1018
        %v4327 = vunpack.c.h.b16 %v1018
        %v4328 = vunpack.c.l.b16 %v1019
        %v4329 = vunpack.c.h.b16 %v1019
        %v4330 = vunpack.c.l.b16 %v1020
        %v4331 = vunpack.c.h.b16 %v1020
        %v4332 = vunpack.c.l.b16 %v1021
        %v4333 = vunpack.c.h.b16 %v1021
        %v4334 = vunpack.c.l.b16 %v1022
        %v4335 = vunpack.c.h.b16 %v1022
        %v4336 = vunpack.c.l.b16 %v1023
        %v4337 = vunpack.c.h.b16 %v1023
        %v4338 = vunpack.c.l.b16 %v1024
        %v4339 = vunpack.c.h.b16 %v1024
        %v4340 = vunpack.c.l.b16 %v1025
        %v4341 = vunpack.c.h.b16 %v1025
        %v4342 = vunpack.c.l.b16 %v1026
        %v4343 = vunpack.c.h.b16 %v1026
        %v4344 = vunpack.c.l.b16 %v1027
        %v4345 = vunpack.c.h.b16 %v1027
        %v4346 = vunpack.c.l.b16 %v1028
        %v4347 = vunpack.c.h.b16 %v1028
        %v4348 = vunpack.c.l.b16 %v1029
        %v4349 = vunpack.c.h.b16 %v1029
        %v4350 = vunpack.c.l.b16 %v1030
        %v4351 = vunpack.c.h.b16 %v1030
        %v4352 = vunpack.c.l.b16 %v1031
        %v4353 = vunpack.c.h.b16 %v1031
        %v4354 = vunpack.c.l.b16 %v1032
        %v4355 = vunpack.c.h.b16 %v1032
        %v4356 = vunpack.c.l.b16 %v1033
        %v4357 = vunpack.c.h.b16 %v1033
        %v4358 = vunpack.c.l.b16 %v1034
        %v4359 = vunpack.c.h.b16 %v1034
        %v4360 = vunpack.c.l.b16 %v1035
        %v4361 = vunpack.c.h.b16 %v1035
        %v4362 = vunpack.c.l.b16 %v1036
        %v4363 = vunpack.c.h.b16 %v1036
        %v4364 = vunpack.c.l.b16 %v1037
        %v4365 = vunpack.c.h.b16 %v1037
        %v4366 = vunpack.c.l.b16 %v1038
        %v4367 = vunpack.c.h.b16 %v1038
        %v4368 = vunpack.c.l.b16 %v1039
        %v4369 = vunpack.c.h.b16 %v1039
        %v4370 = vunpack.c.l.b16 %v1040
        %v4371 = vunpack.c.h.b16 %v1040
        %v4372 = vunpack.c.l.b16 %v1041
        %v4373 = vunpack.c.h.b16 %v1041
        %v4374 = vunpack.c.l.b16 %v1042
        %v4375 = vunpack.c.h.b16 %v1042
        %v4376 = vunpack.c.l.b16 %v1043
        %v4377 = vunpack.c.h.b16 %v1043
        %v4378 = vunpack.c.l.b16 %v1044
        %v4379 = vunpack.c.h.b16 %v1044
        %v4380 = vunpack.c.l.b16 %v1045
        %v4381 = vunpack.c.h.b16 %v1045
        %v4382 = vunpack.c.l.b16 %v1046
        %v4383 = vunpack.c.h.b16 %v1046
        %v4384 = vunpack.c.l.b16 %v1047
        %v4385 = vunpack.c.h.b16 %v1047
        %v4386 = vunpack.c.l.b16 %v1048
        %v4387 = vunpack.c.h.b16 %v1048
        %v4388 = vunpack.c.l.b16 %v1049
        %v4389 = vunpack.c.h.b16 %v1049
        %v4390 = vunpack.c.l.b16 %v1050
        %v4391 = vunpack.c.h.b16 %v1050
        %v4392 = vunpack.c.l.b16 %v1051
        %v4393 = vunpack.c.h.b16 %v1051
        %v4394 = vunpack.c.l.b16 %v1052
        %v4395 = vunpack.c.h.b16 %v1052
        %v4396 = vunpack.c.l.b16 %v1053
        %v4397 = vunpack.c.h.b16 %v1053
        %v4398 = vunpack.c.l.b16 %v1054
        %v4399 = vunpack.c.h.b16 %v1054
        %v4400 = vunpack.c.l.b16 %v1055
        %v4401 = vunpack.c.h.b16 %v1055
        %v4402 = vunpack.c.l.b16 %v1056
        %v4403 = vunpack.c.h.b16 %v1056
        %v4404 = vunpack.c.l.b16 %v1057
        %v4405 = vunpack.c.h.b16 %v1057
        %v4406 = vunpack.c.l.b16 %v1058
        %v4407 = vunpack.c.h.b16 %v1058
        %v4408 = vunpack.c.l.b16 %v1059
        %v4409 = vunpack.c.h.b16 %v1059
        %v4410 = vunpack.c.l.b16 %v1060
        %v4411 = vunpack.c.h.b16 %v1060
        %v4412 = vunpack.c.l.b16 %v1061
        %v4413 = vunpack.c.h.b16 %v1061
        %v4414 = vunpack.c.l.b16 %v1062
        %v4415 = vunpack.c.h.b16 %v1062
        %v4416 = vunpack.c.l.b16 %v1063
        %v4417 = vunpack.c.h.b16 %v1063
        %v4418 = vunpack.c.l.b16 %v1064
        %v4419 = vunpack.c.h.b16 %v1064
        %v4420 = vunpack.c.l.b16 %v1065
        %v4421 = vunpack.c.h.b16 %v1065
        %v4422 = vunpack.c.l.b16 %v1066
        %v4423 = vunpack.c.h.b16 %v1066
        %v4424 = vunpack.c.l.b16 %v1067
        %v4425 = vunpack.c.h.b16 %v1067
        %v4426 = vunpack.c.l.b16 %v1068
        %v4427 = vunpack.c.h.b16 %v1068
        %v4428 = vunpack.c.l.b16 %v1069
        %v4429 = vunpack.c.h.b16 %v1069
        %v4430 = vunpack.c.l.b16 %v1070
        %v4431 = vunpack.c.h.b16 %v1070
        %v4432 = vunpack.c.l.b16 %v1071
        %v4433 = vunpack.c.h.b16 %v1071
        %v4434 = vunpack.c.l.b16 %v1072
        %v4435 = vunpack.c.h.b16 %v1072
        %v4436 = vunpack.c.l.b16 %v1073
        %v4437 = vunpack.c.h.b16 %v1073
        %v4438 = vunpack.c.l.b16 %v1074
        %v4439 = vunpack.c.h.b16 %v1074
        %v4440 = vunpack.c.l.b16 %v1075
        %v4441 = vunpack.c.h.b16 %v1075
        %v4442 = vunpack.c.l.b16 %v1076
        %v4443 = vunpack.c.h.b16 %v1076
        %v4444 = vunpack.c.l.b16 %v1077
        %v4445 = vunpack.c.h.b16 %v1077
        %v4446 = vunpack.c.l.b16 %v1078
        %v4447 = vunpack.c.h.b16 %v1078
        %v4448 = vunpack.c.l.b16 %v1079
        %v4449 = vunpack.c.h.b16 %v1079
        %v4450 = vunpack.c.l.b16 %v1080
        %v4451 = vunpack.c.h.b16 %v1080
        %v4452 = vunpack.c.l.b16 %v1081
        %v4453 = vunpack.c.h.b16 %v1081
        %v4454 = vunpack.c.l.b16 %v1082
        %v4455 = vunpack.c.h.b16 %v1082
        %v4456 = vunpack.c.l.b16 %v1083
        %v4457 = vunpack.c.h.b16 %v1083
        %v4458 = vunpack.c.l.b16 %v1084
        %v4459 = vunpack.c.h.b16 %v1084
        %v4460 = vunpack.c.l.b16 %v1085
        %v4461 = vunpack.c.h.b16 %v1085
        %v4462 = vunpack.c.l.b16 %v1086
        %v4463 = vunpack.c.h.b16 %v1086
        %v4464 = vunpack.c.l.b16 %v1087
        %v4465 = vunpack.c.h.b16 %v1087
        %v4466 = vunpack.c.l.b16 %v1088
        %v4467 = vunpack.c.h.b16 %v1088
        %v4468 = vunpack.c.l.b16 %v1089
        %v4469 = vunpack.c.h.b16 %v1089
        %v4470 = vunpack.c.l.b16 %v1090
        %v4471 = vunpack.c.h.b16 %v1090
        %v4472 = vunpack.c.l.b16 %v1091
        %v4473 = vunpack.c.h.b16 %v1091
        %v4474 = vunpack.c.l.b16 %v1092
        %v4475 = vunpack.c.h.b16 %v1092
        %v4476 = vunpack.c.l.b16 %v1093
        %v4477 = vunpack.c.h.b16 %v1093
        %v4478 = vunpack.c.l.b16 %v1094
        %v4479 = vunpack.c.h.b16 %v1094
        %v4480 = vunpack.c.l.b16 %v1095
        %v4481 = vunpack.c.h.b16 %v1095
        %v4482 = vunpack.c.l.b16 %v1096
        %v4483 = vunpack.c.h.b16 %v1096
        %v4484 = vunpack.c.l.b16 %v1097
        %v4485 = vunpack.c.h.b16 %v1097
        %v4486 = vunpack.c.l.b16 %v1098
        %v4487 = vunpack.c.h.b16 %v1098
        %v4488 = vunpack.c.l.b16 %v1099
        %v4489 = vunpack.c.h.b16 %v1099
        %v4490 = vunpack.c.l.b16 %v1100
        %v4491 = vunpack.c.h.b16 %v1100
        %v4492 = vunpack.c.l.b16 %v1101
        %v4493 = vunpack.c.h.b16 %v1101
        %v4494 = vunpack.c.l.b16 %v1102
        %v4495 = vunpack.c.h.b16 %v1102
        %v4496 = vunpack.c.l.b16 %v1103
        %v4497 = vunpack.c.h.b16 %v1103
        %v4498 = vunpack.c.l.b16 %v1104
        %v4499 = vunpack.c.h.b16 %v1104
        %v4500 = vunpack.c.l.b16 %v1105
        %v4501 = vunpack.c.h.b16 %v1105
        %v4502 = vunpack.c.l.b16 %v1106
        %v4503 = vunpack.c.h.b16 %v1106
        %v4504 = vunpack.c.l.b16 %v1107
        %v4505 = vunpack.c.h.b16 %v1107
        %v4506 = vunpack.c.l.b16 %v1108
        %v4507 = vunpack.c.h.b16 %v1108
        %v4508 = vunpack.c.l.b16 %v1109
        %v4509 = vunpack.c.h.b16 %v1109
        %v4510 = vunpack.c.l.b16 %v1110
        %v4511 = vunpack.c.h.b16 %v1110
        %v4512 = vunpack.c.l.b16 %v1111
        %v4513 = vunpack.c.h.b16 %v1111
        %v4514 = vunpack.c.l.b16 %v1112
        %v4515 = vunpack.c.h.b16 %v1112
        %v4516 = vunpack.c.l.b16 %v1113
        %v4517 = vunpack.c.h.b16 %v1113
        %v4518 = vunpack.c.l.b16 %v1114
        %v4519 = vunpack.c.h.b16 %v1114
        %v4520 = vunpack.c.l.b16 %v1115
        %v4521 = vunpack.c.h.b16 %v1115
        %v4522 = vunpack.c.l.b16 %v1116
        %v4523 = vunpack.c.h.b16 %v1116
        %v4524 = vunpack.c.l.b16 %v1117
        %v4525 = vunpack.c.h.b16 %v1117
        %v4526 = vunpack.c.l.b16 %v1118
        %v4527 = vunpack.c.h.b16 %v1118
        %v4528 = vunpack.c.l.b16 %v1119
        %v4529 = vunpack.c.h.b16 %v1119
        %v4530 = vunpack.c.l.b16 %v1120
        %v4531 = vunpack.c.h.b16 %v1120
        %v4532 = vunpack.c.l.b16 %v1121
        %v4533 = vunpack.c.h.b16 %v1121
        %v4534 = vunpack.c.l.b16 %v1122
        %v4535 = vunpack.c.h.b16 %v1122
        %v4536 = vunpack.c.l.b16 %v1123
        %v4537 = vunpack.c.h.b16 %v1123
        %v4538 = vunpack.c.l.b16 %v1124
        %v4539 = vunpack.c.h.b16 %v1124
        %v4540 = vunpack.c.l.b16 %v1125
        %v4541 = vunpack.c.h.b16 %v1125
        %v4542 = vunpack.c.l.b16 %v1126
        %v4543 = vunpack.c.h.b16 %v1126
        %v4544 = vunpack.c.l.b16 %v1127
        %v4545 = vunpack.c.h.b16 %v1127
        %v4546 = vunpack.c.l.b16 %v1128
        %v4547 = vunpack.c.h.b16 %v1128
        %v4548 = vunpack.c.l.b16 %v1129
        %v4549 = vunpack.c.h.b16 %v1129
        %v4550 = vunpack.c.l.b16 %v1130
        %v4551 = vunpack.c.h.b16 %v1130
        %v4552 = vunpack.c.l.b16 %v1131
        %v4553 = vunpack.c.h.b16 %v1131
        %v4554 = vunpack.c.l.b16 %v1132
        %v4555 = vunpack.c.h.b16 %v1132
        %v4556 = vunpack.c.l.b16 %v1133
        %v4557 = vunpack.c.h.b16 %v1133
        %v4558 = vunpack.c.l.b16 %v1134
        %v4559 = vunpack.c.h.b16 %v1134
        %v4560 = vunpack.c.l.b16 %v1135
        %v4561 = vunpack.c.h.b16 %v1135
        %v4562 = vunpack.c.l.b16 %v1136
        %v4563 = vunpack.c.h.b16 %v1136
        %v4564 = vunpack.c.l.b16 %v1137
        %v4565 = vunpack.c.h.b16 %v1137
        %v4566 = vunpack.c.l.b16 %v1138
        %v4567 = vunpack.c.h.b16 %v1138
        %v4568 = vunpack.c.l.b16 %v1139
        %v4569 = vunpack.c.h.b16 %v1139
        %v4570 = vunpack.c.l.b16 %v1140
        %v4571 = vunpack.c.h.b16 %v1140
        %v4572 = vunpack.c.l.b16 %v1141
        %v4573 = vunpack.c.h.b16 %v1141
        %v4574 = vunpack.c.l.b16 %v1142
        %v4575 = vunpack.c.h.b16 %v1142
        %v4576 = vunpack.c.l.b16 %v1143
        %v4577 = vunpack.c.h.b16 %v1143
        %v4578 = vunpack.c.l.b16 %v1144
        %v4579 = vunpack.c.h.b16 %v1144
        %v4580 = vunpack.c.l.b16 %v1145
        %v4581 = vunpack.c.h.b16 %v1145
        %v4582 = vunpack.c.l.b16 %v1146
        %v4583 = vunpack.c.h.b16 %v1146
        %v4584 = vunpack.c.l.b16 %v1147
        %v4585 = vunpack.c.h.b16 %v1147
        %v4586 = vunpack.c.l.b16 %v1148
        %v4587 = vunpack.c.h.b16 %v1148
        %v4588 = vunpack.c.l.b16 %v1149
        %v4589 = vunpack.c.h.b16 %v1149
        %v4590 = vunpack.c.l.b16 %v1150
        %v4591 = vunpack.c.h.b16 %v1150
        %v4592 = vunpack.c.l.b16 %v1151
        %v4593 = vunpack.c.h.b16 %v1151
        %v4594 = vunpack.c.l.b16 %v1152
        %v4595 = vunpack.c.h.b16 %v1152
        %v4596 = vunpack.c.l.b16 %v1153
        %v4597 = vunpack.c.h.b16 %v1153
        %v4598 = vunpack.c.l.b16 %v1154
        %v4599 = vunpack.c.h.b16 %v1154
        %v4600 = vunpack.c.l.b16 %v1155
        %v4601 = vunpack.c.h.b16 %v1155
        %v4602 = vunpack.c.l.b16 %v1156
        %v4603 = vunpack.c.h.b16 %v1156
        %v4604 = vunpack.c.l.b16 %v1157
        %v4605 = vunpack.c.h.b16 %v1157
        %v4606 = vunpack.c.l.b16 %v1158
        %v4607 = vunpack.c.h.b16 %v1158
        %v4608 = vunpack.c.l.b16 %v1159
        %v4609 = vunpack.c.h.b16 %v1159
        %v4610 = vunpack.c.l.b16 %v1160
        %v4611 = vunpack.c.h.b16 %v1160
        %v4612 = vunpack.c.l.b16 %v1161
        %v4613 = vunpack.c.h.b16 %v1161
        %v4614 = vunpack.c.l.b16 %v1162
        %v4615 = vunpack.c.h.b16 %v1162
        %v4616 = vunpack.c.l.b16 %v1163
        %v4617 = vunpack.c.h.b16 %v1163
        %v4618 = vunpack.c.l.b16 %v1164
        %v4619 = vunpack.c.h.b16 %v1164
        %v4620 = vunpack.c.l.b16 %v1165
        %v4621 = vunpack.c.h.b16 %v1165
        %v4622 = vunpack.c.l.b16 %v1166
        %v4623 = vunpack.c.h.b16 %v1166
        %v4624 = vunpack.c.l.b16 %v1167
        %v4625 = vunpack.c.h.b16 %v1167
        %v4626 = vunpack.c.l.b16 %v1168
        %v4627 = vunpack.c.h.b16 %v1168
        %v4628 = vunpack.c.l.b16 %v1169
        %v4629 = vunpack.c.h.b16 %v1169
        %v4630 = vunpack.c.l.b16 %v1170
        %v4631 = vunpack.c.h.b16 %v1170
        %v4632 = vunpack.c.l.b16 %v1171
        %v4633 = vunpack.c.h.b16 %v1171
        %v4634 = vunpack.c.l.b16 %v1172
        %v4635 = vunpack.c.h.b16 %v1172
        %v4636 = vunpack.c.l.b16 %v1173
        %v4637 = vunpack.c.h.b16 %v1173
        %v4638 = vunpack.c.l.b16 %v1174
        %v4639 = vunpack.c.h.b16 %v1174
        %v4640 = vunpack.c.l.b16 %v1175
        %v4641 = vunpack.c.h.b16 %v1175
        %v4642 = vunpack.c.l.b16 %v1176
        %v4643 = vunpack.c.h.b16 %v1176
        %v4644 = vunpack.c.l.b16 %v1177
        %v4645 = vunpack.c.h.b16 %v1177
        %v4646 = vunpack.c.l.b16 %v1178
        %v4647 = vunpack.c.h.b16 %v1178
        %v4648 = vunpack.c.l.b16 %v1179
        %v4649 = vunpack.c.h.b16 %v1179
        %v4650 = vunpack.c.l.b16 %v1180
        %v4651 = vunpack.c.h.b16 %v1180
        %v4652 = vunpack.c.l.b16 %v1181
        %v4653 = vunpack.c.h.b16 %v1181
        %v4654 = vunpack.c.l.b16 %v1182
        %v4655 = vunpack.c.h.b16 %v1182
        %v4656 = vunpack.c.l.b16 %v1183
        %v4657 = vunpack.c.h.b16 %v1183
        %v4658 = vunpack.c.l.b16 %v1184
        %v4659 = vunpack.c.h.b16 %v1184
        %v4660 = vunpack.c.l.b16 %v1185
        %v4661 = vunpack.c.h.b16 %v1185
        %v4662 = vunpack.c.l.b16 %v1186
        %v4663 = vunpack.c.h.b16 %v1186
        %v4664 = vunpack.c.l.b16 %v1187
        %v4665 = vunpack.c.h.b16 %v1187
        %v4666 = vunpack.c.l.b16 %v1188
        %v4667 = vunpack.c.h.b16 %v1188
        %v4668 = vunpack.c.l.b16 %v1189
        %v4669 = vunpack.c.h.b16 %v1189
        %v4670 = vunpack.c.l.b16 %v1190
        %v4671 = vunpack.c.h.b16 %v1190
        %v4672 = vunpack.c.l.b16 %v1191
        %v4673 = vunpack.c.h.b16 %v1191
        %v4674 = vunpack.c.l.b16 %v1192
        %v4675 = vunpack.c.h.b16 %v1192
        %v4676 = vunpack.c.l.b16 %v1193
        %v4677 = vunpack.c.h.b16 %v1193
        %v4678 = vunpack.c.l.b16 %v1194
        %v4679 = vunpack.c.h.b16 %v1194
        %v4680 = vunpack.c.l.b16 %v1195
        %v4681 = vunpack.c.h.b16 %v1195
        %v4682 = vunpack.c.l.b16 %v1196
        %v4683 = vunpack.c.h.b16 %v1196
        %v4684 = vunpack.c.l.b16 %v1197
        %v4685 = vunpack.c.h.b16 %v1197
        %v4686 = vunpack.c.l.b16 %v1198
        %v4687 = vunpack.c.h.b16 %v1198
        %v4688 = vunpack.c.l.b16 %v1199
        %v4689 = vunpack.c.h.b16 %v1199
        %v4690 = vunpack.c.l.b16 %v1200
        %v4691 = vunpack.c.h.b16 %v1200
        %v4692 = vunpack.c.l.b16 %v1201
        %v4693 = vunpack.c.h.b16 %v1201
        %v4694 = vunpack.c.l.b16 %v1202
        %v4695 = vunpack.c.h.b16 %v1202
        %v4696 = vunpack.c.l.b16 %v1203
        %v4697 = vunpack.c.h.b16 %v1203
        %v4698 = vunpack.c.l.b16 %v1204
        %v4699 = vunpack.c.h.b16 %v1204
        %v4700 = vunpack.c.l.b16 %v1205
        %v4701 = vunpack.c.h.b16 %v1205
        %v4702 = vunpack.c.l.b16 %v1206
        %v4703 = vunpack.c.h.b16 %v1206
        %v4704 = vunpack.c.l.b16 %v1207
        %v4705 = vunpack.c.h.b16 %v1207
        %v4706 = vunpack.c.l.b16 %v1208
        %v4707 = vunpack.c.h.b16 %v1208
        %v4708 = vunpack.c.l.b16 %v1209
        %v4709 = vunpack.c.h.b16 %v1209
        %v4710 = vunpack.c.l.b16 %v1210
        %v4711 = vunpack.c.h.b16 %v1210
        %v4712 = vunpack.c.l.b16 %v1211
        %v4713 = vunpack.c.h.b16 %v1211
        %v4714 = vunpack.c.l.b16 %v1212
        %v4715 = vunpack.c.h.b16 %v1212
        %v4716 = vunpack.c.l.b16 %v1213
        %v4717 = vunpack.c.h.b16 %v1213
        %v4718 = vunpack.c.l.b16 %v1214
        %v4719 = vunpack.c.h.b16 %v1214
        %v4720 = vunpack.c.l.b16 %v1215
        %v4721 = vunpack.c.h.b16 %v1215
        %v4722 = vunpack.c.l.b16 %v1216
        %v4723 = vunpack.c.h.b16 %v1216
        %v4724 = vunpack.c.l.b16 %v1217
        %v4725 = vunpack.c.h.b16 %v1217
        %v4726 = vunpack.c.l.b16 %v1218
        %v4727 = vunpack.c.h.b16 %v1218
        %v4728 = vunpack.c.l.b16 %v1219
        %v4729 = vunpack.c.h.b16 %v1219
        %v4730 = vunpack.c.l.b16 %v1220
        %v4731 = vunpack.c.h.b16 %v1220
        %v4732 = vunpack.c.l.b16 %v1221
        %v4733 = vunpack.c.h.b16 %v1221
        %v4734 = vunpack.c.l.b16 %v1222
        %v4735 = vunpack.c.h.b16 %v1222
        %v4736 = vunpack.c.l.b16 %v1223
        %v4737 = vunpack.c.h.b16 %v1223
        %v4738 = vunpack.c.l.b16 %v1224
        %v4739 = vunpack.c.h.b16 %v1224
        %v4740 = vunpack.c.l.b16 %v1225
        %v4741 = vunpack.c.h.b16 %v1225
        %v4742 = vunpack.c.l.b16 %v1226
        %v4743 = vunpack.c.h.b16 %v1226
        %v4744 = vunpack.c.l.b16 %v1227
        %v4745 = vunpack.c.h.b16 %v1227
        %v4746 = vunpack.c.l.b16 %v1228
        %v4747 = vunpack.c.h.b16 %v1228
        %v4748 = vunpack.c.l.b16 %v1229
        %v4749 = vunpack.c.h.b16 %v1229
        %v4750 = vunpack.c.l.b16 %v1230
        %v4751 = vunpack.c.h.b16 %v1230
        %v4752 = vunpack.c.l.b16 %v1231
        %v4753 = vunpack.c.h.b16 %v1231
        %v4754 = vunpack.c.l.b16 %v1232
        %v4755 = vunpack.c.h.b16 %v1232
        %v4756 = vunpack.c.l.b16 %v1233
        %v4757 = vunpack.c.h.b16 %v1233
        %v4758 = vunpack.c.l.b16 %v1234
        %v4759 = vunpack.c.h.b16 %v1234
        %v4760 = vunpack.c.l.b16 %v1235
        %v4761 = vunpack.c.h.b16 %v1235
        %v4762 = vunpack.c.l.b16 %v1236
        %v4763 = vunpack.c.h.b16 %v1236
        %v4764 = vunpack.c.l.b16 %v1237
        %v4765 = vunpack.c.h.b16 %v1237
        %v4766 = vunpack.c.l.b16 %v1238
        %v4767 = vunpack.c.h.b16 %v1238
        %v4768 = vunpack.c.l.b16 %v1239
        %v4769 = vunpack.c.h.b16 %v1239
        %v4770 = vunpack.c.l.b16 %v1240
        %v4771 = vunpack.c.h.b16 %v1240
        %v4772 = vunpack.c.l.b16 %v1241
        %v4773 = vunpack.c.h.b16 %v1241
        %v4774 = vunpack.c.l.b16 %v1242
        %v4775 = vunpack.c.h.b16 %v1242
        %v4776 = vunpack.c.l.b16 %v1243
        %v4777 = vunpack.c.h.b16 %v1243
        %v4778 = vunpack.c.l.b16 %v1244
        %v4779 = vunpack.c.h.b16 %v1244
        %v4780 = vunpack.c.l.b16 %v1245
        %v4781 = vunpack.c.h.b16 %v1245
        %v4782 = vunpack.c.l.b16 %v1246
        %v4783 = vunpack.c.h.b16 %v1246
        %v4784 = vunpack.c.l.b16 %v1247
        %v4785 = vunpack.c.h.b16 %v1247
        %v4786 = vunpack.c.l.b16 %v1248
        %v4787 = vunpack.c.h.b16 %v1248
        %v4788 = vunpack.c.l.b16 %v1249
        %v4789 = vunpack.c.h.b16 %v1249
        %v4790 = vunpack.c.l.b16 %v1250
        %v4791 = vunpack.c.h.b16 %v1250
        %v4792 = vunpack.c.l.b16 %v1251
        %v4793 = vunpack.c.h.b16 %v1251
        %v4794 = vunpack.c.l.b16 %v1252
        %v4795 = vunpack.c.h.b16 %v1252
        %v4796 = vunpack.c.l.b16 %v1253
        %v4797 = vunpack.c.h.b16 %v1253
        %v4798 = vunpack.c.l.b16 %v1254
        %v4799 = vunpack.c.h.b16 %v1254
        %v4800 = vunpack.c.l.b16 %v1255
        %v4801 = vunpack.c.h.b16 %v1255
        %v4802 = vunpack.c.l.b16 %v1256
        %v4803 = vunpack.c.h.b16 %v1256
        %v4804 = vunpack.c.l.b16 %v1257
        %v4805 = vunpack.c.h.b16 %v1257
        %v4806 = vunpack.c.l.b16 %v1258
        %v4807 = vunpack.c.h.b16 %v1258
        %v4808 = vunpack.c.l.b16 %v1259
        %v4809 = vunpack.c.h.b16 %v1259
        %v4810 = vunpack.c.l.b16 %v1260
        %v4811 = vunpack.c.h.b16 %v1260
        %v4812 = vunpack.c.l.b16 %v1261
        %v4813 = vunpack.c.h.b16 %v1261
        %v4814 = vunpack.c.l.b16 %v1262
        %v4815 = vunpack.c.h.b16 %v1262
        %v4816 = vunpack.c.l.b16 %v1263
        %v4817 = vunpack.c.h.b16 %v1263
        %v4818 = vunpack.c.l.b16 %v1264
        %v4819 = vunpack.c.h.b16 %v1264
        %v4820 = vunpack.c.l.b16 %v1265
        %v4821 = vunpack.c.h.b16 %v1265
        %v4822 = vunpack.c.l.b16 %v1266
        %v4823 = vunpack.c.h.b16 %v1266
        %v4824 = vunpack.c.l.b16 %v1267
        %v4825 = vunpack.c.h.b16 %v1267
        %v4826 = vunpack.c.l.b16 %v1268
        %v4827 = vunpack.c.h.b16 %v1268
        %v4828 = vunpack.c.l.b16 %v1269
        %v4829 = vunpack.c.h.b16 %v1269
        %v4830 = vunpack.c.l.b16 %v1270
        %v4831 = vunpack.c.h.b16 %v1270
        %v4832 = vunpack.c.l.b16 %v1271
        %v4833 = vunpack.c.h.b16 %v1271
        %v4834 = vunpack.c.l.b16 %v1272
        %v4835 = vunpack.c.h.b16 %v1272
        %v4836 = vunpack.c.l.b16 %v1273
        %v4837 = vunpack.c.h.b16 %v1273
        %v4838 = vunpack.c.l.b16 %v1274
        %v4839 = vunpack.c.h.b16 %v1274
        %v4840 = vunpack.c.l.b16 %v1275
        %v4841 = vunpack.c.h.b16 %v1275
        %v4842 = vunpack.c.l.b16 %v1276
        %v4843 = vunpack.c.h.b16 %v1276
        %v4844 = vunpack.c.l.b16 %v1277
        %v4845 = vunpack.c.h.b16 %v1277
        %v4846 = vunpack.c.l.b16 %v1278
        %v4847 = vunpack.c.h.b16 %v1278
        %v4848 = vunpack.c.l.b16 %v1279
        %v4849 = vunpack.c.h.b16 %v1279
        %v4850 = vunpack.c.l.b16 %v1280
        %v4851 = vunpack.c.h.b16 %v1280
        %v4852 = vunpack.c.l.b16 %v1281
        %v4853 = vunpack.c.h.b16 %v1281
        %v4854 = vunpack.c.l.b16 %v1282
        %v4855 = vunpack.c.h.b16 %v1282
        %v4856 = vunpack.c.l.b16 %v1283
        %v4857 = vunpack.c.h.b16 %v1283
        %v4858 = vunpack.c.l.b16 %v1284
        %v4859 = vunpack.c.h.b16 %v1284
        %v4860 = vunpack.c.l.b16 %v1285
        %v4861 = vunpack.c.h.b16 %v1285
        %v4862 = vunpack.c.l.b16 %v1286
        %v4863 = vunpack.c.h.b16 %v1286
        %v4864 = vunpack.c.l.b16 %v1287
        %v4865 = vunpack.c.h.b16 %v1287
        %v4866 = vunpack.c.l.b16 %v1288
        %v4867 = vunpack.c.h.b16 %v1288
        %v4868 = vunpack.c.l.b16 %v1289
        %v4869 = vunpack.c.h.b16 %v1289
        %v4870 = vunpack.c.l.b16 %v1290
        %v4871 = vunpack.c.h.b16 %v1290
        %v4872 = vunpack.c.l.b16 %v1291
        %v4873 = vunpack.c.h.b16 %v1291
        %v4874 = vunpack.c.l.b16 %v1292
        %v4875 = vunpack.c.h.b16 %v1292
        %v4876 = vunpack.c.l.b16 %v1293
        %v4877 = vunpack.c.h.b16 %v1293
        %v4878 = vunpack.c.l.b16 %v1294
        %v4879 = vunpack.c.h.b16 %v1294
        %v4880 = vunpack.c.l.b16 %v1295
        %v4881 = vunpack.c.h.b16 %v1295
        %v4882 = vunpack.c.l.b16 %v1296
        %v4883 = vunpack.c.h.b16 %v1296
        %v4884 = vunpack.c.l.b16 %v1297
        %v4885 = vunpack.c.h.b16 %v1297
        %v4886 = vunpack.c.l.b16 %v1298
        %v4887 = vunpack.c.h.b16 %v1298
        %v4888 = vunpack.c.l.b16 %v1299
        %v4889 = vunpack.c.h.b16 %v1299
        %v4890 = vunpack.c.l.b16 %v1300
        %v4891 = vunpack.c.h.b16 %v1300
        %v4892 = vunpack.c.l.b16 %v1301
        %v4893 = vunpack.c.h.b16 %v1301
        %v4894 = vunpack.c.l.b16 %v1302
        %v4895 = vunpack.c.h.b16 %v1302
        %v4896 = vunpack.c.l.b16 %v1303
        %v4897 = vunpack.c.h.b16 %v1303
        %v4898 = vunpack.c.l.b16 %v1304
        %v4899 = vunpack.c.h.b16 %v1304
        %v4900 = vunpack.c.l.b16 %v1305
        %v4901 = vunpack.c.h.b16 %v1305
        %v4902 = vunpack.c.l.b16 %v1306
        %v4903 = vunpack.c.h.b16 %v1306
        %v4904 = vunpack.c.l.b16 %v1307
        %v4905 = vunpack.c.h.b16 %v1307
        %v4906 = vunpack.c.l.b16 %v1308
        %v4907 = vunpack.c.h.b16 %v1308
        %v4908 = vunpack.c.l.b16 %v1309
        %v4909 = vunpack.c.h.b16 %v1309
        %v4910 = vunpack.c.l.b16 %v1310
        %v4911 = vunpack.c.h.b16 %v1310
        %v4912 = vunpack.c.l.b16 %v1311
        %v4913 = vunpack.c.h.b16 %v1311
        %v4914 = vunpack.c.l.b16 %v1312
        %v4915 = vunpack.c.h.b16 %v1312
        %v4916 = vunpack.c.l.b16 %v1313
        %v4917 = vunpack.c.h.b16 %v1313
        %v4918 = vunpack.c.l.b16 %v1314
        %v4919 = vunpack.c.h.b16 %v1314
        %v4920 = vunpack.c.l.b16 %v1315
        %v4921 = vunpack.c.h.b16 %v1315
        %v4922 = vunpack.c.l.b16 %v1316
        %v4923 = vunpack.c.h.b16 %v1316
        %v4924 = vunpack.c.l.b16 %v1317
        %v4925 = vunpack.c.h.b16 %v1317
        %v4926 = vunpack.c.l.b16 %v1318
        %v4927 = vunpack.c.h.b16 %v1318
        %v4928 = vunpack.c.l.b16 %v1319
        %v4929 = vunpack.c.h.b16 %v1319
        %v4930 = vunpack.c.l.b16 %v1320
        %v4931 = vunpack.c.h.b16 %v1320
        %v4932 = vunpack.c.l.b16 %v1321
        %v4933 = vunpack.c.h.b16 %v1321
        %v4934 = vunpack.c.l.b16 %v1322
        %v4935 = vunpack.c.h.b16 %v1322
        %v4936 = vunpack.c.l.b16 %v1323
        %v4937 = vunpack.c.h.b16 %v1323
        %v4938 = vunpack.c.l.b16 %v1324
        %v4939 = vunpack.c.h.b16 %v1324
        %v4940 = vunpack.c.l.b16 %v1325
        %v4941 = vunpack.c.h.b16 %v1325
        %v4942 = vunpack.c.l.b16 %v1326
        %v4943 = vunpack.c.h.b16 %v1326
        %v4944 = vunpack.c.l.b16 %v1327
        %v4945 = vunpack.c.h.b16 %v1327
        %v4946 = vunpack.c.l.b16 %v1328
        %v4947 = vunpack.c.h.b16 %v1328
        %v4948 = vunpack.c.l.b16 %v1329
        %v4949 = vunpack.c.h.b16 %v1329
        %v4950 = vunpack.c.l.b16 %v1330
        %v4951 = vunpack.c.h.b16 %v1330
        %v4952 = vunpack.c.l.b16 %v1331
        %v4953 = vunpack.c.h.b16 %v1331
        %v4954 = vunpack.c.l.b16 %v1332
        %v4955 = vunpack.c.h.b16 %v1332
        %v4956 = vunpack.c.l.b16 %v1333
        %v4957 = vunpack.c.h.b16 %v1333
        %v4958 = vunpack.c.l.b16 %v1334
        %v4959 = vunpack.c.h.b16 %v1334
        %v4960 = vunpack.c.l.b16 %v1335
        %v4961 = vunpack.c.h.b16 %v1335
        %v4962 = vunpack.c.l.b16 %v1336
        %v4963 = vunpack.c.h.b16 %v1336
        %v4964 = vunpack.c.l.b16 %v1337
        %v4965 = vunpack.c.h.b16 %v1337
        %v4966 = vunpack.c.l.b16 %v1338
        %v4967 = vunpack.c.h.b16 %v1338
        %v4968 = vunpack.c.l.b16 %v1339
        %v4969 = vunpack.c.h.b16 %v1339
        %v4970 = vunpack.c.l.b16 %v1340
        %v4971 = vunpack.c.h.b16 %v1340
        %v4972 = vunpack.c.l.b16 %v1341
        %v4973 = vunpack.c.h.b16 %v1341
        %v4974 = vunpack.c.l.b16 %v1342
        %v4975 = vunpack.c.h.b16 %v1342
        %v4976 = vunpack.c.l.b16 %v1343
        %v4977 = vunpack.c.h.b16 %v1343
        %v4978 = vunpack.c.l.b16 %v1344
        %v4979 = vunpack.c.h.b16 %v1344
        %v4980 = vunpack.c.l.b16 %v1345
        %v4981 = vunpack.c.h.b16 %v1345
        %v4982 = vunpack.c.l.b16 %v1346
        %v4983 = vunpack.c.h.b16 %v1346
        %v4984 = vunpack.c.l.b16 %v1347
        %v4985 = vunpack.c.h.b16 %v1347
        %v4986 = vunpack.c.l.b16 %v1348
        %v4987 = vunpack.c.h.b16 %v1348
        %v4988 = vunpack.c.l.b16 %v1349
        %v4989 = vunpack.c.h.b16 %v1349
        %v4990 = vunpack.c.l.b16 %v1350
        %v4991 = vunpack.c.h.b16 %v1350
        %v4992 = vunpack.c.l.b16 %v1351
        %v4993 = vunpack.c.h.b16 %v1351
        %v4994 = vunpack.c.l.b16 %v1352
        %v4995 = vunpack.c.h.b16 %v1352
        %v4996 = vunpack.c.l.b16 %v1353
        %v4997 = vunpack.c.h.b16 %v1353
        %v4998 = vunpack.c.l.b16 %v1354
        %v4999 = vunpack.c.h.b16 %v1354
        %v5000 = vunpack.c.l.b16 %v1355
        %v5001 = vunpack.c.h.b16 %v1355
        %v5002 = vunpack.c.l.b16 %v1356
        %v5003 = vunpack.c.h.b16 %v1356
        %v5004 = vunpack.c.l.b16 %v1357
        %v5005 = vunpack.c.h.b16 %v1357
        %v5006 = vunpack.c.l.b16 %v1358
        %v5007 = vunpack.c.h.b16 %v1358
        %v5008 = vunpack.c.l.b16 %v1359
        %v5009 = vunpack.c.h.b16 %v1359
        %v5010 = vunpack.c.l.b16 %v1360
        %v5011 = vunpack.c.h.b16 %v1360
        %v5012 = vunpack.c.l.b16 %v1361
        %v5013 = vunpack.c.h.b16 %v1361
        %v5014 = vunpack.c.l.b16 %v1362
        %v5015 = vunpack.c.h.b16 %v1362
        %v5016 = vunpack.c.l.b16 %v1363
        %v5017 = vunpack.c.h.b16 %v1363
        %v5018 = vunpack.c.l.b16 %v1364
        %v5019 = vunpack.c.h.b16 %v1364
        %v5020 = vunpack.c.l.b16 %v1365
        %v5021 = vunpack.c.h.b16 %v1365
        %v5022 = vunpack.c.l.b16 %v1366
        %v5023 = vunpack.c.h.b16 %v1366
        %v5024 = vunpack.c.l.b16 %v1367
        %v5025 = vunpack.c.h.b16 %v1367
        %v5026 = vunpack.c.l.b16 %v1368
        %v5027 = vunpack.c.h.b16 %v1368
        %v5028 = vunpack.c.l.b16 %v1369
        %v5029 = vunpack.c.h.b16 %v1369
        %v5030 = vunpack.c.l.b16 %v1370
        %v5031 = vunpack.c.h.b16 %v1370
        %v5032 = vunpack.c.l.b16 %v1371
        %v5033 = vunpack.c.h.b16 %v1371
        %v5034 = vunpack.c.l.b16 %v1372
        %v5035 = vunpack.c.h.b16 %v1372
        %v5036 = vunpack.c.l.b16 %v1373
        %v5037 = vunpack.c.h.b16 %v1373
        %v5038 = vunpack.c.l.b16 %v1374
        %v5039 = vunpack.c.h.b16 %v1374
        %v5040 = vunpack.c.l.b16 %v1375
        %v5041 = vunpack.c.h.b16 %v1375
        %v5042 = vunpack.c.l.b16 %v1376
        %v5043 = vunpack.c.h.b16 %v1376
        %v5044 = vunpack.c.l.b16 %v1377
        %v5045 = vunpack.c.h.b16 %v1377
        %v5046 = vunpack.c.l.b16 %v1378
        %v5047 = vunpack.c.h.b16 %v1378
        %v5048 = vunpack.c.l.b16 %v1379
        %v5049 = vunpack.c.h.b16 %v1379
        %v5050 = vunpack.c.l.b16 %v1380
        %v5051 = vunpack.c.h.b16 %v1380
        %v5052 = vunpack.c.l.b16 %v1381
        %v5053 = vunpack.c.h.b16 %v1381
        %v5054 = vunpack.c.l.b16 %v1382
        %v5055 = vunpack.c.h.b16 %v1382
        %v5056 = vunpack.c.l.b16 %v1383
        %v5057 = vunpack.c.h.b16 %v1383
        %v5058 = vpack.c.b16 %v3042, %v3010
        %v5059 = vpack.c.b16 %v3043, %v3011
        %v5060 = vpack.c.b16 %v3044, %v3012
        %v5061 = vpack.c.b16 %v3045, %v3013
        %v5062 = vpack.c.b16 %v3046, %v3014
        %v5063 = vpack.c.b16 %v3047, %v3015
        %v5064 = vpack.c.b16 %v3048, %v3016
        %v5065 = vpack.c.b16 %v3049, %v3017
        %v5066 = vpack.c.b16 %v3050, %v3018
        %v5067 = vpack.c.b16 %v3051, %v3019
        %v5068 = vpack.c.b16 %v3052, %v3020
        %v5069 = vpack.c.b16 %v3053, %v3021
        %v5070 = vpack.c.b16 %v3054, %v3022
        %v5071 = vpack.c.b16 %v3055, %v3023
        %v5072 = vpack.c.b16 %v3056, %v3024
        %v5073 = vpack.c.b16 %v3057, %v3025
        %v5074 = vpack.c.b16 %v3058, %v3026
        %v5075 = vpack.c.b16 %v3059, %v3027
        %v5076 = vpack.c.b16 %v3060, %v3028
        %v5077 = vpack.c.b16 %v3061, %v3029
        %v5078 = vpack.c.b16 %v3062, %v3030
        %v5079 = vpack.c.b16 %v3063, %v3031
        %v5080 = vpack.c.b16 %v3064, %v3032
        %v5081 = vpack.c.b16 %v3065, %v3033
        %v5082 = vpack.c.b16 %v3066, %v3034
        %v5083 = vpack.c.b16 %v3067, %v3035
        %v5084 = vpack.c.b16 %v3068, %v3036
        %v5085 = vpack.c.b16 %v3069, %v3037
        %v5086 = vpack.c.b16 %v3070, %v3038
        %v5087 = vpack.c.b16 %v3071, %v3039
        %v5088 = vpack.c.b16 %v3072, %v3040
        %v5089 = vpack.c.b16 %v3073, %v3041
        %v5090 = vpack.c.b16 %v3106, %v3074
        %v5091 = vpack.c.b16 %v3107, %v3075
        %v5092 = vpack.c.b16 %v3108, %v3076
        %v5093 = vpack.c.b16 %v3109, %v3077
        %v5094 = vpack.c.b16 %v3110, %v3078
        %v5095 = vpack.c.b16 %v3111, %v3079
        %v5096 = vpack.c.b16 %v3112, %v3080
        %v5097 = vpack.c.b16 %v3113, %v3081
        %v5098 = vpack.c.b16 %v3114, %v3082
        %v5099 = vpack.c.b16 %v3115, %v3083
        %v5100 = vpack.c.b16 %v3116, %v3084
        %v5101 = vpack.c.b16 %v3117, %v3085
        %v5102 = vpack.c.b16 %v3118, %v3086
        %v5103 = vpack.c.b16 %v3119, %v3087
        %v5104 = vpack.c.b16 %v3120, %v3088
        %v5105 = vpack.c.b16 %v3121, %v3089
        %v5106 = vpack.c.b16 %v3122, %v3090
        %v5107 = vpack.c.b16 %v3123, %v3091
        %v5108 = vpack.c.b16 %v3124, %v3092
        %v5109 = vpack.c.b16 %v3125, %v3093
        %v5110 = vpack.c.b16 %v3126, %v3094
        %v5111 = vpack.c.b16 %v3127, %v3095
        %v5112 = vpack.c.b16 %v3128, %v3096
        %v5113 = vpack.c.b16 %v3129, %v3097
        %v5114 = vpack.c.b16 %v3130, %v3098
        %v5115 = vpack.c.b16 %v3131, %v3099
        %v5116 = vpack.c.b16 %v3132, %v3100
        %v5117 = vpack.c.b16 %v3133, %v3101
        %v5118 = vpack.c.b16 %v3134, %v3102
        %v5119 = vpack.c.b16 %v3135, %v3103
        %v5120 = vpack.c.b16 %v3136, %v3104
        %v5121 = vpack.c.b16 %v3137, %v3105
        %v5122 = vpack.c.b16 %v3170, %v3138
        %v5123 = vpack.c.b16 %v3171, %v3139
        %v5124 = vpack.c.b16 %v3172, %v3140
        %v5125 = vpack.c.b16 %v3173, %v3141
        %v5126 = vpack.c.b16 %v3174, %v3142
        %v5127 = vpack.c.b16 %v3175, %v3143
        %v5128 = vpack.c.b16 %v3176, %v3144
        %v5129 = vpack.c.b16 %v3177, %v3145
        %v5130 = vpack.c.b16 %v3178, %v3146
        %v5131 = vpack.c.b16 %v3179, %v3147
        %v5132 = vpack.c.b16 %v3180, %v3148
        %v5133 = vpack.c.b16 %v3181, %v3149
        %v5134 = vpack.c.b16 %v3182, %v3150
        %v5135 = vpack.c.b16 %v3183, %v3151
        %v5136 = vpack.c.b16 %v3184, %v3152
        %v5137 = vpack.c.b16 %v3185, %v3153
        %v5138 = vpack.c.b16 %v3186, %v3154
        %v5139 = vpack.c.b16 %v3187, %v3155
        %v5140 = vpack.c.b16 %v3188, %v3156
        %v5141 = vpack.c.b16 %v3189, %v3157
        %v5142 = vpack.c.b16 %v3190, %v3158
        %v5143 = vpack.c.b16 %v3191, %v3159
        %v5144 = vpack.c.b16 %v3192, %v3160
        %v5145 = vpack.c.b16 %v3193, %v3161
        %v5146 = vpack.c.b16 %v3194, %v3162
        %v5147 = vpack.c.b16 %v3195, %v3163
        %v5148 = vpack.c.b16 %v3196, %v3164
        %v5149 = vpack.c.b16 %v3197, %v3165
        %v5150 = vpack.c.b16 %v3198, %v3166
        %v5151 = vpack.c.b16 %v3199, %v3167
        %v5152 = vpack.c.b16 %v3200, %v3168
        %v5153 = vpack.c.b16 %v3201, %v3169
        %v5154 = vpack.c.b16 %v3234, %v3202
        %v5155 = vpack.c.b16 %v3235, %v3203
        %v5156 = vpack.c.b16 %v3236, %v3204
        %v5157 = vpack.c.b16 %v3237, %v3205
        %v5158 = vpack.c.b16 %v3238, %v3206
        %v5159 = vpack.c.b16 %v3239, %v3207
        %v5160 = vpack.c.b16 %v3240, %v3208
        %v5161 = vpack.c.b16 %v3241, %v3209
        %v5162 = vpack.c.b16 %v3242, %v3210
        %v5163 = vpack.c.b16 %v3243, %v3211
        %v5164 = vpack.c.b16 %v3244, %v3212
        %v5165 = vpack.c.b16 %v3245, %v3213
        %v5166 = vpack.c.b16 %v3246, %v3214
        %v5167 = vpack.c.b16 %v3247, %v3215
        %v5168 = vpack.c.b16 %v3248, %v3216
        %v5169 = vpack.c.b16 %v3249, %v3217
        %v5170 = vpack.c.b16 %v3250, %v3218
        %v5171 = vpack.c.b16 %v3251, %v3219
        %v5172 = vpack.c.b16 %v3252, %v3220
        %v5173 = vpack.c.b16 %v3253, %v3221
        %v5174 = vpack.c.b16 %v3254, %v3222
        %v5175 = vpack.c.b16 %v3255, %v3223
        %v5176 = vpack.c.b16 %v3256, %v3224
        %v5177 = vpack.c.b16 %v3257, %v3225
        %v5178 = vpack.c.b16 %v3258, %v3226
        %v5179 = vpack.c.b16 %v3259, %v3227
        %v5180 = vpack.c.b16 %v3260, %v3228
        %v5181 = vpack.c.b16 %v3261, %v3229
        %v5182 = vpack.c.b16 %v3262, %v3230
        %v5183 = vpack.c.b16 %v3263, %v3231
        %v5184 = vpack.c.b16 %v3264, %v3232
        %v5185 = vpack.c.b16 %v3265, %v3233
        %v5186 = vpack.c.b16 %v3298, %v3266
        %v5187 = vpack.c.b16 %v3299, %v3267
        %v5188 = vpack.c.b16 %v3300, %v3268
        %v5189 = vpack.c.b16 %v3301, %v3269
        %v5190 = vpack.c.b16 %v3302, %v3270
        %v5191 = vpack.c.b16 %v3303, %v3271
        %v5192 = vpack.c.b16 %v3304, %v3272
        %v5193 = vpack.c.b16 %v3305, %v3273
        %v5194 = vpack.c.b16 %v3306, %v3274
        %v5195 = vpack.c.b16 %v3307, %v3275
        %v5196 = vpack.c.b16 %v3308, %v3276
        %v5197 = vpack.c.b16 %v3309, %v3277
        %v5198 = vpack.c.b16 %v3310, %v3278
        %v5199 = vpack.c.b16 %v3311, %v3279
        %v5200 = vpack.c.b16 %v3312, %v3280
        %v5201 = vpack.c.b16 %v3313, %v3281
        %v5202 = vpack.c.b16 %v3314, %v3282
        %v5203 = vpack.c.b16 %v3315, %v3283
        %v5204 = vpack.c.b16 %v3316, %v3284
        %v5205 = vpack.c.b16 %v3317, %v3285
        %v5206 = vpack.c.b16 %v3318, %v3286
        %v5207 = vpack.c.b16 %v3319, %v3287
        %v5208 = vpack.c.b16 %v3320, %v3288
        %v5209 = vpack.c.b16 %v3321, %v3289
        %v5210 = vpack.c.b16 %v3322, %v3290
        %v5211 = vpack.c.b16 %v3323, %v3291
        %v5212 = vpack.c.b16 %v3324, %v3292
        %v5213 = vpack.c.b16 %v3325, %v3293
        %v5214 = vpack.c.b16 %v3326, %v3294
        %v5215 = vpack.c.b16 %v3327, %v3295
        %v5216 = vpack.c.b16 %v3328, %v3296
        %v5217 = vpack.c.b16 %v3329, %v3297
        %v5218 = vpack.c.b16 %v3362, %v3330
        %v5219 = vpack.c.b16 %v3363, %v3331
        %v5220 = vpack.c.b16 %v3364, %v3332
        %v5221 = vpack.c.b16 %v3365, %v3333
        %v5222 = vpack.c.b16 %v3366, %v3334
        %v5223 = vpack.c.b16 %v3367, %v3335
        %v5224 = vpack.c.b16 %v3368, %v3336
        %v5225 = vpack.c.b16 %v3369, %v3337
        %v5226 = vpack.c.b16 %v3370, %v3338
        %v5227 = vpack.c.b16 %v3371, %v3339
        %v5228 = vpack.c.b16 %v3372, %v3340
        %v5229 = vpack.c.b16 %v3373, %v3341
        %v5230 = vpack.c.b16 %v3374, %v3342
        %v5231 = vpack.c.b16 %v3375, %v3343
        %v5232 = vpack.c.b16 %v3376, %v3344
        %v5233 = vpack.c.b16 %v3377, %v3345
        %v5234 = vpack.c.b16 %v3378, %v3346
        %v5235 = vpack.c.b16 %v3379, %v3347
        %v5236 = vpack.c.b16 %v3380, %v3348
        %v5237 = vpack.c.b16 %v3381, %v3349
        %v5238 = vpack.c.b16 %v3382, %v3350
        %v5239 = vpack.c.b16 %v3383, %v3351
        %v5240 = vpack.c.b16 %v3384, %v3352
        %v5241 = vpack.c.b16 %v3385, %v3353
        %v5242 = vpack.c.b16 %v3386, %v3354
        %v5243 = vpack.c.b16 %v3387, %v3355
        %v5244 = vpack.c.b16 %v3388, %v3356
        %v5245 = vpack.c.b16 %v3389, %v3357
        %v5246 = vpack.c.b16 %v3390, %v3358
        %v5247 = vpack.c.b16 %v3391, %v3359
        %v5248 = vpack.c.b16 %v3392, %v3360
        %v5249 = vpack.c.b16 %v3393, %v3361
        %v5250 = vpack.c.b16 %v3426, %v3394
        %v5251 = vpack.c.b16 %v3427, %v3395
        %v5252 = vpack.c.b16 %v3428, %v3396
        %v5253 = vpack.c.b16 %v3429, %v3397
        %v5254 = vpack.c.b16 %v3430, %v3398
        %v5255 = vpack.c.b16 %v3431, %v3399
        %v5256 = vpack.c.b16 %v3432, %v3400
        %v5257 = vpack.c.b16 %v3433, %v3401
        %v5258 = vpack.c.b16 %v3434, %v3402
        %v5259 = vpack.c.b16 %v3435, %v3403
        %v5260 = vpack.c.b16 %v3436, %v3404
        %v5261 = vpack.c.b16 %v3437, %v3405
        %v5262 = vpack.c.b16 %v3438, %v3406
        %v5263 = vpack.c.b16 %v3439, %v3407
        %v5264 = vpack.c.b16 %v3440, %v3408
        %v5265 = vpack.c.b16 %v3441, %v3409
        %v5266 = vpack.c.b16 %v3442, %v3410
        %v5267 = vpack.c.b16 %v3443, %v3411
        %v5268 = vpack.c.b16 %v3444, %v3412
        %v5269 = vpack.c.b16 %v3445, %v3413
        %v5270 = vpack.c.b16 %v3446, %v3414
        %v5271 = vpack.c.b16 %v3447, %v3415
        %v5272 = vpack.c.b16 %v3448, %v3416
        %v5273 = vpack.c.b16 %v3449, %v3417
        %v5274 = vpack.c.b16 %v3450, %v3418
        %v5275 = vpack.c.b16 %v3451, %v3419
        %v5276 = vpack.c.b16 %v3452, %v3420
        %v5277 = vpack.c.b16 %v3453, %v3421
        %v5278 = vpack.c.b16 %v3454, %v3422
        %v5279 = vpack.c.b16 %v3455, %v3423
        %v5280 = vpack.c.b16 %v3456, %v3424
        %v5281 = vpack.c.b16 %v3457, %v3425
        %v5282 = vpack.c.b16 %v3490, %v3458
        %v5283 = vpack.c.b16 %v3491, %v3459
        %v5284 = vpack.c.b16 %v3492, %v3460
        %v5285 = vpack.c.b16 %v3493, %v3461
        %v5286 = vpack.c.b16 %v3494, %v3462
        %v5287 = vpack.c.b16 %v3495, %v3463
        %v5288 = vpack.c.b16 %v3496, %v3464
        %v5289 = vpack.c.b16 %v3497, %v3465
        %v5290 = vpack.c.b16 %v3498, %v3466
        %v5291 = vpack.c.b16 %v3499, %v3467
        %v5292 = vpack.c.b16 %v3500, %v3468
        %v5293 = vpack.c.b16 %v3501, %v3469
        %v5294 = vpack.c.b16 %v3502, %v3470
        %v5295 = vpack.c.b16 %v3503, %v3471
        %v5296 = vpack.c.b16 %v3504, %v3472
        %v5297 = vpack.c.b16 %v3505, %v3473
        %v5298 = vpack.c.b16 %v3506, %v3474
        %v5299 = vpack.c.b16 %v3507, %v3475
        %v5300 = vpack.c.b16 %v3508, %v3476
        %v5301 = vpack.c.b16 %v3509, %v3477
        %v5302 = vpack.c.b16 %v3510, %v3478
        %v5303 = vpack.c.b16 %v3511, %v3479
        %v5304 = vpack.c.b16 %v3512, %v3480
        %v5305 = vpack.c.b16 %v3513, %v3481
        %v5306 = vpack.c.b16 %v3514, %v3482
        %v5307 = vpack.c.b16 %v3515, %v3483
        %v5308 = vpack.c.b16 %v3516, %v3484
        %v5309 = vpack.c.b16 %v3517, %v3485
        %v5310 = vpack.c.b16 %v3518, %v3486
        %v5311 = vpack.c.b16 %v3519, %v3487
        %v5312 = vpack.c.b16 %v3520, %v3488
        %v5313 = vpack.c.b16 %v3521, %v3489
        %v5314 = vpack.c.b16 %v3554, %v3522
        %v5315 = vpack.c.b16 %v3555, %v3523
        %v5316 = vpack.c.b16 %v3556, %v3524
        %v5317 = vpack.c.b16 %v3557, %v3525
        %v5318 = vpack.c.b16 %v3558, %v3526
        %v5319 = vpack.c.b16 %v3559, %v3527
        %v5320 = vpack.c.b16 %v3560, %v3528
        %v5321 = vpack.c.b16 %v3561, %v3529
        %v5322 = vpack.c.b16 %v3562, %v3530
        %v5323 = vpack.c.b16 %v3563, %v3531
        %v5324 = vpack.c.b16 %v3564, %v3532
        %v5325 = vpack.c.b16 %v3565, %v3533
        %v5326 = vpack.c.b16 %v3566, %v3534
        %v5327 = vpack.c.b16 %v3567, %v3535
        %v5328 = vpack.c.b16 %v3568, %v3536
        %v5329 = vpack.c.b16 %v3569, %v3537
        %v5330 = vpack.c.b16 %v3570, %v3538
        %v5331 = vpack.c.b16 %v3571, %v3539
        %v5332 = vpack.c.b16 %v3572, %v3540
        %v5333 = vpack.c.b16 %v3573, %v3541
        %v5334 = vpack.c.b16 %v3574, %v3542
        %v5335 = vpack.c.b16 %v3575, %v3543
        %v5336 = vpack.c.b16 %v3576, %v3544
        %v5337 = vpack.c.b16 %v3577, %v3545
        %v5338 = vpack.c.b16 %v3578, %v3546
        %v5339 = vpack.c.b16 %v3579, %v3547
        %v5340 = vpack.c.b16 %v3580, %v3548
        %v5341 = vpack.c.b16 %v3581, %v3549
        %v5342 = vpack.c.b16 %v3582, %v3550
        %v5343 = vpack.c.b16 %v3583, %v3551
        %v5344 = vpack.c.b16 %v3584, %v3552
        %v5345 = vpack.c.b16 %v3585, %v3553
        %v5346 = vpack.c.b16 %v3618, %v3586
        %v5347 = vpack.c.b16 %v3619, %v3587
        %v5348 = vpack.c.b16 %v3620, %v3588
        %v5349 = vpack.c.b16 %v3621, %v3589
        %v5350 = vpack.c.b16 %v3622, %v3590
        %v5351 = vpack.c.b16 %v3623, %v3591
        %v5352 = vpack.c.b16 %v3624, %v3592
        %v5353 = vpack.c.b16 %v3625, %v3593
        %v5354 = vpack.c.b16 %v3626, %v3594
        %v5355 = vpack.c.b16 %v3627, %v3595
        %v5356 = vpack.c.b16 %v3628, %v3596
        %v5357 = vpack.c.b16 %v3629, %v3597
        %v5358 = vpack.c.b16 %v3630, %v3598
        %v5359 = vpack.c.b16 %v3631, %v3599
        %v5360 = vpack.c.b16 %v3632, %v3600
        %v5361 = vpack.c.b16 %v3633, %v3601
        %v5362 = vpack.c.b16 %v3634, %v3602
        %v5363 = vpack.c.b16 %v3635, %v3603
        %v5364 = vpack.c.b16 %v3636, %v3604
        %v5365 = vpack.c.b16 %v3637, %v3605
        %v5366 = vpack.c.b16 %v3638, %v3606
        %v5367 = vpack.c.b16 %v3639, %v3607
        %v5368 = vpack.c.b16 %v3640, %v3608
        %v5369 = vpack.c.b16 %v3641, %v3609
        %v5370 = vpack.c.b16 %v3642, %v3610
        %v5371 = vpack.c.b16 %v3643, %v3611
        %v5372 = vpack.c.b16 %v3644, %v3612
        %v5373 = vpack.c.b16 %v3645, %v3613
        %v5374 = vpack.c.b16 %v3646, %v3614
        %v5375 = vpack.c.b16 %v3647, %v3615
        %v5376 = vpack.c.b16 %v3648, %v3616
        %v5377 = vpack.c.b16 %v3649, %v3617
        %v5378 = vpack.c.b16 %v3682, %v3650
        %v5379 = vpack.c.b16 %v3683, %v3651
        %v5380 = vpack.c.b16 %v3684, %v3652
        %v5381 = vpack.c.b16 %v3685, %v3653
        %v5382 = vpack.c.b16 %v3686, %v3654
        %v5383 = vpack.c.b16 %v3687, %v3655
        %v5384 = vpack.c.b16 %v3688, %v3656
        %v5385 = vpack.c.b16 %v3689, %v3657
        %v5386 = vpack.c.b16 %v3690, %v3658
        %v5387 = vpack.c.b16 %v3691, %v3659
        %v5388 = vpack.c.b16 %v3692, %v3660
        %v5389 = vpack.c.b16 %v3693, %v3661
        %v5390 = vpack.c.b16 %v3694, %v3662
        %v5391 = vpack.c.b16 %v3695, %v3663
        %v5392 = vpack.c.b16 %v3696, %v3664
        %v5393 = vpack.c.b16 %v3697, %v3665
        %v5394 = vpack.c.b16 %v3698, %v3666
        %v5395 = vpack.c.b16 %v3699, %v3667
        %v5396 = vpack.c.b16 %v3700, %v3668
        %v5397 = vpack.c.b16 %v3701, %v3669
        %v5398 = vpack.c.b16 %v3702, %v3670
        %v5399 = vpack.c.b16 %v3703, %v3671
        %v5400 = vpack.c.b16 %v3704, %v3672
        %v5401 = vpack.c.b16 %v3705, %v3673
        %v5402 = vpack.c.b16 %v3706, %v3674
        %v5403 = vpack.c.b16 %v3707, %v3675
        %v5404 = vpack.c.b16 %v3708, %v3676
        %v5405 = vpack.c.b16 %v3709, %v3677
        %v5406 = vpack.c.b16 %v3710, %v3678
        %v5407 = vpack.c.b16 %v3711, %v3679
        %v5408 = vpack.c.b16 %v3712, %v3680
        %v5409 = vpack.c.b16 %v3713, %v3681
        %v5410 = vpack.c.b16 %v3746, %v3714
        %v5411 = vpack.c.b16 %v3747, %v3715
        %v5412 = vpack.c.b16 %v3748, %v3716
        %v5413 = vpack.c.b16 %v3749, %v3717
        %v5414 = vpack.c.b16 %v3750, %v3718
        %v5415 = vpack.c.b16 %v3751, %v3719
        %v5416 = vpack.c.b16 %v3752, %v3720
        %v5417 = vpack.c.b16 %v3753, %v3721
        %v5418 = vpack.c.b16 %v3754, %v3722
        %v5419 = vpack.c.b16 %v3755, %v3723
        %v5420 = vpack.c.b16 %v3756, %v3724
        %v5421 = vpack.c.b16 %v3757, %v3725
        %v5422 = vpack.c.b16 %v3758, %v3726
        %v5423 = vpack.c.b16 %v3759, %v3727
        %v5424 = vpack.c.b16 %v3760, %v3728
        %v5425 = vpack.c.b16 %v3761, %v3729
        %v5426 = vpack.c.b16 %v3762, %v3730
        %v5427 = vpack.c.b16 %v3763, %v3731
        %v5428 = vpack.c.b16 %v3764, %v3732
        %v5429 = vpack.c.b16 %v3765, %v3733
        %v5430 = vpack.c.b16 %v3766, %v3734
        %v5431 = vpack.c.b16 %v3767, %v3735
        %v5432 = vpack.c.b16 %v3768, %v3736
        %v5433 = vpack.c.b16 %v3769, %v3737
        %v5434 = vpack.c.b16 %v3770, %v3738
        %v5435 = vpack.c.b16 %v3771, %v3739
        %v5436 = vpack.c.b16 %v3772, %v3740
        %v5437 = vpack.c.b16 %v3773, %v3741
        %v5438 = vpack.c.b16 %v3774, %v3742
        %v5439 = vpack.c.b16 %v3775, %v3743
        %v5440 = vpack.c.b16 %v3776, %v3744
        %v5441 = vpack.c.b16 %v3777, %v3745
        %v5442 = vpack.c.b16 %v3810, %v3778
        %v5443 = vpack.c.b16 %v3811, %v3779
        %v5444 = vpack.c.b16 %v3812, %v3780
        %v5445 = vpack.c.b16 %v3813, %v3781
        %v5446 = vpack.c.b16 %v3814, %v3782
        %v5447 = vpack.c.b16 %v3815, %v3783
        %v5448 = vpack.c.b16 %v3816, %v3784
        %v5449 = vpack.c.b16 %v3817, %v3785
        %v5450 = vpack.c.b16 %v3818, %v3786
        %v5451 = vpack.c.b16 %v3819, %v3787
        %v5452 = vpack.c.b16 %v3820, %v3788
        %v5453 = vpack.c.b16 %v3821, %v3789
        %v5454 = vpack.c.b16 %v3822, %v3790
        %v5455 = vpack.c.b16 %v3823, %v3791
        %v5456 = vpack.c.b16 %v3824, %v3792
        %v5457 = vpack.c.b16 %v3825, %v3793
        %v5458 = vpack.c.b16 %v3826, %v3794
        %v5459 = vpack.c.b16 %v3827, %v3795
        %v5460 = vpack.c.b16 %v3828, %v3796
        %v5461 = vpack.c.b16 %v3829, %v3797
        %v5462 = vpack.c.b16 %v3830, %v3798
        %v5463 = vpack.c.b16 %v3831, %v3799
        %v5464 = vpack.c.b16 %v3832, %v3800
        %v5465 = vpack.c.b16 %v3833, %v3801
        %v5466 = vpack.c.b16 %v3834, %v3802
        %v5467 = vpack.c.b16 %v3835, %v3803
        %v5468 = vpack.c.b16 %v3836, %v3804
        %v5469 = vpack.c.b16 %v3837, %v3805
        %v5470 = vpack.c.b16 %v3838, %v3806
        %v5471 = vpack.c.b16 %v3839, %v3807
        %v5472 = vpack.c.b16 %v3840, %v3808
        %v5473 = vpack.c.b16 %v3841, %v3809
        %v5474 = vpack.c.b16 %v3874, %v3842
        %v5475 = vpack.c.b16 %v3875, %v3843
        %v5476 = vpack.c.b16 %v3876, %v3844
        %v5477 = vpack.c.b16 %v3877, %v3845
        %v5478 = vpack.c.b16 %v3878, %v3846
        %v5479 = vpack.c.b16 %v3879, %v3847
        %v5480 = vpack.c.b16 %v3880, %v3848
        %v5481 = vpack.c.b16 %v3881, %v3849
        %v5482 = vpack.c.b16 %v3882, %v3850
        %v5483 = vpack.c.b16 %v3883, %v3851
        %v5484 = vpack.c.b16 %v3884, %v3852
        %v5485 = vpack.c.b16 %v3885, %v3853
        %v5486 = vpack.c.b16 %v3886, %v3854
        %v5487 = vpack.c.b16 %v3887, %v3855
        %v5488 = vpack.c.b16 %v3888, %v3856
        %v5489 = vpack.c.b16 %v3889, %v3857
        %v5490 = vpack.c.b16 %v3890, %v3858
        %v5491 = vpack.c.b16 %v3891, %v3859
        %v5492 = vpack.c.b16 %v3892, %v3860
        %v5493 = vpack.c.b16 %v3893, %v3861
        %v5494 = vpack.c.b16 %v3894, %v3862
        %v5495 = vpack.c.b16 %v3895, %v3863
        %v5496 = vpack.c.b16 %v3896, %v3864
        %v5497 = vpack.c.b16 %v3897, %v3865
        %v5498 = vpack.c.b16 %v3898, %v3866
        %v5499 = vpack.c.b16 %v3899, %v3867
        %v5500 = vpack.c.b16 %v3900, %v3868
        %v5501 = vpack.c.b16 %v3901, %v3869
        %v5502 = vpack.c.b16 %v3902, %v3870
        %v5503 = vpack.c.b16 %v3903, %v3871
        %v5504 = vpack.c.b16 %v3904, %v3872
        %v5505 = vpack.c.b16 %v3905, %v3873
        %v5506 = vpack.c.b16 %v3938, %v3906
        %v5507 = vpack.c.b16 %v3939, %v3907
        %v5508 = vpack.c.b16 %v3940, %v3908
        %v5509 = vpack.c.b16 %v3941, %v3909
        %v5510 = vpack.c.b16 %v3942, %v3910
        %v5511 = vpack.c.b16 %v3943, %v3911
        %v5512 = vpack.c.b16 %v3944, %v3912
        %v5513 = vpack.c.b16 %v3945, %v3913
        %v5514 = vpack.c.b16 %v3946, %v3914
        %v5515 = vpack.c.b16 %v3947, %v3915
        %v5516 = vpack.c.b16 %v3948, %v3916
        %v5517 = vpack.c.b16 %v3949, %v3917
        %v5518 = vpack.c.b16 %v3950, %v3918
        %v5519 = vpack.c.b16 %v3951, %v3919
        %v5520 = vpack.c.b16 %v3952, %v3920
        %v5521 = vpack.c.b16 %v3953, %v3921
        %v5522 = vpack.c.b16 %v3954, %v3922
        %v5523 = vpack.c.b16 %v3955, %v3923
        %v5524 = vpack.c.b16 %v3956, %v3924
        %v5525 = vpack.c.b16 %v3957, %v3925
        %v5526 = vpack.c.b16 %v3958, %v3926
        %v5527 = vpack.c.b16 %v3959, %v3927
        %v5528 = vpack.c.b16 %v3960, %v3928
        %v5529 = vpack.c.b16 %v3961, %v3929
        %v5530 = vpack.c.b16 %v3962, %v3930
        %v5531 = vpack.c.b16 %v3963, %v3931
        %v5532 = vpack.c.b16 %v3964, %v3932
        %v5533 = vpack.c.b16 %v3965, %v3933
        %v5534 = vpack.c.b16 %v3966, %v3934
        %v5535 = vpack.c.b16 %v3967, %v3935
        %v5536 = vpack.c.b16 %v3968, %v3936
        %v5537 = vpack.c.b16 %v3969, %v3937
        %v5538 = vpack.c.b16 %v4002, %v3970
        %v5539 = vpack.c.b16 %v4003, %v3971
        %v5540 = vpack.c.b16 %v4004, %v3972
        %v5541 = vpack.c.b16 %v4005, %v3973
        %v5542 = vpack.c.b16 %v4006, %v3974
        %v5543 = vpack.c.b16 %v4007, %v3975
        %v5544 = vpack.c.b16 %v4008, %v3976
        %v5545 = vpack.c.b16 %v4009, %v3977
        %v5546 = vpack.c.b16 %v4010, %v3978
        %v5547 = vpack.c.b16 %v4011, %v3979
        %v5548 = vpack.c.b16 %v4012, %v3980
        %v5549 = vpack.c.b16 %v4013, %v3981
        %v5550 = vpack.c.b16 %v4014, %v3982
        %v5551 = vpack.c.b16 %v4015, %v3983
        %v5552 = vpack.c.b16 %v4016, %v3984
        %v5553 = vpack.c.b16 %v4017, %v3985
        %v5554 = vpack.c.b16 %v4018, %v3986
        %v5555 = vpack.c.b16 %v4019, %v3987
        %v5556 = vpack.c.b16 %v4020, %v3988
        %v5557 = vpack.c.b16 %v4021, %v3989
        %v5558 = vpack.c.b16 %v4022, %v3990
        %v5559 = vpack.c.b16 %v4023, %v3991
        %v5560 = vpack.c.b16 %v4024, %v3992
        %v5561 = vpack.c.b16 %v4025, %v3993
        %v5562 = vpack.c.b16 %v4026, %v3994
        %v5563 = vpack.c.b16 %v4027, %v3995
        %v5564 = vpack.c.b16 %v4028, %v3996
        %v5565 = vpack.c.b16 %v4029, %v3997
        %v5566 = vpack.c.b16 %v4030, %v3998
        %v5567 = vpack.c.b16 %v4031, %v3999
        %v5568 = vpack.c.b16 %v4032, %v4000
        %v5569 = vpack.c.b16 %v4033, %v4001
        %v5570 = vpack.c.b16 %v4066, %v4034
        %v5571 = vpack.c.b16 %v4067, %v4035
        %v5572 = vpack.c.b16 %v4068, %v4036
        %v5573 = vpack.c.b16 %v4069, %v4037
        %v5574 = vpack.c.b16 %v4070, %v4038
        %v5575 = vpack.c.b16 %v4071, %v4039
        %v5576 = vpack.c.b16 %v4072, %v4040
        %v5577 = vpack.c.b16 %v4073, %v4041
        %v5578 = vpack.c.b16 %v4074, %v4042
        %v5579 = vpack.c.b16 %v4075, %v4043
        %v5580 = vpack.c.b16 %v4076, %v4044
        %v5581 = vpack.c.b16 %v4077, %v4045
        %v5582 = vpack.c.b16 %v4078, %v4046
        %v5583 = vpack.c.b16 %v4079, %v4047
        %v5584 = vpack.c.b16 %v4080, %v4048
        %v5585 = vpack.c.b16 %v4081, %v4049
        %v5586 = vpack.c.b16 %v4082, %v4050
        %v5587 = vpack.c.b16 %v4083, %v4051
        %v5588 = vpack.c.b16 %v4084, %v4052
        %v5589 = vpack.c.b16 %v4085, %v4053
        %v5590 = vpack.c.b16 %v4086, %v4054
        %v5591 = vpack.c.b16 %v4087, %v4055
        %v5592 = vpack.c.b16 %v4088, %v4056
        %v5593 = vpack.c.b16 %v4089, %v4057
        %v5594 = vpack.c.b16 %v4090, %v4058
        %v5595 = vpack.c.b16 %v4091, %v4059
        %v5596 = vpack.c.b16 %v4092, %v4060
        %v5597 = vpack.c.b16 %v4093, %v4061
        %v5598 = vpack.c.b16 %v4094, %v4062
        %v5599 = vpack.c.b16 %v4095, %v4063
        %v5600 = vpack.c.b16 %v4096, %v4064
        %v5601 = vpack.c.b16 %v4097, %v4065
        %v5602 = vpack.c.b16 %v4130, %v4098
        %v5603 = vpack.c.b16 %v4131, %v4099
        %v5604 = vpack.c.b16 %v4132, %v4100
        %v5605 = vpack.c.b16 %v4133, %v4101
        %v5606 = vpack.c.b16 %v4134, %v4102
        %v5607 = vpack.c.b16 %v4135, %v4103
        %v5608 = vpack.c.b16 %v4136, %v4104
        %v5609 = vpack.c.b16 %v4137, %v4105
        %v5610 = vpack.c.b16 %v4138, %v4106
        %v5611 = vpack.c.b16 %v4139, %v4107
        %v5612 = vpack.c.b16 %v4140, %v4108
        %v5613 = vpack.c.b16 %v4141, %v4109
        %v5614 = vpack.c.b16 %v4142, %v4110
        %v5615 = vpack.c.b16 %v4143, %v4111
        %v5616 = vpack.c.b16 %v4144, %v4112
        %v5617 = vpack.c.b16 %v4145, %v4113
        %v5618 = vpack.c.b16 %v4146, %v4114
        %v5619 = vpack.c.b16 %v4147, %v4115
        %v5620 = vpack.c.b16 %v4148, %v4116
        %v5621 = vpack.c.b16 %v4149, %v4117
        %v5622 = vpack.c.b16 %v4150, %v4118
        %v5623 = vpack.c.b16 %v4151, %v4119
        %v5624 = vpack.c.b16 %v4152, %v4120
        %v5625 = vpack.c.b16 %v4153, %v4121
        %v5626 = vpack.c.b16 %v4154, %v4122
        %v5627 = vpack.c.b16 %v4155, %v4123
        %v5628 = vpack.c.b16 %v4156, %v4124
        %v5629 = vpack.c.b16 %v4157, %v4125
        %v5630 = vpack.c.b16 %v4158, %v4126
        %v5631 = vpack.c.b16 %v4159, %v4127
        %v5632 = vpack.c.b16 %v4160, %v4128
        %v5633 = vpack.c.b16 %v4161, %v4129
        %v5634 = vpack.c.b16 %v4194, %v4162
        %v5635 = vpack.c.b16 %v4195, %v4163
        %v5636 = vpack.c.b16 %v4196, %v4164
        %v5637 = vpack.c.b16 %v4197, %v4165
        %v5638 = vpack.c.b16 %v4198, %v4166
        %v5639 = vpack.c.b16 %v4199, %v4167
        %v5640 = vpack.c.b16 %v4200, %v4168
        %v5641 = vpack.c.b16 %v4201, %v4169
        %v5642 = vpack.c.b16 %v4202, %v4170
        %v5643 = vpack.c.b16 %v4203, %v4171
        %v5644 = vpack.c.b16 %v4204, %v4172
        %v5645 = vpack.c.b16 %v4205, %v4173
        %v5646 = vpack.c.b16 %v4206, %v4174
        %v5647 = vpack.c.b16 %v4207, %v4175
        %v5648 = vpack.c.b16 %v4208, %v4176
        %v5649 = vpack.c.b16 %v4209, %v4177
        %v5650 = vpack.c.b16 %v4210, %v4178
        %v5651 = vpack.c.b16 %v4211, %v4179
        %v5652 = vpack.c.b16 %v4212, %v4180
        %v5653 = vpack.c.b16 %v4213, %v4181
        %v5654 = vpack.c.b16 %v4214, %v4182
        %v5655 = vpack.c.b16 %v4215, %v4183
        %v5656 = vpack.c.b16 %v4216, %v4184
        %v5657 = vpack.c.b16 %v4217, %v4185
        %v5658 = vpack.c.b16 %v4218, %v4186
        %v5659 = vpack.c.b16 %v4219, %v4187
        %v5660 = vpack.c.b16 %v4220, %v4188
        %v5661 = vpack.c.b16 %v4221, %v4189
        %v5662 = vpack.c.b16 %v4222, %v4190
        %v5663 = vpack.c.b16 %v4223, %v4191
        %v5664 = vpack.c.b16 %v4224, %v4192
        %v5665 = vpack.c.b16 %v4225, %v4193
        %v5666 = vpack.c.b16 %v4258, %v4226
        %v5667 = vpack.c.b16 %v4259, %v4227
        %v5668 = vpack.c.b16 %v4260, %v4228
        %v5669 = vpack.c.b16 %v4261, %v4229
        %v5670 = vpack.c.b16 %v4262, %v4230
        %v5671 = vpack.c.b16 %v4263, %v4231
        %v5672 = vpack.c.b16 %v4264, %v4232
        %v5673 = vpack.c.b16 %v4265, %v4233
        %v5674 = vpack.c.b16 %v4266, %v4234
        %v5675 = vpack.c.b16 %v4267, %v4235
        %v5676 = vpack.c.b16 %v4268, %v4236
        %v5677 = vpack.c.b16 %v4269, %v4237
        %v5678 = vpack.c.b16 %v4270, %v4238
        %v5679 = vpack.c.b16 %v4271, %v4239
        %v5680 = vpack.c.b16 %v4272, %v4240
        %v5681 = vpack.c.b16 %v4273, %v4241
        %v5682 = vpack.c.b16 %v4274, %v4242
        %v5683 = vpack.c.b16 %v4275, %v4243
        %v5684 = vpack.c.b16 %v4276, %v4244
        %v5685 = vpack.c.b16 %v4277, %v4245
        %v5686 = vpack.c.b16 %v4278, %v4246
        %v5687 = vpack.c.b16 %v4279, %v4247
        %v5688 = vpack.c.b16 %v4280, %v4248
        %v5689 = vpack.c.b16 %v4281, %v4249
        %v5690 = vpack.c.b16 %v4282, %v4250
        %v5691 = vpack.c.b16 %v4283, %v4251
        %v5692 = vpack.c.b16 %v4284, %v4252
        %v5693 = vpack.c.b16 %v4285, %v4253
        %v5694 = vpack.c.b16 %v4286, %v4254
        %v5695 = vpack.c.b16 %v4287, %v4255
        %v5696 = vpack.c.b16 %v4288, %v4256
        %v5697 = vpack.c.b16 %v4289, %v4257
        %v5698 = vpack.c.b16 %v4322, %v4290
        %v5699 = vpack.c.b16 %v4323, %v4291
        %v5700 = vpack.c.b16 %v4324, %v4292
        %v5701 = vpack.c.b16 %v4325, %v4293
        %v5702 = vpack.c.b16 %v4326, %v4294
        %v5703 = vpack.c.b16 %v4327, %v4295
        %v5704 = vpack.c.b16 %v4328, %v4296
        %v5705 = vpack.c.b16 %v4329, %v4297
        %v5706 = vpack.c.b16 %v4330, %v4298
        %v5707 = vpack.c.b16 %v4331, %v4299
        %v5708 = vpack.c.b16 %v4332, %v4300
        %v5709 = vpack.c.b16 %v4333, %v4301
        %v5710 = vpack.c.b16 %v4334, %v4302
        %v5711 = vpack.c.b16 %v4335, %v4303
        %v5712 = vpack.c.b16 %v4336, %v4304
        %v5713 = vpack.c.b16 %v4337, %v4305
        %v5714 = vpack.c.b16 %v4338, %v4306
        %v5715 = vpack.c.b16 %v4339, %v4307
        %v5716 = vpack.c.b16 %v4340, %v4308
        %v5717 = vpack.c.b16 %v4341, %v4309
        %v5718 = vpack.c.b16 %v4342, %v4310
        %v5719 = vpack.c.b16 %v4343, %v4311
        %v5720 = vpack.c.b16 %v4344, %v4312
        %v5721 = vpack.c.b16 %v4345, %v4313
        %v5722 = vpack.c.b16 %v4346, %v4314
        %v5723 = vpack.c.b16 %v4347, %v4315
        %v5724 = vpack.c.b16 %v4348, %v4316
        %v5725 = vpack.c.b16 %v4349, %v4317
        %v5726 = vpack.c.b16 %v4350, %v4318
        %v5727 = vpack.c.b16 %v4351, %v4319
        %v5728 = vpack.c.b16 %v4352, %v4320
        %v5729 = vpack.c.b16 %v4353, %v4321
        %v5730 = vpack.c.b16 %v4386, %v4354
        %v5731 = vpack.c.b16 %v4387, %v4355
        %v5732 = vpack.c.b16 %v4388, %v4356
        %v5733 = vpack.c.b16 %v4389, %v4357
        %v5734 = vpack.c.b16 %v4390, %v4358
        %v5735 = vpack.c.b16 %v4391, %v4359
        %v5736 = vpack.c.b16 %v4392, %v4360
        %v5737 = vpack.c.b16 %v4393, %v4361
        %v5738 = vpack.c.b16 %v4394, %v4362
        %v5739 = vpack.c.b16 %v4395, %v4363
        %v5740 = vpack.c.b16 %v4396, %v4364
        %v5741 = vpack.c.b16 %v4397, %v4365
        %v5742 = vpack.c.b16 %v4398, %v4366
        %v5743 = vpack.c.b16 %v4399, %v4367
        %v5744 = vpack.c.b16 %v4400, %v4368
        %v5745 = vpack.c.b16 %v4401, %v4369
        %v5746 = vpack.c.b16 %v4402, %v4370
        %v5747 = vpack.c.b16 %v4403, %v4371
        %v5748 = vpack.c.b16 %v4404, %v4372
        %v5749 = vpack.c.b16 %v4405, %v4373
        %v5750 = vpack.c.b16 %v4406, %v4374
        %v5751 = vpack.c.b16 %v4407, %v4375
        %v5752 = vpack.c.b16 %v4408, %v4376
        %v5753 = vpack.c.b16 %v4409, %v4377
        %v5754 = vpack.c.b16 %v4410, %v4378
        %v5755 = vpack.c.b16 %v4411, %v4379
        %v5756 = vpack.c.b16 %v4412, %v4380
        %v5757 = vpack.c.b16 %v4413, %v4381
        %v5758 = vpack.c.b16 %v4414, %v4382
        %v5759 = vpack.c.b16 %v4415, %v4383
        %v5760 = vpack.c.b16 %v4416, %v4384
        %v5761 = vpack.c.b16 %v4417, %v4385
        %v5762 = vpack.c.b16 %v4450, %v4418
        %v5763 = vpack.c.b16 %v4451, %v4419
        %v5764 = vpack.c.b16 %v4452, %v4420
        %v5765 = vpack.c.b16 %v4453, %v4421
        %v5766 = vpack.c.b16 %v4454, %v4422
        %v5767 = vpack.c.b16 %v4455, %v4423
        %v5768 = vpack.c.b16 %v4456, %v4424
        %v5769 = vpack.c.b16 %v4457, %v4425
        %v5770 = vpack.c.b16 %v4458, %v4426
        %v5771 = vpack.c.b16 %v4459, %v4427
        %v5772 = vpack.c.b16 %v4460, %v4428
        %v5773 = vpack.c.b16 %v4461, %v4429
        %v5774 = vpack.c.b16 %v4462, %v4430
        %v5775 = vpack.c.b16 %v4463, %v4431
        %v5776 = vpack.c.b16 %v4464, %v4432
        %v5777 = vpack.c.b16 %v4465, %v4433
        %v5778 = vpack.c.b16 %v4466, %v4434
        %v5779 = vpack.c.b16 %v4467, %v4435
        %v5780 = vpack.c.b16 %v4468, %v4436
        %v5781 = vpack.c.b16 %v4469, %v4437
        %v5782 = vpack.c.b16 %v4470, %v4438
        %v5783 = vpack.c.b16 %v4471, %v4439
        %v5784 = vpack.c.b16 %v4472, %v4440
        %v5785 = vpack.c.b16 %v4473, %v4441
        %v5786 = vpack.c.b16 %v4474, %v4442
        %v5787 = vpack.c.b16 %v4475, %v4443
        %v5788 = vpack.c.b16 %v4476, %v4444
        %v5789 = vpack.c.b16 %v4477, %v4445
        %v5790 = vpack.c.b16 %v4478, %v4446
        %v5791 = vpack.c.b16 %v4479, %v4447
        %v5792 = vpack.c.b16 %v4480, %v4448
        %v5793 = vpack.c.b16 %v4481, %v4449
        %v5794 = vpack.c.b16 %v4514, %v4482
        %v5795 = vpack.c.b16 %v4515, %v4483
        %v5796 = vpack.c.b16 %v4516, %v4484
        %v5797 = vpack.c.b16 %v4517, %v4485
        %v5798 = vpack.c.b16 %v4518, %v4486
        %v5799 = vpack.c.b16 %v4519, %v4487
        %v5800 = vpack.c.b16 %v4520, %v4488
        %v5801 = vpack.c.b16 %v4521, %v4489
        %v5802 = vpack.c.b16 %v4522, %v4490
        %v5803 = vpack.c.b16 %v4523, %v4491
        %v5804 = vpack.c.b16 %v4524, %v4492
        %v5805 = vpack.c.b16 %v4525, %v4493
        %v5806 = vpack.c.b16 %v4526, %v4494
        %v5807 = vpack.c.b16 %v4527, %v4495
        %v5808 = vpack.c.b16 %v4528, %v4496
        %v5809 = vpack.c.b16 %v4529, %v4497
        %v5810 = vpack.c.b16 %v4530, %v4498
        %v5811 = vpack.c.b16 %v4531, %v4499
        %v5812 = vpack.c.b16 %v4532, %v4500
        %v5813 = vpack.c.b16 %v4533, %v4501
        %v5814 = vpack.c.b16 %v4534, %v4502
        %v5815 = vpack.c.b16 %v4535, %v4503
        %v5816 = vpack.c.b16 %v4536, %v4504
        %v5817 = vpack.c.b16 %v4537, %v4505
        %v5818 = vpack.c.b16 %v4538, %v4506
        %v5819 = vpack.c.b16 %v4539, %v4507
        %v5820 = vpack.c.b16 %v4540, %v4508
        %v5821 = vpack.c.b16 %v4541, %v4509
        %v5822 = vpack.c.b16 %v4542, %v4510
        %v5823 = vpack.c.b16 %v4543, %v4511
        %v5824 = vpack.c.b16 %v4544, %v4512
        %v5825 = vpack.c.b16 %v4545, %v4513
        %v5826 = vpack.c.b16 %v4578, %v4546
        %v5827 = vpack.c.b16 %v4579, %v4547
        %v5828 = vpack.c.b16 %v4580, %v4548
        %v5829 = vpack.c.b16 %v4581, %v4549
        %v5830 = vpack.c.b16 %v4582, %v4550
        %v5831 = vpack.c.b16 %v4583, %v4551
        %v5832 = vpack.c.b16 %v4584, %v4552
        %v5833 = vpack.c.b16 %v4585, %v4553
        %v5834 = vpack.c.b16 %v4586, %v4554
        %v5835 = vpack.c.b16 %v4587, %v4555
        %v5836 = vpack.c.b16 %v4588, %v4556
        %v5837 = vpack.c.b16 %v4589, %v4557
        %v5838 = vpack.c.b16 %v4590, %v4558
        %v5839 = vpack.c.b16 %v4591, %v4559
        %v5840 = vpack.c.b16 %v4592, %v4560
        %v5841 = vpack.c.b16 %v4593, %v4561
        %v5842 = vpack.c.b16 %v4594, %v4562
        %v5843 = vpack.c.b16 %v4595, %v4563
        %v5844 = vpack.c.b16 %v4596, %v4564
        %v5845 = vpack.c.b16 %v4597, %v4565
        %v5846 = vpack.c.b16 %v4598, %v4566
        %v5847 = vpack.c.b16 %v4599, %v4567
        %v5848 = vpack.c.b16 %v4600, %v4568
        %v5849 = vpack.c.b16 %v4601, %v4569
        %v5850 = vpack.c.b16 %v4602, %v4570
        %v5851 = vpack.c.b16 %v4603, %v4571
        %v5852 = vpack.c.b16 %v4604, %v4572
        %v5853 = vpack.c.b16 %v4605, %v4573
        %v5854 = vpack.c.b16 %v4606, %v4574
        %v5855 = vpack.c.b16 %v4607, %v4575
        %v5856 = vpack.c.b16 %v4608, %v4576
        %v5857 = vpack.c.b16 %v4609, %v4577
        %v5858 = vpack.c.b16 %v4642, %v4610
        %v5859 = vpack.c.b16 %v4643, %v4611
        %v5860 = vpack.c.b16 %v4644, %v4612
        %v5861 = vpack.c.b16 %v4645, %v4613
        %v5862 = vpack.c.b16 %v4646, %v4614
        %v5863 = vpack.c.b16 %v4647, %v4615
        %v5864 = vpack.c.b16 %v4648, %v4616
        %v5865 = vpack.c.b16 %v4649, %v4617
        %v5866 = vpack.c.b16 %v4650, %v4618
        %v5867 = vpack.c.b16 %v4651, %v4619
        %v5868 = vpack.c.b16 %v4652, %v4620
        %v5869 = vpack.c.b16 %v4653, %v4621
        %v5870 = vpack.c.b16 %v4654, %v4622
        %v5871 = vpack.c.b16 %v4655, %v4623
        %v5872 = vpack.c.b16 %v4656, %v4624
        %v5873 = vpack.c.b16 %v4657, %v4625
        %v5874 = vpack.c.b16 %v4658, %v4626
        %v5875 = vpack.c.b16 %v4659, %v4627
        %v5876 = vpack.c.b16 %v4660, %v4628
        %v5877 = vpack.c.b16 %v4661, %v4629
        %v5878 = vpack.c.b16 %v4662, %v4630
        %v5879 = vpack.c.b16 %v4663, %v4631
        %v5880 = vpack.c.b16 %v4664, %v4632
        %v5881 = vpack.c.b16 %v4665, %v4633
        %v5882 = vpack.c.b16 %v4666, %v4634
        %v5883 = vpack.c.b16 %v4667, %v4635
        %v5884 = vpack.c.b16 %v4668, %v4636
        %v5885 = vpack.c.b16 %v4669, %v4637
        %v5886 = vpack.c.b16 %v4670, %v4638
        %v5887 = vpack.c.b16 %v4671, %v4639
        %v5888 = vpack.c.b16 %v4672, %v4640
        %v5889 = vpack.c.b16 %v4673, %v4641
        %v5890 = vpack.c.b16 %v4706, %v4674
        %v5891 = vpack.c.b16 %v4707, %v4675
        %v5892 = vpack.c.b16 %v4708, %v4676
        %v5893 = vpack.c.b16 %v4709, %v4677
        %v5894 = vpack.c.b16 %v4710, %v4678
        %v5895 = vpack.c.b16 %v4711, %v4679
        %v5896 = vpack.c.b16 %v4712, %v4680
        %v5897 = vpack.c.b16 %v4713, %v4681
        %v5898 = vpack.c.b16 %v4714, %v4682
        %v5899 = vpack.c.b16 %v4715, %v4683
        %v5900 = vpack.c.b16 %v4716, %v4684
        %v5901 = vpack.c.b16 %v4717, %v4685
        %v5902 = vpack.c.b16 %v4718, %v4686
        %v5903 = vpack.c.b16 %v4719, %v4687
        %v5904 = vpack.c.b16 %v4720, %v4688
        %v5905 = vpack.c.b16 %v4721, %v4689
        %v5906 = vpack.c.b16 %v4722, %v4690
        %v5907 = vpack.c.b16 %v4723, %v4691
        %v5908 = vpack.c.b16 %v4724, %v4692
        %v5909 = vpack.c.b16 %v4725, %v4693
        %v5910 = vpack.c.b16 %v4726, %v4694
        %v5911 = vpack.c.b16 %v4727, %v4695
        %v5912 = vpack.c.b16 %v4728, %v4696
        %v5913 = vpack.c.b16 %v4729, %v4697
        %v5914 = vpack.c.b16 %v4730, %v4698
        %v5915 = vpack.c.b16 %v4731, %v4699
        %v5916 = vpack.c.b16 %v4732, %v4700
        %v5917 = vpack.c.b16 %v4733, %v4701
        %v5918 = vpack.c.b16 %v4734, %v4702
        %v5919 = vpack.c.b16 %v4735, %v4703
        %v5920 = vpack.c.b16 %v4736, %v4704
        %v5921 = vpack.c.b16 %v4737, %v4705
        %v5922 = vpack.c.b16 %v4770, %v4738
        %v5923 = vpack.c.b16 %v4771, %v4739
        %v5924 = vpack.c.b16 %v4772, %v4740
        %v5925 = vpack.c.b16 %v4773, %v4741
        %v5926 = vpack.c.b16 %v4774, %v4742
        %v5927 = vpack.c.b16 %v4775, %v4743
        %v5928 = vpack.c.b16 %v4776, %v4744
        %v5929 = vpack.c.b16 %v4777, %v4745
        %v5930 = vpack.c.b16 %v4778, %v4746
        %v5931 = vpack.c.b16 %v4779, %v4747
        %v5932 = vpack.c.b16 %v4780, %v4748
        %v5933 = vpack.c.b16 %v4781, %v4749
        %v5934 = vpack.c.b16 %v4782, %v4750
        %v5935 = vpack.c.b16 %v4783, %v4751
        %v5936 = vpack.c.b16 %v4784, %v4752
        %v5937 = vpack.c.b16 %v4785, %v4753
        %v5938 = vpack.c.b16 %v4786, %v4754
        %v5939 = vpack.c.b16 %v4787, %v4755
        %v5940 = vpack.c.b16 %v4788, %v4756
        %v5941 = vpack.c.b16 %v4789, %v4757
        %v5942 = vpack.c.b16 %v4790, %v4758
        %v5943 = vpack.c.b16 %v4791, %v4759
        %v5944 = vpack.c.b16 %v4792, %v4760
        %v5945 = vpack.c.b16 %v4793, %v4761
        %v5946 = vpack.c.b16 %v4794, %v4762
        %v5947 = vpack.c.b16 %v4795, %v4763
        %v5948 = vpack.c.b16 %v4796, %v4764
        %v5949 = vpack.c.b16 %v4797, %v4765
        %v5950 = vpack.c.b16 %v4798, %v4766
        %v5951 = vpack.c.b16 %v4799, %v4767
        %v5952 = vpack.c.b16 %v4800, %v4768
        %v5953 = vpack.c.b16 %v4801, %v4769
        %v5954 = vpack.c.b16 %v4834, %v4802
        %v5955 = vpack.c.b16 %v4835, %v4803
        %v5956 = vpack.c.b16 %v4836, %v4804
        %v5957 = vpack.c.b16 %v4837, %v4805
        %v5958 = vpack.c.b16 %v4838, %v4806
        %v5959 = vpack.c.b16 %v4839, %v4807
        %v5960 = vpack.c.b16 %v4840, %v4808
        %v5961 = vpack.c.b16 %v4841, %v4809
        %v5962 = vpack.c.b16 %v4842, %v4810
        %v5963 = vpack.c.b16 %v4843, %v4811
        %v5964 = vpack.c.b16 %v4844, %v4812
        %v5965 = vpack.c.b16 %v4845, %v4813
        %v5966 = vpack.c.b16 %v4846, %v4814
        %v5967 = vpack.c.b16 %v4847, %v4815
        %v5968 = vpack.c.b16 %v4848, %v4816
        %v5969 = vpack.c.b16 %v4849, %v4817
        %v5970 = vpack.c.b16 %v4850, %v4818
        %v5971 = vpack.c.b16 %v4851, %v4819
        %v5972 = vpack.c.b16 %v4852, %v4820
        %v5973 = vpack.c.b16 %v4853, %v4821
        %v5974 = vpack.c.b16 %v4854, %v4822
        %v5975 = vpack.c.b16 %v4855, %v4823
        %v5976 = vpack.c.b16 %v4856, %v4824
        %v5977 = vpack.c.b16 %v4857, %v4825
        %v5978 = vpack.c.b16 %v4858, %v4826
        %v5979 = vpack.c.b16 %v4859, %v4827
        %v5980 = vpack.c.b16 %v4860, %v4828
        %v5981 = vpack.c.b16 %v4861, %v4829
        %v5982 = vpack.c.b16 %v4862, %v4830
        %v5983 = vpack.c.b16 %v4863, %v4831
        %v5984 = vpack.c.b16 %v4864, %v4832
        %v5985 = vpack.c.b16 %v4865, %v4833
        %v5986 = vpack.c.b16 %v4898, %v4866
        %v5987 = vpack.c.b16 %v4899, %v4867
        %v5988 = vpack.c.b16 %v4900, %v4868
        %v5989 = vpack.c.b16 %v4901, %v4869
        %v5990 = vpack.c.b16 %v4902, %v4870
        %v5991 = vpack.c.b16 %v4903, %v4871
        %v5992 = vpack.c.b16 %v4904, %v4872
        %v5993 = vpack.c.b16 %v4905, %v4873
        %v5994 = vpack.c.b16 %v4906, %v4874
        %v5995 = vpack.c.b16 %v4907, %v4875
        %v5996 = vpack.c.b16 %v4908, %v4876
        %v5997 = vpack.c.b16 %v4909, %v4877
        %v5998 = vpack.c.b16 %v4910, %v4878
        %v5999 = vpack.c.b16 %v4911, %v4879
        %v6000 = vpack.c.b16 %v4912, %v4880
        %v6001 = vpack.c.b16 %v4913, %v4881
        %v6002 = vpack.c.b16 %v4914, %v4882
        %v6003 = vpack.c.b16 %v4915, %v4883
        %v6004 = vpack.c.b16 %v4916, %v4884
        %v6005 = vpack.c.b16 %v4917, %v4885
        %v6006 = vpack.c.b16 %v4918, %v4886
        %v6007 = vpack.c.b16 %v4919, %v4887
        %v6008 = vpack.c.b16 %v4920, %v4888
        %v6009 = vpack.c.b16 %v4921, %v4889
        %v6010 = vpack.c.b16 %v4922, %v4890
        %v6011 = vpack.c.b16 %v4923, %v4891
        %v6012 = vpack.c.b16 %v4924, %v4892
        %v6013 = vpack.c.b16 %v4925, %v4893
        %v6014 = vpack.c.b16 %v4926, %v4894
        %v6015 = vpack.c.b16 %v4927, %v4895
        %v6016 = vpack.c.b16 %v4928, %v4896
        %v6017 = vpack.c.b16 %v4929, %v4897
        %v6018 = vpack.c.b16 %v4962, %v4930
        %v6019 = vpack.c.b16 %v4963, %v4931
        %v6020 = vpack.c.b16 %v4964, %v4932
        %v6021 = vpack.c.b16 %v4965, %v4933
        %v6022 = vpack.c.b16 %v4966, %v4934
        %v6023 = vpack.c.b16 %v4967, %v4935
        %v6024 = vpack.c.b16 %v4968, %v4936
        %v6025 = vpack.c.b16 %v4969, %v4937
        %v6026 = vpack.c.b16 %v4970, %v4938
        %v6027 = vpack.c.b16 %v4971, %v4939
        %v6028 = vpack.c.b16 %v4972, %v4940
        %v6029 = vpack.c.b16 %v4973, %v4941
        %v6030 = vpack.c.b16 %v4974, %v4942
        %v6031 = vpack.c.b16 %v4975, %v4943
        %v6032 = vpack.c.b16 %v4976, %v4944
        %v6033 = vpack.c.b16 %v4977, %v4945
        %v6034 = vpack.c.b16 %v4978, %v4946
        %v6035 = vpack.c.b16 %v4979, %v4947
        %v6036 = vpack.c.b16 %v4980, %v4948
        %v6037 = vpack.c.b16 %v4981, %v4949
        %v6038 = vpack.c.b16 %v4982, %v4950
        %v6039 = vpack.c.b16 %v4983, %v4951
        %v6040 = vpack.c.b16 %v4984, %v4952
        %v6041 = vpack.c.b16 %v4985, %v4953
        %v6042 = vpack.c.b16 %v4986, %v4954
        %v6043 = vpack.c.b16 %v4987, %v4955
        %v6044 = vpack.c.b16 %v4988, %v4956
        %v6045 = vpack.c.b16 %v4989, %v4957
        %v6046 = vpack.c.b16 %v4990, %v4958
        %v6047 = vpack.c.b16 %v4991, %v4959
        %v6048 = vpack.c.b16 %v4992, %v4960
        %v6049 = vpack.c.b16 %v4993, %v4961
        %v6050 = vpack.c.b16 %v5026, %v4994
        %v6051 = vpack.c.b16 %v5027, %v4995
        %v6052 = vpack.c.b16 %v5028, %v4996
        %v6053 = vpack.c.b16 %v5029, %v4997
        %v6054 = vpack.c.b16 %v5030, %v4998
        %v6055 = vpack.c.b16 %v5031, %v4999
        %v6056 = vpack.c.b16 %v5032, %v5000
        %v6057 = vpack.c.b16 %v5033, %v5001
        %v6058 = vpack.c.b16 %v5034, %v5002
        %v6059 = vpack.c.b16 %v5035, %v5003
        %v6060 = vpack.c.b16 %v5036, %v5004
        %v6061 = vpack.c.b16 %v5037, %v5005
        %v6062 = vpack.c.b16 %v5038, %v5006
        %v6063 = vpack.c.b16 %v5039, %v5007
        %v6064 = vpack.c.b16 %v5040, %v5008
        %v6065 = vpack.c.b16 %v5041, %v5009
        %v6066 = vpack.c.b16 %v5042, %v5010
        %v6067 = vpack.c.b16 %v5043, %v5011
        %v6068 = vpack.c.b16 %v5044, %v5012
        %v6069 = vpack.c.b16 %v5045, %v5013
        %v6070 = vpack.c.b16 %v5046, %v5014
        %v6071 = vpack.c.b16 %v5047, %v5015
        %v6072 = vpack.c.b16 %v5048, %v5016
        %v6073 = vpack.c.b16 %v5049, %v5017
        %v6074 = vpack.c.b16 %v5050, %v5018
        %v6075 = vpack.c.b16 %v5051, %v5019
        %v6076 = vpack.c.b16 %v5052, %v5020
        %v6077 = vpack.c.b16 %v5053, %v5021
        %v6078 = vpack.c.b16 %v5054, %v5022
        %v6079 = vpack.c.b16 %v5055, %v5023
        %v6080 = vpack.c.b16 %v5056, %v5024
        %v6081 = vpack.c.b16 %v5057, %v5025
        %7106 = vmatpush.bf16.xpose.msra.mxu0 %v5282
        %7107 = vmatpush.bf16.xpose.msra.mxu0 %v5250
        %7108 = vmatpush.bf16.xpose.msra.mxu0 %v5218
        %7109 = vmatpush.bf16.xpose.msra.mxu0 %v5186
        %7110 = vmatpush.bf16.xpose.msra.mxu0 %v5154
        %7111 = vmatpush.bf16.xpose.msra.mxu0 %v5122
        %7112 = vmatpush.bf16.xpose.msra.mxu0 %v5090
        %7113 = vmatpush.bf16.xpose.msra.mxu0 %v5058
        %7114 = vmatmul.bf16.gmra.mxu0 %v1730
        %v7115 = vpop.f32.mrf.mxu0
        %v7116 = vadd.f32 %v1386, %v7115
        %v7117 = vpop.f32.mrf.mxu0
        %v7118 = vadd.f32 %v1386, %v7117
        %7119 = vmatmul.bf16.gmra.mxu0 %v1762
        %v7120 = vpop.f32.mrf.mxu0
        %v7121 = vadd.f32 %v1386, %v7120
        %v7122 = vpop.f32.mrf.mxu0
        %v7123 = vadd.f32 %v1386, %v7122
        %7124 = vmatmul.bf16.gmra.mxu0 %v1794
        %v7125 = vpop.f32.mrf.mxu0
        %v7126 = vadd.f32 %v1386, %v7125
        %v7127 = vpop.f32.mrf.mxu0
        %v7128 = vadd.f32 %v1386, %v7127
        %7129 = vmatmul.bf16.gmra.mxu0 %v1826
        %v7130 = vpop.f32.mrf.mxu0
        %v7131 = vadd.f32 %v1386, %v7130
        %v7132 = vpop.f32.mrf.mxu0
        %7133 = vdwg.mxu0
        %7134 = vmatpush.bf16.xpose.msra.mxu0 %v5283
        %7135 = vmatpush.bf16.xpose.msra.mxu0 %v5251
        %7136 = vmatpush.bf16.xpose.msra.mxu0 %v5219
        %7137 = vmatpush.bf16.xpose.msra.mxu0 %v5187
        %7138 = vmatpush.bf16.xpose.msra.mxu0 %v5155
        %7139 = vmatpush.bf16.xpose.msra.mxu0 %v5123
        %7140 = vmatpush.bf16.xpose.msra.mxu0 %v5091
        %7141 = vmatpush.bf16.xpose.msra.mxu0 %v5059
        %7142 = vmatmul.bf16.gmra.mxu0 %v1731
        %v7143 = vpop.f32.mrf.mxu0
        %v7144 = vadd.f32 %v7116, %v7143
        %v7145 = vpop.f32.mrf.mxu0
        %v7146 = vadd.f32 %v7118, %v7145
        %7147 = vmatmul.bf16.gmra.mxu0 %v1763
        %v7148 = vpop.f32.mrf.mxu0
        %v7149 = vadd.f32 %v7121, %v7148
        %v7150 = vpop.f32.mrf.mxu0
        %v7151 = vadd.f32 %v7123, %v7150
        %7152 = vmatmul.bf16.gmra.mxu0 %v1795
        %v7153 = vpop.f32.mrf.mxu0
        %v7154 = vadd.f32 %v7126, %v7153
        %v7155 = vpop.f32.mrf.mxu0
        %v7156 = vadd.f32 %v7128, %v7155
        %7157 = vmatmul.bf16.gmra.mxu0 %v1827
        %v7158 = vpop.f32.mrf.mxu0
        %v7159 = vadd.f32 %v7131, %v7158
        %v7160 = vpop.f32.mrf.mxu0
        %7161 = vdwg.mxu0
        %7162 = vmatpush.bf16.xpose.msra.mxu0 %v5284
        %7163 = vmatpush.bf16.xpose.msra.mxu0 %v5252
        %7164 = vmatpush.bf16.xpose.msra.mxu0 %v5220
        %7165 = vmatpush.bf16.xpose.msra.mxu0 %v5188
        %7166 = vmatpush.bf16.xpose.msra.mxu0 %v5156
        %7167 = vmatpush.bf16.xpose.msra.mxu0 %v5124
        %7168 = vmatpush.bf16.xpose.msra.mxu0 %v5092
        %7169 = vmatpush.bf16.xpose.msra.mxu0 %v5060
        %7170 = vmatmul.bf16.gmra.mxu0 %v1732
        %v7171 = vpop.f32.mrf.mxu0
        %v7172 = vadd.f32 %v7144, %v7171
        %v7173 = vpop.f32.mrf.mxu0
        %v7174 = vadd.f32 %v7146, %v7173
        %7175 = vmatmul.bf16.gmra.mxu0 %v1764
        %v7176 = vpop.f32.mrf.mxu0
        %v7177 = vadd.f32 %v7149, %v7176
        %v7178 = vpop.f32.mrf.mxu0
        %v7179 = vadd.f32 %v7151, %v7178
        %7180 = vmatmul.bf16.gmra.mxu0 %v1796
        %v7181 = vpop.f32.mrf.mxu0
        %v7182 = vadd.f32 %v7154, %v7181
        %v7183 = vpop.f32.mrf.mxu0
        %v7184 = vadd.f32 %v7156, %v7183
        %7185 = vmatmul.bf16.gmra.mxu0 %v1828
        %v7186 = vpop.f32.mrf.mxu0
        %v7187 = vadd.f32 %v7159, %v7186
        %v7188 = vpop.f32.mrf.mxu0
        %7189 = vdwg.mxu0
        %7190 = vmatpush.bf16.xpose.msra.mxu0 %v5285
        %7191 = vmatpush.bf16.xpose.msra.mxu0 %v5253
        %7192 = vmatpush.bf16.xpose.msra.mxu0 %v5221
        %7193 = vmatpush.bf16.xpose.msra.mxu0 %v5189
        %7194 = vmatpush.bf16.xpose.msra.mxu0 %v5157
        %7195 = vmatpush.bf16.xpose.msra.mxu0 %v5125
        %7196 = vmatpush.bf16.xpose.msra.mxu0 %v5093
        %7197 = vmatpush.bf16.xpose.msra.mxu0 %v5061
        %7198 = vmatmul.bf16.gmra.mxu0 %v1733
        %v7199 = vpop.f32.mrf.mxu0
        %v7200 = vadd.f32 %v7172, %v7199
        %v7201 = vpop.f32.mrf.mxu0
        %v7202 = vadd.f32 %v7174, %v7201
        %7203 = vmatmul.bf16.gmra.mxu0 %v1765
        %v7204 = vpop.f32.mrf.mxu0
        %v7205 = vadd.f32 %v7177, %v7204
        %v7206 = vpop.f32.mrf.mxu0
        %v7207 = vadd.f32 %v7179, %v7206
        %7208 = vmatmul.bf16.gmra.mxu0 %v1797
        %v7209 = vpop.f32.mrf.mxu0
        %v7210 = vadd.f32 %v7182, %v7209
        %v7211 = vpop.f32.mrf.mxu0
        %v7212 = vadd.f32 %v7184, %v7211
        %7213 = vmatmul.bf16.gmra.mxu0 %v1829
        %v7214 = vpop.f32.mrf.mxu0
        %v7215 = vadd.f32 %v7187, %v7214
        %v7216 = vpop.f32.mrf.mxu0
        %7217 = vdwg.mxu0
        %7218 = vmatpush.bf16.xpose.msra.mxu0 %v5286
        %7219 = vmatpush.bf16.xpose.msra.mxu0 %v5254
        %7220 = vmatpush.bf16.xpose.msra.mxu0 %v5222
        %7221 = vmatpush.bf16.xpose.msra.mxu0 %v5190
        %7222 = vmatpush.bf16.xpose.msra.mxu0 %v5158
        %7223 = vmatpush.bf16.xpose.msra.mxu0 %v5126
        %7224 = vmatpush.bf16.xpose.msra.mxu0 %v5094
        %7225 = vmatpush.bf16.xpose.msra.mxu0 %v5062
        %7226 = vmatmul.bf16.gmra.mxu0 %v1734
        %v7227 = vpop.f32.mrf.mxu0
        %v7228 = vadd.f32 %v7200, %v7227
        %v7229 = vpop.f32.mrf.mxu0
        %v7230 = vadd.f32 %v7202, %v7229
        %7231 = vmatmul.bf16.gmra.mxu0 %v1766
        %v7232 = vpop.f32.mrf.mxu0
        %v7233 = vadd.f32 %v7205, %v7232
        %v7234 = vpop.f32.mrf.mxu0
        %v7235 = vadd.f32 %v7207, %v7234
        %7236 = vmatmul.bf16.gmra.mxu0 %v1798
        %v7237 = vpop.f32.mrf.mxu0
        %v7238 = vadd.f32 %v7210, %v7237
        %v7239 = vpop.f32.mrf.mxu0
        %v7240 = vadd.f32 %v7212, %v7239
        %7241 = vmatmul.bf16.gmra.mxu0 %v1830
        %v7242 = vpop.f32.mrf.mxu0
        %v7243 = vadd.f32 %v7215, %v7242
        %v7244 = vpop.f32.mrf.mxu0
        %7245 = vdwg.mxu0
        %7246 = vmatpush.bf16.xpose.msra.mxu0 %v5287
        %7247 = vmatpush.bf16.xpose.msra.mxu0 %v5255
        %7248 = vmatpush.bf16.xpose.msra.mxu0 %v5223
        %7249 = vmatpush.bf16.xpose.msra.mxu0 %v5191
        %7250 = vmatpush.bf16.xpose.msra.mxu0 %v5159
        %7251 = vmatpush.bf16.xpose.msra.mxu0 %v5127
        %7252 = vmatpush.bf16.xpose.msra.mxu0 %v5095
        %7253 = vmatpush.bf16.xpose.msra.mxu0 %v5063
        %7254 = vmatmul.bf16.gmra.mxu0 %v1735
        %v7255 = vpop.f32.mrf.mxu0
        %v7256 = vadd.f32 %v7228, %v7255
        %v7257 = vpop.f32.mrf.mxu0
        %v7258 = vadd.f32 %v7230, %v7257
        %7259 = vmatmul.bf16.gmra.mxu0 %v1767
        %v7260 = vpop.f32.mrf.mxu0
        %v7261 = vadd.f32 %v7233, %v7260
        %v7262 = vpop.f32.mrf.mxu0
        %v7263 = vadd.f32 %v7235, %v7262
        %7264 = vmatmul.bf16.gmra.mxu0 %v1799
        %v7265 = vpop.f32.mrf.mxu0
        %v7266 = vadd.f32 %v7238, %v7265
        %v7267 = vpop.f32.mrf.mxu0
        %v7268 = vadd.f32 %v7240, %v7267
        %7269 = vmatmul.bf16.gmra.mxu0 %v1831
        %v7270 = vpop.f32.mrf.mxu0
        %v7271 = vadd.f32 %v7243, %v7270
        %v7272 = vpop.f32.mrf.mxu0
        %7273 = vdwg.mxu0
        %7274 = vmatpush.bf16.xpose.msra.mxu0 %v5288
        %7275 = vmatpush.bf16.xpose.msra.mxu0 %v5256
        %7276 = vmatpush.bf16.xpose.msra.mxu0 %v5224
        %7277 = vmatpush.bf16.xpose.msra.mxu0 %v5192
        %7278 = vmatpush.bf16.xpose.msra.mxu0 %v5160
        %7279 = vmatpush.bf16.xpose.msra.mxu0 %v5128
        %7280 = vmatpush.bf16.xpose.msra.mxu0 %v5096
        %7281 = vmatpush.bf16.xpose.msra.mxu0 %v5064
        %7282 = vmatmul.bf16.gmra.mxu0 %v1736
        %v7283 = vpop.f32.mrf.mxu0
        %v7284 = vadd.f32 %v7256, %v7283
        %v7285 = vpop.f32.mrf.mxu0
        %v7286 = vadd.f32 %v7258, %v7285
        %7287 = vmatmul.bf16.gmra.mxu0 %v1768
        %v7288 = vpop.f32.mrf.mxu0
        %v7289 = vadd.f32 %v7261, %v7288
        %v7290 = vpop.f32.mrf.mxu0
        %v7291 = vadd.f32 %v7263, %v7290
        %7292 = vmatmul.bf16.gmra.mxu0 %v1800
        %v7293 = vpop.f32.mrf.mxu0
        %v7294 = vadd.f32 %v7266, %v7293
        %v7295 = vpop.f32.mrf.mxu0
        %v7296 = vadd.f32 %v7268, %v7295
        %7297 = vmatmul.bf16.gmra.mxu0 %v1832
        %v7298 = vpop.f32.mrf.mxu0
        %v7299 = vadd.f32 %v7271, %v7298
        %v7300 = vpop.f32.mrf.mxu0
        %7301 = vdwg.mxu0
        %7302 = vmatpush.bf16.xpose.msra.mxu0 %v5289
        %7303 = vmatpush.bf16.xpose.msra.mxu0 %v5257
        %7304 = vmatpush.bf16.xpose.msra.mxu0 %v5225
        %7305 = vmatpush.bf16.xpose.msra.mxu0 %v5193
        %7306 = vmatpush.bf16.xpose.msra.mxu0 %v5161
        %7307 = vmatpush.bf16.xpose.msra.mxu0 %v5129
        %7308 = vmatpush.bf16.xpose.msra.mxu0 %v5097
        %7309 = vmatpush.bf16.xpose.msra.mxu0 %v5065
        %7310 = vmatmul.bf16.gmra.mxu0 %v1737
        %v7311 = vpop.f32.mrf.mxu0
        %v7312 = vadd.f32 %v7284, %v7311
        %v7313 = vpop.f32.mrf.mxu0
        %v7314 = vadd.f32 %v7286, %v7313
        %7315 = vmatmul.bf16.gmra.mxu0 %v1769
        %v7316 = vpop.f32.mrf.mxu0
        %v7317 = vadd.f32 %v7289, %v7316
        %v7318 = vpop.f32.mrf.mxu0
        %v7319 = vadd.f32 %v7291, %v7318
        %7320 = vmatmul.bf16.gmra.mxu0 %v1801
        %v7321 = vpop.f32.mrf.mxu0
        %v7322 = vadd.f32 %v7294, %v7321
        %v7323 = vpop.f32.mrf.mxu0
        %v7324 = vadd.f32 %v7296, %v7323
        %7325 = vmatmul.bf16.gmra.mxu0 %v1833
        %v7326 = vpop.f32.mrf.mxu0
        %v7327 = vadd.f32 %v7299, %v7326
        %v7328 = vpop.f32.mrf.mxu0
        %7329 = vdwg.mxu0
        %7330 = vmatpush.bf16.xpose.msra.mxu0 %v5290
        %7331 = vmatpush.bf16.xpose.msra.mxu0 %v5258
        %7332 = vmatpush.bf16.xpose.msra.mxu0 %v5226
        %7333 = vmatpush.bf16.xpose.msra.mxu0 %v5194
        %7334 = vmatpush.bf16.xpose.msra.mxu0 %v5162
        %7335 = vmatpush.bf16.xpose.msra.mxu0 %v5130
        %7336 = vmatpush.bf16.xpose.msra.mxu0 %v5098
        %7337 = vmatpush.bf16.xpose.msra.mxu0 %v5066
        %7338 = vmatmul.bf16.gmra.mxu0 %v1738
        %v7339 = vpop.f32.mrf.mxu0
        %v7340 = vadd.f32 %v7312, %v7339
        %v7341 = vpop.f32.mrf.mxu0
        %v7342 = vadd.f32 %v7314, %v7341
        %7343 = vmatmul.bf16.gmra.mxu0 %v1770
        %v7344 = vpop.f32.mrf.mxu0
        %v7345 = vadd.f32 %v7317, %v7344
        %v7346 = vpop.f32.mrf.mxu0
        %v7347 = vadd.f32 %v7319, %v7346
        %7348 = vmatmul.bf16.gmra.mxu0 %v1802
        %v7349 = vpop.f32.mrf.mxu0
        %v7350 = vadd.f32 %v7322, %v7349
        %v7351 = vpop.f32.mrf.mxu0
        %v7352 = vadd.f32 %v7324, %v7351
        %7353 = vmatmul.bf16.gmra.mxu0 %v1834
        %v7354 = vpop.f32.mrf.mxu0
        %v7355 = vadd.f32 %v7327, %v7354
        %v7356 = vpop.f32.mrf.mxu0
        %7357 = vdwg.mxu0
        %7358 = vmatpush.bf16.xpose.msra.mxu0 %v5291
        %7359 = vmatpush.bf16.xpose.msra.mxu0 %v5259
        %7360 = vmatpush.bf16.xpose.msra.mxu0 %v5227
        %7361 = vmatpush.bf16.xpose.msra.mxu0 %v5195
        %7362 = vmatpush.bf16.xpose.msra.mxu0 %v5163
        %7363 = vmatpush.bf16.xpose.msra.mxu0 %v5131
        %7364 = vmatpush.bf16.xpose.msra.mxu0 %v5099
        %7365 = vmatpush.bf16.xpose.msra.mxu0 %v5067
        %7366 = vmatmul.bf16.gmra.mxu0 %v1739
        %v7367 = vpop.f32.mrf.mxu0
        %v7368 = vadd.f32 %v7340, %v7367
        %v7369 = vpop.f32.mrf.mxu0
        %v7370 = vadd.f32 %v7342, %v7369
        %7371 = vmatmul.bf16.gmra.mxu0 %v1771
        %v7372 = vpop.f32.mrf.mxu0
        %v7373 = vadd.f32 %v7345, %v7372
        %v7374 = vpop.f32.mrf.mxu0
        %v7375 = vadd.f32 %v7347, %v7374
        %7376 = vmatmul.bf16.gmra.mxu0 %v1803
        %v7377 = vpop.f32.mrf.mxu0
        %v7378 = vadd.f32 %v7350, %v7377
        %v7379 = vpop.f32.mrf.mxu0
        %v7380 = vadd.f32 %v7352, %v7379
        %7381 = vmatmul.bf16.gmra.mxu0 %v1835
        %v7382 = vpop.f32.mrf.mxu0
        %v7383 = vadd.f32 %v7355, %v7382
        %v7384 = vpop.f32.mrf.mxu0
        %7385 = vdwg.mxu0
        %7386 = vmatpush.bf16.xpose.msra.mxu0 %v5292
        %7387 = vmatpush.bf16.xpose.msra.mxu0 %v5260
        %7388 = vmatpush.bf16.xpose.msra.mxu0 %v5228
        %7389 = vmatpush.bf16.xpose.msra.mxu0 %v5196
        %7390 = vmatpush.bf16.xpose.msra.mxu0 %v5164
        %7391 = vmatpush.bf16.xpose.msra.mxu0 %v5132
        %7392 = vmatpush.bf16.xpose.msra.mxu0 %v5100
        %7393 = vmatpush.bf16.xpose.msra.mxu0 %v5068
        %7394 = vmatmul.bf16.gmra.mxu0 %v1740
        %v7395 = vpop.f32.mrf.mxu0
        %v7396 = vadd.f32 %v7368, %v7395
        %v7397 = vpop.f32.mrf.mxu0
        %v7398 = vadd.f32 %v7370, %v7397
        %7399 = vmatmul.bf16.gmra.mxu0 %v1772
        %v7400 = vpop.f32.mrf.mxu0
        %v7401 = vadd.f32 %v7373, %v7400
        %v7402 = vpop.f32.mrf.mxu0
        %v7403 = vadd.f32 %v7375, %v7402
        %7404 = vmatmul.bf16.gmra.mxu0 %v1804
        %v7405 = vpop.f32.mrf.mxu0
        %v7406 = vadd.f32 %v7378, %v7405
        %v7407 = vpop.f32.mrf.mxu0
        %v7408 = vadd.f32 %v7380, %v7407
        %7409 = vmatmul.bf16.gmra.mxu0 %v1836
        %v7410 = vpop.f32.mrf.mxu0
        %v7411 = vadd.f32 %v7383, %v7410
        %v7412 = vpop.f32.mrf.mxu0
        %7413 = vdwg.mxu0
        %7414 = vmatpush.bf16.xpose.msra.mxu0 %v5293
        %7415 = vmatpush.bf16.xpose.msra.mxu0 %v5261
        %7416 = vmatpush.bf16.xpose.msra.mxu0 %v5229
        %7417 = vmatpush.bf16.xpose.msra.mxu0 %v5197
        %7418 = vmatpush.bf16.xpose.msra.mxu0 %v5165
        %7419 = vmatpush.bf16.xpose.msra.mxu0 %v5133
        %7420 = vmatpush.bf16.xpose.msra.mxu0 %v5101
        %7421 = vmatpush.bf16.xpose.msra.mxu0 %v5069
        %7422 = vmatmul.bf16.gmra.mxu0 %v1741
        %v7423 = vpop.f32.mrf.mxu0
        %v7424 = vadd.f32 %v7396, %v7423
        %v7425 = vpop.f32.mrf.mxu0
        %v7426 = vadd.f32 %v7398, %v7425
        %7427 = vmatmul.bf16.gmra.mxu0 %v1773
        %v7428 = vpop.f32.mrf.mxu0
        %v7429 = vadd.f32 %v7401, %v7428
        %v7430 = vpop.f32.mrf.mxu0
        %v7431 = vadd.f32 %v7403, %v7430
        %7432 = vmatmul.bf16.gmra.mxu0 %v1805
        %v7433 = vpop.f32.mrf.mxu0
        %v7434 = vadd.f32 %v7406, %v7433
        %v7435 = vpop.f32.mrf.mxu0
        %v7436 = vadd.f32 %v7408, %v7435
        %7437 = vmatmul.bf16.gmra.mxu0 %v1837
        %v7438 = vpop.f32.mrf.mxu0
        %v7439 = vadd.f32 %v7411, %v7438
        %v7440 = vpop.f32.mrf.mxu0
        %7441 = vdwg.mxu0
        %7442 = vmatpush.bf16.xpose.msra.mxu0 %v5294
        %7443 = vmatpush.bf16.xpose.msra.mxu0 %v5262
        %7444 = vmatpush.bf16.xpose.msra.mxu0 %v5230
        %7445 = vmatpush.bf16.xpose.msra.mxu0 %v5198
        %7446 = vmatpush.bf16.xpose.msra.mxu0 %v5166
        %7447 = vmatpush.bf16.xpose.msra.mxu0 %v5134
        %7448 = vmatpush.bf16.xpose.msra.mxu0 %v5102
        %7449 = vmatpush.bf16.xpose.msra.mxu0 %v5070
        %7450 = vmatmul.bf16.gmra.mxu0 %v1742
        %v7451 = vpop.f32.mrf.mxu0
        %v7452 = vadd.f32 %v7424, %v7451
        %v7453 = vpop.f32.mrf.mxu0
        %v7454 = vadd.f32 %v7426, %v7453
        %7455 = vmatmul.bf16.gmra.mxu0 %v1774
        %v7456 = vpop.f32.mrf.mxu0
        %v7457 = vadd.f32 %v7429, %v7456
        %v7458 = vpop.f32.mrf.mxu0
        %v7459 = vadd.f32 %v7431, %v7458
        %7460 = vmatmul.bf16.gmra.mxu0 %v1806
        %v7461 = vpop.f32.mrf.mxu0
        %v7462 = vadd.f32 %v7434, %v7461
        %v7463 = vpop.f32.mrf.mxu0
        %v7464 = vadd.f32 %v7436, %v7463
        %7465 = vmatmul.bf16.gmra.mxu0 %v1838
        %v7466 = vpop.f32.mrf.mxu0
        %v7467 = vadd.f32 %v7439, %v7466
        %v7468 = vpop.f32.mrf.mxu0
        %7469 = vdwg.mxu0
        %7470 = vmatpush.bf16.xpose.msra.mxu0 %v5295
        %7471 = vmatpush.bf16.xpose.msra.mxu0 %v5263
        %7472 = vmatpush.bf16.xpose.msra.mxu0 %v5231
        %7473 = vmatpush.bf16.xpose.msra.mxu0 %v5199
        %7474 = vmatpush.bf16.xpose.msra.mxu0 %v5167
        %7475 = vmatpush.bf16.xpose.msra.mxu0 %v5135
        %7476 = vmatpush.bf16.xpose.msra.mxu0 %v5103
        %7477 = vmatpush.bf16.xpose.msra.mxu0 %v5071
        %7478 = vmatmul.bf16.gmra.mxu0 %v1743
        %v7479 = vpop.f32.mrf.mxu0
        %v7480 = vadd.f32 %v7452, %v7479
        %v7481 = vpop.f32.mrf.mxu0
        %v7482 = vadd.f32 %v7454, %v7481
        %7483 = vmatmul.bf16.gmra.mxu0 %v1775
        %v7484 = vpop.f32.mrf.mxu0
        %v7485 = vadd.f32 %v7457, %v7484
        %v7486 = vpop.f32.mrf.mxu0
        %v7487 = vadd.f32 %v7459, %v7486
        %7488 = vmatmul.bf16.gmra.mxu0 %v1807
        %v7489 = vpop.f32.mrf.mxu0
        %v7490 = vadd.f32 %v7462, %v7489
        %v7491 = vpop.f32.mrf.mxu0
        %v7492 = vadd.f32 %v7464, %v7491
        %7493 = vmatmul.bf16.gmra.mxu0 %v1839
        %v7494 = vpop.f32.mrf.mxu0
        %v7495 = vadd.f32 %v7467, %v7494
        %v7496 = vpop.f32.mrf.mxu0
        %7497 = vdwg.mxu0
        %7498 = vmatpush.bf16.xpose.msra.mxu0 %v5296
        %7499 = vmatpush.bf16.xpose.msra.mxu0 %v5264
        %7500 = vmatpush.bf16.xpose.msra.mxu0 %v5232
        %7501 = vmatpush.bf16.xpose.msra.mxu0 %v5200
        %7502 = vmatpush.bf16.xpose.msra.mxu0 %v5168
        %7503 = vmatpush.bf16.xpose.msra.mxu0 %v5136
        %7504 = vmatpush.bf16.xpose.msra.mxu0 %v5104
        %7505 = vmatpush.bf16.xpose.msra.mxu0 %v5072
        %7506 = vmatmul.bf16.gmra.mxu0 %v1744
        %v7507 = vpop.f32.mrf.mxu0
        %v7508 = vadd.f32 %v7480, %v7507
        %v7509 = vpop.f32.mrf.mxu0
        %v7510 = vadd.f32 %v7482, %v7509
        %7511 = vmatmul.bf16.gmra.mxu0 %v1776
        %v7512 = vpop.f32.mrf.mxu0
        %v7513 = vadd.f32 %v7485, %v7512
        %v7514 = vpop.f32.mrf.mxu0
        %v7515 = vadd.f32 %v7487, %v7514
        %7516 = vmatmul.bf16.gmra.mxu0 %v1808
        %v7517 = vpop.f32.mrf.mxu0
        %v7518 = vadd.f32 %v7490, %v7517
        %v7519 = vpop.f32.mrf.mxu0
        %v7520 = vadd.f32 %v7492, %v7519
        %7521 = vmatmul.bf16.gmra.mxu0 %v1840
        %v7522 = vpop.f32.mrf.mxu0
        %v7523 = vadd.f32 %v7495, %v7522
        %v7524 = vpop.f32.mrf.mxu0
        %7525 = vdwg.mxu0
        %7526 = vmatpush.bf16.xpose.msra.mxu0 %v5297
        %7527 = vmatpush.bf16.xpose.msra.mxu0 %v5265
        %7528 = vmatpush.bf16.xpose.msra.mxu0 %v5233
        %7529 = vmatpush.bf16.xpose.msra.mxu0 %v5201
        %7530 = vmatpush.bf16.xpose.msra.mxu0 %v5169
        %7531 = vmatpush.bf16.xpose.msra.mxu0 %v5137
        %7532 = vmatpush.bf16.xpose.msra.mxu0 %v5105
        %7533 = vmatpush.bf16.xpose.msra.mxu0 %v5073
        %7534 = vmatmul.bf16.gmra.mxu0 %v1745
        %v7535 = vpop.f32.mrf.mxu0
        %v7536 = vadd.f32 %v7508, %v7535
        %v7537 = vpop.f32.mrf.mxu0
        %v7538 = vadd.f32 %v7510, %v7537
        %7539 = vmatmul.bf16.gmra.mxu0 %v1777
        %v7540 = vpop.f32.mrf.mxu0
        %v7541 = vadd.f32 %v7513, %v7540
        %v7542 = vpop.f32.mrf.mxu0
        %v7543 = vadd.f32 %v7515, %v7542
        %7544 = vmatmul.bf16.gmra.mxu0 %v1809
        %v7545 = vpop.f32.mrf.mxu0
        %v7546 = vadd.f32 %v7518, %v7545
        %v7547 = vpop.f32.mrf.mxu0
        %v7548 = vadd.f32 %v7520, %v7547
        %7549 = vmatmul.bf16.gmra.mxu0 %v1841
        %v7550 = vpop.f32.mrf.mxu0
        %v7551 = vadd.f32 %v7523, %v7550
        %v7552 = vpop.f32.mrf.mxu0
        %7553 = vdwg.mxu0
        %7554 = vmatpush.bf16.xpose.msra.mxu0 %v5298
        %7555 = vmatpush.bf16.xpose.msra.mxu0 %v5266
        %7556 = vmatpush.bf16.xpose.msra.mxu0 %v5234
        %7557 = vmatpush.bf16.xpose.msra.mxu0 %v5202
        %7558 = vmatpush.bf16.xpose.msra.mxu0 %v5170
        %7559 = vmatpush.bf16.xpose.msra.mxu0 %v5138
        %7560 = vmatpush.bf16.xpose.msra.mxu0 %v5106
        %7561 = vmatpush.bf16.xpose.msra.mxu0 %v5074
        %7562 = vmatmul.bf16.gmra.mxu0 %v1746
        %v7563 = vpop.f32.mrf.mxu0
        %v7564 = vadd.f32 %v7536, %v7563
        %v7565 = vpop.f32.mrf.mxu0
        %v7566 = vadd.f32 %v7538, %v7565
        %7567 = vmatmul.bf16.gmra.mxu0 %v1778
        %v7568 = vpop.f32.mrf.mxu0
        %v7569 = vadd.f32 %v7541, %v7568
        %v7570 = vpop.f32.mrf.mxu0
        %v7571 = vadd.f32 %v7543, %v7570
        %7572 = vmatmul.bf16.gmra.mxu0 %v1810
        %v7573 = vpop.f32.mrf.mxu0
        %v7574 = vadd.f32 %v7546, %v7573
        %v7575 = vpop.f32.mrf.mxu0
        %v7576 = vadd.f32 %v7548, %v7575
        %7577 = vmatmul.bf16.gmra.mxu0 %v1842
        %v7578 = vpop.f32.mrf.mxu0
        %v7579 = vadd.f32 %v7551, %v7578
        %v7580 = vpop.f32.mrf.mxu0
        %7581 = vdwg.mxu0
        %7582 = vmatpush.bf16.xpose.msra.mxu0 %v5299
        %7583 = vmatpush.bf16.xpose.msra.mxu0 %v5267
        %7584 = vmatpush.bf16.xpose.msra.mxu0 %v5235
        %7585 = vmatpush.bf16.xpose.msra.mxu0 %v5203
        %7586 = vmatpush.bf16.xpose.msra.mxu0 %v5171
        %7587 = vmatpush.bf16.xpose.msra.mxu0 %v5139
        %7588 = vmatpush.bf16.xpose.msra.mxu0 %v5107
        %7589 = vmatpush.bf16.xpose.msra.mxu0 %v5075
        %7590 = vmatmul.bf16.gmra.mxu0 %v1747
        %v7591 = vpop.f32.mrf.mxu0
        %v7592 = vadd.f32 %v7564, %v7591
        %v7593 = vpop.f32.mrf.mxu0
        %v7594 = vadd.f32 %v7566, %v7593
        %7595 = vmatmul.bf16.gmra.mxu0 %v1779
        %v7596 = vpop.f32.mrf.mxu0
        %v7597 = vadd.f32 %v7569, %v7596
        %v7598 = vpop.f32.mrf.mxu0
        %v7599 = vadd.f32 %v7571, %v7598
        %7600 = vmatmul.bf16.gmra.mxu0 %v1811
        %v7601 = vpop.f32.mrf.mxu0
        %v7602 = vadd.f32 %v7574, %v7601
        %v7603 = vpop.f32.mrf.mxu0
        %v7604 = vadd.f32 %v7576, %v7603
        %7605 = vmatmul.bf16.gmra.mxu0 %v1843
        %v7606 = vpop.f32.mrf.mxu0
        %v7607 = vadd.f32 %v7579, %v7606
        %v7608 = vpop.f32.mrf.mxu0
        %7609 = vdwg.mxu0
        %7610 = vmatpush.bf16.xpose.msra.mxu0 %v5300
        %7611 = vmatpush.bf16.xpose.msra.mxu0 %v5268
        %7612 = vmatpush.bf16.xpose.msra.mxu0 %v5236
        %7613 = vmatpush.bf16.xpose.msra.mxu0 %v5204
        %7614 = vmatpush.bf16.xpose.msra.mxu0 %v5172
        %7615 = vmatpush.bf16.xpose.msra.mxu0 %v5140
        %7616 = vmatpush.bf16.xpose.msra.mxu0 %v5108
        %7617 = vmatpush.bf16.xpose.msra.mxu0 %v5076
        %7618 = vmatmul.bf16.gmra.mxu0 %v1748
        %v7619 = vpop.f32.mrf.mxu0
        %v7620 = vadd.f32 %v7592, %v7619
        %v7621 = vpop.f32.mrf.mxu0
        %v7622 = vadd.f32 %v7594, %v7621
        %7623 = vmatmul.bf16.gmra.mxu0 %v1780
        %v7624 = vpop.f32.mrf.mxu0
        %v7625 = vadd.f32 %v7597, %v7624
        %v7626 = vpop.f32.mrf.mxu0
        %v7627 = vadd.f32 %v7599, %v7626
        %7628 = vmatmul.bf16.gmra.mxu0 %v1812
        %v7629 = vpop.f32.mrf.mxu0
        %v7630 = vadd.f32 %v7602, %v7629
        %v7631 = vpop.f32.mrf.mxu0
        %v7632 = vadd.f32 %v7604, %v7631
        %7633 = vmatmul.bf16.gmra.mxu0 %v1844
        %v7634 = vpop.f32.mrf.mxu0
        %v7635 = vadd.f32 %v7607, %v7634
        %v7636 = vpop.f32.mrf.mxu0
        %7637 = vdwg.mxu0
        %7638 = vmatpush.bf16.xpose.msra.mxu0 %v5301
        %7639 = vmatpush.bf16.xpose.msra.mxu0 %v5269
        %7640 = vmatpush.bf16.xpose.msra.mxu0 %v5237
        %7641 = vmatpush.bf16.xpose.msra.mxu0 %v5205
        %7642 = vmatpush.bf16.xpose.msra.mxu0 %v5173
        %7643 = vmatpush.bf16.xpose.msra.mxu0 %v5141
        %7644 = vmatpush.bf16.xpose.msra.mxu0 %v5109
        %7645 = vmatpush.bf16.xpose.msra.mxu0 %v5077
        %7646 = vmatmul.bf16.gmra.mxu0 %v1749
        %v7647 = vpop.f32.mrf.mxu0
        %v7648 = vadd.f32 %v7620, %v7647
        %v7649 = vpop.f32.mrf.mxu0
        %v7650 = vadd.f32 %v7622, %v7649
        %7651 = vmatmul.bf16.gmra.mxu0 %v1781
        %v7652 = vpop.f32.mrf.mxu0
        %v7653 = vadd.f32 %v7625, %v7652
        %v7654 = vpop.f32.mrf.mxu0
        %v7655 = vadd.f32 %v7627, %v7654
        %7656 = vmatmul.bf16.gmra.mxu0 %v1813
        %v7657 = vpop.f32.mrf.mxu0
        %v7658 = vadd.f32 %v7630, %v7657
        %v7659 = vpop.f32.mrf.mxu0
        %v7660 = vadd.f32 %v7632, %v7659
        %7661 = vmatmul.bf16.gmra.mxu0 %v1845
        %v7662 = vpop.f32.mrf.mxu0
        %v7663 = vadd.f32 %v7635, %v7662
        %v7664 = vpop.f32.mrf.mxu0
        %7665 = vdwg.mxu0
        %7666 = vmatpush.bf16.xpose.msra.mxu0 %v5302
        %7667 = vmatpush.bf16.xpose.msra.mxu0 %v5270
        %7668 = vmatpush.bf16.xpose.msra.mxu0 %v5238
        %7669 = vmatpush.bf16.xpose.msra.mxu0 %v5206
        %7670 = vmatpush.bf16.xpose.msra.mxu0 %v5174
        %7671 = vmatpush.bf16.xpose.msra.mxu0 %v5142
        %7672 = vmatpush.bf16.xpose.msra.mxu0 %v5110
        %7673 = vmatpush.bf16.xpose.msra.mxu0 %v5078
        %7674 = vmatmul.bf16.gmra.mxu0 %v1750
        %v7675 = vpop.f32.mrf.mxu0
        %v7676 = vadd.f32 %v7648, %v7675
        %v7677 = vpop.f32.mrf.mxu0
        %v7678 = vadd.f32 %v7650, %v7677
        %7679 = vmatmul.bf16.gmra.mxu0 %v1782
        %v7680 = vpop.f32.mrf.mxu0
        %v7681 = vadd.f32 %v7653, %v7680
        %v7682 = vpop.f32.mrf.mxu0
        %v7683 = vadd.f32 %v7655, %v7682
        %7684 = vmatmul.bf16.gmra.mxu0 %v1814
        %v7685 = vpop.f32.mrf.mxu0
        %v7686 = vadd.f32 %v7658, %v7685
        %v7687 = vpop.f32.mrf.mxu0
        %v7688 = vadd.f32 %v7660, %v7687
        %7689 = vmatmul.bf16.gmra.mxu0 %v1846
        %v7690 = vpop.f32.mrf.mxu0
        %v7691 = vadd.f32 %v7663, %v7690
        %v7692 = vpop.f32.mrf.mxu0
        %7693 = vdwg.mxu0
        %7694 = vmatpush.bf16.xpose.msra.mxu0 %v5303
        %7695 = vmatpush.bf16.xpose.msra.mxu0 %v5271
        %7696 = vmatpush.bf16.xpose.msra.mxu0 %v5239
        %7697 = vmatpush.bf16.xpose.msra.mxu0 %v5207
        %7698 = vmatpush.bf16.xpose.msra.mxu0 %v5175
        %7699 = vmatpush.bf16.xpose.msra.mxu0 %v5143
        %7700 = vmatpush.bf16.xpose.msra.mxu0 %v5111
        %7701 = vmatpush.bf16.xpose.msra.mxu0 %v5079
        %7702 = vmatmul.bf16.gmra.mxu0 %v1751
        %v7703 = vpop.f32.mrf.mxu0
        %v7704 = vadd.f32 %v7676, %v7703
        %v7705 = vpop.f32.mrf.mxu0
        %v7706 = vadd.f32 %v7678, %v7705
        %7707 = vmatmul.bf16.gmra.mxu0 %v1783
        %v7708 = vpop.f32.mrf.mxu0
        %v7709 = vadd.f32 %v7681, %v7708
        %v7710 = vpop.f32.mrf.mxu0
        %v7711 = vadd.f32 %v7683, %v7710
        %7712 = vmatmul.bf16.gmra.mxu0 %v1815
        %v7713 = vpop.f32.mrf.mxu0
        %v7714 = vadd.f32 %v7686, %v7713
        %v7715 = vpop.f32.mrf.mxu0
        %v7716 = vadd.f32 %v7688, %v7715
        %7717 = vmatmul.bf16.gmra.mxu0 %v1847
        %v7718 = vpop.f32.mrf.mxu0
        %v7719 = vadd.f32 %v7691, %v7718
        %v7720 = vpop.f32.mrf.mxu0
        %7721 = vdwg.mxu0
        %7722 = vmatpush.bf16.xpose.msra.mxu0 %v5304
        %7723 = vmatpush.bf16.xpose.msra.mxu0 %v5272
        %7724 = vmatpush.bf16.xpose.msra.mxu0 %v5240
        %7725 = vmatpush.bf16.xpose.msra.mxu0 %v5208
        %7726 = vmatpush.bf16.xpose.msra.mxu0 %v5176
        %7727 = vmatpush.bf16.xpose.msra.mxu0 %v5144
        %7728 = vmatpush.bf16.xpose.msra.mxu0 %v5112
        %7729 = vmatpush.bf16.xpose.msra.mxu0 %v5080
        %7730 = vmatmul.bf16.gmra.mxu0 %v1752
        %v7731 = vpop.f32.mrf.mxu0
        %v7732 = vadd.f32 %v7704, %v7731
        %v7733 = vpop.f32.mrf.mxu0
        %v7734 = vadd.f32 %v7706, %v7733
        %7735 = vmatmul.bf16.gmra.mxu0 %v1784
        %v7736 = vpop.f32.mrf.mxu0
        %v7737 = vadd.f32 %v7709, %v7736
        %v7738 = vpop.f32.mrf.mxu0
        %v7739 = vadd.f32 %v7711, %v7738
        %7740 = vmatmul.bf16.gmra.mxu0 %v1816
        %v7741 = vpop.f32.mrf.mxu0
        %v7742 = vadd.f32 %v7714, %v7741
        %v7743 = vpop.f32.mrf.mxu0
        %v7744 = vadd.f32 %v7716, %v7743
        %7745 = vmatmul.bf16.gmra.mxu0 %v1848
        %v7746 = vpop.f32.mrf.mxu0
        %v7747 = vadd.f32 %v7719, %v7746
        %v7748 = vpop.f32.mrf.mxu0
        %7749 = vdwg.mxu0
        %7750 = vmatpush.bf16.xpose.msra.mxu0 %v5305
        %7751 = vmatpush.bf16.xpose.msra.mxu0 %v5273
        %7752 = vmatpush.bf16.xpose.msra.mxu0 %v5241
        %7753 = vmatpush.bf16.xpose.msra.mxu0 %v5209
        %7754 = vmatpush.bf16.xpose.msra.mxu0 %v5177
        %7755 = vmatpush.bf16.xpose.msra.mxu0 %v5145
        %7756 = vmatpush.bf16.xpose.msra.mxu0 %v5113
        %7757 = vmatpush.bf16.xpose.msra.mxu0 %v5081
        %7758 = vmatmul.bf16.gmra.mxu0 %v1753
        %v7759 = vpop.f32.mrf.mxu0
        %v7760 = vadd.f32 %v7732, %v7759
        %v7761 = vpop.f32.mrf.mxu0
        %v7762 = vadd.f32 %v7734, %v7761
        %7763 = vmatmul.bf16.gmra.mxu0 %v1785
        %v7764 = vpop.f32.mrf.mxu0
        %v7765 = vadd.f32 %v7737, %v7764
        %v7766 = vpop.f32.mrf.mxu0
        %v7767 = vadd.f32 %v7739, %v7766
        %7768 = vmatmul.bf16.gmra.mxu0 %v1817
        %v7769 = vpop.f32.mrf.mxu0
        %v7770 = vadd.f32 %v7742, %v7769
        %v7771 = vpop.f32.mrf.mxu0
        %v7772 = vadd.f32 %v7744, %v7771
        %7773 = vmatmul.bf16.gmra.mxu0 %v1849
        %v7774 = vpop.f32.mrf.mxu0
        %v7775 = vadd.f32 %v7747, %v7774
        %v7776 = vpop.f32.mrf.mxu0
        %7777 = vdwg.mxu0
        %7778 = vmatpush.bf16.xpose.msra.mxu0 %v5306
        %7779 = vmatpush.bf16.xpose.msra.mxu0 %v5274
        %7780 = vmatpush.bf16.xpose.msra.mxu0 %v5242
        %7781 = vmatpush.bf16.xpose.msra.mxu0 %v5210
        %7782 = vmatpush.bf16.xpose.msra.mxu0 %v5178
        %7783 = vmatpush.bf16.xpose.msra.mxu0 %v5146
        %7784 = vmatpush.bf16.xpose.msra.mxu0 %v5114
        %7785 = vmatpush.bf16.xpose.msra.mxu0 %v5082
        %7786 = vmatmul.bf16.gmra.mxu0 %v1754
        %v7787 = vpop.f32.mrf.mxu0
        %v7788 = vadd.f32 %v7760, %v7787
        %v7789 = vpop.f32.mrf.mxu0
        %v7790 = vadd.f32 %v7762, %v7789
        %7791 = vmatmul.bf16.gmra.mxu0 %v1786
        %v7792 = vpop.f32.mrf.mxu0
        %v7793 = vadd.f32 %v7765, %v7792
        %v7794 = vpop.f32.mrf.mxu0
        %v7795 = vadd.f32 %v7767, %v7794
        %7796 = vmatmul.bf16.gmra.mxu0 %v1818
        %v7797 = vpop.f32.mrf.mxu0
        %v7798 = vadd.f32 %v7770, %v7797
        %v7799 = vpop.f32.mrf.mxu0
        %v7800 = vadd.f32 %v7772, %v7799
        %7801 = vmatmul.bf16.gmra.mxu0 %v1850
        %v7802 = vpop.f32.mrf.mxu0
        %v7803 = vadd.f32 %v7775, %v7802
        %v7804 = vpop.f32.mrf.mxu0
        %7805 = vdwg.mxu0
        %7806 = vmatpush.bf16.xpose.msra.mxu0 %v5307
        %7807 = vmatpush.bf16.xpose.msra.mxu0 %v5275
        %7808 = vmatpush.bf16.xpose.msra.mxu0 %v5243
        %7809 = vmatpush.bf16.xpose.msra.mxu0 %v5211
        %7810 = vmatpush.bf16.xpose.msra.mxu0 %v5179
        %7811 = vmatpush.bf16.xpose.msra.mxu0 %v5147
        %7812 = vmatpush.bf16.xpose.msra.mxu0 %v5115
        %7813 = vmatpush.bf16.xpose.msra.mxu0 %v5083
        %7814 = vmatmul.bf16.gmra.mxu0 %v1755
        %v7815 = vpop.f32.mrf.mxu0
        %v7816 = vadd.f32 %v7788, %v7815
        %v7817 = vpop.f32.mrf.mxu0
        %v7818 = vadd.f32 %v7790, %v7817
        %7819 = vmatmul.bf16.gmra.mxu0 %v1787
        %v7820 = vpop.f32.mrf.mxu0
        %v7821 = vadd.f32 %v7793, %v7820
        %v7822 = vpop.f32.mrf.mxu0
        %v7823 = vadd.f32 %v7795, %v7822
        %7824 = vmatmul.bf16.gmra.mxu0 %v1819
        %v7825 = vpop.f32.mrf.mxu0
        %v7826 = vadd.f32 %v7798, %v7825
        %v7827 = vpop.f32.mrf.mxu0
        %v7828 = vadd.f32 %v7800, %v7827
        %7829 = vmatmul.bf16.gmra.mxu0 %v1851
        %v7830 = vpop.f32.mrf.mxu0
        %v7831 = vadd.f32 %v7803, %v7830
        %v7832 = vpop.f32.mrf.mxu0
        %7833 = vdwg.mxu0
        %7834 = vmatpush.bf16.xpose.msra.mxu0 %v5308
        %7835 = vmatpush.bf16.xpose.msra.mxu0 %v5276
        %7836 = vmatpush.bf16.xpose.msra.mxu0 %v5244
        %7837 = vmatpush.bf16.xpose.msra.mxu0 %v5212
        %7838 = vmatpush.bf16.xpose.msra.mxu0 %v5180
        %7839 = vmatpush.bf16.xpose.msra.mxu0 %v5148
        %7840 = vmatpush.bf16.xpose.msra.mxu0 %v5116
        %7841 = vmatpush.bf16.xpose.msra.mxu0 %v5084
        %7842 = vmatmul.bf16.gmra.mxu0 %v1756
        %v7843 = vpop.f32.mrf.mxu0
        %v7844 = vadd.f32 %v7816, %v7843
        %v7845 = vpop.f32.mrf.mxu0
        %v7846 = vadd.f32 %v7818, %v7845
        %7847 = vmatmul.bf16.gmra.mxu0 %v1788
        %v7848 = vpop.f32.mrf.mxu0
        %v7849 = vadd.f32 %v7821, %v7848
        %v7850 = vpop.f32.mrf.mxu0
        %v7851 = vadd.f32 %v7823, %v7850
        %7852 = vmatmul.bf16.gmra.mxu0 %v1820
        %v7853 = vpop.f32.mrf.mxu0
        %v7854 = vadd.f32 %v7826, %v7853
        %v7855 = vpop.f32.mrf.mxu0
        %v7856 = vadd.f32 %v7828, %v7855
        %7857 = vmatmul.bf16.gmra.mxu0 %v1852
        %v7858 = vpop.f32.mrf.mxu0
        %v7859 = vadd.f32 %v7831, %v7858
        %v7860 = vpop.f32.mrf.mxu0
        %7861 = vdwg.mxu0
        %7862 = vmatpush.bf16.xpose.msra.mxu0 %v5309
        %7863 = vmatpush.bf16.xpose.msra.mxu0 %v5277
        %7864 = vmatpush.bf16.xpose.msra.mxu0 %v5245
        %7865 = vmatpush.bf16.xpose.msra.mxu0 %v5213
        %7866 = vmatpush.bf16.xpose.msra.mxu0 %v5181
        %7867 = vmatpush.bf16.xpose.msra.mxu0 %v5149
        %7868 = vmatpush.bf16.xpose.msra.mxu0 %v5117
        %7869 = vmatpush.bf16.xpose.msra.mxu0 %v5085
        %7870 = vmatmul.bf16.gmra.mxu0 %v1757
        %v7871 = vpop.f32.mrf.mxu0
        %v7872 = vadd.f32 %v7844, %v7871
        %v7873 = vpop.f32.mrf.mxu0
        %v7874 = vadd.f32 %v7846, %v7873
        %7875 = vmatmul.bf16.gmra.mxu0 %v1789
        %v7876 = vpop.f32.mrf.mxu0
        %v7877 = vadd.f32 %v7849, %v7876
        %v7878 = vpop.f32.mrf.mxu0
        %v7879 = vadd.f32 %v7851, %v7878
        %7880 = vmatmul.bf16.gmra.mxu0 %v1821
        %v7881 = vpop.f32.mrf.mxu0
        %v7882 = vadd.f32 %v7854, %v7881
        %v7883 = vpop.f32.mrf.mxu0
        %v7884 = vadd.f32 %v7856, %v7883
        %7885 = vmatmul.bf16.gmra.mxu0 %v1853
        %v7886 = vpop.f32.mrf.mxu0
        %v7887 = vadd.f32 %v7859, %v7886
        %v7888 = vpop.f32.mrf.mxu0
        %7889 = vdwg.mxu0
        %7890 = vmatpush.bf16.xpose.msra.mxu0 %v5310
        %7891 = vmatpush.bf16.xpose.msra.mxu0 %v5278
        %7892 = vmatpush.bf16.xpose.msra.mxu0 %v5246
        %7893 = vmatpush.bf16.xpose.msra.mxu0 %v5214
        %7894 = vmatpush.bf16.xpose.msra.mxu0 %v5182
        %7895 = vmatpush.bf16.xpose.msra.mxu0 %v5150
        %7896 = vmatpush.bf16.xpose.msra.mxu0 %v5118
        %7897 = vmatpush.bf16.xpose.msra.mxu0 %v5086
        %7898 = vmatmul.bf16.gmra.mxu0 %v1758
        %v7899 = vpop.f32.mrf.mxu0
        %v7900 = vadd.f32 %v7872, %v7899
        %v7901 = vpop.f32.mrf.mxu0
        %v7902 = vadd.f32 %v7874, %v7901
        %7903 = vmatmul.bf16.gmra.mxu0 %v1790
        %v7904 = vpop.f32.mrf.mxu0
        %v7905 = vadd.f32 %v7877, %v7904
        %v7906 = vpop.f32.mrf.mxu0
        %v7907 = vadd.f32 %v7879, %v7906
        %7908 = vmatmul.bf16.gmra.mxu0 %v1822
        %v7909 = vpop.f32.mrf.mxu0
        %v7910 = vadd.f32 %v7882, %v7909
        %v7911 = vpop.f32.mrf.mxu0
        %v7912 = vadd.f32 %v7884, %v7911
        %7913 = vmatmul.bf16.gmra.mxu0 %v1854
        %v7914 = vpop.f32.mrf.mxu0
        %v7915 = vadd.f32 %v7887, %v7914
        %v7916 = vpop.f32.mrf.mxu0
        %7917 = vdwg.mxu0
        %7918 = vmatpush.bf16.xpose.msra.mxu0 %v5311
        %7919 = vmatpush.bf16.xpose.msra.mxu0 %v5279
        %7920 = vmatpush.bf16.xpose.msra.mxu0 %v5247
        %7921 = vmatpush.bf16.xpose.msra.mxu0 %v5215
        %7922 = vmatpush.bf16.xpose.msra.mxu0 %v5183
        %7923 = vmatpush.bf16.xpose.msra.mxu0 %v5151
        %7924 = vmatpush.bf16.xpose.msra.mxu0 %v5119
        %7925 = vmatpush.bf16.xpose.msra.mxu0 %v5087
        %7926 = vmatmul.bf16.gmra.mxu0 %v1759
        %v7927 = vpop.f32.mrf.mxu0
        %v7928 = vadd.f32 %v7900, %v7927
        %v7929 = vpop.f32.mrf.mxu0
        %v7930 = vadd.f32 %v7902, %v7929
        %7931 = vmatmul.bf16.gmra.mxu0 %v1791
        %v7932 = vpop.f32.mrf.mxu0
        %v7933 = vadd.f32 %v7905, %v7932
        %v7934 = vpop.f32.mrf.mxu0
        %v7935 = vadd.f32 %v7907, %v7934
        %7936 = vmatmul.bf16.gmra.mxu0 %v1823
        %v7937 = vpop.f32.mrf.mxu0
        %v7938 = vadd.f32 %v7910, %v7937
        %v7939 = vpop.f32.mrf.mxu0
        %v7940 = vadd.f32 %v7912, %v7939
        %7941 = vmatmul.bf16.gmra.mxu0 %v1855
        %v7942 = vpop.f32.mrf.mxu0
        %v7943 = vadd.f32 %v7915, %v7942
        %v7944 = vpop.f32.mrf.mxu0
        %7945 = vdwg.mxu0
        %7946 = vmatpush.bf16.xpose.msra.mxu0 %v5312
        %7947 = vmatpush.bf16.xpose.msra.mxu0 %v5280
        %7948 = vmatpush.bf16.xpose.msra.mxu0 %v5248
        %7949 = vmatpush.bf16.xpose.msra.mxu0 %v5216
        %7950 = vmatpush.bf16.xpose.msra.mxu0 %v5184
        %7951 = vmatpush.bf16.xpose.msra.mxu0 %v5152
        %7952 = vmatpush.bf16.xpose.msra.mxu0 %v5120
        %7953 = vmatpush.bf16.xpose.msra.mxu0 %v5088
        %7954 = vmatmul.bf16.gmra.mxu0 %v1760
        %v7955 = vpop.f32.mrf.mxu0
        %v7956 = vadd.f32 %v7928, %v7955
        %v7957 = vpop.f32.mrf.mxu0
        %v7958 = vadd.f32 %v7930, %v7957
        %7959 = vmatmul.bf16.gmra.mxu0 %v1792
        %v7960 = vpop.f32.mrf.mxu0
        %v7961 = vadd.f32 %v7933, %v7960
        %v7962 = vpop.f32.mrf.mxu0
        %v7963 = vadd.f32 %v7935, %v7962
        %7964 = vmatmul.bf16.gmra.mxu0 %v1824
        %v7965 = vpop.f32.mrf.mxu0
        %v7966 = vadd.f32 %v7938, %v7965
        %v7967 = vpop.f32.mrf.mxu0
        %v7968 = vadd.f32 %v7940, %v7967
        %7969 = vmatmul.bf16.gmra.mxu0 %v1856
        %v7970 = vpop.f32.mrf.mxu0
        %v7971 = vadd.f32 %v7943, %v7970
        %v7972 = vpop.f32.mrf.mxu0
        %7973 = vdwg.mxu0
        %7974 = vmatpush.bf16.xpose.msra.mxu0 %v5313
        %7975 = vmatpush.bf16.xpose.msra.mxu0 %v5281
        %7976 = vmatpush.bf16.xpose.msra.mxu0 %v5249
        %7977 = vmatpush.bf16.xpose.msra.mxu0 %v5217
        %7978 = vmatpush.bf16.xpose.msra.mxu0 %v5185
        %7979 = vmatpush.bf16.xpose.msra.mxu0 %v5153
        %7980 = vmatpush.bf16.xpose.msra.mxu0 %v5121
        %7981 = vmatpush.bf16.xpose.msra.mxu0 %v5089
        %7982 = vmatmul.bf16.gmra.mxu0 %v1761
        %v7983 = vpop.f32.mrf.mxu0
        %v7984 = vadd.f32 %v7956, %v7983
        %v7985 = vpop.f32.mrf.mxu0
        %v7986 = vadd.f32 %v7958, %v7985
        %7987 = vmatmul.bf16.gmra.mxu0 %v1793
        %v7988 = vpop.f32.mrf.mxu0
        %v7989 = vadd.f32 %v7961, %v7988
        %v7990 = vpop.f32.mrf.mxu0
        %v7991 = vadd.f32 %v7963, %v7990
        %7992 = vmatmul.bf16.gmra.mxu0 %v1825
        %v7993 = vpop.f32.mrf.mxu0
        %v7994 = vadd.f32 %v7966, %v7993
        %v7995 = vpop.f32.mrf.mxu0
        %v7996 = vadd.f32 %v7968, %v7995
        %7997 = vmatmul.bf16.gmra.mxu0 %v1857
        %v7998 = vpop.f32.mrf.mxu0
        %v7999 = vadd.f32 %v7971, %v7998
        %v8000 = vpop.f32.mrf.mxu0
        %8001 = vdwg.mxu0
        %8002 = vmatpush.bf16.xpose.msra.mxu0 %v5538
        %8003 = vmatpush.bf16.xpose.msra.mxu0 %v5506
        %8004 = vmatpush.bf16.xpose.msra.mxu0 %v5474
        %8005 = vmatpush.bf16.xpose.msra.mxu0 %v5442
        %8006 = vmatpush.bf16.xpose.msra.mxu0 %v5410
        %8007 = vmatpush.bf16.xpose.msra.mxu0 %v5378
        %8008 = vmatpush.bf16.xpose.msra.mxu0 %v5346
        %8009 = vmatpush.bf16.xpose.msra.mxu0 %v5314
        %8010 = vmatmul.bf16.gmra.mxu0 %v1730
        %v8011 = vpop.f32.mrf.mxu0
        %v8012 = vadd.f32 %v1387, %v8011
        %v8013 = vpop.f32.mrf.mxu0
        %v8014 = vadd.f32 %v1387, %v8013
        %8015 = vmatmul.bf16.gmra.mxu0 %v1762
        %v8016 = vpop.f32.mrf.mxu0
        %v8017 = vadd.f32 %v1387, %v8016
        %v8018 = vpop.f32.mrf.mxu0
        %v8019 = vadd.f32 %v1387, %v8018
        %8020 = vmatmul.bf16.gmra.mxu0 %v1794
        %v8021 = vpop.f32.mrf.mxu0
        %v8022 = vadd.f32 %v1387, %v8021
        %v8023 = vpop.f32.mrf.mxu0
        %v8024 = vadd.f32 %v1387, %v8023
        %8025 = vmatmul.bf16.gmra.mxu0 %v1826
        %v8026 = vpop.f32.mrf.mxu0
        %v8027 = vadd.f32 %v1387, %v8026
        %v8028 = vpop.f32.mrf.mxu0
        %8029 = vdwg.mxu0
        %8030 = vmatpush.bf16.xpose.msra.mxu0 %v5539
        %8031 = vmatpush.bf16.xpose.msra.mxu0 %v5507
        %8032 = vmatpush.bf16.xpose.msra.mxu0 %v5475
        %8033 = vmatpush.bf16.xpose.msra.mxu0 %v5443
        %8034 = vmatpush.bf16.xpose.msra.mxu0 %v5411
        %8035 = vmatpush.bf16.xpose.msra.mxu0 %v5379
        %8036 = vmatpush.bf16.xpose.msra.mxu0 %v5347
        %8037 = vmatpush.bf16.xpose.msra.mxu0 %v5315
        %8038 = vmatmul.bf16.gmra.mxu0 %v1731
        %v8039 = vpop.f32.mrf.mxu0
        %v8040 = vadd.f32 %v8012, %v8039
        %v8041 = vpop.f32.mrf.mxu0
        %v8042 = vadd.f32 %v8014, %v8041
        %8043 = vmatmul.bf16.gmra.mxu0 %v1763
        %v8044 = vpop.f32.mrf.mxu0
        %v8045 = vadd.f32 %v8017, %v8044
        %v8046 = vpop.f32.mrf.mxu0
        %v8047 = vadd.f32 %v8019, %v8046
        %8048 = vmatmul.bf16.gmra.mxu0 %v1795
        %v8049 = vpop.f32.mrf.mxu0
        %v8050 = vadd.f32 %v8022, %v8049
        %v8051 = vpop.f32.mrf.mxu0
        %v8052 = vadd.f32 %v8024, %v8051
        %8053 = vmatmul.bf16.gmra.mxu0 %v1827
        %v8054 = vpop.f32.mrf.mxu0
        %v8055 = vadd.f32 %v8027, %v8054
        %v8056 = vpop.f32.mrf.mxu0
        %8057 = vdwg.mxu0
        %8058 = vmatpush.bf16.xpose.msra.mxu0 %v5540
        %8059 = vmatpush.bf16.xpose.msra.mxu0 %v5508
        %8060 = vmatpush.bf16.xpose.msra.mxu0 %v5476
        %8061 = vmatpush.bf16.xpose.msra.mxu0 %v5444
        %8062 = vmatpush.bf16.xpose.msra.mxu0 %v5412
        %8063 = vmatpush.bf16.xpose.msra.mxu0 %v5380
        %8064 = vmatpush.bf16.xpose.msra.mxu0 %v5348
        %8065 = vmatpush.bf16.xpose.msra.mxu0 %v5316
        %8066 = vmatmul.bf16.gmra.mxu0 %v1732
        %v8067 = vpop.f32.mrf.mxu0
        %v8068 = vadd.f32 %v8040, %v8067
        %v8069 = vpop.f32.mrf.mxu0
        %v8070 = vadd.f32 %v8042, %v8069
        %8071 = vmatmul.bf16.gmra.mxu0 %v1764
        %v8072 = vpop.f32.mrf.mxu0
        %v8073 = vadd.f32 %v8045, %v8072
        %v8074 = vpop.f32.mrf.mxu0
        %v8075 = vadd.f32 %v8047, %v8074
        %8076 = vmatmul.bf16.gmra.mxu0 %v1796
        %v8077 = vpop.f32.mrf.mxu0
        %v8078 = vadd.f32 %v8050, %v8077
        %v8079 = vpop.f32.mrf.mxu0
        %v8080 = vadd.f32 %v8052, %v8079
        %8081 = vmatmul.bf16.gmra.mxu0 %v1828
        %v8082 = vpop.f32.mrf.mxu0
        %v8083 = vadd.f32 %v8055, %v8082
        %v8084 = vpop.f32.mrf.mxu0
        %8085 = vdwg.mxu0
        %8086 = vmatpush.bf16.xpose.msra.mxu0 %v5541
        %8087 = vmatpush.bf16.xpose.msra.mxu0 %v5509
        %8088 = vmatpush.bf16.xpose.msra.mxu0 %v5477
        %8089 = vmatpush.bf16.xpose.msra.mxu0 %v5445
        %8090 = vmatpush.bf16.xpose.msra.mxu0 %v5413
        %8091 = vmatpush.bf16.xpose.msra.mxu0 %v5381
        %8092 = vmatpush.bf16.xpose.msra.mxu0 %v5349
        %8093 = vmatpush.bf16.xpose.msra.mxu0 %v5317
        %8094 = vmatmul.bf16.gmra.mxu0 %v1733
        %v8095 = vpop.f32.mrf.mxu0
        %v8096 = vadd.f32 %v8068, %v8095
        %v8097 = vpop.f32.mrf.mxu0
        %v8098 = vadd.f32 %v8070, %v8097
        %8099 = vmatmul.bf16.gmra.mxu0 %v1765
        %v8100 = vpop.f32.mrf.mxu0
        %v8101 = vadd.f32 %v8073, %v8100
        %v8102 = vpop.f32.mrf.mxu0
        %v8103 = vadd.f32 %v8075, %v8102
        %8104 = vmatmul.bf16.gmra.mxu0 %v1797
        %v8105 = vpop.f32.mrf.mxu0
        %v8106 = vadd.f32 %v8078, %v8105
        %v8107 = vpop.f32.mrf.mxu0
        %v8108 = vadd.f32 %v8080, %v8107
        %8109 = vmatmul.bf16.gmra.mxu0 %v1829
        %v8110 = vpop.f32.mrf.mxu0
        %v8111 = vadd.f32 %v8083, %v8110
        %v8112 = vpop.f32.mrf.mxu0
        %8113 = vdwg.mxu0
        %8114 = vmatpush.bf16.xpose.msra.mxu0 %v5542
        %8115 = vmatpush.bf16.xpose.msra.mxu0 %v5510
        %8116 = vmatpush.bf16.xpose.msra.mxu0 %v5478
        %8117 = vmatpush.bf16.xpose.msra.mxu0 %v5446
        %8118 = vmatpush.bf16.xpose.msra.mxu0 %v5414
        %8119 = vmatpush.bf16.xpose.msra.mxu0 %v5382
        %8120 = vmatpush.bf16.xpose.msra.mxu0 %v5350
        %8121 = vmatpush.bf16.xpose.msra.mxu0 %v5318
        %8122 = vmatmul.bf16.gmra.mxu0 %v1734
        %v8123 = vpop.f32.mrf.mxu0
        %v8124 = vadd.f32 %v8096, %v8123
        %v8125 = vpop.f32.mrf.mxu0
        %v8126 = vadd.f32 %v8098, %v8125
        %8127 = vmatmul.bf16.gmra.mxu0 %v1766
        %v8128 = vpop.f32.mrf.mxu0
        %v8129 = vadd.f32 %v8101, %v8128
        %v8130 = vpop.f32.mrf.mxu0
        %v8131 = vadd.f32 %v8103, %v8130
        %8132 = vmatmul.bf16.gmra.mxu0 %v1798
        %v8133 = vpop.f32.mrf.mxu0
        %v8134 = vadd.f32 %v8106, %v8133
        %v8135 = vpop.f32.mrf.mxu0
        %v8136 = vadd.f32 %v8108, %v8135
        %8137 = vmatmul.bf16.gmra.mxu0 %v1830
        %v8138 = vpop.f32.mrf.mxu0
        %v8139 = vadd.f32 %v8111, %v8138
        %v8140 = vpop.f32.mrf.mxu0
        %8141 = vdwg.mxu0
        %8142 = vmatpush.bf16.xpose.msra.mxu0 %v5543
        %8143 = vmatpush.bf16.xpose.msra.mxu0 %v5511
        %8144 = vmatpush.bf16.xpose.msra.mxu0 %v5479
        %8145 = vmatpush.bf16.xpose.msra.mxu0 %v5447
        %8146 = vmatpush.bf16.xpose.msra.mxu0 %v5415
        %8147 = vmatpush.bf16.xpose.msra.mxu0 %v5383
        %8148 = vmatpush.bf16.xpose.msra.mxu0 %v5351
        %8149 = vmatpush.bf16.xpose.msra.mxu0 %v5319
        %8150 = vmatmul.bf16.gmra.mxu0 %v1735
        %v8151 = vpop.f32.mrf.mxu0
        %v8152 = vadd.f32 %v8124, %v8151
        %v8153 = vpop.f32.mrf.mxu0
        %v8154 = vadd.f32 %v8126, %v8153
        %8155 = vmatmul.bf16.gmra.mxu0 %v1767
        %v8156 = vpop.f32.mrf.mxu0
        %v8157 = vadd.f32 %v8129, %v8156
        %v8158 = vpop.f32.mrf.mxu0
        %v8159 = vadd.f32 %v8131, %v8158
        %8160 = vmatmul.bf16.gmra.mxu0 %v1799
        %v8161 = vpop.f32.mrf.mxu0
        %v8162 = vadd.f32 %v8134, %v8161
        %v8163 = vpop.f32.mrf.mxu0
        %v8164 = vadd.f32 %v8136, %v8163
        %8165 = vmatmul.bf16.gmra.mxu0 %v1831
        %v8166 = vpop.f32.mrf.mxu0
        %v8167 = vadd.f32 %v8139, %v8166
        %v8168 = vpop.f32.mrf.mxu0
        %8169 = vdwg.mxu0
        %8170 = vmatpush.bf16.xpose.msra.mxu0 %v5544
        %8171 = vmatpush.bf16.xpose.msra.mxu0 %v5512
        %8172 = vmatpush.bf16.xpose.msra.mxu0 %v5480
        %8173 = vmatpush.bf16.xpose.msra.mxu0 %v5448
        %8174 = vmatpush.bf16.xpose.msra.mxu0 %v5416
        %8175 = vmatpush.bf16.xpose.msra.mxu0 %v5384
        %8176 = vmatpush.bf16.xpose.msra.mxu0 %v5352
        %8177 = vmatpush.bf16.xpose.msra.mxu0 %v5320
        %8178 = vmatmul.bf16.gmra.mxu0 %v1736
        %v8179 = vpop.f32.mrf.mxu0
        %v8180 = vadd.f32 %v8152, %v8179
        %v8181 = vpop.f32.mrf.mxu0
        %v8182 = vadd.f32 %v8154, %v8181
        %8183 = vmatmul.bf16.gmra.mxu0 %v1768
        %v8184 = vpop.f32.mrf.mxu0
        %v8185 = vadd.f32 %v8157, %v8184
        %v8186 = vpop.f32.mrf.mxu0
        %v8187 = vadd.f32 %v8159, %v8186
        %8188 = vmatmul.bf16.gmra.mxu0 %v1800
        %v8189 = vpop.f32.mrf.mxu0
        %v8190 = vadd.f32 %v8162, %v8189
        %v8191 = vpop.f32.mrf.mxu0
        %v8192 = vadd.f32 %v8164, %v8191
        %8193 = vmatmul.bf16.gmra.mxu0 %v1832
        %v8194 = vpop.f32.mrf.mxu0
        %v8195 = vadd.f32 %v8167, %v8194
        %v8196 = vpop.f32.mrf.mxu0
        %8197 = vdwg.mxu0
        %8198 = vmatpush.bf16.xpose.msra.mxu0 %v5545
        %8199 = vmatpush.bf16.xpose.msra.mxu0 %v5513
        %8200 = vmatpush.bf16.xpose.msra.mxu0 %v5481
        %8201 = vmatpush.bf16.xpose.msra.mxu0 %v5449
        %8202 = vmatpush.bf16.xpose.msra.mxu0 %v5417
        %8203 = vmatpush.bf16.xpose.msra.mxu0 %v5385
        %8204 = vmatpush.bf16.xpose.msra.mxu0 %v5353
        %8205 = vmatpush.bf16.xpose.msra.mxu0 %v5321
        %8206 = vmatmul.bf16.gmra.mxu0 %v1737
        %v8207 = vpop.f32.mrf.mxu0
        %v8208 = vadd.f32 %v8180, %v8207
        %v8209 = vpop.f32.mrf.mxu0
        %v8210 = vadd.f32 %v8182, %v8209
        %8211 = vmatmul.bf16.gmra.mxu0 %v1769
        %v8212 = vpop.f32.mrf.mxu0
        %v8213 = vadd.f32 %v8185, %v8212
        %v8214 = vpop.f32.mrf.mxu0
        %v8215 = vadd.f32 %v8187, %v8214
        %8216 = vmatmul.bf16.gmra.mxu0 %v1801
        %v8217 = vpop.f32.mrf.mxu0
        %v8218 = vadd.f32 %v8190, %v8217
        %v8219 = vpop.f32.mrf.mxu0
        %v8220 = vadd.f32 %v8192, %v8219
        %8221 = vmatmul.bf16.gmra.mxu0 %v1833
        %v8222 = vpop.f32.mrf.mxu0
        %v8223 = vadd.f32 %v8195, %v8222
        %v8224 = vpop.f32.mrf.mxu0
        %8225 = vdwg.mxu0
        %8226 = vmatpush.bf16.xpose.msra.mxu0 %v5546
        %8227 = vmatpush.bf16.xpose.msra.mxu0 %v5514
        %8228 = vmatpush.bf16.xpose.msra.mxu0 %v5482
        %8229 = vmatpush.bf16.xpose.msra.mxu0 %v5450
        %8230 = vmatpush.bf16.xpose.msra.mxu0 %v5418
        %8231 = vmatpush.bf16.xpose.msra.mxu0 %v5386
        %8232 = vmatpush.bf16.xpose.msra.mxu0 %v5354
        %8233 = vmatpush.bf16.xpose.msra.mxu0 %v5322
        %8234 = vmatmul.bf16.gmra.mxu0 %v1738
        %v8235 = vpop.f32.mrf.mxu0
        %v8236 = vadd.f32 %v8208, %v8235
        %v8237 = vpop.f32.mrf.mxu0
        %v8238 = vadd.f32 %v8210, %v8237
        %8239 = vmatmul.bf16.gmra.mxu0 %v1770
        %v8240 = vpop.f32.mrf.mxu0
        %v8241 = vadd.f32 %v8213, %v8240
        %v8242 = vpop.f32.mrf.mxu0
        %v8243 = vadd.f32 %v8215, %v8242
        %8244 = vmatmul.bf16.gmra.mxu0 %v1802
        %v8245 = vpop.f32.mrf.mxu0
        %v8246 = vadd.f32 %v8218, %v8245
        %v8247 = vpop.f32.mrf.mxu0
        %v8248 = vadd.f32 %v8220, %v8247
        %8249 = vmatmul.bf16.gmra.mxu0 %v1834
        %v8250 = vpop.f32.mrf.mxu0
        %v8251 = vadd.f32 %v8223, %v8250
        %v8252 = vpop.f32.mrf.mxu0
        %8253 = vdwg.mxu0
        %8254 = vmatpush.bf16.xpose.msra.mxu0 %v5547
        %8255 = vmatpush.bf16.xpose.msra.mxu0 %v5515
        %8256 = vmatpush.bf16.xpose.msra.mxu0 %v5483
        %8257 = vmatpush.bf16.xpose.msra.mxu0 %v5451
        %8258 = vmatpush.bf16.xpose.msra.mxu0 %v5419
        %8259 = vmatpush.bf16.xpose.msra.mxu0 %v5387
        %8260 = vmatpush.bf16.xpose.msra.mxu0 %v5355
        %8261 = vmatpush.bf16.xpose.msra.mxu0 %v5323
        %8262 = vmatmul.bf16.gmra.mxu0 %v1739
        %v8263 = vpop.f32.mrf.mxu0
        %v8264 = vadd.f32 %v8236, %v8263
        %v8265 = vpop.f32.mrf.mxu0
        %v8266 = vadd.f32 %v8238, %v8265
        %8267 = vmatmul.bf16.gmra.mxu0 %v1771
        %v8268 = vpop.f32.mrf.mxu0
        %v8269 = vadd.f32 %v8241, %v8268
        %v8270 = vpop.f32.mrf.mxu0
        %v8271 = vadd.f32 %v8243, %v8270
        %8272 = vmatmul.bf16.gmra.mxu0 %v1803
        %v8273 = vpop.f32.mrf.mxu0
        %v8274 = vadd.f32 %v8246, %v8273
        %v8275 = vpop.f32.mrf.mxu0
        %v8276 = vadd.f32 %v8248, %v8275
        %8277 = vmatmul.bf16.gmra.mxu0 %v1835
        %v8278 = vpop.f32.mrf.mxu0
        %v8279 = vadd.f32 %v8251, %v8278
        %v8280 = vpop.f32.mrf.mxu0
        %8281 = vdwg.mxu0
        %8282 = vmatpush.bf16.xpose.msra.mxu0 %v5548
        %8283 = vmatpush.bf16.xpose.msra.mxu0 %v5516
        %8284 = vmatpush.bf16.xpose.msra.mxu0 %v5484
        %8285 = vmatpush.bf16.xpose.msra.mxu0 %v5452
        %8286 = vmatpush.bf16.xpose.msra.mxu0 %v5420
        %8287 = vmatpush.bf16.xpose.msra.mxu0 %v5388
        %8288 = vmatpush.bf16.xpose.msra.mxu0 %v5356
        %8289 = vmatpush.bf16.xpose.msra.mxu0 %v5324
        %8290 = vmatmul.bf16.gmra.mxu0 %v1740
        %v8291 = vpop.f32.mrf.mxu0
        %v8292 = vadd.f32 %v8264, %v8291
        %v8293 = vpop.f32.mrf.mxu0
        %v8294 = vadd.f32 %v8266, %v8293
        %8295 = vmatmul.bf16.gmra.mxu0 %v1772
        %v8296 = vpop.f32.mrf.mxu0
        %v8297 = vadd.f32 %v8269, %v8296
        %v8298 = vpop.f32.mrf.mxu0
        %v8299 = vadd.f32 %v8271, %v8298
        %8300 = vmatmul.bf16.gmra.mxu0 %v1804
        %v8301 = vpop.f32.mrf.mxu0
        %v8302 = vadd.f32 %v8274, %v8301
        %v8303 = vpop.f32.mrf.mxu0
        %v8304 = vadd.f32 %v8276, %v8303
        %8305 = vmatmul.bf16.gmra.mxu0 %v1836
        %v8306 = vpop.f32.mrf.mxu0
        %v8307 = vadd.f32 %v8279, %v8306
        %v8308 = vpop.f32.mrf.mxu0
        %8309 = vdwg.mxu0
        %8310 = vmatpush.bf16.xpose.msra.mxu0 %v5549
        %8311 = vmatpush.bf16.xpose.msra.mxu0 %v5517
        %8312 = vmatpush.bf16.xpose.msra.mxu0 %v5485
        %8313 = vmatpush.bf16.xpose.msra.mxu0 %v5453
        %8314 = vmatpush.bf16.xpose.msra.mxu0 %v5421
        %8315 = vmatpush.bf16.xpose.msra.mxu0 %v5389
        %8316 = vmatpush.bf16.xpose.msra.mxu0 %v5357
        %8317 = vmatpush.bf16.xpose.msra.mxu0 %v5325
        %8318 = vmatmul.bf16.gmra.mxu0 %v1741
        %v8319 = vpop.f32.mrf.mxu0
        %v8320 = vadd.f32 %v8292, %v8319
        %v8321 = vpop.f32.mrf.mxu0
        %v8322 = vadd.f32 %v8294, %v8321
        %8323 = vmatmul.bf16.gmra.mxu0 %v1773
        %v8324 = vpop.f32.mrf.mxu0
        %v8325 = vadd.f32 %v8297, %v8324
        %v8326 = vpop.f32.mrf.mxu0
        %v8327 = vadd.f32 %v8299, %v8326
        %8328 = vmatmul.bf16.gmra.mxu0 %v1805
        %v8329 = vpop.f32.mrf.mxu0
        %v8330 = vadd.f32 %v8302, %v8329
        %v8331 = vpop.f32.mrf.mxu0
        %v8332 = vadd.f32 %v8304, %v8331
        %8333 = vmatmul.bf16.gmra.mxu0 %v1837
        %v8334 = vpop.f32.mrf.mxu0
        %v8335 = vadd.f32 %v8307, %v8334
        %v8336 = vpop.f32.mrf.mxu0
        %8337 = vdwg.mxu0
        %8338 = vmatpush.bf16.xpose.msra.mxu0 %v5550
        %8339 = vmatpush.bf16.xpose.msra.mxu0 %v5518
        %8340 = vmatpush.bf16.xpose.msra.mxu0 %v5486
        %8341 = vmatpush.bf16.xpose.msra.mxu0 %v5454
        %8342 = vmatpush.bf16.xpose.msra.mxu0 %v5422
        %8343 = vmatpush.bf16.xpose.msra.mxu0 %v5390
        %8344 = vmatpush.bf16.xpose.msra.mxu0 %v5358
        %8345 = vmatpush.bf16.xpose.msra.mxu0 %v5326
        %8346 = vmatmul.bf16.gmra.mxu0 %v1742
        %v8347 = vpop.f32.mrf.mxu0
        %v8348 = vadd.f32 %v8320, %v8347
        %v8349 = vpop.f32.mrf.mxu0
        %v8350 = vadd.f32 %v8322, %v8349
        %8351 = vmatmul.bf16.gmra.mxu0 %v1774
        %v8352 = vpop.f32.mrf.mxu0
        %v8353 = vadd.f32 %v8325, %v8352
        %v8354 = vpop.f32.mrf.mxu0
        %v8355 = vadd.f32 %v8327, %v8354
        %8356 = vmatmul.bf16.gmra.mxu0 %v1806
        %v8357 = vpop.f32.mrf.mxu0
        %v8358 = vadd.f32 %v8330, %v8357
        %v8359 = vpop.f32.mrf.mxu0
        %v8360 = vadd.f32 %v8332, %v8359
        %8361 = vmatmul.bf16.gmra.mxu0 %v1838
        %v8362 = vpop.f32.mrf.mxu0
        %v8363 = vadd.f32 %v8335, %v8362
        %v8364 = vpop.f32.mrf.mxu0
        %8365 = vdwg.mxu0
        %8366 = vmatpush.bf16.xpose.msra.mxu0 %v5551
        %8367 = vmatpush.bf16.xpose.msra.mxu0 %v5519
        %8368 = vmatpush.bf16.xpose.msra.mxu0 %v5487
        %8369 = vmatpush.bf16.xpose.msra.mxu0 %v5455
        %8370 = vmatpush.bf16.xpose.msra.mxu0 %v5423
        %8371 = vmatpush.bf16.xpose.msra.mxu0 %v5391
        %8372 = vmatpush.bf16.xpose.msra.mxu0 %v5359
        %8373 = vmatpush.bf16.xpose.msra.mxu0 %v5327
        %8374 = vmatmul.bf16.gmra.mxu0 %v1743
        %v8375 = vpop.f32.mrf.mxu0
        %v8376 = vadd.f32 %v8348, %v8375
        %v8377 = vpop.f32.mrf.mxu0
        %v8378 = vadd.f32 %v8350, %v8377
        %8379 = vmatmul.bf16.gmra.mxu0 %v1775
        %v8380 = vpop.f32.mrf.mxu0
        %v8381 = vadd.f32 %v8353, %v8380
        %v8382 = vpop.f32.mrf.mxu0
        %v8383 = vadd.f32 %v8355, %v8382
        %8384 = vmatmul.bf16.gmra.mxu0 %v1807
        %v8385 = vpop.f32.mrf.mxu0
        %v8386 = vadd.f32 %v8358, %v8385
        %v8387 = vpop.f32.mrf.mxu0
        %v8388 = vadd.f32 %v8360, %v8387
        %8389 = vmatmul.bf16.gmra.mxu0 %v1839
        %v8390 = vpop.f32.mrf.mxu0
        %v8391 = vadd.f32 %v8363, %v8390
        %v8392 = vpop.f32.mrf.mxu0
        %8393 = vdwg.mxu0
        %8394 = vmatpush.bf16.xpose.msra.mxu0 %v5552
        %8395 = vmatpush.bf16.xpose.msra.mxu0 %v5520
        %8396 = vmatpush.bf16.xpose.msra.mxu0 %v5488
        %8397 = vmatpush.bf16.xpose.msra.mxu0 %v5456
        %8398 = vmatpush.bf16.xpose.msra.mxu0 %v5424
        %8399 = vmatpush.bf16.xpose.msra.mxu0 %v5392
        %8400 = vmatpush.bf16.xpose.msra.mxu0 %v5360
        %8401 = vmatpush.bf16.xpose.msra.mxu0 %v5328
        %8402 = vmatmul.bf16.gmra.mxu0 %v1744
        %v8403 = vpop.f32.mrf.mxu0
        %v8404 = vadd.f32 %v8376, %v8403
        %v8405 = vpop.f32.mrf.mxu0
        %v8406 = vadd.f32 %v8378, %v8405
        %8407 = vmatmul.bf16.gmra.mxu0 %v1776
        %v8408 = vpop.f32.mrf.mxu0
        %v8409 = vadd.f32 %v8381, %v8408
        %v8410 = vpop.f32.mrf.mxu0
        %v8411 = vadd.f32 %v8383, %v8410
        %8412 = vmatmul.bf16.gmra.mxu0 %v1808
        %v8413 = vpop.f32.mrf.mxu0
        %v8414 = vadd.f32 %v8386, %v8413
        %v8415 = vpop.f32.mrf.mxu0
        %v8416 = vadd.f32 %v8388, %v8415
        %8417 = vmatmul.bf16.gmra.mxu0 %v1840
        %v8418 = vpop.f32.mrf.mxu0
        %v8419 = vadd.f32 %v8391, %v8418
        %v8420 = vpop.f32.mrf.mxu0
        %8421 = vdwg.mxu0
        %8422 = vmatpush.bf16.xpose.msra.mxu0 %v5553
        %8423 = vmatpush.bf16.xpose.msra.mxu0 %v5521
        %8424 = vmatpush.bf16.xpose.msra.mxu0 %v5489
        %8425 = vmatpush.bf16.xpose.msra.mxu0 %v5457
        %8426 = vmatpush.bf16.xpose.msra.mxu0 %v5425
        %8427 = vmatpush.bf16.xpose.msra.mxu0 %v5393
        %8428 = vmatpush.bf16.xpose.msra.mxu0 %v5361
        %8429 = vmatpush.bf16.xpose.msra.mxu0 %v5329
        %8430 = vmatmul.bf16.gmra.mxu0 %v1745
        %v8431 = vpop.f32.mrf.mxu0
        %v8432 = vadd.f32 %v8404, %v8431
        %v8433 = vpop.f32.mrf.mxu0
        %v8434 = vadd.f32 %v8406, %v8433
        %8435 = vmatmul.bf16.gmra.mxu0 %v1777
        %v8436 = vpop.f32.mrf.mxu0
        %v8437 = vadd.f32 %v8409, %v8436
        %v8438 = vpop.f32.mrf.mxu0
        %v8439 = vadd.f32 %v8411, %v8438
        %8440 = vmatmul.bf16.gmra.mxu0 %v1809
        %v8441 = vpop.f32.mrf.mxu0
        %v8442 = vadd.f32 %v8414, %v8441
        %v8443 = vpop.f32.mrf.mxu0
        %v8444 = vadd.f32 %v8416, %v8443
        %8445 = vmatmul.bf16.gmra.mxu0 %v1841
        %v8446 = vpop.f32.mrf.mxu0
        %v8447 = vadd.f32 %v8419, %v8446
        %v8448 = vpop.f32.mrf.mxu0
        %8449 = vdwg.mxu0
        %8450 = vmatpush.bf16.xpose.msra.mxu0 %v5554
        %8451 = vmatpush.bf16.xpose.msra.mxu0 %v5522
        %8452 = vmatpush.bf16.xpose.msra.mxu0 %v5490
        %8453 = vmatpush.bf16.xpose.msra.mxu0 %v5458
        %8454 = vmatpush.bf16.xpose.msra.mxu0 %v5426
        %8455 = vmatpush.bf16.xpose.msra.mxu0 %v5394
        %8456 = vmatpush.bf16.xpose.msra.mxu0 %v5362
        %8457 = vmatpush.bf16.xpose.msra.mxu0 %v5330
        %8458 = vmatmul.bf16.gmra.mxu0 %v1746
        %v8459 = vpop.f32.mrf.mxu0
        %v8460 = vadd.f32 %v8432, %v8459
        %v8461 = vpop.f32.mrf.mxu0
        %v8462 = vadd.f32 %v8434, %v8461
        %8463 = vmatmul.bf16.gmra.mxu0 %v1778
        %v8464 = vpop.f32.mrf.mxu0
        %v8465 = vadd.f32 %v8437, %v8464
        %v8466 = vpop.f32.mrf.mxu0
        %v8467 = vadd.f32 %v8439, %v8466
        %8468 = vmatmul.bf16.gmra.mxu0 %v1810
        %v8469 = vpop.f32.mrf.mxu0
        %v8470 = vadd.f32 %v8442, %v8469
        %v8471 = vpop.f32.mrf.mxu0
        %v8472 = vadd.f32 %v8444, %v8471
        %8473 = vmatmul.bf16.gmra.mxu0 %v1842
        %v8474 = vpop.f32.mrf.mxu0
        %v8475 = vadd.f32 %v8447, %v8474
        %v8476 = vpop.f32.mrf.mxu0
        %8477 = vdwg.mxu0
        %8478 = vmatpush.bf16.xpose.msra.mxu0 %v5555
        %8479 = vmatpush.bf16.xpose.msra.mxu0 %v5523
        %8480 = vmatpush.bf16.xpose.msra.mxu0 %v5491
        %8481 = vmatpush.bf16.xpose.msra.mxu0 %v5459
        %8482 = vmatpush.bf16.xpose.msra.mxu0 %v5427
        %8483 = vmatpush.bf16.xpose.msra.mxu0 %v5395
        %8484 = vmatpush.bf16.xpose.msra.mxu0 %v5363
        %8485 = vmatpush.bf16.xpose.msra.mxu0 %v5331
        %8486 = vmatmul.bf16.gmra.mxu0 %v1747
        %v8487 = vpop.f32.mrf.mxu0
        %v8488 = vadd.f32 %v8460, %v8487
        %v8489 = vpop.f32.mrf.mxu0
        %v8490 = vadd.f32 %v8462, %v8489
        %8491 = vmatmul.bf16.gmra.mxu0 %v1779
        %v8492 = vpop.f32.mrf.mxu0
        %v8493 = vadd.f32 %v8465, %v8492
        %v8494 = vpop.f32.mrf.mxu0
        %v8495 = vadd.f32 %v8467, %v8494
        %8496 = vmatmul.bf16.gmra.mxu0 %v1811
        %v8497 = vpop.f32.mrf.mxu0
        %v8498 = vadd.f32 %v8470, %v8497
        %v8499 = vpop.f32.mrf.mxu0
        %v8500 = vadd.f32 %v8472, %v8499
        %8501 = vmatmul.bf16.gmra.mxu0 %v1843
        %v8502 = vpop.f32.mrf.mxu0
        %v8503 = vadd.f32 %v8475, %v8502
        %v8504 = vpop.f32.mrf.mxu0
        %8505 = vdwg.mxu0
        %8506 = vmatpush.bf16.xpose.msra.mxu0 %v5556
        %8507 = vmatpush.bf16.xpose.msra.mxu0 %v5524
        %8508 = vmatpush.bf16.xpose.msra.mxu0 %v5492
        %8509 = vmatpush.bf16.xpose.msra.mxu0 %v5460
        %8510 = vmatpush.bf16.xpose.msra.mxu0 %v5428
        %8511 = vmatpush.bf16.xpose.msra.mxu0 %v5396
        %8512 = vmatpush.bf16.xpose.msra.mxu0 %v5364
        %8513 = vmatpush.bf16.xpose.msra.mxu0 %v5332
        %8514 = vmatmul.bf16.gmra.mxu0 %v1748
        %v8515 = vpop.f32.mrf.mxu0
        %v8516 = vadd.f32 %v8488, %v8515
        %v8517 = vpop.f32.mrf.mxu0
        %v8518 = vadd.f32 %v8490, %v8517
        %8519 = vmatmul.bf16.gmra.mxu0 %v1780
        %v8520 = vpop.f32.mrf.mxu0
        %v8521 = vadd.f32 %v8493, %v8520
        %v8522 = vpop.f32.mrf.mxu0
        %v8523 = vadd.f32 %v8495, %v8522
        %8524 = vmatmul.bf16.gmra.mxu0 %v1812
        %v8525 = vpop.f32.mrf.mxu0
        %v8526 = vadd.f32 %v8498, %v8525
        %v8527 = vpop.f32.mrf.mxu0
        %v8528 = vadd.f32 %v8500, %v8527
        %8529 = vmatmul.bf16.gmra.mxu0 %v1844
        %v8530 = vpop.f32.mrf.mxu0
        %v8531 = vadd.f32 %v8503, %v8530
        %v8532 = vpop.f32.mrf.mxu0
        %8533 = vdwg.mxu0
        %8534 = vmatpush.bf16.xpose.msra.mxu0 %v5557
        %8535 = vmatpush.bf16.xpose.msra.mxu0 %v5525
        %8536 = vmatpush.bf16.xpose.msra.mxu0 %v5493
        %8537 = vmatpush.bf16.xpose.msra.mxu0 %v5461
        %8538 = vmatpush.bf16.xpose.msra.mxu0 %v5429
        %8539 = vmatpush.bf16.xpose.msra.mxu0 %v5397
        %8540 = vmatpush.bf16.xpose.msra.mxu0 %v5365
        %8541 = vmatpush.bf16.xpose.msra.mxu0 %v5333
        %8542 = vmatmul.bf16.gmra.mxu0 %v1749
        %v8543 = vpop.f32.mrf.mxu0
        %v8544 = vadd.f32 %v8516, %v8543
        %v8545 = vpop.f32.mrf.mxu0
        %v8546 = vadd.f32 %v8518, %v8545
        %8547 = vmatmul.bf16.gmra.mxu0 %v1781
        %v8548 = vpop.f32.mrf.mxu0
        %v8549 = vadd.f32 %v8521, %v8548
        %v8550 = vpop.f32.mrf.mxu0
        %v8551 = vadd.f32 %v8523, %v8550
        %8552 = vmatmul.bf16.gmra.mxu0 %v1813
        %v8553 = vpop.f32.mrf.mxu0
        %v8554 = vadd.f32 %v8526, %v8553
        %v8555 = vpop.f32.mrf.mxu0
        %v8556 = vadd.f32 %v8528, %v8555
        %8557 = vmatmul.bf16.gmra.mxu0 %v1845
        %v8558 = vpop.f32.mrf.mxu0
        %v8559 = vadd.f32 %v8531, %v8558
        %v8560 = vpop.f32.mrf.mxu0
        %8561 = vdwg.mxu0
        %8562 = vmatpush.bf16.xpose.msra.mxu0 %v5558
        %8563 = vmatpush.bf16.xpose.msra.mxu0 %v5526
        %8564 = vmatpush.bf16.xpose.msra.mxu0 %v5494
        %8565 = vmatpush.bf16.xpose.msra.mxu0 %v5462
        %8566 = vmatpush.bf16.xpose.msra.mxu0 %v5430
        %8567 = vmatpush.bf16.xpose.msra.mxu0 %v5398
        %8568 = vmatpush.bf16.xpose.msra.mxu0 %v5366
        %8569 = vmatpush.bf16.xpose.msra.mxu0 %v5334
        %8570 = vmatmul.bf16.gmra.mxu0 %v1750
        %v8571 = vpop.f32.mrf.mxu0
        %v8572 = vadd.f32 %v8544, %v8571
        %v8573 = vpop.f32.mrf.mxu0
        %v8574 = vadd.f32 %v8546, %v8573
        %8575 = vmatmul.bf16.gmra.mxu0 %v1782
        %v8576 = vpop.f32.mrf.mxu0
        %v8577 = vadd.f32 %v8549, %v8576
        %v8578 = vpop.f32.mrf.mxu0
        %v8579 = vadd.f32 %v8551, %v8578
        %8580 = vmatmul.bf16.gmra.mxu0 %v1814
        %v8581 = vpop.f32.mrf.mxu0
        %v8582 = vadd.f32 %v8554, %v8581
        %v8583 = vpop.f32.mrf.mxu0
        %v8584 = vadd.f32 %v8556, %v8583
        %8585 = vmatmul.bf16.gmra.mxu0 %v1846
        %v8586 = vpop.f32.mrf.mxu0
        %v8587 = vadd.f32 %v8559, %v8586
        %v8588 = vpop.f32.mrf.mxu0
        %8589 = vdwg.mxu0
        %8590 = vmatpush.bf16.xpose.msra.mxu0 %v5559
        %8591 = vmatpush.bf16.xpose.msra.mxu0 %v5527
        %8592 = vmatpush.bf16.xpose.msra.mxu0 %v5495
        %8593 = vmatpush.bf16.xpose.msra.mxu0 %v5463
        %8594 = vmatpush.bf16.xpose.msra.mxu0 %v5431
        %8595 = vmatpush.bf16.xpose.msra.mxu0 %v5399
        %8596 = vmatpush.bf16.xpose.msra.mxu0 %v5367
        %8597 = vmatpush.bf16.xpose.msra.mxu0 %v5335
        %8598 = vmatmul.bf16.gmra.mxu0 %v1751
        %v8599 = vpop.f32.mrf.mxu0
        %v8600 = vadd.f32 %v8572, %v8599
        %v8601 = vpop.f32.mrf.mxu0
        %v8602 = vadd.f32 %v8574, %v8601
        %8603 = vmatmul.bf16.gmra.mxu0 %v1783
        %v8604 = vpop.f32.mrf.mxu0
        %v8605 = vadd.f32 %v8577, %v8604
        %v8606 = vpop.f32.mrf.mxu0
        %v8607 = vadd.f32 %v8579, %v8606
        %8608 = vmatmul.bf16.gmra.mxu0 %v1815
        %v8609 = vpop.f32.mrf.mxu0
        %v8610 = vadd.f32 %v8582, %v8609
        %v8611 = vpop.f32.mrf.mxu0
        %v8612 = vadd.f32 %v8584, %v8611
        %8613 = vmatmul.bf16.gmra.mxu0 %v1847
        %v8614 = vpop.f32.mrf.mxu0
        %v8615 = vadd.f32 %v8587, %v8614
        %v8616 = vpop.f32.mrf.mxu0
        %8617 = vdwg.mxu0
        %8618 = vmatpush.bf16.xpose.msra.mxu0 %v5560
        %8619 = vmatpush.bf16.xpose.msra.mxu0 %v5528
        %8620 = vmatpush.bf16.xpose.msra.mxu0 %v5496
        %8621 = vmatpush.bf16.xpose.msra.mxu0 %v5464
        %8622 = vmatpush.bf16.xpose.msra.mxu0 %v5432
        %8623 = vmatpush.bf16.xpose.msra.mxu0 %v5400
        %8624 = vmatpush.bf16.xpose.msra.mxu0 %v5368
        %8625 = vmatpush.bf16.xpose.msra.mxu0 %v5336
        %8626 = vmatmul.bf16.gmra.mxu0 %v1752
        %v8627 = vpop.f32.mrf.mxu0
        %v8628 = vadd.f32 %v8600, %v8627
        %v8629 = vpop.f32.mrf.mxu0
        %v8630 = vadd.f32 %v8602, %v8629
        %8631 = vmatmul.bf16.gmra.mxu0 %v1784
        %v8632 = vpop.f32.mrf.mxu0
        %v8633 = vadd.f32 %v8605, %v8632
        %v8634 = vpop.f32.mrf.mxu0
        %v8635 = vadd.f32 %v8607, %v8634
        %8636 = vmatmul.bf16.gmra.mxu0 %v1816
        %v8637 = vpop.f32.mrf.mxu0
        %v8638 = vadd.f32 %v8610, %v8637
        %v8639 = vpop.f32.mrf.mxu0
        %v8640 = vadd.f32 %v8612, %v8639
        %8641 = vmatmul.bf16.gmra.mxu0 %v1848
        %v8642 = vpop.f32.mrf.mxu0
        %v8643 = vadd.f32 %v8615, %v8642
        %v8644 = vpop.f32.mrf.mxu0
        %8645 = vdwg.mxu0
        %8646 = vmatpush.bf16.xpose.msra.mxu0 %v5561
        %8647 = vmatpush.bf16.xpose.msra.mxu0 %v5529
        %8648 = vmatpush.bf16.xpose.msra.mxu0 %v5497
        %8649 = vmatpush.bf16.xpose.msra.mxu0 %v5465
        %8650 = vmatpush.bf16.xpose.msra.mxu0 %v5433
        %8651 = vmatpush.bf16.xpose.msra.mxu0 %v5401
        %8652 = vmatpush.bf16.xpose.msra.mxu0 %v5369
        %8653 = vmatpush.bf16.xpose.msra.mxu0 %v5337
        %8654 = vmatmul.bf16.gmra.mxu0 %v1753
        %v8655 = vpop.f32.mrf.mxu0
        %v8656 = vadd.f32 %v8628, %v8655
        %v8657 = vpop.f32.mrf.mxu0
        %v8658 = vadd.f32 %v8630, %v8657
        %8659 = vmatmul.bf16.gmra.mxu0 %v1785
        %v8660 = vpop.f32.mrf.mxu0
        %v8661 = vadd.f32 %v8633, %v8660
        %v8662 = vpop.f32.mrf.mxu0
        %v8663 = vadd.f32 %v8635, %v8662
        %8664 = vmatmul.bf16.gmra.mxu0 %v1817
        %v8665 = vpop.f32.mrf.mxu0
        %v8666 = vadd.f32 %v8638, %v8665
        %v8667 = vpop.f32.mrf.mxu0
        %v8668 = vadd.f32 %v8640, %v8667
        %8669 = vmatmul.bf16.gmra.mxu0 %v1849
        %v8670 = vpop.f32.mrf.mxu0
        %v8671 = vadd.f32 %v8643, %v8670
        %v8672 = vpop.f32.mrf.mxu0
        %8673 = vdwg.mxu0
        %8674 = vmatpush.bf16.xpose.msra.mxu0 %v5562
        %8675 = vmatpush.bf16.xpose.msra.mxu0 %v5530
        %8676 = vmatpush.bf16.xpose.msra.mxu0 %v5498
        %8677 = vmatpush.bf16.xpose.msra.mxu0 %v5466
        %8678 = vmatpush.bf16.xpose.msra.mxu0 %v5434
        %8679 = vmatpush.bf16.xpose.msra.mxu0 %v5402
        %8680 = vmatpush.bf16.xpose.msra.mxu0 %v5370
        %8681 = vmatpush.bf16.xpose.msra.mxu0 %v5338
        %8682 = vmatmul.bf16.gmra.mxu0 %v1754
        %v8683 = vpop.f32.mrf.mxu0
        %v8684 = vadd.f32 %v8656, %v8683
        %v8685 = vpop.f32.mrf.mxu0
        %v8686 = vadd.f32 %v8658, %v8685
        %8687 = vmatmul.bf16.gmra.mxu0 %v1786
        %v8688 = vpop.f32.mrf.mxu0
        %v8689 = vadd.f32 %v8661, %v8688
        %v8690 = vpop.f32.mrf.mxu0
        %v8691 = vadd.f32 %v8663, %v8690
        %8692 = vmatmul.bf16.gmra.mxu0 %v1818
        %v8693 = vpop.f32.mrf.mxu0
        %v8694 = vadd.f32 %v8666, %v8693
        %v8695 = vpop.f32.mrf.mxu0
        %v8696 = vadd.f32 %v8668, %v8695
        %8697 = vmatmul.bf16.gmra.mxu0 %v1850
        %v8698 = vpop.f32.mrf.mxu0
        %v8699 = vadd.f32 %v8671, %v8698
        %v8700 = vpop.f32.mrf.mxu0
        %8701 = vdwg.mxu0
        %8702 = vmatpush.bf16.xpose.msra.mxu0 %v5563
        %8703 = vmatpush.bf16.xpose.msra.mxu0 %v5531
        %8704 = vmatpush.bf16.xpose.msra.mxu0 %v5499
        %8705 = vmatpush.bf16.xpose.msra.mxu0 %v5467
        %8706 = vmatpush.bf16.xpose.msra.mxu0 %v5435
        %8707 = vmatpush.bf16.xpose.msra.mxu0 %v5403
        %8708 = vmatpush.bf16.xpose.msra.mxu0 %v5371
        %8709 = vmatpush.bf16.xpose.msra.mxu0 %v5339
        %8710 = vmatmul.bf16.gmra.mxu0 %v1755
        %v8711 = vpop.f32.mrf.mxu0
        %v8712 = vadd.f32 %v8684, %v8711
        %v8713 = vpop.f32.mrf.mxu0
        %v8714 = vadd.f32 %v8686, %v8713
        %8715 = vmatmul.bf16.gmra.mxu0 %v1787
        %v8716 = vpop.f32.mrf.mxu0
        %v8717 = vadd.f32 %v8689, %v8716
        %v8718 = vpop.f32.mrf.mxu0
        %v8719 = vadd.f32 %v8691, %v8718
        %8720 = vmatmul.bf16.gmra.mxu0 %v1819
        %v8721 = vpop.f32.mrf.mxu0
        %v8722 = vadd.f32 %v8694, %v8721
        %v8723 = vpop.f32.mrf.mxu0
        %v8724 = vadd.f32 %v8696, %v8723
        %8725 = vmatmul.bf16.gmra.mxu0 %v1851
        %v8726 = vpop.f32.mrf.mxu0
        %v8727 = vadd.f32 %v8699, %v8726
        %v8728 = vpop.f32.mrf.mxu0
        %8729 = vdwg.mxu0
        %8730 = vmatpush.bf16.xpose.msra.mxu0 %v5564
        %8731 = vmatpush.bf16.xpose.msra.mxu0 %v5532
        %8732 = vmatpush.bf16.xpose.msra.mxu0 %v5500
        %8733 = vmatpush.bf16.xpose.msra.mxu0 %v5468
        %8734 = vmatpush.bf16.xpose.msra.mxu0 %v5436
        %8735 = vmatpush.bf16.xpose.msra.mxu0 %v5404
        %8736 = vmatpush.bf16.xpose.msra.mxu0 %v5372
        %8737 = vmatpush.bf16.xpose.msra.mxu0 %v5340
        %8738 = vmatmul.bf16.gmra.mxu0 %v1756
        %v8739 = vpop.f32.mrf.mxu0
        %v8740 = vadd.f32 %v8712, %v8739
        %v8741 = vpop.f32.mrf.mxu0
        %v8742 = vadd.f32 %v8714, %v8741
        %8743 = vmatmul.bf16.gmra.mxu0 %v1788
        %v8744 = vpop.f32.mrf.mxu0
        %v8745 = vadd.f32 %v8717, %v8744
        %v8746 = vpop.f32.mrf.mxu0
        %v8747 = vadd.f32 %v8719, %v8746
        %8748 = vmatmul.bf16.gmra.mxu0 %v1820
        %v8749 = vpop.f32.mrf.mxu0
        %v8750 = vadd.f32 %v8722, %v8749
        %v8751 = vpop.f32.mrf.mxu0
        %v8752 = vadd.f32 %v8724, %v8751
        %8753 = vmatmul.bf16.gmra.mxu0 %v1852
        %v8754 = vpop.f32.mrf.mxu0
        %v8755 = vadd.f32 %v8727, %v8754
        %v8756 = vpop.f32.mrf.mxu0
        %8757 = vdwg.mxu0
        %8758 = vmatpush.bf16.xpose.msra.mxu0 %v5565
        %8759 = vmatpush.bf16.xpose.msra.mxu0 %v5533
        %8760 = vmatpush.bf16.xpose.msra.mxu0 %v5501
        %8761 = vmatpush.bf16.xpose.msra.mxu0 %v5469
        %8762 = vmatpush.bf16.xpose.msra.mxu0 %v5437
        %8763 = vmatpush.bf16.xpose.msra.mxu0 %v5405
        %8764 = vmatpush.bf16.xpose.msra.mxu0 %v5373
        %8765 = vmatpush.bf16.xpose.msra.mxu0 %v5341
        %8766 = vmatmul.bf16.gmra.mxu0 %v1757
        %v8767 = vpop.f32.mrf.mxu0
        %v8768 = vadd.f32 %v8740, %v8767
        %v8769 = vpop.f32.mrf.mxu0
        %v8770 = vadd.f32 %v8742, %v8769
        %8771 = vmatmul.bf16.gmra.mxu0 %v1789
        %v8772 = vpop.f32.mrf.mxu0
        %v8773 = vadd.f32 %v8745, %v8772
        %v8774 = vpop.f32.mrf.mxu0
        %v8775 = vadd.f32 %v8747, %v8774
        %8776 = vmatmul.bf16.gmra.mxu0 %v1821
        %v8777 = vpop.f32.mrf.mxu0
        %v8778 = vadd.f32 %v8750, %v8777
        %v8779 = vpop.f32.mrf.mxu0
        %v8780 = vadd.f32 %v8752, %v8779
        %8781 = vmatmul.bf16.gmra.mxu0 %v1853
        %v8782 = vpop.f32.mrf.mxu0
        %v8783 = vadd.f32 %v8755, %v8782
        %v8784 = vpop.f32.mrf.mxu0
        %8785 = vdwg.mxu0
        %8786 = vmatpush.bf16.xpose.msra.mxu0 %v5566
        %8787 = vmatpush.bf16.xpose.msra.mxu0 %v5534
        %8788 = vmatpush.bf16.xpose.msra.mxu0 %v5502
        %8789 = vmatpush.bf16.xpose.msra.mxu0 %v5470
        %8790 = vmatpush.bf16.xpose.msra.mxu0 %v5438
        %8791 = vmatpush.bf16.xpose.msra.mxu0 %v5406
        %8792 = vmatpush.bf16.xpose.msra.mxu0 %v5374
        %8793 = vmatpush.bf16.xpose.msra.mxu0 %v5342
        %8794 = vmatmul.bf16.gmra.mxu0 %v1758
        %v8795 = vpop.f32.mrf.mxu0
        %v8796 = vadd.f32 %v8768, %v8795
        %v8797 = vpop.f32.mrf.mxu0
        %v8798 = vadd.f32 %v8770, %v8797
        %8799 = vmatmul.bf16.gmra.mxu0 %v1790
        %v8800 = vpop.f32.mrf.mxu0
        %v8801 = vadd.f32 %v8773, %v8800
        %v8802 = vpop.f32.mrf.mxu0
        %v8803 = vadd.f32 %v8775, %v8802
        %8804 = vmatmul.bf16.gmra.mxu0 %v1822
        %v8805 = vpop.f32.mrf.mxu0
        %v8806 = vadd.f32 %v8778, %v8805
        %v8807 = vpop.f32.mrf.mxu0
        %v8808 = vadd.f32 %v8780, %v8807
        %8809 = vmatmul.bf16.gmra.mxu0 %v1854
        %v8810 = vpop.f32.mrf.mxu0
        %v8811 = vadd.f32 %v8783, %v8810
        %v8812 = vpop.f32.mrf.mxu0
        %8813 = vdwg.mxu0
        %8814 = vmatpush.bf16.xpose.msra.mxu0 %v5567
        %8815 = vmatpush.bf16.xpose.msra.mxu0 %v5535
        %8816 = vmatpush.bf16.xpose.msra.mxu0 %v5503
        %8817 = vmatpush.bf16.xpose.msra.mxu0 %v5471
        %8818 = vmatpush.bf16.xpose.msra.mxu0 %v5439
        %8819 = vmatpush.bf16.xpose.msra.mxu0 %v5407
        %8820 = vmatpush.bf16.xpose.msra.mxu0 %v5375
        %8821 = vmatpush.bf16.xpose.msra.mxu0 %v5343
        %8822 = vmatmul.bf16.gmra.mxu0 %v1759
        %v8823 = vpop.f32.mrf.mxu0
        %v8824 = vadd.f32 %v8796, %v8823
        %v8825 = vpop.f32.mrf.mxu0
        %v8826 = vadd.f32 %v8798, %v8825
        %8827 = vmatmul.bf16.gmra.mxu0 %v1791
        %v8828 = vpop.f32.mrf.mxu0
        %v8829 = vadd.f32 %v8801, %v8828
        %v8830 = vpop.f32.mrf.mxu0
        %v8831 = vadd.f32 %v8803, %v8830
        %8832 = vmatmul.bf16.gmra.mxu0 %v1823
        %v8833 = vpop.f32.mrf.mxu0
        %v8834 = vadd.f32 %v8806, %v8833
        %v8835 = vpop.f32.mrf.mxu0
        %v8836 = vadd.f32 %v8808, %v8835
        %8837 = vmatmul.bf16.gmra.mxu0 %v1855
        %v8838 = vpop.f32.mrf.mxu0
        %v8839 = vadd.f32 %v8811, %v8838
        %v8840 = vpop.f32.mrf.mxu0
        %8841 = vdwg.mxu0
        %8842 = vmatpush.bf16.xpose.msra.mxu0 %v5568
        %8843 = vmatpush.bf16.xpose.msra.mxu0 %v5536
        %8844 = vmatpush.bf16.xpose.msra.mxu0 %v5504
        %8845 = vmatpush.bf16.xpose.msra.mxu0 %v5472
        %8846 = vmatpush.bf16.xpose.msra.mxu0 %v5440
        %8847 = vmatpush.bf16.xpose.msra.mxu0 %v5408
        %8848 = vmatpush.bf16.xpose.msra.mxu0 %v5376
        %8849 = vmatpush.bf16.xpose.msra.mxu0 %v5344
        %8850 = vmatmul.bf16.gmra.mxu0 %v1760
        %v8851 = vpop.f32.mrf.mxu0
        %v8852 = vadd.f32 %v8824, %v8851
        %v8853 = vpop.f32.mrf.mxu0
        %v8854 = vadd.f32 %v8826, %v8853
        %8855 = vmatmul.bf16.gmra.mxu0 %v1792
        %v8856 = vpop.f32.mrf.mxu0
        %v8857 = vadd.f32 %v8829, %v8856
        %v8858 = vpop.f32.mrf.mxu0
        %v8859 = vadd.f32 %v8831, %v8858
        %8860 = vmatmul.bf16.gmra.mxu0 %v1824
        %v8861 = vpop.f32.mrf.mxu0
        %v8862 = vadd.f32 %v8834, %v8861
        %v8863 = vpop.f32.mrf.mxu0
        %v8864 = vadd.f32 %v8836, %v8863
        %8865 = vmatmul.bf16.gmra.mxu0 %v1856
        %v8866 = vpop.f32.mrf.mxu0
        %v8867 = vadd.f32 %v8839, %v8866
        %v8868 = vpop.f32.mrf.mxu0
        %8869 = vdwg.mxu0
        %8870 = vmatpush.bf16.xpose.msra.mxu0 %v5569
        %8871 = vmatpush.bf16.xpose.msra.mxu0 %v5537
        %8872 = vmatpush.bf16.xpose.msra.mxu0 %v5505
        %8873 = vmatpush.bf16.xpose.msra.mxu0 %v5473
        %8874 = vmatpush.bf16.xpose.msra.mxu0 %v5441
        %8875 = vmatpush.bf16.xpose.msra.mxu0 %v5409
        %8876 = vmatpush.bf16.xpose.msra.mxu0 %v5377
        %8877 = vmatpush.bf16.xpose.msra.mxu0 %v5345
        %8878 = vmatmul.bf16.gmra.mxu0 %v1761
        %v8879 = vpop.f32.mrf.mxu0
        %v8880 = vadd.f32 %v8852, %v8879
        %v8881 = vpop.f32.mrf.mxu0
        %v8882 = vadd.f32 %v8854, %v8881
        %8883 = vmatmul.bf16.gmra.mxu0 %v1793
        %v8884 = vpop.f32.mrf.mxu0
        %v8885 = vadd.f32 %v8857, %v8884
        %v8886 = vpop.f32.mrf.mxu0
        %v8887 = vadd.f32 %v8859, %v8886
        %8888 = vmatmul.bf16.gmra.mxu0 %v1825
        %v8889 = vpop.f32.mrf.mxu0
        %v8890 = vadd.f32 %v8862, %v8889
        %v8891 = vpop.f32.mrf.mxu0
        %v8892 = vadd.f32 %v8864, %v8891
        %8893 = vmatmul.bf16.gmra.mxu0 %v1857
        %v8894 = vpop.f32.mrf.mxu0
        %v8895 = vadd.f32 %v8867, %v8894
        %v8896 = vpop.f32.mrf.mxu0
        %8897 = vdwg.mxu0
        %8898 = vmatpush.bf16.xpose.msra.mxu0 %v5794
        %8899 = vmatpush.bf16.xpose.msra.mxu0 %v5762
        %8900 = vmatpush.bf16.xpose.msra.mxu0 %v5730
        %8901 = vmatpush.bf16.xpose.msra.mxu0 %v5698
        %8902 = vmatpush.bf16.xpose.msra.mxu0 %v5666
        %8903 = vmatpush.bf16.xpose.msra.mxu0 %v5634
        %8904 = vmatpush.bf16.xpose.msra.mxu0 %v5602
        %8905 = vmatpush.bf16.xpose.msra.mxu0 %v5570
        %8906 = vmatmul.bf16.gmra.mxu0 %v1730
        %v8907 = vpop.f32.mrf.mxu0
        %v8908 = vadd.f32 %v1388, %v8907
        %v8909 = vpop.f32.mrf.mxu0
        %v8910 = vadd.f32 %v1388, %v8909
        %8911 = vmatmul.bf16.gmra.mxu0 %v1762
        %v8912 = vpop.f32.mrf.mxu0
        %v8913 = vadd.f32 %v1388, %v8912
        %v8914 = vpop.f32.mrf.mxu0
        %v8915 = vadd.f32 %v1388, %v8914
        %8916 = vmatmul.bf16.gmra.mxu0 %v1794
        %v8917 = vpop.f32.mrf.mxu0
        %v8918 = vadd.f32 %v1388, %v8917
        %v8919 = vpop.f32.mrf.mxu0
        %v8920 = vadd.f32 %v1388, %v8919
        %8921 = vmatmul.bf16.gmra.mxu0 %v1826
        %v8922 = vpop.f32.mrf.mxu0
        %v8923 = vadd.f32 %v1388, %v8922
        %v8924 = vpop.f32.mrf.mxu0
        %8925 = vdwg.mxu0
        %8926 = vmatpush.bf16.xpose.msra.mxu0 %v5795
        %8927 = vmatpush.bf16.xpose.msra.mxu0 %v5763
        %8928 = vmatpush.bf16.xpose.msra.mxu0 %v5731
        %8929 = vmatpush.bf16.xpose.msra.mxu0 %v5699
        %8930 = vmatpush.bf16.xpose.msra.mxu0 %v5667
        %8931 = vmatpush.bf16.xpose.msra.mxu0 %v5635
        %8932 = vmatpush.bf16.xpose.msra.mxu0 %v5603
        %8933 = vmatpush.bf16.xpose.msra.mxu0 %v5571
        %8934 = vmatmul.bf16.gmra.mxu0 %v1731
        %v8935 = vpop.f32.mrf.mxu0
        %v8936 = vadd.f32 %v8908, %v8935
        %v8937 = vpop.f32.mrf.mxu0
        %v8938 = vadd.f32 %v8910, %v8937
        %8939 = vmatmul.bf16.gmra.mxu0 %v1763
        %v8940 = vpop.f32.mrf.mxu0
        %v8941 = vadd.f32 %v8913, %v8940
        %v8942 = vpop.f32.mrf.mxu0
        %v8943 = vadd.f32 %v8915, %v8942
        %8944 = vmatmul.bf16.gmra.mxu0 %v1795
        %v8945 = vpop.f32.mrf.mxu0
        %v8946 = vadd.f32 %v8918, %v8945
        %v8947 = vpop.f32.mrf.mxu0
        %v8948 = vadd.f32 %v8920, %v8947
        %8949 = vmatmul.bf16.gmra.mxu0 %v1827
        %v8950 = vpop.f32.mrf.mxu0
        %v8951 = vadd.f32 %v8923, %v8950
        %v8952 = vpop.f32.mrf.mxu0
        %8953 = vdwg.mxu0
        %8954 = vmatpush.bf16.xpose.msra.mxu0 %v5796
        %8955 = vmatpush.bf16.xpose.msra.mxu0 %v5764
        %8956 = vmatpush.bf16.xpose.msra.mxu0 %v5732
        %8957 = vmatpush.bf16.xpose.msra.mxu0 %v5700
        %8958 = vmatpush.bf16.xpose.msra.mxu0 %v5668
        %8959 = vmatpush.bf16.xpose.msra.mxu0 %v5636
        %8960 = vmatpush.bf16.xpose.msra.mxu0 %v5604
        %8961 = vmatpush.bf16.xpose.msra.mxu0 %v5572
        %8962 = vmatmul.bf16.gmra.mxu0 %v1732
        %v8963 = vpop.f32.mrf.mxu0
        %v8964 = vadd.f32 %v8936, %v8963
        %v8965 = vpop.f32.mrf.mxu0
        %v8966 = vadd.f32 %v8938, %v8965
        %8967 = vmatmul.bf16.gmra.mxu0 %v1764
        %v8968 = vpop.f32.mrf.mxu0
        %v8969 = vadd.f32 %v8941, %v8968
        %v8970 = vpop.f32.mrf.mxu0
        %v8971 = vadd.f32 %v8943, %v8970
        %8972 = vmatmul.bf16.gmra.mxu0 %v1796
        %v8973 = vpop.f32.mrf.mxu0
        %v8974 = vadd.f32 %v8946, %v8973
        %v8975 = vpop.f32.mrf.mxu0
        %v8976 = vadd.f32 %v8948, %v8975
        %8977 = vmatmul.bf16.gmra.mxu0 %v1828
        %v8978 = vpop.f32.mrf.mxu0
        %v8979 = vadd.f32 %v8951, %v8978
        %v8980 = vpop.f32.mrf.mxu0
        %8981 = vdwg.mxu0
        %8982 = vmatpush.bf16.xpose.msra.mxu0 %v5797
        %8983 = vmatpush.bf16.xpose.msra.mxu0 %v5765
        %8984 = vmatpush.bf16.xpose.msra.mxu0 %v5733
        %8985 = vmatpush.bf16.xpose.msra.mxu0 %v5701
        %8986 = vmatpush.bf16.xpose.msra.mxu0 %v5669
        %8987 = vmatpush.bf16.xpose.msra.mxu0 %v5637
        %8988 = vmatpush.bf16.xpose.msra.mxu0 %v5605
        %8989 = vmatpush.bf16.xpose.msra.mxu0 %v5573
        %8990 = vmatmul.bf16.gmra.mxu0 %v1733
        %v8991 = vpop.f32.mrf.mxu0
        %v8992 = vadd.f32 %v8964, %v8991
        %v8993 = vpop.f32.mrf.mxu0
        %v8994 = vadd.f32 %v8966, %v8993
        %8995 = vmatmul.bf16.gmra.mxu0 %v1765
        %v8996 = vpop.f32.mrf.mxu0
        %v8997 = vadd.f32 %v8969, %v8996
        %v8998 = vpop.f32.mrf.mxu0
        %v8999 = vadd.f32 %v8971, %v8998
        %9000 = vmatmul.bf16.gmra.mxu0 %v1797
        %v9001 = vpop.f32.mrf.mxu0
        %v9002 = vadd.f32 %v8974, %v9001
        %v9003 = vpop.f32.mrf.mxu0
        %v9004 = vadd.f32 %v8976, %v9003
        %9005 = vmatmul.bf16.gmra.mxu0 %v1829
        %v9006 = vpop.f32.mrf.mxu0
        %v9007 = vadd.f32 %v8979, %v9006
        %v9008 = vpop.f32.mrf.mxu0
        %9009 = vdwg.mxu0
        %9010 = vmatpush.bf16.xpose.msra.mxu0 %v5798
        %9011 = vmatpush.bf16.xpose.msra.mxu0 %v5766
        %9012 = vmatpush.bf16.xpose.msra.mxu0 %v5734
        %9013 = vmatpush.bf16.xpose.msra.mxu0 %v5702
        %9014 = vmatpush.bf16.xpose.msra.mxu0 %v5670
        %9015 = vmatpush.bf16.xpose.msra.mxu0 %v5638
        %9016 = vmatpush.bf16.xpose.msra.mxu0 %v5606
        %9017 = vmatpush.bf16.xpose.msra.mxu0 %v5574
        %9018 = vmatmul.bf16.gmra.mxu0 %v1734
        %v9019 = vpop.f32.mrf.mxu0
        %v9020 = vadd.f32 %v8992, %v9019
        %v9021 = vpop.f32.mrf.mxu0
        %v9022 = vadd.f32 %v8994, %v9021
        %9023 = vmatmul.bf16.gmra.mxu0 %v1766
        %v9024 = vpop.f32.mrf.mxu0
        %v9025 = vadd.f32 %v8997, %v9024
        %v9026 = vpop.f32.mrf.mxu0
        %v9027 = vadd.f32 %v8999, %v9026
        %9028 = vmatmul.bf16.gmra.mxu0 %v1798
        %v9029 = vpop.f32.mrf.mxu0
        %v9030 = vadd.f32 %v9002, %v9029
        %v9031 = vpop.f32.mrf.mxu0
        %v9032 = vadd.f32 %v9004, %v9031
        %9033 = vmatmul.bf16.gmra.mxu0 %v1830
        %v9034 = vpop.f32.mrf.mxu0
        %v9035 = vadd.f32 %v9007, %v9034
        %v9036 = vpop.f32.mrf.mxu0
        %9037 = vdwg.mxu0
        %9038 = vmatpush.bf16.xpose.msra.mxu0 %v5799
        %9039 = vmatpush.bf16.xpose.msra.mxu0 %v5767
        %9040 = vmatpush.bf16.xpose.msra.mxu0 %v5735
        %9041 = vmatpush.bf16.xpose.msra.mxu0 %v5703
        %9042 = vmatpush.bf16.xpose.msra.mxu0 %v5671
        %9043 = vmatpush.bf16.xpose.msra.mxu0 %v5639
        %9044 = vmatpush.bf16.xpose.msra.mxu0 %v5607
        %9045 = vmatpush.bf16.xpose.msra.mxu0 %v5575
        %9046 = vmatmul.bf16.gmra.mxu0 %v1735
        %v9047 = vpop.f32.mrf.mxu0
        %v9048 = vadd.f32 %v9020, %v9047
        %v9049 = vpop.f32.mrf.mxu0
        %v9050 = vadd.f32 %v9022, %v9049
        %9051 = vmatmul.bf16.gmra.mxu0 %v1767
        %v9052 = vpop.f32.mrf.mxu0
        %v9053 = vadd.f32 %v9025, %v9052
        %v9054 = vpop.f32.mrf.mxu0
        %v9055 = vadd.f32 %v9027, %v9054
        %9056 = vmatmul.bf16.gmra.mxu0 %v1799
        %v9057 = vpop.f32.mrf.mxu0
        %v9058 = vadd.f32 %v9030, %v9057
        %v9059 = vpop.f32.mrf.mxu0
        %v9060 = vadd.f32 %v9032, %v9059
        %9061 = vmatmul.bf16.gmra.mxu0 %v1831
        %v9062 = vpop.f32.mrf.mxu0
        %v9063 = vadd.f32 %v9035, %v9062
        %v9064 = vpop.f32.mrf.mxu0
        %9065 = vdwg.mxu0
        %9066 = vmatpush.bf16.xpose.msra.mxu0 %v5800
        %9067 = vmatpush.bf16.xpose.msra.mxu0 %v5768
        %9068 = vmatpush.bf16.xpose.msra.mxu0 %v5736
        %9069 = vmatpush.bf16.xpose.msra.mxu0 %v5704
        %9070 = vmatpush.bf16.xpose.msra.mxu0 %v5672
        %9071 = vmatpush.bf16.xpose.msra.mxu0 %v5640
        %9072 = vmatpush.bf16.xpose.msra.mxu0 %v5608
        %9073 = vmatpush.bf16.xpose.msra.mxu0 %v5576
        %9074 = vmatmul.bf16.gmra.mxu0 %v1736
        %v9075 = vpop.f32.mrf.mxu0
        %v9076 = vadd.f32 %v9048, %v9075
        %v9077 = vpop.f32.mrf.mxu0
        %v9078 = vadd.f32 %v9050, %v9077
        %9079 = vmatmul.bf16.gmra.mxu0 %v1768
        %v9080 = vpop.f32.mrf.mxu0
        %v9081 = vadd.f32 %v9053, %v9080
        %v9082 = vpop.f32.mrf.mxu0
        %v9083 = vadd.f32 %v9055, %v9082
        %9084 = vmatmul.bf16.gmra.mxu0 %v1800
        %v9085 = vpop.f32.mrf.mxu0
        %v9086 = vadd.f32 %v9058, %v9085
        %v9087 = vpop.f32.mrf.mxu0
        %v9088 = vadd.f32 %v9060, %v9087
        %9089 = vmatmul.bf16.gmra.mxu0 %v1832
        %v9090 = vpop.f32.mrf.mxu0
        %v9091 = vadd.f32 %v9063, %v9090
        %v9092 = vpop.f32.mrf.mxu0
        %9093 = vdwg.mxu0
        %9094 = vmatpush.bf16.xpose.msra.mxu0 %v5801
        %9095 = vmatpush.bf16.xpose.msra.mxu0 %v5769
        %9096 = vmatpush.bf16.xpose.msra.mxu0 %v5737
        %9097 = vmatpush.bf16.xpose.msra.mxu0 %v5705
        %9098 = vmatpush.bf16.xpose.msra.mxu0 %v5673
        %9099 = vmatpush.bf16.xpose.msra.mxu0 %v5641
        %9100 = vmatpush.bf16.xpose.msra.mxu0 %v5609
        %9101 = vmatpush.bf16.xpose.msra.mxu0 %v5577
        %9102 = vmatmul.bf16.gmra.mxu0 %v1737
        %v9103 = vpop.f32.mrf.mxu0
        %v9104 = vadd.f32 %v9076, %v9103
        %v9105 = vpop.f32.mrf.mxu0
        %v9106 = vadd.f32 %v9078, %v9105
        %9107 = vmatmul.bf16.gmra.mxu0 %v1769
        %v9108 = vpop.f32.mrf.mxu0
        %v9109 = vadd.f32 %v9081, %v9108
        %v9110 = vpop.f32.mrf.mxu0
        %v9111 = vadd.f32 %v9083, %v9110
        %9112 = vmatmul.bf16.gmra.mxu0 %v1801
        %v9113 = vpop.f32.mrf.mxu0
        %v9114 = vadd.f32 %v9086, %v9113
        %v9115 = vpop.f32.mrf.mxu0
        %v9116 = vadd.f32 %v9088, %v9115
        %9117 = vmatmul.bf16.gmra.mxu0 %v1833
        %v9118 = vpop.f32.mrf.mxu0
        %v9119 = vadd.f32 %v9091, %v9118
        %v9120 = vpop.f32.mrf.mxu0
        %9121 = vdwg.mxu0
        %9122 = vmatpush.bf16.xpose.msra.mxu0 %v5802
        %9123 = vmatpush.bf16.xpose.msra.mxu0 %v5770
        %9124 = vmatpush.bf16.xpose.msra.mxu0 %v5738
        %9125 = vmatpush.bf16.xpose.msra.mxu0 %v5706
        %9126 = vmatpush.bf16.xpose.msra.mxu0 %v5674
        %9127 = vmatpush.bf16.xpose.msra.mxu0 %v5642
        %9128 = vmatpush.bf16.xpose.msra.mxu0 %v5610
        %9129 = vmatpush.bf16.xpose.msra.mxu0 %v5578
        %9130 = vmatmul.bf16.gmra.mxu0 %v1738
        %v9131 = vpop.f32.mrf.mxu0
        %v9132 = vadd.f32 %v9104, %v9131
        %v9133 = vpop.f32.mrf.mxu0
        %v9134 = vadd.f32 %v9106, %v9133
        %9135 = vmatmul.bf16.gmra.mxu0 %v1770
        %v9136 = vpop.f32.mrf.mxu0
        %v9137 = vadd.f32 %v9109, %v9136
        %v9138 = vpop.f32.mrf.mxu0
        %v9139 = vadd.f32 %v9111, %v9138
        %9140 = vmatmul.bf16.gmra.mxu0 %v1802
        %v9141 = vpop.f32.mrf.mxu0
        %v9142 = vadd.f32 %v9114, %v9141
        %v9143 = vpop.f32.mrf.mxu0
        %v9144 = vadd.f32 %v9116, %v9143
        %9145 = vmatmul.bf16.gmra.mxu0 %v1834
        %v9146 = vpop.f32.mrf.mxu0
        %v9147 = vadd.f32 %v9119, %v9146
        %v9148 = vpop.f32.mrf.mxu0
        %9149 = vdwg.mxu0
        %9150 = vmatpush.bf16.xpose.msra.mxu0 %v5803
        %9151 = vmatpush.bf16.xpose.msra.mxu0 %v5771
        %9152 = vmatpush.bf16.xpose.msra.mxu0 %v5739
        %9153 = vmatpush.bf16.xpose.msra.mxu0 %v5707
        %9154 = vmatpush.bf16.xpose.msra.mxu0 %v5675
        %9155 = vmatpush.bf16.xpose.msra.mxu0 %v5643
        %9156 = vmatpush.bf16.xpose.msra.mxu0 %v5611
        %9157 = vmatpush.bf16.xpose.msra.mxu0 %v5579
        %9158 = vmatmul.bf16.gmra.mxu0 %v1739
        %v9159 = vpop.f32.mrf.mxu0
        %v9160 = vadd.f32 %v9132, %v9159
        %v9161 = vpop.f32.mrf.mxu0
        %v9162 = vadd.f32 %v9134, %v9161
        %9163 = vmatmul.bf16.gmra.mxu0 %v1771
        %v9164 = vpop.f32.mrf.mxu0
        %v9165 = vadd.f32 %v9137, %v9164
        %v9166 = vpop.f32.mrf.mxu0
        %v9167 = vadd.f32 %v9139, %v9166
        %9168 = vmatmul.bf16.gmra.mxu0 %v1803
        %v9169 = vpop.f32.mrf.mxu0
        %v9170 = vadd.f32 %v9142, %v9169
        %v9171 = vpop.f32.mrf.mxu0
        %v9172 = vadd.f32 %v9144, %v9171
        %9173 = vmatmul.bf16.gmra.mxu0 %v1835
        %v9174 = vpop.f32.mrf.mxu0
        %v9175 = vadd.f32 %v9147, %v9174
        %v9176 = vpop.f32.mrf.mxu0
        %9177 = vdwg.mxu0
        %9178 = vmatpush.bf16.xpose.msra.mxu0 %v5804
        %9179 = vmatpush.bf16.xpose.msra.mxu0 %v5772
        %9180 = vmatpush.bf16.xpose.msra.mxu0 %v5740
        %9181 = vmatpush.bf16.xpose.msra.mxu0 %v5708
        %9182 = vmatpush.bf16.xpose.msra.mxu0 %v5676
        %9183 = vmatpush.bf16.xpose.msra.mxu0 %v5644
        %9184 = vmatpush.bf16.xpose.msra.mxu0 %v5612
        %9185 = vmatpush.bf16.xpose.msra.mxu0 %v5580
        %9186 = vmatmul.bf16.gmra.mxu0 %v1740
        %v9187 = vpop.f32.mrf.mxu0
        %v9188 = vadd.f32 %v9160, %v9187
        %v9189 = vpop.f32.mrf.mxu0
        %v9190 = vadd.f32 %v9162, %v9189
        %9191 = vmatmul.bf16.gmra.mxu0 %v1772
        %v9192 = vpop.f32.mrf.mxu0
        %v9193 = vadd.f32 %v9165, %v9192
        %v9194 = vpop.f32.mrf.mxu0
        %v9195 = vadd.f32 %v9167, %v9194
        %9196 = vmatmul.bf16.gmra.mxu0 %v1804
        %v9197 = vpop.f32.mrf.mxu0
        %v9198 = vadd.f32 %v9170, %v9197
        %v9199 = vpop.f32.mrf.mxu0
        %v9200 = vadd.f32 %v9172, %v9199
        %9201 = vmatmul.bf16.gmra.mxu0 %v1836
        %v9202 = vpop.f32.mrf.mxu0
        %v9203 = vadd.f32 %v9175, %v9202
        %v9204 = vpop.f32.mrf.mxu0
        %9205 = vdwg.mxu0
        %9206 = vmatpush.bf16.xpose.msra.mxu0 %v5805
        %9207 = vmatpush.bf16.xpose.msra.mxu0 %v5773
        %9208 = vmatpush.bf16.xpose.msra.mxu0 %v5741
        %9209 = vmatpush.bf16.xpose.msra.mxu0 %v5709
        %9210 = vmatpush.bf16.xpose.msra.mxu0 %v5677
        %9211 = vmatpush.bf16.xpose.msra.mxu0 %v5645
        %9212 = vmatpush.bf16.xpose.msra.mxu0 %v5613
        %9213 = vmatpush.bf16.xpose.msra.mxu0 %v5581
        %9214 = vmatmul.bf16.gmra.mxu0 %v1741
        %v9215 = vpop.f32.mrf.mxu0
        %v9216 = vadd.f32 %v9188, %v9215
        %v9217 = vpop.f32.mrf.mxu0
        %v9218 = vadd.f32 %v9190, %v9217
        %9219 = vmatmul.bf16.gmra.mxu0 %v1773
        %v9220 = vpop.f32.mrf.mxu0
        %v9221 = vadd.f32 %v9193, %v9220
        %v9222 = vpop.f32.mrf.mxu0
        %v9223 = vadd.f32 %v9195, %v9222
        %9224 = vmatmul.bf16.gmra.mxu0 %v1805
        %v9225 = vpop.f32.mrf.mxu0
        %v9226 = vadd.f32 %v9198, %v9225
        %v9227 = vpop.f32.mrf.mxu0
        %v9228 = vadd.f32 %v9200, %v9227
        %9229 = vmatmul.bf16.gmra.mxu0 %v1837
        %v9230 = vpop.f32.mrf.mxu0
        %v9231 = vadd.f32 %v9203, %v9230
        %v9232 = vpop.f32.mrf.mxu0
        %9233 = vdwg.mxu0
        %9234 = vmatpush.bf16.xpose.msra.mxu0 %v5806
        %9235 = vmatpush.bf16.xpose.msra.mxu0 %v5774
        %9236 = vmatpush.bf16.xpose.msra.mxu0 %v5742
        %9237 = vmatpush.bf16.xpose.msra.mxu0 %v5710
        %9238 = vmatpush.bf16.xpose.msra.mxu0 %v5678
        %9239 = vmatpush.bf16.xpose.msra.mxu0 %v5646
        %9240 = vmatpush.bf16.xpose.msra.mxu0 %v5614
        %9241 = vmatpush.bf16.xpose.msra.mxu0 %v5582
        %9242 = vmatmul.bf16.gmra.mxu0 %v1742
        %v9243 = vpop.f32.mrf.mxu0
        %v9244 = vadd.f32 %v9216, %v9243
        %v9245 = vpop.f32.mrf.mxu0
        %v9246 = vadd.f32 %v9218, %v9245
        %9247 = vmatmul.bf16.gmra.mxu0 %v1774
        %v9248 = vpop.f32.mrf.mxu0
        %v9249 = vadd.f32 %v9221, %v9248
        %v9250 = vpop.f32.mrf.mxu0
        %v9251 = vadd.f32 %v9223, %v9250
        %9252 = vmatmul.bf16.gmra.mxu0 %v1806
        %v9253 = vpop.f32.mrf.mxu0
        %v9254 = vadd.f32 %v9226, %v9253
        %v9255 = vpop.f32.mrf.mxu0
        %v9256 = vadd.f32 %v9228, %v9255
        %9257 = vmatmul.bf16.gmra.mxu0 %v1838
        %v9258 = vpop.f32.mrf.mxu0
        %v9259 = vadd.f32 %v9231, %v9258
        %v9260 = vpop.f32.mrf.mxu0
        %9261 = vdwg.mxu0
        %9262 = vmatpush.bf16.xpose.msra.mxu0 %v5807
        %9263 = vmatpush.bf16.xpose.msra.mxu0 %v5775
        %9264 = vmatpush.bf16.xpose.msra.mxu0 %v5743
        %9265 = vmatpush.bf16.xpose.msra.mxu0 %v5711
        %9266 = vmatpush.bf16.xpose.msra.mxu0 %v5679
        %9267 = vmatpush.bf16.xpose.msra.mxu0 %v5647
        %9268 = vmatpush.bf16.xpose.msra.mxu0 %v5615
        %9269 = vmatpush.bf16.xpose.msra.mxu0 %v5583
        %9270 = vmatmul.bf16.gmra.mxu0 %v1743
        %v9271 = vpop.f32.mrf.mxu0
        %v9272 = vadd.f32 %v9244, %v9271
        %v9273 = vpop.f32.mrf.mxu0
        %v9274 = vadd.f32 %v9246, %v9273
        %9275 = vmatmul.bf16.gmra.mxu0 %v1775
        %v9276 = vpop.f32.mrf.mxu0
        %v9277 = vadd.f32 %v9249, %v9276
        %v9278 = vpop.f32.mrf.mxu0
        %v9279 = vadd.f32 %v9251, %v9278
        %9280 = vmatmul.bf16.gmra.mxu0 %v1807
        %v9281 = vpop.f32.mrf.mxu0
        %v9282 = vadd.f32 %v9254, %v9281
        %v9283 = vpop.f32.mrf.mxu0
        %v9284 = vadd.f32 %v9256, %v9283
        %9285 = vmatmul.bf16.gmra.mxu0 %v1839
        %v9286 = vpop.f32.mrf.mxu0
        %v9287 = vadd.f32 %v9259, %v9286
        %v9288 = vpop.f32.mrf.mxu0
        %9289 = vdwg.mxu0
        %9290 = vmatpush.bf16.xpose.msra.mxu0 %v5808
        %9291 = vmatpush.bf16.xpose.msra.mxu0 %v5776
        %9292 = vmatpush.bf16.xpose.msra.mxu0 %v5744
        %9293 = vmatpush.bf16.xpose.msra.mxu0 %v5712
        %9294 = vmatpush.bf16.xpose.msra.mxu0 %v5680
        %9295 = vmatpush.bf16.xpose.msra.mxu0 %v5648
        %9296 = vmatpush.bf16.xpose.msra.mxu0 %v5616
        %9297 = vmatpush.bf16.xpose.msra.mxu0 %v5584
        %9298 = vmatmul.bf16.gmra.mxu0 %v1744
        %v9299 = vpop.f32.mrf.mxu0
        %v9300 = vadd.f32 %v9272, %v9299
        %v9301 = vpop.f32.mrf.mxu0
        %v9302 = vadd.f32 %v9274, %v9301
        %9303 = vmatmul.bf16.gmra.mxu0 %v1776
        %v9304 = vpop.f32.mrf.mxu0
        %v9305 = vadd.f32 %v9277, %v9304
        %v9306 = vpop.f32.mrf.mxu0
        %v9307 = vadd.f32 %v9279, %v9306
        %9308 = vmatmul.bf16.gmra.mxu0 %v1808
        %v9309 = vpop.f32.mrf.mxu0
        %v9310 = vadd.f32 %v9282, %v9309
        %v9311 = vpop.f32.mrf.mxu0
        %v9312 = vadd.f32 %v9284, %v9311
        %9313 = vmatmul.bf16.gmra.mxu0 %v1840
        %v9314 = vpop.f32.mrf.mxu0
        %v9315 = vadd.f32 %v9287, %v9314
        %v9316 = vpop.f32.mrf.mxu0
        %9317 = vdwg.mxu0
        %9318 = vmatpush.bf16.xpose.msra.mxu0 %v5809
        %9319 = vmatpush.bf16.xpose.msra.mxu0 %v5777
        %9320 = vmatpush.bf16.xpose.msra.mxu0 %v5745
        %9321 = vmatpush.bf16.xpose.msra.mxu0 %v5713
        %9322 = vmatpush.bf16.xpose.msra.mxu0 %v5681
        %9323 = vmatpush.bf16.xpose.msra.mxu0 %v5649
        %9324 = vmatpush.bf16.xpose.msra.mxu0 %v5617
        %9325 = vmatpush.bf16.xpose.msra.mxu0 %v5585
        %9326 = vmatmul.bf16.gmra.mxu0 %v1745
        %v9327 = vpop.f32.mrf.mxu0
        %v9328 = vadd.f32 %v9300, %v9327
        %v9329 = vpop.f32.mrf.mxu0
        %v9330 = vadd.f32 %v9302, %v9329
        %9331 = vmatmul.bf16.gmra.mxu0 %v1777
        %v9332 = vpop.f32.mrf.mxu0
        %v9333 = vadd.f32 %v9305, %v9332
        %v9334 = vpop.f32.mrf.mxu0
        %v9335 = vadd.f32 %v9307, %v9334
        %9336 = vmatmul.bf16.gmra.mxu0 %v1809
        %v9337 = vpop.f32.mrf.mxu0
        %v9338 = vadd.f32 %v9310, %v9337
        %v9339 = vpop.f32.mrf.mxu0
        %v9340 = vadd.f32 %v9312, %v9339
        %9341 = vmatmul.bf16.gmra.mxu0 %v1841
        %v9342 = vpop.f32.mrf.mxu0
        %v9343 = vadd.f32 %v9315, %v9342
        %v9344 = vpop.f32.mrf.mxu0
        %9345 = vdwg.mxu0
        %9346 = vmatpush.bf16.xpose.msra.mxu0 %v5810
        %9347 = vmatpush.bf16.xpose.msra.mxu0 %v5778
        %9348 = vmatpush.bf16.xpose.msra.mxu0 %v5746
        %9349 = vmatpush.bf16.xpose.msra.mxu0 %v5714
        %9350 = vmatpush.bf16.xpose.msra.mxu0 %v5682
        %9351 = vmatpush.bf16.xpose.msra.mxu0 %v5650
        %9352 = vmatpush.bf16.xpose.msra.mxu0 %v5618
        %9353 = vmatpush.bf16.xpose.msra.mxu0 %v5586
        %9354 = vmatmul.bf16.gmra.mxu0 %v1746
        %v9355 = vpop.f32.mrf.mxu0
        %v9356 = vadd.f32 %v9328, %v9355
        %v9357 = vpop.f32.mrf.mxu0
        %v9358 = vadd.f32 %v9330, %v9357
        %9359 = vmatmul.bf16.gmra.mxu0 %v1778
        %v9360 = vpop.f32.mrf.mxu0
        %v9361 = vadd.f32 %v9333, %v9360
        %v9362 = vpop.f32.mrf.mxu0
        %v9363 = vadd.f32 %v9335, %v9362
        %9364 = vmatmul.bf16.gmra.mxu0 %v1810
        %v9365 = vpop.f32.mrf.mxu0
        %v9366 = vadd.f32 %v9338, %v9365
        %v9367 = vpop.f32.mrf.mxu0
        %v9368 = vadd.f32 %v9340, %v9367
        %9369 = vmatmul.bf16.gmra.mxu0 %v1842
        %v9370 = vpop.f32.mrf.mxu0
        %v9371 = vadd.f32 %v9343, %v9370
        %v9372 = vpop.f32.mrf.mxu0
        %9373 = vdwg.mxu0
        %9374 = vmatpush.bf16.xpose.msra.mxu0 %v5811
        %9375 = vmatpush.bf16.xpose.msra.mxu0 %v5779
        %9376 = vmatpush.bf16.xpose.msra.mxu0 %v5747
        %9377 = vmatpush.bf16.xpose.msra.mxu0 %v5715
        %9378 = vmatpush.bf16.xpose.msra.mxu0 %v5683
        %9379 = vmatpush.bf16.xpose.msra.mxu0 %v5651
        %9380 = vmatpush.bf16.xpose.msra.mxu0 %v5619
        %9381 = vmatpush.bf16.xpose.msra.mxu0 %v5587
        %9382 = vmatmul.bf16.gmra.mxu0 %v1747
        %v9383 = vpop.f32.mrf.mxu0
        %v9384 = vadd.f32 %v9356, %v9383
        %v9385 = vpop.f32.mrf.mxu0
        %v9386 = vadd.f32 %v9358, %v9385
        %9387 = vmatmul.bf16.gmra.mxu0 %v1779
        %v9388 = vpop.f32.mrf.mxu0
        %v9389 = vadd.f32 %v9361, %v9388
        %v9390 = vpop.f32.mrf.mxu0
        %v9391 = vadd.f32 %v9363, %v9390
        %9392 = vmatmul.bf16.gmra.mxu0 %v1811
        %v9393 = vpop.f32.mrf.mxu0
        %v9394 = vadd.f32 %v9366, %v9393
        %v9395 = vpop.f32.mrf.mxu0
        %v9396 = vadd.f32 %v9368, %v9395
        %9397 = vmatmul.bf16.gmra.mxu0 %v1843
        %v9398 = vpop.f32.mrf.mxu0
        %v9399 = vadd.f32 %v9371, %v9398
        %v9400 = vpop.f32.mrf.mxu0
        %9401 = vdwg.mxu0
        %9402 = vmatpush.bf16.xpose.msra.mxu0 %v5812
        %9403 = vmatpush.bf16.xpose.msra.mxu0 %v5780
        %9404 = vmatpush.bf16.xpose.msra.mxu0 %v5748
        %9405 = vmatpush.bf16.xpose.msra.mxu0 %v5716
        %9406 = vmatpush.bf16.xpose.msra.mxu0 %v5684
        %9407 = vmatpush.bf16.xpose.msra.mxu0 %v5652
        %9408 = vmatpush.bf16.xpose.msra.mxu0 %v5620
        %9409 = vmatpush.bf16.xpose.msra.mxu0 %v5588
        %9410 = vmatmul.bf16.gmra.mxu0 %v1748
        %v9411 = vpop.f32.mrf.mxu0
        %v9412 = vadd.f32 %v9384, %v9411
        %v9413 = vpop.f32.mrf.mxu0
        %v9414 = vadd.f32 %v9386, %v9413
        %9415 = vmatmul.bf16.gmra.mxu0 %v1780
        %v9416 = vpop.f32.mrf.mxu0
        %v9417 = vadd.f32 %v9389, %v9416
        %v9418 = vpop.f32.mrf.mxu0
        %v9419 = vadd.f32 %v9391, %v9418
        %9420 = vmatmul.bf16.gmra.mxu0 %v1812
        %v9421 = vpop.f32.mrf.mxu0
        %v9422 = vadd.f32 %v9394, %v9421
        %v9423 = vpop.f32.mrf.mxu0
        %v9424 = vadd.f32 %v9396, %v9423
        %9425 = vmatmul.bf16.gmra.mxu0 %v1844
        %v9426 = vpop.f32.mrf.mxu0
        %v9427 = vadd.f32 %v9399, %v9426
        %v9428 = vpop.f32.mrf.mxu0
        %9429 = vdwg.mxu0
        %9430 = vmatpush.bf16.xpose.msra.mxu0 %v5813
        %9431 = vmatpush.bf16.xpose.msra.mxu0 %v5781
        %9432 = vmatpush.bf16.xpose.msra.mxu0 %v5749
        %9433 = vmatpush.bf16.xpose.msra.mxu0 %v5717
        %9434 = vmatpush.bf16.xpose.msra.mxu0 %v5685
        %9435 = vmatpush.bf16.xpose.msra.mxu0 %v5653
        %9436 = vmatpush.bf16.xpose.msra.mxu0 %v5621
        %9437 = vmatpush.bf16.xpose.msra.mxu0 %v5589
        %9438 = vmatmul.bf16.gmra.mxu0 %v1749
        %v9439 = vpop.f32.mrf.mxu0
        %v9440 = vadd.f32 %v9412, %v9439
        %v9441 = vpop.f32.mrf.mxu0
        %v9442 = vadd.f32 %v9414, %v9441
        %9443 = vmatmul.bf16.gmra.mxu0 %v1781
        %v9444 = vpop.f32.mrf.mxu0
        %v9445 = vadd.f32 %v9417, %v9444
        %v9446 = vpop.f32.mrf.mxu0
        %v9447 = vadd.f32 %v9419, %v9446
        %9448 = vmatmul.bf16.gmra.mxu0 %v1813
        %v9449 = vpop.f32.mrf.mxu0
        %v9450 = vadd.f32 %v9422, %v9449
        %v9451 = vpop.f32.mrf.mxu0
        %v9452 = vadd.f32 %v9424, %v9451
        %9453 = vmatmul.bf16.gmra.mxu0 %v1845
        %v9454 = vpop.f32.mrf.mxu0
        %v9455 = vadd.f32 %v9427, %v9454
        %v9456 = vpop.f32.mrf.mxu0
        %9457 = vdwg.mxu0
        %9458 = vmatpush.bf16.xpose.msra.mxu0 %v5814
        %9459 = vmatpush.bf16.xpose.msra.mxu0 %v5782
        %9460 = vmatpush.bf16.xpose.msra.mxu0 %v5750
        %9461 = vmatpush.bf16.xpose.msra.mxu0 %v5718
        %9462 = vmatpush.bf16.xpose.msra.mxu0 %v5686
        %9463 = vmatpush.bf16.xpose.msra.mxu0 %v5654
        %9464 = vmatpush.bf16.xpose.msra.mxu0 %v5622
        %9465 = vmatpush.bf16.xpose.msra.mxu0 %v5590
        %9466 = vmatmul.bf16.gmra.mxu0 %v1750
        %v9467 = vpop.f32.mrf.mxu0
        %v9468 = vadd.f32 %v9440, %v9467
        %v9469 = vpop.f32.mrf.mxu0
        %v9470 = vadd.f32 %v9442, %v9469
        %9471 = vmatmul.bf16.gmra.mxu0 %v1782
        %v9472 = vpop.f32.mrf.mxu0
        %v9473 = vadd.f32 %v9445, %v9472
        %v9474 = vpop.f32.mrf.mxu0
        %v9475 = vadd.f32 %v9447, %v9474
        %9476 = vmatmul.bf16.gmra.mxu0 %v1814
        %v9477 = vpop.f32.mrf.mxu0
        %v9478 = vadd.f32 %v9450, %v9477
        %v9479 = vpop.f32.mrf.mxu0
        %v9480 = vadd.f32 %v9452, %v9479
        %9481 = vmatmul.bf16.gmra.mxu0 %v1846
        %v9482 = vpop.f32.mrf.mxu0
        %v9483 = vadd.f32 %v9455, %v9482
        %v9484 = vpop.f32.mrf.mxu0
        %9485 = vdwg.mxu0
        %9486 = vmatpush.bf16.xpose.msra.mxu0 %v5815
        %9487 = vmatpush.bf16.xpose.msra.mxu0 %v5783
        %9488 = vmatpush.bf16.xpose.msra.mxu0 %v5751
        %9489 = vmatpush.bf16.xpose.msra.mxu0 %v5719
        %9490 = vmatpush.bf16.xpose.msra.mxu0 %v5687
        %9491 = vmatpush.bf16.xpose.msra.mxu0 %v5655
        %9492 = vmatpush.bf16.xpose.msra.mxu0 %v5623
        %9493 = vmatpush.bf16.xpose.msra.mxu0 %v5591
        %9494 = vmatmul.bf16.gmra.mxu0 %v1751
        %v9495 = vpop.f32.mrf.mxu0
        %v9496 = vadd.f32 %v9468, %v9495
        %v9497 = vpop.f32.mrf.mxu0
        %v9498 = vadd.f32 %v9470, %v9497
        %9499 = vmatmul.bf16.gmra.mxu0 %v1783
        %v9500 = vpop.f32.mrf.mxu0
        %v9501 = vadd.f32 %v9473, %v9500
        %v9502 = vpop.f32.mrf.mxu0
        %v9503 = vadd.f32 %v9475, %v9502
        %9504 = vmatmul.bf16.gmra.mxu0 %v1815
        %v9505 = vpop.f32.mrf.mxu0
        %v9506 = vadd.f32 %v9478, %v9505
        %v9507 = vpop.f32.mrf.mxu0
        %v9508 = vadd.f32 %v9480, %v9507
        %9509 = vmatmul.bf16.gmra.mxu0 %v1847
        %v9510 = vpop.f32.mrf.mxu0
        %v9511 = vadd.f32 %v9483, %v9510
        %v9512 = vpop.f32.mrf.mxu0
        %9513 = vdwg.mxu0
        %9514 = vmatpush.bf16.xpose.msra.mxu0 %v5816
        %9515 = vmatpush.bf16.xpose.msra.mxu0 %v5784
        %9516 = vmatpush.bf16.xpose.msra.mxu0 %v5752
        %9517 = vmatpush.bf16.xpose.msra.mxu0 %v5720
        %9518 = vmatpush.bf16.xpose.msra.mxu0 %v5688
        %9519 = vmatpush.bf16.xpose.msra.mxu0 %v5656
        %9520 = vmatpush.bf16.xpose.msra.mxu0 %v5624
        %9521 = vmatpush.bf16.xpose.msra.mxu0 %v5592
        %9522 = vmatmul.bf16.gmra.mxu0 %v1752
        %v9523 = vpop.f32.mrf.mxu0
        %v9524 = vadd.f32 %v9496, %v9523
        %v9525 = vpop.f32.mrf.mxu0
        %v9526 = vadd.f32 %v9498, %v9525
        %9527 = vmatmul.bf16.gmra.mxu0 %v1784
        %v9528 = vpop.f32.mrf.mxu0
        %v9529 = vadd.f32 %v9501, %v9528
        %v9530 = vpop.f32.mrf.mxu0
        %v9531 = vadd.f32 %v9503, %v9530
        %9532 = vmatmul.bf16.gmra.mxu0 %v1816
        %v9533 = vpop.f32.mrf.mxu0
        %v9534 = vadd.f32 %v9506, %v9533
        %v9535 = vpop.f32.mrf.mxu0
        %v9536 = vadd.f32 %v9508, %v9535
        %9537 = vmatmul.bf16.gmra.mxu0 %v1848
        %v9538 = vpop.f32.mrf.mxu0
        %v9539 = vadd.f32 %v9511, %v9538
        %v9540 = vpop.f32.mrf.mxu0
        %9541 = vdwg.mxu0
        %9542 = vmatpush.bf16.xpose.msra.mxu0 %v5817
        %9543 = vmatpush.bf16.xpose.msra.mxu0 %v5785
        %9544 = vmatpush.bf16.xpose.msra.mxu0 %v5753
        %9545 = vmatpush.bf16.xpose.msra.mxu0 %v5721
        %9546 = vmatpush.bf16.xpose.msra.mxu0 %v5689
        %9547 = vmatpush.bf16.xpose.msra.mxu0 %v5657
        %9548 = vmatpush.bf16.xpose.msra.mxu0 %v5625
        %9549 = vmatpush.bf16.xpose.msra.mxu0 %v5593
        %9550 = vmatmul.bf16.gmra.mxu0 %v1753
        %v9551 = vpop.f32.mrf.mxu0
        %v9552 = vadd.f32 %v9524, %v9551
        %v9553 = vpop.f32.mrf.mxu0
        %v9554 = vadd.f32 %v9526, %v9553
        %9555 = vmatmul.bf16.gmra.mxu0 %v1785
        %v9556 = vpop.f32.mrf.mxu0
        %v9557 = vadd.f32 %v9529, %v9556
        %v9558 = vpop.f32.mrf.mxu0
        %v9559 = vadd.f32 %v9531, %v9558
        %9560 = vmatmul.bf16.gmra.mxu0 %v1817
        %v9561 = vpop.f32.mrf.mxu0
        %v9562 = vadd.f32 %v9534, %v9561
        %v9563 = vpop.f32.mrf.mxu0
        %v9564 = vadd.f32 %v9536, %v9563
        %9565 = vmatmul.bf16.gmra.mxu0 %v1849
        %v9566 = vpop.f32.mrf.mxu0
        %v9567 = vadd.f32 %v9539, %v9566
        %v9568 = vpop.f32.mrf.mxu0
        %9569 = vdwg.mxu0
        %9570 = vmatpush.bf16.xpose.msra.mxu0 %v5818
        %9571 = vmatpush.bf16.xpose.msra.mxu0 %v5786
        %9572 = vmatpush.bf16.xpose.msra.mxu0 %v5754
        %9573 = vmatpush.bf16.xpose.msra.mxu0 %v5722
        %9574 = vmatpush.bf16.xpose.msra.mxu0 %v5690
        %9575 = vmatpush.bf16.xpose.msra.mxu0 %v5658
        %9576 = vmatpush.bf16.xpose.msra.mxu0 %v5626
        %9577 = vmatpush.bf16.xpose.msra.mxu0 %v5594
        %9578 = vmatmul.bf16.gmra.mxu0 %v1754
        %v9579 = vpop.f32.mrf.mxu0
        %v9580 = vadd.f32 %v9552, %v9579
        %v9581 = vpop.f32.mrf.mxu0
        %v9582 = vadd.f32 %v9554, %v9581
        %9583 = vmatmul.bf16.gmra.mxu0 %v1786
        %v9584 = vpop.f32.mrf.mxu0
        %v9585 = vadd.f32 %v9557, %v9584
        %v9586 = vpop.f32.mrf.mxu0
        %v9587 = vadd.f32 %v9559, %v9586
        %9588 = vmatmul.bf16.gmra.mxu0 %v1818
        %v9589 = vpop.f32.mrf.mxu0
        %v9590 = vadd.f32 %v9562, %v9589
        %v9591 = vpop.f32.mrf.mxu0
        %v9592 = vadd.f32 %v9564, %v9591
        %9593 = vmatmul.bf16.gmra.mxu0 %v1850
        %v9594 = vpop.f32.mrf.mxu0
        %v9595 = vadd.f32 %v9567, %v9594
        %v9596 = vpop.f32.mrf.mxu0
        %9597 = vdwg.mxu0
        %9598 = vmatpush.bf16.xpose.msra.mxu0 %v5819
        %9599 = vmatpush.bf16.xpose.msra.mxu0 %v5787
        %9600 = vmatpush.bf16.xpose.msra.mxu0 %v5755
        %9601 = vmatpush.bf16.xpose.msra.mxu0 %v5723
        %9602 = vmatpush.bf16.xpose.msra.mxu0 %v5691
        %9603 = vmatpush.bf16.xpose.msra.mxu0 %v5659
        %9604 = vmatpush.bf16.xpose.msra.mxu0 %v5627
        %9605 = vmatpush.bf16.xpose.msra.mxu0 %v5595
        %9606 = vmatmul.bf16.gmra.mxu0 %v1755
        %v9607 = vpop.f32.mrf.mxu0
        %v9608 = vadd.f32 %v9580, %v9607
        %v9609 = vpop.f32.mrf.mxu0
        %v9610 = vadd.f32 %v9582, %v9609
        %9611 = vmatmul.bf16.gmra.mxu0 %v1787
        %v9612 = vpop.f32.mrf.mxu0
        %v9613 = vadd.f32 %v9585, %v9612
        %v9614 = vpop.f32.mrf.mxu0
        %v9615 = vadd.f32 %v9587, %v9614
        %9616 = vmatmul.bf16.gmra.mxu0 %v1819
        %v9617 = vpop.f32.mrf.mxu0
        %v9618 = vadd.f32 %v9590, %v9617
        %v9619 = vpop.f32.mrf.mxu0
        %v9620 = vadd.f32 %v9592, %v9619
        %9621 = vmatmul.bf16.gmra.mxu0 %v1851
        %v9622 = vpop.f32.mrf.mxu0
        %v9623 = vadd.f32 %v9595, %v9622
        %v9624 = vpop.f32.mrf.mxu0
        %9625 = vdwg.mxu0
        %9626 = vmatpush.bf16.xpose.msra.mxu0 %v5820
        %9627 = vmatpush.bf16.xpose.msra.mxu0 %v5788
        %9628 = vmatpush.bf16.xpose.msra.mxu0 %v5756
        %9629 = vmatpush.bf16.xpose.msra.mxu0 %v5724
        %9630 = vmatpush.bf16.xpose.msra.mxu0 %v5692
        %9631 = vmatpush.bf16.xpose.msra.mxu0 %v5660
        %9632 = vmatpush.bf16.xpose.msra.mxu0 %v5628
        %9633 = vmatpush.bf16.xpose.msra.mxu0 %v5596
        %9634 = vmatmul.bf16.gmra.mxu0 %v1756
        %v9635 = vpop.f32.mrf.mxu0
        %v9636 = vadd.f32 %v9608, %v9635
        %v9637 = vpop.f32.mrf.mxu0
        %v9638 = vadd.f32 %v9610, %v9637
        %9639 = vmatmul.bf16.gmra.mxu0 %v1788
        %v9640 = vpop.f32.mrf.mxu0
        %v9641 = vadd.f32 %v9613, %v9640
        %v9642 = vpop.f32.mrf.mxu0
        %v9643 = vadd.f32 %v9615, %v9642
        %9644 = vmatmul.bf16.gmra.mxu0 %v1820
        %v9645 = vpop.f32.mrf.mxu0
        %v9646 = vadd.f32 %v9618, %v9645
        %v9647 = vpop.f32.mrf.mxu0
        %v9648 = vadd.f32 %v9620, %v9647
        %9649 = vmatmul.bf16.gmra.mxu0 %v1852
        %v9650 = vpop.f32.mrf.mxu0
        %v9651 = vadd.f32 %v9623, %v9650
        %v9652 = vpop.f32.mrf.mxu0
        %9653 = vdwg.mxu0
        %9654 = vmatpush.bf16.xpose.msra.mxu0 %v5821
        %9655 = vmatpush.bf16.xpose.msra.mxu0 %v5789
        %9656 = vmatpush.bf16.xpose.msra.mxu0 %v5757
        %9657 = vmatpush.bf16.xpose.msra.mxu0 %v5725
        %9658 = vmatpush.bf16.xpose.msra.mxu0 %v5693
        %9659 = vmatpush.bf16.xpose.msra.mxu0 %v5661
        %9660 = vmatpush.bf16.xpose.msra.mxu0 %v5629
        %9661 = vmatpush.bf16.xpose.msra.mxu0 %v5597
        %9662 = vmatmul.bf16.gmra.mxu0 %v1757
        %v9663 = vpop.f32.mrf.mxu0
        %v9664 = vadd.f32 %v9636, %v9663
        %v9665 = vpop.f32.mrf.mxu0
        %v9666 = vadd.f32 %v9638, %v9665
        %9667 = vmatmul.bf16.gmra.mxu0 %v1789
        %v9668 = vpop.f32.mrf.mxu0
        %v9669 = vadd.f32 %v9641, %v9668
        %v9670 = vpop.f32.mrf.mxu0
        %v9671 = vadd.f32 %v9643, %v9670
        %9672 = vmatmul.bf16.gmra.mxu0 %v1821
        %v9673 = vpop.f32.mrf.mxu0
        %v9674 = vadd.f32 %v9646, %v9673
        %v9675 = vpop.f32.mrf.mxu0
        %v9676 = vadd.f32 %v9648, %v9675
        %9677 = vmatmul.bf16.gmra.mxu0 %v1853
        %v9678 = vpop.f32.mrf.mxu0
        %v9679 = vadd.f32 %v9651, %v9678
        %v9680 = vpop.f32.mrf.mxu0
        %9681 = vdwg.mxu0
        %9682 = vmatpush.bf16.xpose.msra.mxu0 %v5822
        %9683 = vmatpush.bf16.xpose.msra.mxu0 %v5790
        %9684 = vmatpush.bf16.xpose.msra.mxu0 %v5758
        %9685 = vmatpush.bf16.xpose.msra.mxu0 %v5726
        %9686 = vmatpush.bf16.xpose.msra.mxu0 %v5694
        %9687 = vmatpush.bf16.xpose.msra.mxu0 %v5662
        %9688 = vmatpush.bf16.xpose.msra.mxu0 %v5630
        %9689 = vmatpush.bf16.xpose.msra.mxu0 %v5598
        %9690 = vmatmul.bf16.gmra.mxu0 %v1758
        %v9691 = vpop.f32.mrf.mxu0
        %v9692 = vadd.f32 %v9664, %v9691
        %v9693 = vpop.f32.mrf.mxu0
        %v9694 = vadd.f32 %v9666, %v9693
        %9695 = vmatmul.bf16.gmra.mxu0 %v1790
        %v9696 = vpop.f32.mrf.mxu0
        %v9697 = vadd.f32 %v9669, %v9696
        %v9698 = vpop.f32.mrf.mxu0
        %v9699 = vadd.f32 %v9671, %v9698
        %9700 = vmatmul.bf16.gmra.mxu0 %v1822
        %v9701 = vpop.f32.mrf.mxu0
        %v9702 = vadd.f32 %v9674, %v9701
        %v9703 = vpop.f32.mrf.mxu0
        %v9704 = vadd.f32 %v9676, %v9703
        %9705 = vmatmul.bf16.gmra.mxu0 %v1854
        %v9706 = vpop.f32.mrf.mxu0
        %v9707 = vadd.f32 %v9679, %v9706
        %v9708 = vpop.f32.mrf.mxu0
        %9709 = vdwg.mxu0
        %9710 = vmatpush.bf16.xpose.msra.mxu0 %v5823
        %9711 = vmatpush.bf16.xpose.msra.mxu0 %v5791
        %9712 = vmatpush.bf16.xpose.msra.mxu0 %v5759
        %9713 = vmatpush.bf16.xpose.msra.mxu0 %v5727
        %9714 = vmatpush.bf16.xpose.msra.mxu0 %v5695
        %9715 = vmatpush.bf16.xpose.msra.mxu0 %v5663
        %9716 = vmatpush.bf16.xpose.msra.mxu0 %v5631
        %9717 = vmatpush.bf16.xpose.msra.mxu0 %v5599
        %9718 = vmatmul.bf16.gmra.mxu0 %v1759
        %v9719 = vpop.f32.mrf.mxu0
        %v9720 = vadd.f32 %v9692, %v9719
        %v9721 = vpop.f32.mrf.mxu0
        %v9722 = vadd.f32 %v9694, %v9721
        %9723 = vmatmul.bf16.gmra.mxu0 %v1791
        %v9724 = vpop.f32.mrf.mxu0
        %v9725 = vadd.f32 %v9697, %v9724
        %v9726 = vpop.f32.mrf.mxu0
        %v9727 = vadd.f32 %v9699, %v9726
        %9728 = vmatmul.bf16.gmra.mxu0 %v1823
        %v9729 = vpop.f32.mrf.mxu0
        %v9730 = vadd.f32 %v9702, %v9729
        %v9731 = vpop.f32.mrf.mxu0
        %v9732 = vadd.f32 %v9704, %v9731
        %9733 = vmatmul.bf16.gmra.mxu0 %v1855
        %v9734 = vpop.f32.mrf.mxu0
        %v9735 = vadd.f32 %v9707, %v9734
        %v9736 = vpop.f32.mrf.mxu0
        %9737 = vdwg.mxu0
        %9738 = vmatpush.bf16.xpose.msra.mxu0 %v5824
        %9739 = vmatpush.bf16.xpose.msra.mxu0 %v5792
        %9740 = vmatpush.bf16.xpose.msra.mxu0 %v5760
        %9741 = vmatpush.bf16.xpose.msra.mxu0 %v5728
        %9742 = vmatpush.bf16.xpose.msra.mxu0 %v5696
        %9743 = vmatpush.bf16.xpose.msra.mxu0 %v5664
        %9744 = vmatpush.bf16.xpose.msra.mxu0 %v5632
        %9745 = vmatpush.bf16.xpose.msra.mxu0 %v5600
        %9746 = vmatmul.bf16.gmra.mxu0 %v1760
        %v9747 = vpop.f32.mrf.mxu0
        %v9748 = vadd.f32 %v9720, %v9747
        %v9749 = vpop.f32.mrf.mxu0
        %v9750 = vadd.f32 %v9722, %v9749
        %9751 = vmatmul.bf16.gmra.mxu0 %v1792
        %v9752 = vpop.f32.mrf.mxu0
        %v9753 = vadd.f32 %v9725, %v9752
        %v9754 = vpop.f32.mrf.mxu0
        %v9755 = vadd.f32 %v9727, %v9754
        %9756 = vmatmul.bf16.gmra.mxu0 %v1824
        %v9757 = vpop.f32.mrf.mxu0
        %v9758 = vadd.f32 %v9730, %v9757
        %v9759 = vpop.f32.mrf.mxu0
        %v9760 = vadd.f32 %v9732, %v9759
        %9761 = vmatmul.bf16.gmra.mxu0 %v1856
        %v9762 = vpop.f32.mrf.mxu0
        %v9763 = vadd.f32 %v9735, %v9762
        %v9764 = vpop.f32.mrf.mxu0
        %9765 = vdwg.mxu0
        %9766 = vmatpush.bf16.xpose.msra.mxu0 %v5825
        %9767 = vmatpush.bf16.xpose.msra.mxu0 %v5793
        %9768 = vmatpush.bf16.xpose.msra.mxu0 %v5761
        %9769 = vmatpush.bf16.xpose.msra.mxu0 %v5729
        %9770 = vmatpush.bf16.xpose.msra.mxu0 %v5697
        %9771 = vmatpush.bf16.xpose.msra.mxu0 %v5665
        %9772 = vmatpush.bf16.xpose.msra.mxu0 %v5633
        %9773 = vmatpush.bf16.xpose.msra.mxu0 %v5601
        %9774 = vmatmul.bf16.gmra.mxu0 %v1761
        %v9775 = vpop.f32.mrf.mxu0
        %v9776 = vadd.f32 %v9748, %v9775
        %v9777 = vpop.f32.mrf.mxu0
        %v9778 = vadd.f32 %v9750, %v9777
        %9779 = vmatmul.bf16.gmra.mxu0 %v1793
        %v9780 = vpop.f32.mrf.mxu0
        %v9781 = vadd.f32 %v9753, %v9780
        %v9782 = vpop.f32.mrf.mxu0
        %v9783 = vadd.f32 %v9755, %v9782
        %9784 = vmatmul.bf16.gmra.mxu0 %v1825
        %v9785 = vpop.f32.mrf.mxu0
        %v9786 = vadd.f32 %v9758, %v9785
        %v9787 = vpop.f32.mrf.mxu0
        %v9788 = vadd.f32 %v9760, %v9787
        %9789 = vmatmul.bf16.gmra.mxu0 %v1857
        %v9790 = vpop.f32.mrf.mxu0
        %v9791 = vadd.f32 %v9763, %v9790
        %v9792 = vpop.f32.mrf.mxu0
        %9793 = vdwg.mxu0
        %9794 = vmatpush.bf16.xpose.msra.mxu0 %v6050
        %9795 = vmatpush.bf16.xpose.msra.mxu0 %v6018
        %9796 = vmatpush.bf16.xpose.msra.mxu0 %v5986
        %9797 = vmatpush.bf16.xpose.msra.mxu0 %v5954
        %9798 = vmatpush.bf16.xpose.msra.mxu0 %v5922
        %9799 = vmatpush.bf16.xpose.msra.mxu0 %v5890
        %9800 = vmatpush.bf16.xpose.msra.mxu0 %v5858
        %9801 = vmatpush.bf16.xpose.msra.mxu0 %v5826
        %9802 = vmatmul.bf16.gmra.mxu0 %v1730
        %v9803 = vpop.f32.mrf.mxu0
        %v9804 = vadd.f32 %v1389, %v9803
        %v9805 = vpop.f32.mrf.mxu0
        %v9806 = vadd.f32 %v1389, %v9805
        %9807 = vmatmul.bf16.gmra.mxu0 %v1762
        %v9808 = vpop.f32.mrf.mxu0
        %v9809 = vadd.f32 %v1389, %v9808
        %v9810 = vpop.f32.mrf.mxu0
        %v9811 = vadd.f32 %v1389, %v9810
        %9812 = vmatmul.bf16.gmra.mxu0 %v1794
        %v9813 = vpop.f32.mrf.mxu0
        %v9814 = vadd.f32 %v1389, %v9813
        %v9815 = vpop.f32.mrf.mxu0
        %v9816 = vadd.f32 %v1389, %v9815
        %9817 = vmatmul.bf16.gmra.mxu0 %v1826
        %v9818 = vpop.f32.mrf.mxu0
        %v9819 = vadd.f32 %v1389, %v9818
        %v9820 = vpop.f32.mrf.mxu0
        %9821 = vdwg.mxu0
        %9822 = vmatpush.bf16.xpose.msra.mxu0 %v6051
        %9823 = vmatpush.bf16.xpose.msra.mxu0 %v6019
        %9824 = vmatpush.bf16.xpose.msra.mxu0 %v5987
        %9825 = vmatpush.bf16.xpose.msra.mxu0 %v5955
        %9826 = vmatpush.bf16.xpose.msra.mxu0 %v5923
        %9827 = vmatpush.bf16.xpose.msra.mxu0 %v5891
        %9828 = vmatpush.bf16.xpose.msra.mxu0 %v5859
        %9829 = vmatpush.bf16.xpose.msra.mxu0 %v5827
        %9830 = vmatmul.bf16.gmra.mxu0 %v1731
        %v9831 = vpop.f32.mrf.mxu0
        %v9832 = vadd.f32 %v9804, %v9831
        %v9833 = vpop.f32.mrf.mxu0
        %v9834 = vadd.f32 %v9806, %v9833
        %9835 = vmatmul.bf16.gmra.mxu0 %v1763
        %v9836 = vpop.f32.mrf.mxu0
        %v9837 = vadd.f32 %v9809, %v9836
        %v9838 = vpop.f32.mrf.mxu0
        %v9839 = vadd.f32 %v9811, %v9838
        %9840 = vmatmul.bf16.gmra.mxu0 %v1795
        %v9841 = vpop.f32.mrf.mxu0
        %v9842 = vadd.f32 %v9814, %v9841
        %v9843 = vpop.f32.mrf.mxu0
        %v9844 = vadd.f32 %v9816, %v9843
        %9845 = vmatmul.bf16.gmra.mxu0 %v1827
        %v9846 = vpop.f32.mrf.mxu0
        %v9847 = vadd.f32 %v9819, %v9846
        %v9848 = vpop.f32.mrf.mxu0
        %9849 = vdwg.mxu0
        %9850 = vmatpush.bf16.xpose.msra.mxu0 %v6052
        %9851 = vmatpush.bf16.xpose.msra.mxu0 %v6020
        %9852 = vmatpush.bf16.xpose.msra.mxu0 %v5988
        %9853 = vmatpush.bf16.xpose.msra.mxu0 %v5956
        %9854 = vmatpush.bf16.xpose.msra.mxu0 %v5924
        %9855 = vmatpush.bf16.xpose.msra.mxu0 %v5892
        %9856 = vmatpush.bf16.xpose.msra.mxu0 %v5860
        %9857 = vmatpush.bf16.xpose.msra.mxu0 %v5828
        %9858 = vmatmul.bf16.gmra.mxu0 %v1732
        %v9859 = vpop.f32.mrf.mxu0
        %v9860 = vadd.f32 %v9832, %v9859
        %v9861 = vpop.f32.mrf.mxu0
        %v9862 = vadd.f32 %v9834, %v9861
        %9863 = vmatmul.bf16.gmra.mxu0 %v1764
        %v9864 = vpop.f32.mrf.mxu0
        %v9865 = vadd.f32 %v9837, %v9864
        %v9866 = vpop.f32.mrf.mxu0
        %v9867 = vadd.f32 %v9839, %v9866
        %9868 = vmatmul.bf16.gmra.mxu0 %v1796
        %v9869 = vpop.f32.mrf.mxu0
        %v9870 = vadd.f32 %v9842, %v9869
        %v9871 = vpop.f32.mrf.mxu0
        %v9872 = vadd.f32 %v9844, %v9871
        %9873 = vmatmul.bf16.gmra.mxu0 %v1828
        %v9874 = vpop.f32.mrf.mxu0
        %v9875 = vadd.f32 %v9847, %v9874
        %v9876 = vpop.f32.mrf.mxu0
        %9877 = vdwg.mxu0
        %9878 = vmatpush.bf16.xpose.msra.mxu0 %v6053
        %9879 = vmatpush.bf16.xpose.msra.mxu0 %v6021
        %9880 = vmatpush.bf16.xpose.msra.mxu0 %v5989
        %9881 = vmatpush.bf16.xpose.msra.mxu0 %v5957
        %9882 = vmatpush.bf16.xpose.msra.mxu0 %v5925
        %9883 = vmatpush.bf16.xpose.msra.mxu0 %v5893
        %9884 = vmatpush.bf16.xpose.msra.mxu0 %v5861
        %9885 = vmatpush.bf16.xpose.msra.mxu0 %v5829
        %9886 = vmatmul.bf16.gmra.mxu0 %v1733
        %v9887 = vpop.f32.mrf.mxu0
        %v9888 = vadd.f32 %v9860, %v9887
        %v9889 = vpop.f32.mrf.mxu0
        %v9890 = vadd.f32 %v9862, %v9889
        %9891 = vmatmul.bf16.gmra.mxu0 %v1765
        %v9892 = vpop.f32.mrf.mxu0
        %v9893 = vadd.f32 %v9865, %v9892
        %v9894 = vpop.f32.mrf.mxu0
        %v9895 = vadd.f32 %v9867, %v9894
        %9896 = vmatmul.bf16.gmra.mxu0 %v1797
        %v9897 = vpop.f32.mrf.mxu0
        %v9898 = vadd.f32 %v9870, %v9897
        %v9899 = vpop.f32.mrf.mxu0
        %v9900 = vadd.f32 %v9872, %v9899
        %9901 = vmatmul.bf16.gmra.mxu0 %v1829
        %v9902 = vpop.f32.mrf.mxu0
        %v9903 = vadd.f32 %v9875, %v9902
        %v9904 = vpop.f32.mrf.mxu0
        %9905 = vdwg.mxu0
        %9906 = vmatpush.bf16.xpose.msra.mxu0 %v6054
        %9907 = vmatpush.bf16.xpose.msra.mxu0 %v6022
        %9908 = vmatpush.bf16.xpose.msra.mxu0 %v5990
        %9909 = vmatpush.bf16.xpose.msra.mxu0 %v5958
        %9910 = vmatpush.bf16.xpose.msra.mxu0 %v5926
        %9911 = vmatpush.bf16.xpose.msra.mxu0 %v5894
        %9912 = vmatpush.bf16.xpose.msra.mxu0 %v5862
        %9913 = vmatpush.bf16.xpose.msra.mxu0 %v5830
        %9914 = vmatmul.bf16.gmra.mxu0 %v1734
        %v9915 = vpop.f32.mrf.mxu0
        %v9916 = vadd.f32 %v9888, %v9915
        %v9917 = vpop.f32.mrf.mxu0
        %v9918 = vadd.f32 %v9890, %v9917
        %9919 = vmatmul.bf16.gmra.mxu0 %v1766
        %v9920 = vpop.f32.mrf.mxu0
        %v9921 = vadd.f32 %v9893, %v9920
        %v9922 = vpop.f32.mrf.mxu0
        %v9923 = vadd.f32 %v9895, %v9922
        %9924 = vmatmul.bf16.gmra.mxu0 %v1798
        %v9925 = vpop.f32.mrf.mxu0
        %v9926 = vadd.f32 %v9898, %v9925
        %v9927 = vpop.f32.mrf.mxu0
        %v9928 = vadd.f32 %v9900, %v9927
        %9929 = vmatmul.bf16.gmra.mxu0 %v1830
        %v9930 = vpop.f32.mrf.mxu0
        %v9931 = vadd.f32 %v9903, %v9930
        %v9932 = vpop.f32.mrf.mxu0
        %9933 = vdwg.mxu0
        %9934 = vmatpush.bf16.xpose.msra.mxu0 %v6055
        %9935 = vmatpush.bf16.xpose.msra.mxu0 %v6023
        %9936 = vmatpush.bf16.xpose.msra.mxu0 %v5991
        %9937 = vmatpush.bf16.xpose.msra.mxu0 %v5959
        %9938 = vmatpush.bf16.xpose.msra.mxu0 %v5927
        %9939 = vmatpush.bf16.xpose.msra.mxu0 %v5895
        %9940 = vmatpush.bf16.xpose.msra.mxu0 %v5863
        %9941 = vmatpush.bf16.xpose.msra.mxu0 %v5831
        %9942 = vmatmul.bf16.gmra.mxu0 %v1735
        %v9943 = vpop.f32.mrf.mxu0
        %v9944 = vadd.f32 %v9916, %v9943
        %v9945 = vpop.f32.mrf.mxu0
        %v9946 = vadd.f32 %v9918, %v9945
        %9947 = vmatmul.bf16.gmra.mxu0 %v1767
        %v9948 = vpop.f32.mrf.mxu0
        %v9949 = vadd.f32 %v9921, %v9948
        %v9950 = vpop.f32.mrf.mxu0
        %v9951 = vadd.f32 %v9923, %v9950
        %9952 = vmatmul.bf16.gmra.mxu0 %v1799
        %v9953 = vpop.f32.mrf.mxu0
        %v9954 = vadd.f32 %v9926, %v9953
        %v9955 = vpop.f32.mrf.mxu0
        %v9956 = vadd.f32 %v9928, %v9955
        %9957 = vmatmul.bf16.gmra.mxu0 %v1831
        %v9958 = vpop.f32.mrf.mxu0
        %v9959 = vadd.f32 %v9931, %v9958
        %v9960 = vpop.f32.mrf.mxu0
        %9961 = vdwg.mxu0
        %9962 = vmatpush.bf16.xpose.msra.mxu0 %v6056
        %9963 = vmatpush.bf16.xpose.msra.mxu0 %v6024
        %9964 = vmatpush.bf16.xpose.msra.mxu0 %v5992
        %9965 = vmatpush.bf16.xpose.msra.mxu0 %v5960
        %9966 = vmatpush.bf16.xpose.msra.mxu0 %v5928
        %9967 = vmatpush.bf16.xpose.msra.mxu0 %v5896
        %9968 = vmatpush.bf16.xpose.msra.mxu0 %v5864
        %9969 = vmatpush.bf16.xpose.msra.mxu0 %v5832
        %9970 = vmatmul.bf16.gmra.mxu0 %v1736
        %v9971 = vpop.f32.mrf.mxu0
        %v9972 = vadd.f32 %v9944, %v9971
        %v9973 = vpop.f32.mrf.mxu0
        %v9974 = vadd.f32 %v9946, %v9973
        %9975 = vmatmul.bf16.gmra.mxu0 %v1768
        %v9976 = vpop.f32.mrf.mxu0
        %v9977 = vadd.f32 %v9949, %v9976
        %v9978 = vpop.f32.mrf.mxu0
        %v9979 = vadd.f32 %v9951, %v9978
        %9980 = vmatmul.bf16.gmra.mxu0 %v1800
        %v9981 = vpop.f32.mrf.mxu0
        %v9982 = vadd.f32 %v9954, %v9981
        %v9983 = vpop.f32.mrf.mxu0
        %v9984 = vadd.f32 %v9956, %v9983
        %9985 = vmatmul.bf16.gmra.mxu0 %v1832
        %v9986 = vpop.f32.mrf.mxu0
        %v9987 = vadd.f32 %v9959, %v9986
        %v9988 = vpop.f32.mrf.mxu0
        %9989 = vdwg.mxu0
        %9990 = vmatpush.bf16.xpose.msra.mxu0 %v6057
        %9991 = vmatpush.bf16.xpose.msra.mxu0 %v6025
        %9992 = vmatpush.bf16.xpose.msra.mxu0 %v5993
        %9993 = vmatpush.bf16.xpose.msra.mxu0 %v5961
        %9994 = vmatpush.bf16.xpose.msra.mxu0 %v5929
        %9995 = vmatpush.bf16.xpose.msra.mxu0 %v5897
        %9996 = vmatpush.bf16.xpose.msra.mxu0 %v5865
        %9997 = vmatpush.bf16.xpose.msra.mxu0 %v5833
        %9998 = vmatmul.bf16.gmra.mxu0 %v1737
        %v9999 = vpop.f32.mrf.mxu0
        %v10000 = vadd.f32 %v9972, %v9999
        %v10001 = vpop.f32.mrf.mxu0
        %v10002 = vadd.f32 %v9974, %v10001
        %10003 = vmatmul.bf16.gmra.mxu0 %v1769
        %v10004 = vpop.f32.mrf.mxu0
        %v10005 = vadd.f32 %v9977, %v10004
        %v10006 = vpop.f32.mrf.mxu0
        %v10007 = vadd.f32 %v9979, %v10006
        %10008 = vmatmul.bf16.gmra.mxu0 %v1801
        %v10009 = vpop.f32.mrf.mxu0
        %v10010 = vadd.f32 %v9982, %v10009
        %v10011 = vpop.f32.mrf.mxu0
        %v10012 = vadd.f32 %v9984, %v10011
        %10013 = vmatmul.bf16.gmra.mxu0 %v1833
        %v10014 = vpop.f32.mrf.mxu0
        %v10015 = vadd.f32 %v9987, %v10014
        %v10016 = vpop.f32.mrf.mxu0
        %10017 = vdwg.mxu0
        %10018 = vmatpush.bf16.xpose.msra.mxu0 %v6058
        %10019 = vmatpush.bf16.xpose.msra.mxu0 %v6026
        %10020 = vmatpush.bf16.xpose.msra.mxu0 %v5994
        %10021 = vmatpush.bf16.xpose.msra.mxu0 %v5962
        %10022 = vmatpush.bf16.xpose.msra.mxu0 %v5930
        %10023 = vmatpush.bf16.xpose.msra.mxu0 %v5898
        %10024 = vmatpush.bf16.xpose.msra.mxu0 %v5866
        %10025 = vmatpush.bf16.xpose.msra.mxu0 %v5834
        %10026 = vmatmul.bf16.gmra.mxu0 %v1738
        %v10027 = vpop.f32.mrf.mxu0
        %v10028 = vadd.f32 %v10000, %v10027
        %v10029 = vpop.f32.mrf.mxu0
        %v10030 = vadd.f32 %v10002, %v10029
        %10031 = vmatmul.bf16.gmra.mxu0 %v1770
        %v10032 = vpop.f32.mrf.mxu0
        %v10033 = vadd.f32 %v10005, %v10032
        %v10034 = vpop.f32.mrf.mxu0
        %v10035 = vadd.f32 %v10007, %v10034
        %10036 = vmatmul.bf16.gmra.mxu0 %v1802
        %v10037 = vpop.f32.mrf.mxu0
        %v10038 = vadd.f32 %v10010, %v10037
        %v10039 = vpop.f32.mrf.mxu0
        %v10040 = vadd.f32 %v10012, %v10039
        %10041 = vmatmul.bf16.gmra.mxu0 %v1834
        %v10042 = vpop.f32.mrf.mxu0
        %v10043 = vadd.f32 %v10015, %v10042
        %v10044 = vpop.f32.mrf.mxu0
        %10045 = vdwg.mxu0
        %10046 = vmatpush.bf16.xpose.msra.mxu0 %v6059
        %10047 = vmatpush.bf16.xpose.msra.mxu0 %v6027
        %10048 = vmatpush.bf16.xpose.msra.mxu0 %v5995
        %10049 = vmatpush.bf16.xpose.msra.mxu0 %v5963
        %10050 = vmatpush.bf16.xpose.msra.mxu0 %v5931
        %10051 = vmatpush.bf16.xpose.msra.mxu0 %v5899
        %10052 = vmatpush.bf16.xpose.msra.mxu0 %v5867
        %10053 = vmatpush.bf16.xpose.msra.mxu0 %v5835
        %10054 = vmatmul.bf16.gmra.mxu0 %v1739
        %v10055 = vpop.f32.mrf.mxu0
        %v10056 = vadd.f32 %v10028, %v10055
        %v10057 = vpop.f32.mrf.mxu0
        %v10058 = vadd.f32 %v10030, %v10057
        %10059 = vmatmul.bf16.gmra.mxu0 %v1771
        %v10060 = vpop.f32.mrf.mxu0
        %v10061 = vadd.f32 %v10033, %v10060
        %v10062 = vpop.f32.mrf.mxu0
        %v10063 = vadd.f32 %v10035, %v10062
        %10064 = vmatmul.bf16.gmra.mxu0 %v1803
        %v10065 = vpop.f32.mrf.mxu0
        %v10066 = vadd.f32 %v10038, %v10065
        %v10067 = vpop.f32.mrf.mxu0
        %v10068 = vadd.f32 %v10040, %v10067
        %10069 = vmatmul.bf16.gmra.mxu0 %v1835
        %v10070 = vpop.f32.mrf.mxu0
        %v10071 = vadd.f32 %v10043, %v10070
        %v10072 = vpop.f32.mrf.mxu0
        %10073 = vdwg.mxu0
        %10074 = vmatpush.bf16.xpose.msra.mxu0 %v6060
        %10075 = vmatpush.bf16.xpose.msra.mxu0 %v6028
        %10076 = vmatpush.bf16.xpose.msra.mxu0 %v5996
        %10077 = vmatpush.bf16.xpose.msra.mxu0 %v5964
        %10078 = vmatpush.bf16.xpose.msra.mxu0 %v5932
        %10079 = vmatpush.bf16.xpose.msra.mxu0 %v5900
        %10080 = vmatpush.bf16.xpose.msra.mxu0 %v5868
        %10081 = vmatpush.bf16.xpose.msra.mxu0 %v5836
        %10082 = vmatmul.bf16.gmra.mxu0 %v1740
        %v10083 = vpop.f32.mrf.mxu0
        %v10084 = vadd.f32 %v10056, %v10083
        %v10085 = vpop.f32.mrf.mxu0
        %v10086 = vadd.f32 %v10058, %v10085
        %10087 = vmatmul.bf16.gmra.mxu0 %v1772
        %v10088 = vpop.f32.mrf.mxu0
        %v10089 = vadd.f32 %v10061, %v10088
        %v10090 = vpop.f32.mrf.mxu0
        %v10091 = vadd.f32 %v10063, %v10090
        %10092 = vmatmul.bf16.gmra.mxu0 %v1804
        %v10093 = vpop.f32.mrf.mxu0
        %v10094 = vadd.f32 %v10066, %v10093
        %v10095 = vpop.f32.mrf.mxu0
        %v10096 = vadd.f32 %v10068, %v10095
        %10097 = vmatmul.bf16.gmra.mxu0 %v1836
        %v10098 = vpop.f32.mrf.mxu0
        %v10099 = vadd.f32 %v10071, %v10098
        %v10100 = vpop.f32.mrf.mxu0
        %10101 = vdwg.mxu0
        %10102 = vmatpush.bf16.xpose.msra.mxu0 %v6061
        %10103 = vmatpush.bf16.xpose.msra.mxu0 %v6029
        %10104 = vmatpush.bf16.xpose.msra.mxu0 %v5997
        %10105 = vmatpush.bf16.xpose.msra.mxu0 %v5965
        %10106 = vmatpush.bf16.xpose.msra.mxu0 %v5933
        %10107 = vmatpush.bf16.xpose.msra.mxu0 %v5901
        %10108 = vmatpush.bf16.xpose.msra.mxu0 %v5869
        %10109 = vmatpush.bf16.xpose.msra.mxu0 %v5837
        %10110 = vmatmul.bf16.gmra.mxu0 %v1741
        %v10111 = vpop.f32.mrf.mxu0
        %v10112 = vadd.f32 %v10084, %v10111
        %v10113 = vpop.f32.mrf.mxu0
        %v10114 = vadd.f32 %v10086, %v10113
        %10115 = vmatmul.bf16.gmra.mxu0 %v1773
        %v10116 = vpop.f32.mrf.mxu0
        %v10117 = vadd.f32 %v10089, %v10116
        %v10118 = vpop.f32.mrf.mxu0
        %v10119 = vadd.f32 %v10091, %v10118
        %10120 = vmatmul.bf16.gmra.mxu0 %v1805
        %v10121 = vpop.f32.mrf.mxu0
        %v10122 = vadd.f32 %v10094, %v10121
        %v10123 = vpop.f32.mrf.mxu0
        %v10124 = vadd.f32 %v10096, %v10123
        %10125 = vmatmul.bf16.gmra.mxu0 %v1837
        %v10126 = vpop.f32.mrf.mxu0
        %v10127 = vadd.f32 %v10099, %v10126
        %v10128 = vpop.f32.mrf.mxu0
        %10129 = vdwg.mxu0
        %10130 = vmatpush.bf16.xpose.msra.mxu0 %v6062
        %10131 = vmatpush.bf16.xpose.msra.mxu0 %v6030
        %10132 = vmatpush.bf16.xpose.msra.mxu0 %v5998
        %10133 = vmatpush.bf16.xpose.msra.mxu0 %v5966
        %10134 = vmatpush.bf16.xpose.msra.mxu0 %v5934
        %10135 = vmatpush.bf16.xpose.msra.mxu0 %v5902
        %10136 = vmatpush.bf16.xpose.msra.mxu0 %v5870
        %10137 = vmatpush.bf16.xpose.msra.mxu0 %v5838
        %10138 = vmatmul.bf16.gmra.mxu0 %v1742
        %v10139 = vpop.f32.mrf.mxu0
        %v10140 = vadd.f32 %v10112, %v10139
        %v10141 = vpop.f32.mrf.mxu0
        %v10142 = vadd.f32 %v10114, %v10141
        %10143 = vmatmul.bf16.gmra.mxu0 %v1774
        %v10144 = vpop.f32.mrf.mxu0
        %v10145 = vadd.f32 %v10117, %v10144
        %v10146 = vpop.f32.mrf.mxu0
        %v10147 = vadd.f32 %v10119, %v10146
        %10148 = vmatmul.bf16.gmra.mxu0 %v1806
        %v10149 = vpop.f32.mrf.mxu0
        %v10150 = vadd.f32 %v10122, %v10149
        %v10151 = vpop.f32.mrf.mxu0
        %v10152 = vadd.f32 %v10124, %v10151
        %10153 = vmatmul.bf16.gmra.mxu0 %v1838
        %v10154 = vpop.f32.mrf.mxu0
        %v10155 = vadd.f32 %v10127, %v10154
        %v10156 = vpop.f32.mrf.mxu0
        %10157 = vdwg.mxu0
        %10158 = vmatpush.bf16.xpose.msra.mxu0 %v6063
        %10159 = vmatpush.bf16.xpose.msra.mxu0 %v6031
        %10160 = vmatpush.bf16.xpose.msra.mxu0 %v5999
        %10161 = vmatpush.bf16.xpose.msra.mxu0 %v5967
        %10162 = vmatpush.bf16.xpose.msra.mxu0 %v5935
        %10163 = vmatpush.bf16.xpose.msra.mxu0 %v5903
        %10164 = vmatpush.bf16.xpose.msra.mxu0 %v5871
        %10165 = vmatpush.bf16.xpose.msra.mxu0 %v5839
        %10166 = vmatmul.bf16.gmra.mxu0 %v1743
        %v10167 = vpop.f32.mrf.mxu0
        %v10168 = vadd.f32 %v10140, %v10167
        %v10169 = vpop.f32.mrf.mxu0
        %v10170 = vadd.f32 %v10142, %v10169
        %10171 = vmatmul.bf16.gmra.mxu0 %v1775
        %v10172 = vpop.f32.mrf.mxu0
        %v10173 = vadd.f32 %v10145, %v10172
        %v10174 = vpop.f32.mrf.mxu0
        %v10175 = vadd.f32 %v10147, %v10174
        %10176 = vmatmul.bf16.gmra.mxu0 %v1807
        %v10177 = vpop.f32.mrf.mxu0
        %v10178 = vadd.f32 %v10150, %v10177
        %v10179 = vpop.f32.mrf.mxu0
        %v10180 = vadd.f32 %v10152, %v10179
        %10181 = vmatmul.bf16.gmra.mxu0 %v1839
        %v10182 = vpop.f32.mrf.mxu0
        %v10183 = vadd.f32 %v10155, %v10182
        %v10184 = vpop.f32.mrf.mxu0
        %10185 = vdwg.mxu0
        %10186 = vmatpush.bf16.xpose.msra.mxu0 %v6064
        %10187 = vmatpush.bf16.xpose.msra.mxu0 %v6032
        %10188 = vmatpush.bf16.xpose.msra.mxu0 %v6000
        %10189 = vmatpush.bf16.xpose.msra.mxu0 %v5968
        %10190 = vmatpush.bf16.xpose.msra.mxu0 %v5936
        %10191 = vmatpush.bf16.xpose.msra.mxu0 %v5904
        %10192 = vmatpush.bf16.xpose.msra.mxu0 %v5872
        %10193 = vmatpush.bf16.xpose.msra.mxu0 %v5840
        %10194 = vmatmul.bf16.gmra.mxu0 %v1744
        %v10195 = vpop.f32.mrf.mxu0
        %v10196 = vadd.f32 %v10168, %v10195
        %v10197 = vpop.f32.mrf.mxu0
        %v10198 = vadd.f32 %v10170, %v10197
        %10199 = vmatmul.bf16.gmra.mxu0 %v1776
        %v10200 = vpop.f32.mrf.mxu0
        %v10201 = vadd.f32 %v10173, %v10200
        %v10202 = vpop.f32.mrf.mxu0
        %v10203 = vadd.f32 %v10175, %v10202
        %10204 = vmatmul.bf16.gmra.mxu0 %v1808
        %v10205 = vpop.f32.mrf.mxu0
        %v10206 = vadd.f32 %v10178, %v10205
        %v10207 = vpop.f32.mrf.mxu0
        %v10208 = vadd.f32 %v10180, %v10207
        %10209 = vmatmul.bf16.gmra.mxu0 %v1840
        %v10210 = vpop.f32.mrf.mxu0
        %v10211 = vadd.f32 %v10183, %v10210
        %v10212 = vpop.f32.mrf.mxu0
        %10213 = vdwg.mxu0
        %10214 = vmatpush.bf16.xpose.msra.mxu0 %v6065
        %10215 = vmatpush.bf16.xpose.msra.mxu0 %v6033
        %10216 = vmatpush.bf16.xpose.msra.mxu0 %v6001
        %10217 = vmatpush.bf16.xpose.msra.mxu0 %v5969
        %10218 = vmatpush.bf16.xpose.msra.mxu0 %v5937
        %10219 = vmatpush.bf16.xpose.msra.mxu0 %v5905
        %10220 = vmatpush.bf16.xpose.msra.mxu0 %v5873
        %10221 = vmatpush.bf16.xpose.msra.mxu0 %v5841
        %10222 = vmatmul.bf16.gmra.mxu0 %v1745
        %v10223 = vpop.f32.mrf.mxu0
        %v10224 = vadd.f32 %v10196, %v10223
        %v10225 = vpop.f32.mrf.mxu0
        %v10226 = vadd.f32 %v10198, %v10225
        %10227 = vmatmul.bf16.gmra.mxu0 %v1777
        %v10228 = vpop.f32.mrf.mxu0
        %v10229 = vadd.f32 %v10201, %v10228
        %v10230 = vpop.f32.mrf.mxu0
        %v10231 = vadd.f32 %v10203, %v10230
        %10232 = vmatmul.bf16.gmra.mxu0 %v1809
        %v10233 = vpop.f32.mrf.mxu0
        %v10234 = vadd.f32 %v10206, %v10233
        %v10235 = vpop.f32.mrf.mxu0
        %v10236 = vadd.f32 %v10208, %v10235
        %10237 = vmatmul.bf16.gmra.mxu0 %v1841
        %v10238 = vpop.f32.mrf.mxu0
        %v10239 = vadd.f32 %v10211, %v10238
        %v10240 = vpop.f32.mrf.mxu0
        %10241 = vdwg.mxu0
        %10242 = vmatpush.bf16.xpose.msra.mxu0 %v6066
        %10243 = vmatpush.bf16.xpose.msra.mxu0 %v6034
        %10244 = vmatpush.bf16.xpose.msra.mxu0 %v6002
        %10245 = vmatpush.bf16.xpose.msra.mxu0 %v5970
        %10246 = vmatpush.bf16.xpose.msra.mxu0 %v5938
        %10247 = vmatpush.bf16.xpose.msra.mxu0 %v5906
        %10248 = vmatpush.bf16.xpose.msra.mxu0 %v5874
        %10249 = vmatpush.bf16.xpose.msra.mxu0 %v5842
        %10250 = vmatmul.bf16.gmra.mxu0 %v1746
        %v10251 = vpop.f32.mrf.mxu0
        %v10252 = vadd.f32 %v10224, %v10251
        %v10253 = vpop.f32.mrf.mxu0
        %v10254 = vadd.f32 %v10226, %v10253
        %10255 = vmatmul.bf16.gmra.mxu0 %v1778
        %v10256 = vpop.f32.mrf.mxu0
        %v10257 = vadd.f32 %v10229, %v10256
        %v10258 = vpop.f32.mrf.mxu0
        %v10259 = vadd.f32 %v10231, %v10258
        %10260 = vmatmul.bf16.gmra.mxu0 %v1810
        %v10261 = vpop.f32.mrf.mxu0
        %v10262 = vadd.f32 %v10234, %v10261
        %v10263 = vpop.f32.mrf.mxu0
        %v10264 = vadd.f32 %v10236, %v10263
        %10265 = vmatmul.bf16.gmra.mxu0 %v1842
        %v10266 = vpop.f32.mrf.mxu0
        %v10267 = vadd.f32 %v10239, %v10266
        %v10268 = vpop.f32.mrf.mxu0
        %10269 = vdwg.mxu0
        %10270 = vmatpush.bf16.xpose.msra.mxu0 %v6067
        %10271 = vmatpush.bf16.xpose.msra.mxu0 %v6035
        %10272 = vmatpush.bf16.xpose.msra.mxu0 %v6003
        %10273 = vmatpush.bf16.xpose.msra.mxu0 %v5971
        %10274 = vmatpush.bf16.xpose.msra.mxu0 %v5939
        %10275 = vmatpush.bf16.xpose.msra.mxu0 %v5907
        %10276 = vmatpush.bf16.xpose.msra.mxu0 %v5875
        %10277 = vmatpush.bf16.xpose.msra.mxu0 %v5843
        %10278 = vmatmul.bf16.gmra.mxu0 %v1747
        %v10279 = vpop.f32.mrf.mxu0
        %v10280 = vadd.f32 %v10252, %v10279
        %v10281 = vpop.f32.mrf.mxu0
        %v10282 = vadd.f32 %v10254, %v10281
        %10283 = vmatmul.bf16.gmra.mxu0 %v1779
        %v10284 = vpop.f32.mrf.mxu0
        %v10285 = vadd.f32 %v10257, %v10284
        %v10286 = vpop.f32.mrf.mxu0
        %v10287 = vadd.f32 %v10259, %v10286
        %10288 = vmatmul.bf16.gmra.mxu0 %v1811
        %v10289 = vpop.f32.mrf.mxu0
        %v10290 = vadd.f32 %v10262, %v10289
        %v10291 = vpop.f32.mrf.mxu0
        %v10292 = vadd.f32 %v10264, %v10291
        %10293 = vmatmul.bf16.gmra.mxu0 %v1843
        %v10294 = vpop.f32.mrf.mxu0
        %v10295 = vadd.f32 %v10267, %v10294
        %v10296 = vpop.f32.mrf.mxu0
        %10297 = vdwg.mxu0
        %10298 = vmatpush.bf16.xpose.msra.mxu0 %v6068
        %10299 = vmatpush.bf16.xpose.msra.mxu0 %v6036
        %10300 = vmatpush.bf16.xpose.msra.mxu0 %v6004
        %10301 = vmatpush.bf16.xpose.msra.mxu0 %v5972
        %10302 = vmatpush.bf16.xpose.msra.mxu0 %v5940
        %10303 = vmatpush.bf16.xpose.msra.mxu0 %v5908
        %10304 = vmatpush.bf16.xpose.msra.mxu0 %v5876
        %10305 = vmatpush.bf16.xpose.msra.mxu0 %v5844
        %10306 = vmatmul.bf16.gmra.mxu0 %v1748
        %v10307 = vpop.f32.mrf.mxu0
        %v10308 = vadd.f32 %v10280, %v10307
        %v10309 = vpop.f32.mrf.mxu0
        %v10310 = vadd.f32 %v10282, %v10309
        %10311 = vmatmul.bf16.gmra.mxu0 %v1780
        %v10312 = vpop.f32.mrf.mxu0
        %v10313 = vadd.f32 %v10285, %v10312
        %v10314 = vpop.f32.mrf.mxu0
        %v10315 = vadd.f32 %v10287, %v10314
        %10316 = vmatmul.bf16.gmra.mxu0 %v1812
        %v10317 = vpop.f32.mrf.mxu0
        %v10318 = vadd.f32 %v10290, %v10317
        %v10319 = vpop.f32.mrf.mxu0
        %v10320 = vadd.f32 %v10292, %v10319
        %10321 = vmatmul.bf16.gmra.mxu0 %v1844
        %v10322 = vpop.f32.mrf.mxu0
        %v10323 = vadd.f32 %v10295, %v10322
        %v10324 = vpop.f32.mrf.mxu0
        %10325 = vdwg.mxu0
        %10326 = vmatpush.bf16.xpose.msra.mxu0 %v6069
        %10327 = vmatpush.bf16.xpose.msra.mxu0 %v6037
        %10328 = vmatpush.bf16.xpose.msra.mxu0 %v6005
        %10329 = vmatpush.bf16.xpose.msra.mxu0 %v5973
        %10330 = vmatpush.bf16.xpose.msra.mxu0 %v5941
        %10331 = vmatpush.bf16.xpose.msra.mxu0 %v5909
        %10332 = vmatpush.bf16.xpose.msra.mxu0 %v5877
        %10333 = vmatpush.bf16.xpose.msra.mxu0 %v5845
        %10334 = vmatmul.bf16.gmra.mxu0 %v1749
        %v10335 = vpop.f32.mrf.mxu0
        %v10336 = vadd.f32 %v10308, %v10335
        %v10337 = vpop.f32.mrf.mxu0
        %v10338 = vadd.f32 %v10310, %v10337
        %10339 = vmatmul.bf16.gmra.mxu0 %v1781
        %v10340 = vpop.f32.mrf.mxu0
        %v10341 = vadd.f32 %v10313, %v10340
        %v10342 = vpop.f32.mrf.mxu0
        %v10343 = vadd.f32 %v10315, %v10342
        %10344 = vmatmul.bf16.gmra.mxu0 %v1813
        %v10345 = vpop.f32.mrf.mxu0
        %v10346 = vadd.f32 %v10318, %v10345
        %v10347 = vpop.f32.mrf.mxu0
        %v10348 = vadd.f32 %v10320, %v10347
        %10349 = vmatmul.bf16.gmra.mxu0 %v1845
        %v10350 = vpop.f32.mrf.mxu0
        %v10351 = vadd.f32 %v10323, %v10350
        %v10352 = vpop.f32.mrf.mxu0
        %10353 = vdwg.mxu0
        %10354 = vmatpush.bf16.xpose.msra.mxu0 %v6070
        %10355 = vmatpush.bf16.xpose.msra.mxu0 %v6038
        %10356 = vmatpush.bf16.xpose.msra.mxu0 %v6006
        %10357 = vmatpush.bf16.xpose.msra.mxu0 %v5974
        %10358 = vmatpush.bf16.xpose.msra.mxu0 %v5942
        %10359 = vmatpush.bf16.xpose.msra.mxu0 %v5910
        %10360 = vmatpush.bf16.xpose.msra.mxu0 %v5878
        %10361 = vmatpush.bf16.xpose.msra.mxu0 %v5846
        %10362 = vmatmul.bf16.gmra.mxu0 %v1750
        %v10363 = vpop.f32.mrf.mxu0
        %v10364 = vadd.f32 %v10336, %v10363
        %v10365 = vpop.f32.mrf.mxu0
        %v10366 = vadd.f32 %v10338, %v10365
        %10367 = vmatmul.bf16.gmra.mxu0 %v1782
        %v10368 = vpop.f32.mrf.mxu0
        %v10369 = vadd.f32 %v10341, %v10368
        %v10370 = vpop.f32.mrf.mxu0
        %v10371 = vadd.f32 %v10343, %v10370
        %10372 = vmatmul.bf16.gmra.mxu0 %v1814
        %v10373 = vpop.f32.mrf.mxu0
        %v10374 = vadd.f32 %v10346, %v10373
        %v10375 = vpop.f32.mrf.mxu0
        %v10376 = vadd.f32 %v10348, %v10375
        %10377 = vmatmul.bf16.gmra.mxu0 %v1846
        %v10378 = vpop.f32.mrf.mxu0
        %v10379 = vadd.f32 %v10351, %v10378
        %v10380 = vpop.f32.mrf.mxu0
        %10381 = vdwg.mxu0
        %10382 = vmatpush.bf16.xpose.msra.mxu0 %v6071
        %10383 = vmatpush.bf16.xpose.msra.mxu0 %v6039
        %10384 = vmatpush.bf16.xpose.msra.mxu0 %v6007
        %10385 = vmatpush.bf16.xpose.msra.mxu0 %v5975
        %10386 = vmatpush.bf16.xpose.msra.mxu0 %v5943
        %10387 = vmatpush.bf16.xpose.msra.mxu0 %v5911
        %10388 = vmatpush.bf16.xpose.msra.mxu0 %v5879
        %10389 = vmatpush.bf16.xpose.msra.mxu0 %v5847
        %10390 = vmatmul.bf16.gmra.mxu0 %v1751
        %v10391 = vpop.f32.mrf.mxu0
        %v10392 = vadd.f32 %v10364, %v10391
        %v10393 = vpop.f32.mrf.mxu0
        %v10394 = vadd.f32 %v10366, %v10393
        %10395 = vmatmul.bf16.gmra.mxu0 %v1783
        %v10396 = vpop.f32.mrf.mxu0
        %v10397 = vadd.f32 %v10369, %v10396
        %v10398 = vpop.f32.mrf.mxu0
        %v10399 = vadd.f32 %v10371, %v10398
        %10400 = vmatmul.bf16.gmra.mxu0 %v1815
        %v10401 = vpop.f32.mrf.mxu0
        %v10402 = vadd.f32 %v10374, %v10401
        %v10403 = vpop.f32.mrf.mxu0
        %v10404 = vadd.f32 %v10376, %v10403
        %10405 = vmatmul.bf16.gmra.mxu0 %v1847
        %v10406 = vpop.f32.mrf.mxu0
        %v10407 = vadd.f32 %v10379, %v10406
        %v10408 = vpop.f32.mrf.mxu0
        %10409 = vdwg.mxu0
        %10410 = vmatpush.bf16.xpose.msra.mxu0 %v6072
        %10411 = vmatpush.bf16.xpose.msra.mxu0 %v6040
        %10412 = vmatpush.bf16.xpose.msra.mxu0 %v6008
        %10413 = vmatpush.bf16.xpose.msra.mxu0 %v5976
        %10414 = vmatpush.bf16.xpose.msra.mxu0 %v5944
        %10415 = vmatpush.bf16.xpose.msra.mxu0 %v5912
        %10416 = vmatpush.bf16.xpose.msra.mxu0 %v5880
        %10417 = vmatpush.bf16.xpose.msra.mxu0 %v5848
        %10418 = vmatmul.bf16.gmra.mxu0 %v1752
        %v10419 = vpop.f32.mrf.mxu0
        %v10420 = vadd.f32 %v10392, %v10419
        %v10421 = vpop.f32.mrf.mxu0
        %v10422 = vadd.f32 %v10394, %v10421
        %10423 = vmatmul.bf16.gmra.mxu0 %v1784
        %v10424 = vpop.f32.mrf.mxu0
        %v10425 = vadd.f32 %v10397, %v10424
        %v10426 = vpop.f32.mrf.mxu0
        %v10427 = vadd.f32 %v10399, %v10426
        %10428 = vmatmul.bf16.gmra.mxu0 %v1816
        %v10429 = vpop.f32.mrf.mxu0
        %v10430 = vadd.f32 %v10402, %v10429
        %v10431 = vpop.f32.mrf.mxu0
        %v10432 = vadd.f32 %v10404, %v10431
        %10433 = vmatmul.bf16.gmra.mxu0 %v1848
        %v10434 = vpop.f32.mrf.mxu0
        %v10435 = vadd.f32 %v10407, %v10434
        %v10436 = vpop.f32.mrf.mxu0
        %10437 = vdwg.mxu0
        %10438 = vmatpush.bf16.xpose.msra.mxu0 %v6073
        %10439 = vmatpush.bf16.xpose.msra.mxu0 %v6041
        %10440 = vmatpush.bf16.xpose.msra.mxu0 %v6009
        %10441 = vmatpush.bf16.xpose.msra.mxu0 %v5977
        %10442 = vmatpush.bf16.xpose.msra.mxu0 %v5945
        %10443 = vmatpush.bf16.xpose.msra.mxu0 %v5913
        %10444 = vmatpush.bf16.xpose.msra.mxu0 %v5881
        %10445 = vmatpush.bf16.xpose.msra.mxu0 %v5849
        %10446 = vmatmul.bf16.gmra.mxu0 %v1753
        %v10447 = vpop.f32.mrf.mxu0
        %v10448 = vadd.f32 %v10420, %v10447
        %v10449 = vpop.f32.mrf.mxu0
        %v10450 = vadd.f32 %v10422, %v10449
        %10451 = vmatmul.bf16.gmra.mxu0 %v1785
        %v10452 = vpop.f32.mrf.mxu0
        %v10453 = vadd.f32 %v10425, %v10452
        %v10454 = vpop.f32.mrf.mxu0
        %v10455 = vadd.f32 %v10427, %v10454
        %10456 = vmatmul.bf16.gmra.mxu0 %v1817
        %v10457 = vpop.f32.mrf.mxu0
        %v10458 = vadd.f32 %v10430, %v10457
        %v10459 = vpop.f32.mrf.mxu0
        %v10460 = vadd.f32 %v10432, %v10459
        %10461 = vmatmul.bf16.gmra.mxu0 %v1849
        %v10462 = vpop.f32.mrf.mxu0
        %v10463 = vadd.f32 %v10435, %v10462
        %v10464 = vpop.f32.mrf.mxu0
        %10465 = vdwg.mxu0
        %10466 = vmatpush.bf16.xpose.msra.mxu0 %v6074
        %10467 = vmatpush.bf16.xpose.msra.mxu0 %v6042
        %10468 = vmatpush.bf16.xpose.msra.mxu0 %v6010
        %10469 = vmatpush.bf16.xpose.msra.mxu0 %v5978
        %10470 = vmatpush.bf16.xpose.msra.mxu0 %v5946
        %10471 = vmatpush.bf16.xpose.msra.mxu0 %v5914
        %10472 = vmatpush.bf16.xpose.msra.mxu0 %v5882
        %10473 = vmatpush.bf16.xpose.msra.mxu0 %v5850
        %10474 = vmatmul.bf16.gmra.mxu0 %v1754
        %v10475 = vpop.f32.mrf.mxu0
        %v10476 = vadd.f32 %v10448, %v10475
        %v10477 = vpop.f32.mrf.mxu0
        %v10478 = vadd.f32 %v10450, %v10477
        %10479 = vmatmul.bf16.gmra.mxu0 %v1786
        %v10480 = vpop.f32.mrf.mxu0
        %v10481 = vadd.f32 %v10453, %v10480
        %v10482 = vpop.f32.mrf.mxu0
        %v10483 = vadd.f32 %v10455, %v10482
        %10484 = vmatmul.bf16.gmra.mxu0 %v1818
        %v10485 = vpop.f32.mrf.mxu0
        %v10486 = vadd.f32 %v10458, %v10485
        %v10487 = vpop.f32.mrf.mxu0
        %v10488 = vadd.f32 %v10460, %v10487
        %10489 = vmatmul.bf16.gmra.mxu0 %v1850
        %v10490 = vpop.f32.mrf.mxu0
        %v10491 = vadd.f32 %v10463, %v10490
        %v10492 = vpop.f32.mrf.mxu0
        %10493 = vdwg.mxu0
        %10494 = vmatpush.bf16.xpose.msra.mxu0 %v6075
        %10495 = vmatpush.bf16.xpose.msra.mxu0 %v6043
        %10496 = vmatpush.bf16.xpose.msra.mxu0 %v6011
        %10497 = vmatpush.bf16.xpose.msra.mxu0 %v5979
        %10498 = vmatpush.bf16.xpose.msra.mxu0 %v5947
        %10499 = vmatpush.bf16.xpose.msra.mxu0 %v5915
        %10500 = vmatpush.bf16.xpose.msra.mxu0 %v5883
        %10501 = vmatpush.bf16.xpose.msra.mxu0 %v5851
        %10502 = vmatmul.bf16.gmra.mxu0 %v1755
        %v10503 = vpop.f32.mrf.mxu0
        %v10504 = vadd.f32 %v10476, %v10503
        %v10505 = vpop.f32.mrf.mxu0
        %v10506 = vadd.f32 %v10478, %v10505
        %10507 = vmatmul.bf16.gmra.mxu0 %v1787
        %v10508 = vpop.f32.mrf.mxu0
        %v10509 = vadd.f32 %v10481, %v10508
        %v10510 = vpop.f32.mrf.mxu0
        %v10511 = vadd.f32 %v10483, %v10510
        %10512 = vmatmul.bf16.gmra.mxu0 %v1819
        %v10513 = vpop.f32.mrf.mxu0
        %v10514 = vadd.f32 %v10486, %v10513
        %v10515 = vpop.f32.mrf.mxu0
        %v10516 = vadd.f32 %v10488, %v10515
        %10517 = vmatmul.bf16.gmra.mxu0 %v1851
        %v10518 = vpop.f32.mrf.mxu0
        %v10519 = vadd.f32 %v10491, %v10518
        %v10520 = vpop.f32.mrf.mxu0
        %10521 = vdwg.mxu0
        %10522 = vmatpush.bf16.xpose.msra.mxu0 %v6076
        %10523 = vmatpush.bf16.xpose.msra.mxu0 %v6044
        %10524 = vmatpush.bf16.xpose.msra.mxu0 %v6012
        %10525 = vmatpush.bf16.xpose.msra.mxu0 %v5980
        %10526 = vmatpush.bf16.xpose.msra.mxu0 %v5948
        %10527 = vmatpush.bf16.xpose.msra.mxu0 %v5916
        %10528 = vmatpush.bf16.xpose.msra.mxu0 %v5884
        %10529 = vmatpush.bf16.xpose.msra.mxu0 %v5852
        %10530 = vmatmul.bf16.gmra.mxu0 %v1756
        %v10531 = vpop.f32.mrf.mxu0
        %v10532 = vadd.f32 %v10504, %v10531
        %v10533 = vpop.f32.mrf.mxu0
        %v10534 = vadd.f32 %v10506, %v10533
        %10535 = vmatmul.bf16.gmra.mxu0 %v1788
        %v10536 = vpop.f32.mrf.mxu0
        %v10537 = vadd.f32 %v10509, %v10536
        %v10538 = vpop.f32.mrf.mxu0
        %v10539 = vadd.f32 %v10511, %v10538
        %10540 = vmatmul.bf16.gmra.mxu0 %v1820
        %v10541 = vpop.f32.mrf.mxu0
        %v10542 = vadd.f32 %v10514, %v10541
        %v10543 = vpop.f32.mrf.mxu0
        %v10544 = vadd.f32 %v10516, %v10543
        %10545 = vmatmul.bf16.gmra.mxu0 %v1852
        %v10546 = vpop.f32.mrf.mxu0
        %v10547 = vadd.f32 %v10519, %v10546
        %v10548 = vpop.f32.mrf.mxu0
        %10549 = vdwg.mxu0
        %10550 = vmatpush.bf16.xpose.msra.mxu0 %v6077
        %10551 = vmatpush.bf16.xpose.msra.mxu0 %v6045
        %10552 = vmatpush.bf16.xpose.msra.mxu0 %v6013
        %10553 = vmatpush.bf16.xpose.msra.mxu0 %v5981
        %10554 = vmatpush.bf16.xpose.msra.mxu0 %v5949
        %10555 = vmatpush.bf16.xpose.msra.mxu0 %v5917
        %10556 = vmatpush.bf16.xpose.msra.mxu0 %v5885
        %10557 = vmatpush.bf16.xpose.msra.mxu0 %v5853
        %10558 = vmatmul.bf16.gmra.mxu0 %v1757
        %v10559 = vpop.f32.mrf.mxu0
        %v10560 = vadd.f32 %v10532, %v10559
        %v10561 = vpop.f32.mrf.mxu0
        %v10562 = vadd.f32 %v10534, %v10561
        %10563 = vmatmul.bf16.gmra.mxu0 %v1789
        %v10564 = vpop.f32.mrf.mxu0
        %v10565 = vadd.f32 %v10537, %v10564
        %v10566 = vpop.f32.mrf.mxu0
        %v10567 = vadd.f32 %v10539, %v10566
        %10568 = vmatmul.bf16.gmra.mxu0 %v1821
        %v10569 = vpop.f32.mrf.mxu0
        %v10570 = vadd.f32 %v10542, %v10569
        %v10571 = vpop.f32.mrf.mxu0
        %v10572 = vadd.f32 %v10544, %v10571
        %10573 = vmatmul.bf16.gmra.mxu0 %v1853
        %v10574 = vpop.f32.mrf.mxu0
        %v10575 = vadd.f32 %v10547, %v10574
        %v10576 = vpop.f32.mrf.mxu0
        %10577 = vdwg.mxu0
        %10578 = vmatpush.bf16.xpose.msra.mxu0 %v6078
        %10579 = vmatpush.bf16.xpose.msra.mxu0 %v6046
        %10580 = vmatpush.bf16.xpose.msra.mxu0 %v6014
        %10581 = vmatpush.bf16.xpose.msra.mxu0 %v5982
        %10582 = vmatpush.bf16.xpose.msra.mxu0 %v5950
        %10583 = vmatpush.bf16.xpose.msra.mxu0 %v5918
        %10584 = vmatpush.bf16.xpose.msra.mxu0 %v5886
        %10585 = vmatpush.bf16.xpose.msra.mxu0 %v5854
        %10586 = vmatmul.bf16.gmra.mxu0 %v1758
        %v10587 = vpop.f32.mrf.mxu0
        %v10588 = vadd.f32 %v10560, %v10587
        %v10589 = vpop.f32.mrf.mxu0
        %v10590 = vadd.f32 %v10562, %v10589
        %10591 = vmatmul.bf16.gmra.mxu0 %v1790
        %v10592 = vpop.f32.mrf.mxu0
        %v10593 = vadd.f32 %v10565, %v10592
        %v10594 = vpop.f32.mrf.mxu0
        %v10595 = vadd.f32 %v10567, %v10594
        %10596 = vmatmul.bf16.gmra.mxu0 %v1822
        %v10597 = vpop.f32.mrf.mxu0
        %v10598 = vadd.f32 %v10570, %v10597
        %v10599 = vpop.f32.mrf.mxu0
        %v10600 = vadd.f32 %v10572, %v10599
        %10601 = vmatmul.bf16.gmra.mxu0 %v1854
        %v10602 = vpop.f32.mrf.mxu0
        %v10603 = vadd.f32 %v10575, %v10602
        %v10604 = vpop.f32.mrf.mxu0
        %10605 = vdwg.mxu0
        %10606 = vmatpush.bf16.xpose.msra.mxu0 %v6079
        %10607 = vmatpush.bf16.xpose.msra.mxu0 %v6047
        %10608 = vmatpush.bf16.xpose.msra.mxu0 %v6015
        %10609 = vmatpush.bf16.xpose.msra.mxu0 %v5983
        %10610 = vmatpush.bf16.xpose.msra.mxu0 %v5951
        %10611 = vmatpush.bf16.xpose.msra.mxu0 %v5919
        %10612 = vmatpush.bf16.xpose.msra.mxu0 %v5887
        %10613 = vmatpush.bf16.xpose.msra.mxu0 %v5855
        %10614 = vmatmul.bf16.gmra.mxu0 %v1759
        %v10615 = vpop.f32.mrf.mxu0
        %v10616 = vadd.f32 %v10588, %v10615
        %v10617 = vpop.f32.mrf.mxu0
        %v10618 = vadd.f32 %v10590, %v10617
        %10619 = vmatmul.bf16.gmra.mxu0 %v1791
        %v10620 = vpop.f32.mrf.mxu0
        %v10621 = vadd.f32 %v10593, %v10620
        %v10622 = vpop.f32.mrf.mxu0
        %v10623 = vadd.f32 %v10595, %v10622
        %10624 = vmatmul.bf16.gmra.mxu0 %v1823
        %v10625 = vpop.f32.mrf.mxu0
        %v10626 = vadd.f32 %v10598, %v10625
        %v10627 = vpop.f32.mrf.mxu0
        %v10628 = vadd.f32 %v10600, %v10627
        %10629 = vmatmul.bf16.gmra.mxu0 %v1855
        %v10630 = vpop.f32.mrf.mxu0
        %v10631 = vadd.f32 %v10603, %v10630
        %v10632 = vpop.f32.mrf.mxu0
        %10633 = vdwg.mxu0
        %10634 = vmatpush.bf16.xpose.msra.mxu0 %v6080
        %10635 = vmatpush.bf16.xpose.msra.mxu0 %v6048
        %10636 = vmatpush.bf16.xpose.msra.mxu0 %v6016
        %10637 = vmatpush.bf16.xpose.msra.mxu0 %v5984
        %10638 = vmatpush.bf16.xpose.msra.mxu0 %v5952
        %10639 = vmatpush.bf16.xpose.msra.mxu0 %v5920
        %10640 = vmatpush.bf16.xpose.msra.mxu0 %v5888
        %10641 = vmatpush.bf16.xpose.msra.mxu0 %v5856
        %10642 = vmatmul.bf16.gmra.mxu0 %v1760
        %v10643 = vpop.f32.mrf.mxu0
        %v10644 = vadd.f32 %v10616, %v10643
        %v10645 = vpop.f32.mrf.mxu0
        %v10646 = vadd.f32 %v10618, %v10645
        %10647 = vmatmul.bf16.gmra.mxu0 %v1792
        %v10648 = vpop.f32.mrf.mxu0
        %v10649 = vadd.f32 %v10621, %v10648
        %v10650 = vpop.f32.mrf.mxu0
        %v10651 = vadd.f32 %v10623, %v10650
        %10652 = vmatmul.bf16.gmra.mxu0 %v1824
        %v10653 = vpop.f32.mrf.mxu0
        %v10654 = vadd.f32 %v10626, %v10653
        %v10655 = vpop.f32.mrf.mxu0
        %v10656 = vadd.f32 %v10628, %v10655
        %10657 = vmatmul.bf16.gmra.mxu0 %v1856
        %v10658 = vpop.f32.mrf.mxu0
        %v10659 = vadd.f32 %v10631, %v10658
        %v10660 = vpop.f32.mrf.mxu0
        %10661 = vdwg.mxu0
        %10662 = vmatpush.bf16.xpose.msra.mxu0 %v6081
        %10663 = vmatpush.bf16.xpose.msra.mxu0 %v6049
        %10664 = vmatpush.bf16.xpose.msra.mxu0 %v6017
        %10665 = vmatpush.bf16.xpose.msra.mxu0 %v5985
        %10666 = vmatpush.bf16.xpose.msra.mxu0 %v5953
        %10667 = vmatpush.bf16.xpose.msra.mxu0 %v5921
        %10668 = vmatpush.bf16.xpose.msra.mxu0 %v5889
        %10669 = vmatpush.bf16.xpose.msra.mxu0 %v5857
        %10670 = vmatmul.bf16.gmra.mxu0 %v1761
        %v10671 = vpop.f32.mrf.mxu0
        %v10672 = vadd.f32 %v10644, %v10671
        %v10673 = vpop.f32.mrf.mxu0
        %v10674 = vadd.f32 %v10646, %v10673
        %10675 = vmatmul.bf16.gmra.mxu0 %v1793
        %v10676 = vpop.f32.mrf.mxu0
        %v10677 = vadd.f32 %v10649, %v10676
        %v10678 = vpop.f32.mrf.mxu0
        %v10679 = vadd.f32 %v10651, %v10678
        %10680 = vmatmul.bf16.gmra.mxu0 %v1825
        %v10681 = vpop.f32.mrf.mxu0
        %v10682 = vadd.f32 %v10654, %v10681
        %v10683 = vpop.f32.mrf.mxu0
        %v10684 = vadd.f32 %v10656, %v10683
        %10685 = vmatmul.bf16.gmra.mxu0 %v1857
        %v10686 = vpop.f32.mrf.mxu0
        %v10687 = vadd.f32 %v10659, %v10686
        %v10688 = vpop.f32.mrf.mxu0
        %10689 = vdwg.mxu0
        %10690 = vst [vmem:[%s244] sm:$0xff] %v7984
        %10691 = vst [vmem:[%s244 + $0x8] sm:$0xff] %v8880
        %10692 = vst [vmem:[%s244 + $0x10] sm:$0xff] %v9776
        %10693 = vst [vmem:[%s244 + $0x18] sm:$0xff] %v10672
        %10694 = vst [vmem:[%s244 + $0x20] sm:$0xff] %v7986
        %10695 = vst [vmem:[%s244 + $0x28] sm:$0xff] %v8882
        %10696 = vst [vmem:[%s244 + $0x30] sm:$0xff] %v9778
        %10697 = vst [vmem:[%s244 + $0x38] sm:$0xff] %v10674
        %10698 = vst [vmem:[%s244 + $0x40] sm:$0xff] %v7989
        %10699 = vst [vmem:[%s244 + $0x48] sm:$0xff] %v8885
        %10700 = vst [vmem:[%s244 + $0x50] sm:$0xff] %v9781
        %10701 = vst [vmem:[%s244 + $0x58] sm:$0xff] %v10677
        %10702 = vst [vmem:[%s244 + $0x60] sm:$0xff] %v7991
        %10703 = vst [vmem:[%s244 + $0x68] sm:$0xff] %v8887
        %10704 = vst [vmem:[%s244 + $0x70] sm:$0xff] %v9783
        %10705 = vst [vmem:[%s244 + $0x78] sm:$0xff] %v10679
        %10706 = vst [vmem:[%s244 + $0x80] sm:$0xff] %v7994
        %10707 = vst [vmem:[%s244 + $0x88] sm:$0xff] %v8890
        %10708 = vst [vmem:[%s244 + $0x90] sm:$0xff] %v9786
        %10709 = vst [vmem:[%s244 + $0x98] sm:$0xff] %v10682
        %10710 = vst [vmem:[%s244 + $0xa0] sm:$0xff] %v7996
        %10711 = vst [vmem:[%s244 + $0xa8] sm:$0xff] %v8892
        %10712 = vst [vmem:[%s244 + $0xb0] sm:$0xff] %v9788
        %10713 = vst [vmem:[%s244 + $0xb8] sm:$0xff] %v10684
        %10714 = vst [vmem:[%s244 + $0xc0] sm:$0x1] %v7999
        %10715 = vst [vmem:[%s244 + $0xc8] sm:$0x1] %v8895
        %10716 = vst [vmem:[%s244 + $0xd0] sm:$0x1] %v9791
        %10717 = vst [vmem:[%s244 + $0xd8] sm:$0x1] %v10687
        %s10718 = sand.u32 %s102, 1
        %s10719 = scalar_lea.sflag [#allocation4], %s10718
        %s10720 = sand.u32 %s102, 1
        %s10721 = smul.addr %s10720, 224
        %s10722 = scalar_lea.vmem [#allocation8], %s10721
        // Predicated region
        $region45: #{tpu_custom_call.1} parent=31 // pred_check
          %p10723 = pneg %p112
        $region46: #{tpu_custom_call.1} parent=31 // pred_check_branch
          %10725 = sbr.rel (%p10723) target = $region48
        $region47: #{tpu_custom_call.1} parent=31 // pred_region
          %s10726 = smul.u32 4, %s21
          %10728 = vsyncadd %s10719, 0
          %s10729 = smul.addr %s10726, 8
          %s10730 = scalar_lea.hbm %s3, %s10729
          %s10731 = sshll.u32 %s10722, 4
          %s10732 = int_to_ptr.vmem [resolvable:$true] %s10731
          %s10733 = sshll.u32 %s10730, 4
          %s10734 = int_to_ptr.hbm [resolvable:$true] %s10733
          %10739 = dma.vmem_to_hbm [thread:$0]  %s10732, 3584, %s10734, %s10719, 512, 1024, 32
        $region48: #{tpu_custom_call.1} parent=31 // pred_fallthru
          _
      $region32: #{tpu_custom_call.1} parent=5 // pred_fallthru
        _
      %p10740 = scmp.le.s32.totalorder 2, %s16
      // Predicated region
      $region49: #{tpu_custom_call.1} parent=5 // pred_check
        %p10741 = pneg %p10740
      $region50: #{tpu_custom_call.1} parent=5 // pred_check_branch
        %10743 = sbr.rel (%p10741) target = $region52
      $region51: #{tpu_custom_call.1} parent=5 // pred_region
        %s10744 = ssub.s32 %s16, 2
        // Predicated region
        $region53: #{tpu_custom_call.1} parent=51 // pred_check
          %p10745 = pneg %p118
        $region54: #{tpu_custom_call.1} parent=51 // pred_check_branch
          %10747 = sbr.rel (%p10745) target = $region56
        $region55: #{tpu_custom_call.1} parent=51 // pred_region
          %s10748 = sand.u32 %s103, 1
          %s10749 = scalar_lea.sflag [#allocation4], %s10748
          %s10750 = sand.u32 %s103, 1
          %s10751 = smul.addr %s10750, 224
          %s10752 = scalar_lea.vmem [#allocation8], %s10751
          %10754 = dma.done %s10749, 3584
        $region56: #{tpu_custom_call.1} parent=51 // pred_fallthru
          _
      $region52: #{tpu_custom_call.1} parent=5 // pred_fallthru
        _
    $region6: #{tpu_custom_call.1} parent=1 // loop_footer
      %s20 = sadd.s32 1, %s16
    $region7: #{tpu_custom_call.1} parent=1 // loop_footer_branch
      %15 = sbr.rel target = $region3
    $region8: #{tpu_custom_call.1} parent=1 // loop_exit
      _
    %10755 = vsyncpa [#allocation3], 1
    %s10756 = scalar_lea.sflag [#allocation3], 1
    %10757 = vsyncpa %s10756, 1
    %10758 = vsyncpa [#allocation6], 1
    %s10759 = scalar_lea.sflag [#allocation6], 1
    %10760 = vsyncpa %s10759, 1
    %10761 = vsyncpa [#allocation4], 1
    %s10762 = scalar_lea.sflag [#allocation4], 1
    %10763 = vsyncpa %s10762, 1

</llo_original>
